<compile_context>
chip_gen: v7x
topology: tpu7x:2x2x1
jax: 0.10.0
libtpu: 0.0.40
codegen_flags: <defaults>
</compile_context>

<pallas_src>
import math

import numpy as np
import jax
import jax.numpy as jnp
from jax import lax
from jax.experimental import pallas as pl
from jax.experimental.pallas import tpu as pltpu

# ----------------------------- hyper-parameters ------------------------------
INPUT_RNA = 256
INPUT_ATAC = 256            # must equal INPUT_RNA (shared cross-attention embed dim)
GAP = 32
N_HEAD = 2                  # encoder heads
MIX_HEADS = 2 * N_HEAD      # cross-attention heads
NUM_CLASSES = 10
DIM_FF = 1024               # fixed dim_feedforward in the PyTorch module
BATCH = 4
SEQ = INPUT_RNA // GAP      # 8
LN_EPS = 1e-5

D = INPUT_RNA
TWO_B = 2 * BATCH           # stacked {rna, atac} rows
BS = BATCH * SEQ            # encoder slab rows per branch

assert INPUT_RNA == INPUT_ATAC


# ----------------------------- kernel helpers --------------------------------
def _bf16(x):
    return x.astype(jnp.bfloat16)


def _softmax(s):
    # f32 softmax; the divide goes to the EUP via the approximate reciprocal.
    s = s - jnp.max(s, axis=-1, keepdims=True)
    e = jnp.exp(s)
    return e * pl.reciprocal(jnp.sum(e, axis=-1, keepdims=True), approx=True)


def _layer_norm(x, g, b):
    mu = jnp.mean(x, axis=-1, keepdims=True)
    var = jnp.mean((x - mu) * (x - mu), axis=-1, keepdims=True)
    return (x - mu) * lax.rsqrt(var + LN_EPS) * g + b


# ----------------------------- fused Pallas kernel ---------------------------
def _fused_kernel(x_ref, pe_ref,
                  cwq_ref, cbq_ref, cwkv_ref, cbkv_ref, cwo_ref, cbo_ref,
                  e_wqkv_ref, e_bqkv_ref, e_wo_ref, e_bo_ref,
                  e_ln1g_ref, e_ln1b_ref, e_w1_ref, e_b1_ref,
                  e_w2_ref, e_b2_ref, e_ln2g_ref, e_ln2b_ref,
                  p_w1_ref, p_b1_ref, p_w2_ref, p_b2_ref,
                  out_ref,
                  cctx_scr, f3_scr, ectx_scr, feat_scr):
    """Whole pretrain forward in one invocation.

    x_ref rows [0, B) = x_rna, rows [B, 2B) = x_atac.
    Cross-attention and prediction-head weights are shared; encoder weights are
    stacked over a leading branch axis of size 2.
    """
    x = x_ref[...]                                   # (2B, D) f32
    x_bf = _bf16(x)

    # ---- shared cross-attention, both directions in one stacked pass --------
    # 1/sqrt(hd) is pre-folded into cwq / cbq on the host.
    q = _bf16(jnp.dot(x_bf, cwq_ref[...], preferred_element_type=jnp.float32)
              + cbq_ref[...])                        # (2B, D)
    kv = (jnp.dot(x_bf, cwkv_ref[...], preferred_element_type=jnp.float32)
          + cbkv_ref[...])                           # (2B, 2D) packed K/V
    k = _bf16(kv[:, :D])
    v = _bf16(kv[:, D:])

    # RNA queries (rows < B) attend only to ATAC keys (rows >= B) and vice versa.
    row_is_atac = lax.broadcasted_iota(jnp.int32, (TWO_B, TWO_B), 0) >= BATCH
    col_is_atac = lax.broadcasted_iota(jnp.int32, (TWO_B, TWO_B), 1) >= BATCH
    cross_mask = row_is_atac != col_is_atac

    hd = D // MIX_HEADS
    for h in range(MIX_HEADS):                       # static unroll (4 heads)
        sl = slice(h * hd, (h + 1) * hd)
        s = lax.dot_general(q[:, sl], k[:, sl], (((1,), (1,)), ((), ())),
                            preferred_element_type=jnp.float32)       # (2B, 2B)
        p = _softmax(jnp.where(cross_mask, s, -1e30))
        ctx = jnp.dot(_bf16(p), v[:, sl], preferred_element_type=jnp.float32)
        cctx_scr[:, sl] = _bf16(ctx)                 # lane-slice write, no concat
    att = (jnp.dot(cctx_scr[...], cwo_ref[...], preferred_element_type=jnp.float32)
           + cbo_ref[...])                           # ONE (2B,D)@(D,D) out-proj GEMM

    # ---- 0.5*x + 0.5*attn, re-layout (2B, D) -> (2B*S, G), add PE once ------
    f = 0.5 * x + 0.5 * att                          # f32 residual
    for s_idx in range(SEQ):                         # static unroll (8 lane chunks)
        f3_scr[:, s_idx, :] = f[:, s_idx * GAP:(s_idx + 1) * GAP]
    # (2B, S, G) -> (2B*S, G) collapses leading dims only (layout preserving).
    x2_all = f3_scr[...].reshape(TWO_B * SEQ, GAP) + pe_ref[...]      # single PE add

    # ---- per-branch TransformerEncoderLayer (post-LN, relu) + mean pool ------
    ehd = GAP // N_HEAD
    for br in range(2):                              # static unroll (rna, atac)
        xb = x2_all[br * BS:(br + 1) * BS]           # (BS, G) f32
        # packed QKV; the Q-block score scale is pre-folded into the weights.
        qkv = (jnp.dot(_bf16(xb), e_wqkv_ref[br], preferred_element_type=jnp.float32)
               + e_bqkv_ref[br])                     # (BS, 3G)
        q3 = _bf16(qkv[:, :GAP].reshape(BATCH, SEQ, GAP))
        k3 = _bf16(qkv[:, GAP:2 * GAP].reshape(BATCH, SEQ, GAP))
        v3 = _bf16(qkv[:, 2 * GAP:].reshape(BATCH, SEQ, GAP))
        for h in range(N_HEAD):                      # static unroll (2 heads)
            sl = slice(h * ehd, (h + 1) * ehd)
            sc = jnp.einsum('bsd,btd->bst', q3[..., sl], k3[..., sl],
                            preferred_element_type=jnp.float32)
            p = _softmax(sc)
            ctx = jnp.einsum('bst,btd->bsd', _bf16(p), v3[..., sl],
                             preferred_element_type=jnp.float32)
            ectx_scr[:, sl] = _bf16(ctx.reshape(BS, ehd))
        att2 = (jnp.dot(ectx_scr[...], e_wo_ref[br], preferred_element_type=jnp.float32)
                + e_bo_ref[br])                      # one out-proj GEMM per branch
        y = _layer_norm(xb + att2, e_ln1g_ref[br], e_ln1b_ref[br])    # norm1
        ff = jnp.maximum(jnp.dot(_bf16(y), e_w1_ref[br],
                                 preferred_element_type=jnp.float32) + e_b1_ref[br], 0.0)
        ff = (jnp.dot(_bf16(ff), e_w2_ref[br], preferred_element_type=jnp.float32)
              + e_b2_ref[br])
        z = _layer_norm(y + ff, e_ln2g_ref[br], e_ln2b_ref[br])       # norm2
        feat_scr[br * BATCH:(br + 1) * BATCH, :] = jnp.mean(
            z.reshape(BATCH, SEQ, GAP), axis=1)      # mean over sequence

    # ---- shared prediction head on the stacked (2B, G) features -------------
    m = feat_scr[...]
    h1 = jnp.maximum(jnp.dot(_bf16(m), p_w1_ref[...],
                             preferred_element_type=jnp.float32) + p_b1_ref[...], 0.0)
    out_ref[...] = (jnp.dot(_bf16(h1), p_w2_ref[...],
                            preferred_element_type=jnp.float32) + p_b2_ref[...])


# ----------------------------- wrapper ---------------------------------------
def scmoanno_pretrain(x_rna, x_atac, params, pe):
    """Fused forward.  `params` are the f32 reference parameters; attention score
    scales are folded into the Q projections and matmul weights are cast to bf16
    here (biases / LayerNorm params stay f32)."""
    B, D_ = x_rna.shape
    c, e, pr = params["cross"], params["enc"], params["pred"]
    bf = jnp.bfloat16

    q_scale = 1.0 / math.sqrt(D_ // MIX_HEADS)        # exact power of two
    eq_scale = 1.0 / math.sqrt(GAP // N_HEAD)         # exact power of two

    cross_w = ((c["wq"] * q_scale).astype(bf), c["bq"] * q_scale,
               c["wkv"].astype(bf), c["bkv"],
               c["wo"].astype(bf), c["bo"])
    enc_w = (e["wqkv"].at[:, :, :GAP].multiply(eq_scale).astype(bf),
             e["bqkv"].at[:, :, :GAP].multiply(eq_scale),
             e["wo"].astype(bf), e["bo"],
             e["ln1_g"], e["ln1_b"],
             e["w1"].astype(bf), e["b1"],
             e["w2"].astype(bf), e["b2"],
             e["ln2_g"], e["ln2_b"])
    pred_w = (pr["w1"].astype(bf), pr["b1"], pr["w2"].astype(bf), pr["b2"])

    x_all = jnp.concatenate([x_rna, x_atac], axis=0)          # (2B, D) f32
    pe_tiled = jnp.tile(pe, (2 * B, 1))                       # (2B*S, G) f32

    args = (x_all, pe_tiled) + cross_w + enc_w + pred_w
    vmem = pl.BlockSpec(memory_space=pltpu.MemorySpace.VMEM)

    # advisory cost estimate (single step; every operand is touched exactly once)
    flops = int(
        2 * TWO_B * D_ * D_ + 2 * TWO_B * D_ * (2 * D_) + 2 * TWO_B * D_ * D_
        + MIX_HEADS * 4 * TWO_B * TWO_B * (D_ // MIX_HEADS)
        + 2 * (2 * BS * GAP * 3 * GAP
               + N_HEAD * 4 * BATCH * SEQ * SEQ * (GAP // N_HEAD)
               + 2 * BS * GAP * GAP
               + 4 * BS * GAP * DIM_FF)
        + 2 * TWO_B * GAP * GAP + 2 * TWO_B * GAP * NUM_CLASSES)
    transcendentals = int(MIX_HEADS * TWO_B * TWO_B + 2 * N_HEAD * BATCH * SEQ * SEQ)
    bytes_accessed = int(sum(int(np.prod(a.shape)) * a.dtype.itemsize for a in args)
                         + TWO_B * NUM_CLASSES * 4)

    out = pl.pallas_call(
        _fused_kernel,
        out_shape=jax.ShapeDtypeStruct((TWO_B, NUM_CLASSES), jnp.float32),
        in_specs=[vmem] * len(args),
        out_specs=vmem,
        scratch_shapes=[
            pltpu.VMEM((TWO_B, D_), jnp.bfloat16),        # cross-attn per-head contexts
            pltpu.VMEM((TWO_B, SEQ, GAP), jnp.float32),   # (2B, D) -> (2B, S, G) re-layout
            pltpu.VMEM((BS, GAP), jnp.bfloat16),          # encoder per-head contexts
            pltpu.VMEM((TWO_B, GAP), jnp.float32),        # mean-pooled features
        ],
        cost_estimate=pl.CostEstimate(flops=flops, transcendentals=transcendentals,
                                      bytes_accessed=bytes_accessed),
    )(*args)
    return out[:B], out[B:]


# ----------------------------- parameters / PE --------------------------------
def positional_encoding(seq_len, d_model):
    pos = np.arange(seq_len, dtype=np.float32)[:, None]
    div = np.exp(np.arange(0, d_model, 2, dtype=np.float32) * (-math.log(10000.0) / d_model))
    pe = np.zeros((seq_len, d_model), dtype=np.float32)
    pe[:, 0::2] = np.sin(pos * div)
    pe[:, 1::2] = np.cos(pos * div)
    return jnp.asarray(pe)                                           # (S, d_model)


def init_params(key):
    keys = iter(jax.random.split(key, 32))

    def w(shape, scale=0.05):
        return scale * jax.random.normal(next(keys), shape, dtype=jnp.float32)

    Dm, G = INPUT_RNA, GAP
    cross = dict(wq=w((Dm, Dm)), bq=w((1, Dm)),
                 wkv=w((Dm, 2 * Dm)), bkv=w((1, 2 * Dm)),            # packed K/V projection
                 wo=w((Dm, Dm)), bo=w((1, Dm)))
    # encoder params stacked over the {rna, atac} branch axis (leading dim 2)
    enc = dict(wqkv=w((2, G, 3 * G)), bqkv=w((2, 1, 3 * G)),         # packed Q/K/V
               wo=w((2, G, G)), bo=w((2, 1, G)),
               ln1_g=jnp.ones((2, 1, G), jnp.float32), ln1_b=jnp.zeros((2, 1, G), jnp.float32),
               w1=w((2, G, DIM_FF)), b1=w((2, 1, DIM_FF)),
               w2=w((2, DIM_FF, G)), b2=w((2, 1, G)),
               ln2_g=jnp.ones((2, 1, G), jnp.float32), ln2_b=jnp.zeros((2, 1, G), jnp.float32))
    pred = dict(w1=w((G, G)), b1=w((1, G)),
                w2=w((G, NUM_CLASSES)), b2=w((1, NUM_CLASSES)))
    return dict(cross=cross, enc=enc, pred=pred)


# ----------------------------- pure-JAX reference -----------------------------
def _reference_forward(x_rna, x_atac, params, pe):
    c, e, pr = params["cross"], params["enc"], params["pred"]

    def layer_norm(x, g, b):
        mu = x.mean(-1, keepdims=True)
        var = ((x - mu) ** 2).mean(-1, keepdims=True)
        return (x - mu) / jnp.sqrt(var + LN_EPS) * g + b

    def cross_mha(xq, xkv):
        E = xq.shape[1]
        hd = E // MIX_HEADS
        q = xq @ c["wq"] + c["bq"]
        kv = xkv @ c["wkv"] + c["bkv"]
        k, v = kv[:, :E], kv[:, E:]
        heads = []
        for h in range(MIX_HEADS):
            sl = slice(h * hd, (h + 1) * hd)
            s = (q[:, sl] @ k[:, sl].T) / math.sqrt(hd)
            heads.append(jax.nn.softmax(s, axis=-1) @ v[:, sl])
        return jnp.concatenate(heads, axis=-1) @ c["wo"] + c["bo"]

    def encode_and_predict(f_flat, idx):
        B = f_flat.shape[0]
        x3 = f_flat.reshape(B, SEQ, GAP) + pe[None]
        hd = GAP // N_HEAD
        means = []
        for b in range(B):
            xb = x3[b]
            qkv = xb @ e["wqkv"][idx] + e["bqkv"][idx]
            q, k, v = qkv[:, :GAP], qkv[:, GAP:2 * GAP], qkv[:, 2 * GAP:]
            heads = []
            for h in range(N_HEAD):
                sl = slice(h * hd, (h + 1) * hd)
                s = (q[:, sl] @ k[:, sl].T) / math.sqrt(hd)
                heads.append(jax.nn.softmax(s, axis=-1) @ v[:, sl])
            att = jnp.concatenate(heads, axis=-1) @ e["wo"][idx] + e["bo"][idx]
            y = layer_norm(xb + att, e["ln1_g"][idx], e["ln1_b"][idx])
            ff = jax.nn.relu(y @ e["w1"][idx] + e["b1"][idx]) @ e["w2"][idx] + e["b2"][idx]
            z = layer_norm(y + ff, e["ln2_g"][idx], e["ln2_b"][idx])
            means.append(z.mean(axis=0))
        m = jnp.stack(means, axis=0)
        return jax.nn.relu(m @ pr["w1"] + pr["b1"]) @ pr["w2"] + pr["b2"]

    f_rna = 0.5 * x_rna + 0.5 * cross_mha(x_rna, x_atac)
    f_atac = 0.5 * x_atac + 0.5 * cross_mha(x_atac, x_rna)
    return encode_and_predict(f_rna, 0), encode_and_predict(f_atac, 1)


# ----------------------------- main -------------------------------------------
if __name__ == "__main__":
    key = jax.random.PRNGKey(0)
    k_p, k_rna, k_atac = jax.random.split(key, 3)
    params = init_params(k_p)
    x_rna = jax.random.normal(k_rna, (BATCH, INPUT_RNA), dtype=jnp.float32)
    x_atac = jax.random.normal(k_atac, (BATCH, INPUT_ATAC), dtype=jnp.float32)
    pe = positional_encoding(SEQ, GAP)

    fwd = jax.jit(scmoanno_pretrain)
    pred_rna, pred_atac = fwd(x_rna, x_atac, params, pe)
    jax.block_until_ready((pred_rna, pred_atac))
    assert pred_rna.shape == (BATCH, NUM_CLASSES)
    assert pred_atac.shape == (BATCH, NUM_CLASSES)

    ref_rna, ref_atac = _reference_forward(x_rna, x_atac, params, pe)
    np.testing.assert_allclose(np.asarray(pred_rna), np.asarray(ref_rna), rtol=5e-2, atol=5e-2)
    np.testing.assert_allclose(np.asarray(pred_atac), np.asarray(ref_atac), rtol=5e-2, atol=5e-2)
    print("KERNEL_OK")
</pallas_src>

<mosaic_0001>
module attributes {stable_mosaic.version = 11 : i64} {
  func.func @_fused_kernel(%arg0: memref<8x256xf32, #tpu.memory_space<vmem>>, %arg1: memref<64x32xf32, #tpu.memory_space<vmem>>, %arg2: memref<256x256xbf16, #tpu.memory_space<vmem>>, %arg3: memref<1x256xf32, #tpu.memory_space<vmem>>, %arg4: memref<256x512xbf16, #tpu.memory_space<vmem>>, %arg5: memref<1x512xf32, #tpu.memory_space<vmem>>, %arg6: memref<256x256xbf16, #tpu.memory_space<vmem>>, %arg7: memref<1x256xf32, #tpu.memory_space<vmem>>, %arg8: memref<2x32x96xbf16, #tpu.memory_space<vmem>>, %arg9: memref<2x1x96xf32, #tpu.memory_space<vmem>>, %arg10: memref<2x32x32xbf16, #tpu.memory_space<vmem>>, %arg11: memref<2x1x32xf32, #tpu.memory_space<vmem>>, %arg12: memref<2x1x32xf32, #tpu.memory_space<vmem>>, %arg13: memref<2x1x32xf32, #tpu.memory_space<vmem>>, %arg14: memref<2x32x1024xbf16, #tpu.memory_space<vmem>>, %arg15: memref<2x1x1024xf32, #tpu.memory_space<vmem>>, %arg16: memref<2x1024x32xbf16, #tpu.memory_space<vmem>>, %arg17: memref<2x1x32xf32, #tpu.memory_space<vmem>>, %arg18: memref<2x1x32xf32, #tpu.memory_space<vmem>>, %arg19: memref<2x1x32xf32, #tpu.memory_space<vmem>>, %arg20: memref<32x32xbf16, #tpu.memory_space<vmem>>, %arg21: memref<1x32xf32, #tpu.memory_space<vmem>>, %arg22: memref<32x10xbf16, #tpu.memory_space<vmem>>, %arg23: memref<1x10xf32, #tpu.memory_space<vmem>>, %arg24: memref<8x10xf32, #tpu.memory_space<vmem>>, %arg25: memref<8x256xbf16, #tpu.memory_space<vmem>>, %arg26: memref<8x8x32xf32, #tpu.memory_space<vmem>>, %arg27: memref<32x32xbf16, #tpu.memory_space<vmem>>, %arg28: memref<8x32xf32, #tpu.memory_space<vmem>>) attributes {dimension_semantics = [], scalar_prefetch = 0 : i64, scratch_operands = 4 : i64, tpu.core_type = #tpu.core_type<tc>} {
    %c0 = arith.constant 0 : index
    %c0_0 = arith.constant 0 : index
    %0 = vector.load %arg0[%c0, %c0_0] : memref<8x256xf32, #tpu.memory_space<vmem>>, vector<8x256xf32>
    %1 = arith.truncf %0 : vector<8x256xf32> to vector<8x256xbf16>
    %c0_1 = arith.constant 0 : index
    %c0_2 = arith.constant 0 : index
    %2 = vector.load %arg2[%c0_1, %c0_2] : memref<256x256xbf16, #tpu.memory_space<vmem>>, vector<256x256xbf16>
    %cst = arith.constant dense<0.000000e+00> : vector<8x256xf32>
    %3 = tpu.matmul %1, %2, %cst {dimension_numbers = #tpu.dot_dimension_numbers<[1], [0], [0], [1], [0, 0, 1, 1], [], []>} : vector<8x256xbf16>, vector<256x256xbf16>, vector<8x256xf32> -> vector<8x256xf32>
    %c0_3 = arith.constant 0 : index
    %c0_4 = arith.constant 0 : index
    %4 = vector.load %arg3[%c0_3, %c0_4] : memref<1x256xf32, #tpu.memory_space<vmem>>, vector<1x256xf32>
    %5 = vector.broadcast %4 : vector<1x256xf32> to vector<8x256xf32>
    %6 = arith.addf %3, %5 : vector<8x256xf32>
    %7 = arith.truncf %6 : vector<8x256xf32> to vector<8x256xbf16>
    %c0_5 = arith.constant 0 : index
    %c0_6 = arith.constant 0 : index
    %8 = vector.load %arg4[%c0_5, %c0_6] : memref<256x512xbf16, #tpu.memory_space<vmem>>, vector<256x512xbf16>
    %cst_7 = arith.constant dense<0.000000e+00> : vector<8x512xf32>
    %9 = tpu.matmul %1, %8, %cst_7 {dimension_numbers = #tpu.dot_dimension_numbers<[1], [0], [0], [1], [0, 0, 1, 1], [], []>} : vector<8x256xbf16>, vector<256x512xbf16>, vector<8x512xf32> -> vector<8x512xf32>
    %c0_8 = arith.constant 0 : index
    %c0_9 = arith.constant 0 : index
    %10 = vector.load %arg5[%c0_8, %c0_9] : memref<1x512xf32, #tpu.memory_space<vmem>>, vector<1x512xf32>
    %11 = vector.broadcast %10 : vector<1x512xf32> to vector<8x512xf32>
    %12 = arith.addf %9, %11 : vector<8x512xf32>
    %13 = vector.extract_strided_slice %12 {offsets = [0, 0], sizes = [8, 256], strides = [1, 1]} : vector<8x512xf32> to vector<8x256xf32>
    %14 = arith.truncf %13 : vector<8x256xf32> to vector<8x256xbf16>
    %15 = vector.extract_strided_slice %12 {offsets = [0, 256], sizes = [8, 256], strides = [1, 1]} : vector<8x512xf32> to vector<8x256xf32>
    %16 = arith.truncf %15 : vector<8x256xf32> to vector<8x256xbf16>
    %17 = tpu.iota {dimensions = array<i32: 0>} : vector<8x8xi32>
    %c4_i32 = arith.constant 4 : i32
    %18 = vector.broadcast %c4_i32 : i32 to vector<8x8xi32>
    %19 = arith.cmpi sge, %17, %18 : vector<8x8xi32>
    %20 = tpu.iota {dimensions = array<i32: 1>} : vector<8x8xi32>
    %c4_i32_10 = arith.constant 4 : i32
    %21 = vector.broadcast %c4_i32_10 : i32 to vector<8x8xi32>
    %22 = arith.cmpi sge, %20, %21 : vector<8x8xi32>
    %23 = arith.xori %19, %22 : vector<8x8xi1>
    %24 = vector.extract_strided_slice %7 {offsets = [0, 0], sizes = [8, 64], strides = [1, 1]} : vector<8x256xbf16> to vector<8x64xbf16>
    %25 = vector.extract_strided_slice %14 {offsets = [0, 0], sizes = [8, 64], strides = [1, 1]} : vector<8x256xbf16> to vector<8x64xbf16>
    %cst_11 = arith.constant dense<0.000000e+00> : vector<8x8xf32>
    %26 = tpu.matmul %24, %25, %cst_11 {dimension_numbers = #tpu.dot_dimension_numbers<[1], [1], [0], [0], [0, 0, 1, 0], [], []>} : vector<8x64xbf16>, vector<8x64xbf16>, vector<8x8xf32> -> vector<8x8xf32>
    %cst_12 = arith.constant -1.000000e+30 : f32
    %27 = vector.broadcast %cst_12 : f32 to vector<8x8xf32>
    %28 = arith.select %23, %26, %27 : vector<8x8xi1>, vector<8x8xf32>
    %cst_13 = arith.constant dense<0xFF800000> : vector<8xf32>
    %29 = vector.multi_reduction <maximumf>, %28, %cst_13 [1] : vector<8x8xf32> to vector<8xf32>
    %30 = vector.shape_cast %29 : vector<8xf32> to vector<8x1xf32>
    %31 = vector.broadcast %30 : vector<8x1xf32> to vector<8x8xf32>
    %32 = arith.subf %28, %31 : vector<8x8xf32>
    %33 = math.exp %32 : vector<8x8xf32>
    %cst_14 = arith.constant dense<0.000000e+00> : vector<8xf32>
    %34 = vector.multi_reduction <add>, %33, %cst_14 [1] : vector<8x8xf32> to vector<8xf32>
    %35 = vector.shape_cast %34 : vector<8xf32> to vector<8x1xf32>
    %36 = tpu.reciprocal %35 {approx = true} : vector<8x1xf32> -> vector<8x1xf32>
    %37 = vector.broadcast %36 : vector<8x1xf32> to vector<8x8xf32>
    %38 = arith.mulf %33, %37 : vector<8x8xf32>
    %39 = arith.truncf %38 : vector<8x8xf32> to vector<8x8xbf16>
    %40 = vector.extract_strided_slice %16 {offsets = [0, 0], sizes = [8, 64], strides = [1, 1]} : vector<8x256xbf16> to vector<8x64xbf16>
    %cst_15 = arith.constant dense<0.000000e+00> : vector<8x64xf32>
    %41 = tpu.matmul %39, %40, %cst_15 {dimension_numbers = #tpu.dot_dimension_numbers<[1], [0], [0], [1], [0, 0, 1, 1], [], []>} : vector<8x8xbf16>, vector<8x64xbf16>, vector<8x64xf32> -> vector<8x64xf32>
    %42 = arith.truncf %41 : vector<8x64xf32> to vector<8x64xbf16>
    %c0_16 = arith.constant 0 : index
    %c0_17 = arith.constant 0 : index
    %43 = vector.load %arg25[%c0_16, %c0_17] : memref<8x256xbf16, #tpu.memory_space<vmem>>, vector<8x64xbf16>
    tpu.vector_store %arg25[%c0_16, %c0_17], %42 {strides = array<i32>} : memref<8x256xbf16, #tpu.memory_space<vmem>>, vector<8x64xbf16>,
    %44 = vector.extract_strided_slice %7 {offsets = [0, 64], sizes = [8, 64], strides = [1, 1]} : vector<8x256xbf16> to vector<8x64xbf16>
    %45 = vector.extract_strided_slice %14 {offsets = [0, 64], sizes = [8, 64], strides = [1, 1]} : vector<8x256xbf16> to vector<8x64xbf16>
    %cst_18 = arith.constant dense<0.000000e+00> : vector<8x8xf32>
    %46 = tpu.matmul %44, %45, %cst_18 {dimension_numbers = #tpu.dot_dimension_numbers<[1], [1], [0], [0], [0, 0, 1, 0], [], []>} : vector<8x64xbf16>, vector<8x64xbf16>, vector<8x8xf32> -> vector<8x8xf32>
    %cst_19 = arith.constant -1.000000e+30 : f32
    %47 = vector.broadcast %cst_19 : f32 to vector<8x8xf32>
    %48 = arith.select %23, %46, %47 : vector<8x8xi1>, vector<8x8xf32>
    %cst_20 = arith.constant dense<0xFF800000> : vector<8xf32>
    %49 = vector.multi_reduction <maximumf>, %48, %cst_20 [1] : vector<8x8xf32> to vector<8xf32>
    %50 = vector.shape_cast %49 : vector<8xf32> to vector<8x1xf32>
    %51 = vector.broadcast %50 : vector<8x1xf32> to vector<8x8xf32>
    %52 = arith.subf %48, %51 : vector<8x8xf32>
    %53 = math.exp %52 : vector<8x8xf32>
    %cst_21 = arith.constant dense<0.000000e+00> : vector<8xf32>
    %54 = vector.multi_reduction <add>, %53, %cst_21 [1] : vector<8x8xf32> to vector<8xf32>
    %55 = vector.shape_cast %54 : vector<8xf32> to vector<8x1xf32>
    %56 = tpu.reciprocal %55 {approx = true} : vector<8x1xf32> -> vector<8x1xf32>
    %57 = vector.broadcast %56 : vector<8x1xf32> to vector<8x8xf32>
    %58 = arith.mulf %53, %57 : vector<8x8xf32>
    %59 = arith.truncf %58 : vector<8x8xf32> to vector<8x8xbf16>
    %60 = vector.extract_strided_slice %16 {offsets = [0, 64], sizes = [8, 64], strides = [1, 1]} : vector<8x256xbf16> to vector<8x64xbf16>
    %cst_22 = arith.constant dense<0.000000e+00> : vector<8x64xf32>
    %61 = tpu.matmul %59, %60, %cst_22 {dimension_numbers = #tpu.dot_dimension_numbers<[1], [0], [0], [1], [0, 0, 1, 1], [], []>} : vector<8x8xbf16>, vector<8x64xbf16>, vector<8x64xf32> -> vector<8x64xf32>
    %62 = arith.truncf %61 : vector<8x64xf32> to vector<8x64xbf16>
    %c0_23 = arith.constant 0 : index
    %c64 = arith.constant 64 : index
    %63 = vector.load %arg25[%c0_23, %c64] : memref<8x256xbf16, #tpu.memory_space<vmem>>, vector<8x64xbf16>
    tpu.vector_store %arg25[%c0_23, %c64], %62 {strides = array<i32>} : memref<8x256xbf16, #tpu.memory_space<vmem>>, vector<8x64xbf16>,
    %64 = vector.extract_strided_slice %7 {offsets = [0, 128], sizes = [8, 64], strides = [1, 1]} : vector<8x256xbf16> to vector<8x64xbf16>
    %65 = vector.extract_strided_slice %14 {offsets = [0, 128], sizes = [8, 64], strides = [1, 1]} : vector<8x256xbf16> to vector<8x64xbf16>
    %cst_24 = arith.constant dense<0.000000e+00> : vector<8x8xf32>
    %66 = tpu.matmul %64, %65, %cst_24 {dimension_numbers = #tpu.dot_dimension_numbers<[1], [1], [0], [0], [0, 0, 1, 0], [], []>} : vector<8x64xbf16>, vector<8x64xbf16>, vector<8x8xf32> -> vector<8x8xf32>
    %cst_25 = arith.constant -1.000000e+30 : f32
    %67 = vector.broadcast %cst_25 : f32 to vector<8x8xf32>
    %68 = arith.select %23, %66, %67 : vector<8x8xi1>, vector<8x8xf32>
    %cst_26 = arith.constant dense<0xFF800000> : vector<8xf32>
    %69 = vector.multi_reduction <maximumf>, %68, %cst_26 [1] : vector<8x8xf32> to vector<8xf32>
    %70 = vector.shape_cast %69 : vector<8xf32> to vector<8x1xf32>
    %71 = vector.broadcast %70 : vector<8x1xf32> to vector<8x8xf32>
    %72 = arith.subf %68, %71 : vector<8x8xf32>
    %73 = math.exp %72 : vector<8x8xf32>
    %cst_27 = arith.constant dense<0.000000e+00> : vector<8xf32>
    %74 = vector.multi_reduction <add>, %73, %cst_27 [1] : vector<8x8xf32> to vector<8xf32>
    %75 = vector.shape_cast %74 : vector<8xf32> to vector<8x1xf32>
    %76 = tpu.reciprocal %75 {approx = true} : vector<8x1xf32> -> vector<8x1xf32>
    %77 = vector.broadcast %76 : vector<8x1xf32> to vector<8x8xf32>
    %78 = arith.mulf %73, %77 : vector<8x8xf32>
    %79 = arith.truncf %78 : vector<8x8xf32> to vector<8x8xbf16>
    %80 = vector.extract_strided_slice %16 {offsets = [0, 128], sizes = [8, 64], strides = [1, 1]} : vector<8x256xbf16> to vector<8x64xbf16>
    %cst_28 = arith.constant dense<0.000000e+00> : vector<8x64xf32>
    %81 = tpu.matmul %79, %80, %cst_28 {dimension_numbers = #tpu.dot_dimension_numbers<[1], [0], [0], [1], [0, 0, 1, 1], [], []>} : vector<8x8xbf16>, vector<8x64xbf16>, vector<8x64xf32> -> vector<8x64xf32>
    %82 = arith.truncf %81 : vector<8x64xf32> to vector<8x64xbf16>
    %c0_29 = arith.constant 0 : index
    %c128 = arith.constant 128 : index
    %83 = vector.load %arg25[%c0_29, %c128] : memref<8x256xbf16, #tpu.memory_space<vmem>>, vector<8x64xbf16>
    tpu.vector_store %arg25[%c0_29, %c128], %82 {strides = array<i32>} : memref<8x256xbf16, #tpu.memory_space<vmem>>, vector<8x64xbf16>,
    %84 = vector.extract_strided_slice %7 {offsets = [0, 192], sizes = [8, 64], strides = [1, 1]} : vector<8x256xbf16> to vector<8x64xbf16>
    %85 = vector.extract_strided_slice %14 {offsets = [0, 192], sizes = [8, 64], strides = [1, 1]} : vector<8x256xbf16> to vector<8x64xbf16>
    %cst_30 = arith.constant dense<0.000000e+00> : vector<8x8xf32>
    %86 = tpu.matmul %84, %85, %cst_30 {dimension_numbers = #tpu.dot_dimension_numbers<[1], [1], [0], [0], [0, 0, 1, 0], [], []>} : vector<8x64xbf16>, vector<8x64xbf16>, vector<8x8xf32> -> vector<8x8xf32>
    %cst_31 = arith.constant -1.000000e+30 : f32
    %87 = vector.broadcast %cst_31 : f32 to vector<8x8xf32>
    %88 = arith.select %23, %86, %87 : vector<8x8xi1>, vector<8x8xf32>
    %cst_32 = arith.constant dense<0xFF800000> : vector<8xf32>
    %89 = vector.multi_reduction <maximumf>, %88, %cst_32 [1] : vector<8x8xf32> to vector<8xf32>
    %90 = vector.shape_cast %89 : vector<8xf32> to vector<8x1xf32>
    %91 = vector.broadcast %90 : vector<8x1xf32> to vector<8x8xf32>
    %92 = arith.subf %88, %91 : vector<8x8xf32>
    %93 = math.exp %92 : vector<8x8xf32>
    %cst_33 = arith.constant dense<0.000000e+00> : vector<8xf32>
    %94 = vector.multi_reduction <add>, %93, %cst_33 [1] : vector<8x8xf32> to vector<8xf32>
    %95 = vector.shape_cast %94 : vector<8xf32> to vector<8x1xf32>
    %96 = tpu.reciprocal %95 {approx = true} : vector<8x1xf32> -> vector<8x1xf32>
    %97 = vector.broadcast %96 : vector<8x1xf32> to vector<8x8xf32>
    %98 = arith.mulf %93, %97 : vector<8x8xf32>
    %99 = arith.truncf %98 : vector<8x8xf32> to vector<8x8xbf16>
    %100 = vector.extract_strided_slice %16 {offsets = [0, 192], sizes = [8, 64], strides = [1, 1]} : vector<8x256xbf16> to vector<8x64xbf16>
    %cst_34 = arith.constant dense<0.000000e+00> : vector<8x64xf32>
    %101 = tpu.matmul %99, %100, %cst_34 {dimension_numbers = #tpu.dot_dimension_numbers<[1], [0], [0], [1], [0, 0, 1, 1], [], []>} : vector<8x8xbf16>, vector<8x64xbf16>, vector<8x64xf32> -> vector<8x64xf32>
    %102 = arith.truncf %101 : vector<8x64xf32> to vector<8x64xbf16>
    %c0_35 = arith.constant 0 : index
    %c192 = arith.constant 192 : index
    %103 = vector.load %arg25[%c0_35, %c192] : memref<8x256xbf16, #tpu.memory_space<vmem>>, vector<8x64xbf16>
    tpu.vector_store %arg25[%c0_35, %c192], %102 {strides = array<i32>} : memref<8x256xbf16, #tpu.memory_space<vmem>>, vector<8x64xbf16>,
    %c0_36 = arith.constant 0 : index
    %c0_37 = arith.constant 0 : index
    %104 = vector.load %arg25[%c0_36, %c0_37] : memref<8x256xbf16, #tpu.memory_space<vmem>>, vector<8x256xbf16>
    %c0_38 = arith.constant 0 : index
    %c0_39 = arith.constant 0 : index
    %105 = vector.load %arg6[%c0_38, %c0_39] : memref<256x256xbf16, #tpu.memory_space<vmem>>, vector<256x256xbf16>
    %cst_40 = arith.constant dense<0.000000e+00> : vector<8x256xf32>
    %106 = tpu.matmul %104, %105, %cst_40 {dimension_numbers = #tpu.dot_dimension_numbers<[1], [0], [0], [1], [0, 0, 1, 1], [], []>} : vector<8x256xbf16>, vector<256x256xbf16>, vector<8x256xf32> -> vector<8x256xf32>
    %c0_41 = arith.constant 0 : index
    %c0_42 = arith.constant 0 : index
    %107 = vector.load %arg7[%c0_41, %c0_42] : memref<1x256xf32, #tpu.memory_space<vmem>>, vector<1x256xf32>
    %108 = vector.broadcast %107 : vector<1x256xf32> to vector<8x256xf32>
    %109 = arith.addf %106, %108 : vector<8x256xf32>
    %cst_43 = arith.constant 5.000000e-01 : f32
    %110 = vector.broadcast %cst_43 : f32 to vector<8x256xf32>
    %111 = arith.mulf %110, %0 : vector<8x256xf32>
    %cst_44 = arith.constant 5.000000e-01 : f32
    %112 = vector.broadcast %cst_44 : f32 to vector<8x256xf32>
    %113 = arith.mulf %112, %109 : vector<8x256xf32>
    %114 = arith.addf %111, %113 : vector<8x256xf32>
    %115 = vector.extract_strided_slice %114 {offsets = [0, 0], sizes = [8, 32], strides = [1, 1]} : vector<8x256xf32> to vector<8x32xf32>
    %c0_45 = arith.constant 0 : index
    %c0_46 = arith.constant 0 : index
    %c0_47 = arith.constant 0 : index
    %116 = vector.load %arg26[%c0_45, %c0_46, %c0_47] : memref<8x8x32xf32, #tpu.memory_space<vmem>>, vector<8x1x32xf32>
    %117 = vector.shape_cast %116 : vector<8x1x32xf32> to vector<8x32xf32>
    %118 = vector.shape_cast %115 : vector<8x32xf32> to vector<8x1x32xf32>
    tpu.vector_store %arg26[%c0_45, %c0_46, %c0_47], %118 {strides = array<i32>} : memref<8x8x32xf32, #tpu.memory_space<vmem>>, vector<8x1x32xf32>,
    %119 = vector.extract_strided_slice %114 {offsets = [0, 32], sizes = [8, 32], strides = [1, 1]} : vector<8x256xf32> to vector<8x32xf32>
    %c0_48 = arith.constant 0 : index
    %c1 = arith.constant 1 : index
    %c0_49 = arith.constant 0 : index
    %120 = vector.load %arg26[%c0_48, %c1, %c0_49] : memref<8x8x32xf32, #tpu.memory_space<vmem>>, vector<8x1x32xf32>
    %121 = vector.shape_cast %120 : vector<8x1x32xf32> to vector<8x32xf32>
    %122 = vector.shape_cast %119 : vector<8x32xf32> to vector<8x1x32xf32>
    tpu.vector_store %arg26[%c0_48, %c1, %c0_49], %122 {strides = array<i32>} : memref<8x8x32xf32, #tpu.memory_space<vmem>>, vector<8x1x32xf32>,
    %123 = vector.extract_strided_slice %114 {offsets = [0, 64], sizes = [8, 32], strides = [1, 1]} : vector<8x256xf32> to vector<8x32xf32>
    %c0_50 = arith.constant 0 : index
    %c2 = arith.constant 2 : index
    %c0_51 = arith.constant 0 : index
    %124 = vector.load %arg26[%c0_50, %c2, %c0_51] : memref<8x8x32xf32, #tpu.memory_space<vmem>>, vector<8x1x32xf32>
    %125 = vector.shape_cast %124 : vector<8x1x32xf32> to vector<8x32xf32>
    %126 = vector.shape_cast %123 : vector<8x32xf32> to vector<8x1x32xf32>
    tpu.vector_store %arg26[%c0_50, %c2, %c0_51], %126 {strides = array<i32>} : memref<8x8x32xf32, #tpu.memory_space<vmem>>, vector<8x1x32xf32>,
    %127 = vector.extract_strided_slice %114 {offsets = [0, 96], sizes = [8, 32], strides = [1, 1]} : vector<8x256xf32> to vector<8x32xf32>
    %c0_52 = arith.constant 0 : index
    %c3 = arith.constant 3 : index
    %c0_53 = arith.constant 0 : index
    %128 = vector.load %arg26[%c0_52, %c3, %c0_53] : memref<8x8x32xf32, #tpu.memory_space<vmem>>, vector<8x1x32xf32>
    %129 = vector.shape_cast %128 : vector<8x1x32xf32> to vector<8x32xf32>
    %130 = vector.shape_cast %127 : vector<8x32xf32> to vector<8x1x32xf32>
    tpu.vector_store %arg26[%c0_52, %c3, %c0_53], %130 {strides = array<i32>} : memref<8x8x32xf32, #tpu.memory_space<vmem>>, vector<8x1x32xf32>,
    %131 = vector.extract_strided_slice %114 {offsets = [0, 128], sizes = [8, 32], strides = [1, 1]} : vector<8x256xf32> to vector<8x32xf32>
    %c0_54 = arith.constant 0 : index
    %c4 = arith.constant 4 : index
    %c0_55 = arith.constant 0 : index
    %132 = vector.load %arg26[%c0_54, %c4, %c0_55] : memref<8x8x32xf32, #tpu.memory_space<vmem>>, vector<8x1x32xf32>
    %133 = vector.shape_cast %132 : vector<8x1x32xf32> to vector<8x32xf32>
    %134 = vector.shape_cast %131 : vector<8x32xf32> to vector<8x1x32xf32>
    tpu.vector_store %arg26[%c0_54, %c4, %c0_55], %134 {strides = array<i32>} : memref<8x8x32xf32, #tpu.memory_space<vmem>>, vector<8x1x32xf32>,
    %135 = vector.extract_strided_slice %114 {offsets = [0, 160], sizes = [8, 32], strides = [1, 1]} : vector<8x256xf32> to vector<8x32xf32>
    %c0_56 = arith.constant 0 : index
    %c5 = arith.constant 5 : index
    %c0_57 = arith.constant 0 : index
    %136 = vector.load %arg26[%c0_56, %c5, %c0_57] : memref<8x8x32xf32, #tpu.memory_space<vmem>>, vector<8x1x32xf32>
    %137 = vector.shape_cast %136 : vector<8x1x32xf32> to vector<8x32xf32>
    %138 = vector.shape_cast %135 : vector<8x32xf32> to vector<8x1x32xf32>
    tpu.vector_store %arg26[%c0_56, %c5, %c0_57], %138 {strides = array<i32>} : memref<8x8x32xf32, #tpu.memory_space<vmem>>, vector<8x1x32xf32>,
    %139 = vector.extract_strided_slice %114 {offsets = [0, 192], sizes = [8, 32], strides = [1, 1]} : vector<8x256xf32> to vector<8x32xf32>
    %c0_58 = arith.constant 0 : index
    %c6 = arith.constant 6 : index
    %c0_59 = arith.constant 0 : index
    %140 = vector.load %arg26[%c0_58, %c6, %c0_59] : memref<8x8x32xf32, #tpu.memory_space<vmem>>, vector<8x1x32xf32>
    %141 = vector.shape_cast %140 : vector<8x1x32xf32> to vector<8x32xf32>
    %142 = vector.shape_cast %139 : vector<8x32xf32> to vector<8x1x32xf32>
    tpu.vector_store %arg26[%c0_58, %c6, %c0_59], %142 {strides = array<i32>} : memref<8x8x32xf32, #tpu.memory_space<vmem>>, vector<8x1x32xf32>,
    %143 = vector.extract_strided_slice %114 {offsets = [0, 224], sizes = [8, 32], strides = [1, 1]} : vector<8x256xf32> to vector<8x32xf32>
    %c0_60 = arith.constant 0 : index
    %c7 = arith.constant 7 : index
    %c0_61 = arith.constant 0 : index
    %144 = vector.load %arg26[%c0_60, %c7, %c0_61] : memref<8x8x32xf32, #tpu.memory_space<vmem>>, vector<8x1x32xf32>
    %145 = vector.shape_cast %144 : vector<8x1x32xf32> to vector<8x32xf32>
    %146 = vector.shape_cast %143 : vector<8x32xf32> to vector<8x1x32xf32>
    tpu.vector_store %arg26[%c0_60, %c7, %c0_61], %146 {strides = array<i32>} : memref<8x8x32xf32, #tpu.memory_space<vmem>>, vector<8x1x32xf32>,
    %c0_62 = arith.constant 0 : index
    %c0_63 = arith.constant 0 : index
    %c0_64 = arith.constant 0 : index
    %147 = vector.load %arg26[%c0_62, %c0_63, %c0_64] : memref<8x8x32xf32, #tpu.memory_space<vmem>>, vector<8x8x32xf32>
    %148 = vector.shape_cast %147 : vector<8x8x32xf32> to vector<64x32xf32>
    %c0_65 = arith.constant 0 : index
    %c0_66 = arith.constant 0 : index
    %149 = vector.load %arg1[%c0_65, %c0_66] : memref<64x32xf32, #tpu.memory_space<vmem>>, vector<64x32xf32>
    %150 = arith.addf %148, %149 : vector<64x32xf32>
    %151 = vector.extract_strided_slice %150 {offsets = [0, 0], sizes = [32, 32], strides = [1, 1]} : vector<64x32xf32> to vector<32x32xf32>
    %152 = arith.truncf %151 : vector<32x32xf32> to vector<32x32xbf16>
    %c0_67 = arith.constant 0 : index
    %c0_68 = arith.constant 0 : index
    %c0_69 = arith.constant 0 : index
    %153 = vector.load %arg8[%c0_67, %c0_68, %c0_69] : memref<2x32x96xbf16, #tpu.memory_space<vmem>>, vector<1x32x96xbf16>
    %154 = vector.shape_cast %153 : vector<1x32x96xbf16> to vector<32x96xbf16>
    %cst_70 = arith.constant dense<0.000000e+00> : vector<32x96xf32>
    %155 = tpu.matmul %152, %154, %cst_70 {dimension_numbers = #tpu.dot_dimension_numbers<[1], [0], [0], [1], [0, 0, 1, 1], [], []>} : vector<32x32xbf16>, vector<32x96xbf16>, vector<32x96xf32> -> vector<32x96xf32>
    %c0_71 = arith.constant 0 : index
    %c0_72 = arith.constant 0 : index
    %c0_73 = arith.constant 0 : index
    %156 = vector.load %arg9[%c0_71, %c0_72, %c0_73] : memref<2x1x96xf32, #tpu.memory_space<vmem>>, vector<1x1x96xf32>
    %157 = vector.shape_cast %156 : vector<1x1x96xf32> to vector<1x96xf32>
    %158 = vector.broadcast %157 : vector<1x96xf32> to vector<32x96xf32>
    %159 = arith.addf %155, %158 : vector<32x96xf32>
    %160 = vector.extract_strided_slice %159 {offsets = [0, 0], sizes = [32, 32], strides = [1, 1]} : vector<32x96xf32> to vector<32x32xf32>
    %161 = vector.shape_cast %160 : vector<32x32xf32> to vector<4x8x32xf32>
    %162 = arith.truncf %161 : vector<4x8x32xf32> to vector<4x8x32xbf16>
    %163 = vector.extract_strided_slice %159 {offsets = [0, 32], sizes = [32, 32], strides = [1, 1]} : vector<32x96xf32> to vector<32x32xf32>
    %164 = vector.shape_cast %163 : vector<32x32xf32> to vector<4x8x32xf32>
    %165 = arith.truncf %164 : vector<4x8x32xf32> to vector<4x8x32xbf16>
    %166 = vector.extract_strided_slice %159 {offsets = [0, 64], sizes = [32, 32], strides = [1, 1]} : vector<32x96xf32> to vector<32x32xf32>
    %167 = vector.shape_cast %166 : vector<32x32xf32> to vector<4x8x32xf32>
    %168 = arith.truncf %167 : vector<4x8x32xf32> to vector<4x8x32xbf16>
    %169 = vector.extract_strided_slice %162 {offsets = [0, 0, 0], sizes = [4, 8, 16], strides = [1, 1, 1]} : vector<4x8x32xbf16> to vector<4x8x16xbf16>
    %170 = vector.extract_strided_slice %165 {offsets = [0, 0, 0], sizes = [4, 8, 16], strides = [1, 1, 1]} : vector<4x8x32xbf16> to vector<4x8x16xbf16>
    "tpu.trace_start"() <{level = 10 : i32, message = "bsd,btd->bst"}> : () -> ()
    %cst_74 = arith.constant dense<0.000000e+00> : vector<4x8x8xf32>
    %171 = tpu.matmul %169, %170, %cst_74 {dimension_numbers = #tpu.dot_dimension_numbers<[2], [2], [1], [1], [0, 0, 0, 1, 1, 1], [0], [0]>} : vector<4x8x16xbf16>, vector<4x8x16xbf16>, vector<4x8x8xf32> -> vector<4x8x8xf32>
    "tpu.trace_stop"() : () -> ()
    %cst_75 = arith.constant dense<0xFF800000> : vector<4x8xf32>
    %172 = vector.multi_reduction <maximumf>, %171, %cst_75 [2] : vector<4x8x8xf32> to vector<4x8xf32>
    %173 = vector.shape_cast %172 : vector<4x8xf32> to vector<4x8x1xf32>
    %174 = vector.broadcast %173 : vector<4x8x1xf32> to vector<4x8x8xf32>
    %175 = arith.subf %171, %174 : vector<4x8x8xf32>
    %176 = math.exp %175 : vector<4x8x8xf32>
    %cst_76 = arith.constant dense<0.000000e+00> : vector<4x8xf32>
    %177 = vector.multi_reduction <add>, %176, %cst_76 [2] : vector<4x8x8xf32> to vector<4x8xf32>
    %178 = vector.shape_cast %177 : vector<4x8xf32> to vector<4x8x1xf32>
    %179 = tpu.reciprocal %178 {approx = true} : vector<4x8x1xf32> -> vector<4x8x1xf32>
    %180 = vector.broadcast %179 : vector<4x8x1xf32> to vector<4x8x8xf32>
    %181 = arith.mulf %176, %180 : vector<4x8x8xf32>
    %182 = arith.truncf %181 : vector<4x8x8xf32> to vector<4x8x8xbf16>
    %183 = vector.extract_strided_slice %168 {offsets = [0, 0, 0], sizes = [4, 8, 16], strides = [1, 1, 1]} : vector<4x8x32xbf16> to vector<4x8x16xbf16>
    "tpu.trace_start"() <{level = 10 : i32, message = "bst,btd->bsd"}> : () -> ()
    %cst_77 = arith.constant dense<0.000000e+00> : vector<4x8x16xf32>
    %184 = tpu.matmul %182, %183, %cst_77 {dimension_numbers = #tpu.dot_dimension_numbers<[2], [1], [1], [2], [0, 0, 0, 1, 1, 2], [0], [0]>} : vector<4x8x8xbf16>, vector<4x8x16xbf16>, vector<4x8x16xf32> -> vector<4x8x16xf32>
    "tpu.trace_stop"() : () -> ()
    %185 = vector.shape_cast %184 : vector<4x8x16xf32> to vector<32x16xf32>
    %186 = arith.truncf %185 : vector<32x16xf32> to vector<32x16xbf16>
    %c0_78 = arith.constant 0 : index
    %c0_79 = arith.constant 0 : index
    %187 = vector.load %arg27[%c0_78, %c0_79] : memref<32x32xbf16, #tpu.memory_space<vmem>>, vector<32x16xbf16>
    tpu.vector_store %arg27[%c0_78, %c0_79], %186 {strides = array<i32>} : memref<32x32xbf16, #tpu.memory_space<vmem>>, vector<32x16xbf16>,
    %188 = vector.extract_strided_slice %162 {offsets = [0, 0, 16], sizes = [4, 8, 16], strides = [1, 1, 1]} : vector<4x8x32xbf16> to vector<4x8x16xbf16>
    %189 = vector.extract_strided_slice %165 {offsets = [0, 0, 16], sizes = [4, 8, 16], strides = [1, 1, 1]} : vector<4x8x32xbf16> to vector<4x8x16xbf16>
    "tpu.trace_start"() <{level = 10 : i32, message = "bsd,btd->bst"}> : () -> ()
    %cst_80 = arith.constant dense<0.000000e+00> : vector<4x8x8xf32>
    %190 = tpu.matmul %188, %189, %cst_80 {dimension_numbers = #tpu.dot_dimension_numbers<[2], [2], [1], [1], [0, 0, 0, 1, 1, 1], [0], [0]>} : vector<4x8x16xbf16>, vector<4x8x16xbf16>, vector<4x8x8xf32> -> vector<4x8x8xf32>
    "tpu.trace_stop"() : () -> ()
    %cst_81 = arith.constant dense<0xFF800000> : vector<4x8xf32>
    %191 = vector.multi_reduction <maximumf>, %190, %cst_81 [2] : vector<4x8x8xf32> to vector<4x8xf32>
    %192 = vector.shape_cast %191 : vector<4x8xf32> to vector<4x8x1xf32>
    %193 = vector.broadcast %192 : vector<4x8x1xf32> to vector<4x8x8xf32>
    %194 = arith.subf %190, %193 : vector<4x8x8xf32>
    %195 = math.exp %194 : vector<4x8x8xf32>
    %cst_82 = arith.constant dense<0.000000e+00> : vector<4x8xf32>
    %196 = vector.multi_reduction <add>, %195, %cst_82 [2] : vector<4x8x8xf32> to vector<4x8xf32>
    %197 = vector.shape_cast %196 : vector<4x8xf32> to vector<4x8x1xf32>
    %198 = tpu.reciprocal %197 {approx = true} : vector<4x8x1xf32> -> vector<4x8x1xf32>
    %199 = vector.broadcast %198 : vector<4x8x1xf32> to vector<4x8x8xf32>
    %200 = arith.mulf %195, %199 : vector<4x8x8xf32>
    %201 = arith.truncf %200 : vector<4x8x8xf32> to vector<4x8x8xbf16>
    %202 = vector.extract_strided_slice %168 {offsets = [0, 0, 16], sizes = [4, 8, 16], strides = [1, 1, 1]} : vector<4x8x32xbf16> to vector<4x8x16xbf16>
    "tpu.trace_start"() <{level = 10 : i32, message = "bst,btd->bsd"}> : () -> ()
    %cst_83 = arith.constant dense<0.000000e+00> : vector<4x8x16xf32>
    %203 = tpu.matmul %201, %202, %cst_83 {dimension_numbers = #tpu.dot_dimension_numbers<[2], [1], [1], [2], [0, 0, 0, 1, 1, 2], [0], [0]>} : vector<4x8x8xbf16>, vector<4x8x16xbf16>, vector<4x8x16xf32> -> vector<4x8x16xf32>
    "tpu.trace_stop"() : () -> ()
    %204 = vector.shape_cast %203 : vector<4x8x16xf32> to vector<32x16xf32>
    %205 = arith.truncf %204 : vector<32x16xf32> to vector<32x16xbf16>
    %c0_84 = arith.constant 0 : index
    %c16 = arith.constant 16 : index
    %206 = vector.load %arg27[%c0_84, %c16] : memref<32x32xbf16, #tpu.memory_space<vmem>>, vector<32x16xbf16>
    tpu.vector_store %arg27[%c0_84, %c16], %205 {strides = array<i32>} : memref<32x32xbf16, #tpu.memory_space<vmem>>, vector<32x16xbf16>,
    %c0_85 = arith.constant 0 : index
    %c0_86 = arith.constant 0 : index
    %207 = vector.load %arg27[%c0_85, %c0_86] : memref<32x32xbf16, #tpu.memory_space<vmem>>, vector<32x32xbf16>
    %c0_87 = arith.constant 0 : index
    %c0_88 = arith.constant 0 : index
    %c0_89 = arith.constant 0 : index
    %208 = vector.load %arg10[%c0_87, %c0_88, %c0_89] : memref<2x32x32xbf16, #tpu.memory_space<vmem>>, vector<1x32x32xbf16>
    %209 = vector.shape_cast %208 : vector<1x32x32xbf16> to vector<32x32xbf16>
    %cst_90 = arith.constant dense<0.000000e+00> : vector<32x32xf32>
    %210 = tpu.matmul %207, %209, %cst_90 {dimension_numbers = #tpu.dot_dimension_numbers<[1], [0], [0], [1], [0, 0, 1, 1], [], []>} : vector<32x32xbf16>, vector<32x32xbf16>, vector<32x32xf32> -> vector<32x32xf32>
    %c0_91 = arith.constant 0 : index
    %c0_92 = arith.constant 0 : index
    %c0_93 = arith.constant 0 : index
    %211 = vector.load %arg11[%c0_91, %c0_92, %c0_93] : memref<2x1x32xf32, #tpu.memory_space<vmem>>, vector<1x1x32xf32>
    %212 = vector.shape_cast %211 : vector<1x1x32xf32> to vector<1x32xf32>
    %213 = vector.broadcast %212 : vector<1x32xf32> to vector<32x32xf32>
    %214 = arith.addf %210, %213 : vector<32x32xf32>
    %215 = arith.addf %151, %214 : vector<32x32xf32>
    %c0_94 = arith.constant 0 : index
    %c0_95 = arith.constant 0 : index
    %c0_96 = arith.constant 0 : index
    %216 = vector.load %arg12[%c0_94, %c0_95, %c0_96] : memref<2x1x32xf32, #tpu.memory_space<vmem>>, vector<1x1x32xf32>
    %217 = vector.shape_cast %216 : vector<1x1x32xf32> to vector<1x32xf32>
    %c0_97 = arith.constant 0 : index
    %c0_98 = arith.constant 0 : index
    %c0_99 = arith.constant 0 : index
    %218 = vector.load %arg13[%c0_97, %c0_98, %c0_99] : memref<2x1x32xf32, #tpu.memory_space<vmem>>, vector<1x1x32xf32>
    %219 = vector.shape_cast %218 : vector<1x1x32xf32> to vector<1x32xf32>
    %cst_100 = arith.constant dense<0.000000e+00> : vector<32xf32>
    %220 = vector.multi_reduction <add>, %215, %cst_100 [1] : vector<32x32xf32> to vector<32xf32>
    %221 = vector.shape_cast %220 : vector<32xf32> to vector<32x1xf32>
    %cst_101 = arith.constant 3.200000e+01 : f32
    %222 = vector.broadcast %cst_101 : f32 to vector<32x1xf32>
    %223 = arith.divf %221, %222 : vector<32x1xf32>
    %224 = vector.broadcast %223 : vector<32x1xf32> to vector<32x32xf32>
    %225 = arith.subf %215, %224 : vector<32x32xf32>
    %226 = vector.broadcast %223 : vector<32x1xf32> to vector<32x32xf32>
    %227 = arith.subf %215, %226 : vector<32x32xf32>
    %228 = arith.mulf %225, %227 : vector<32x32xf32>
    %cst_102 = arith.constant dense<0.000000e+00> : vector<32xf32>
    %229 = vector.multi_reduction <add>, %228, %cst_102 [1] : vector<32x32xf32> to vector<32xf32>
    %230 = vector.shape_cast %229 : vector<32xf32> to vector<32x1xf32>
    %cst_103 = arith.constant 3.200000e+01 : f32
    %231 = vector.broadcast %cst_103 : f32 to vector<32x1xf32>
    %232 = arith.divf %230, %231 : vector<32x1xf32>
    %233 = vector.broadcast %223 : vector<32x1xf32> to vector<32x32xf32>
    %234 = arith.subf %215, %233 : vector<32x32xf32>
    %cst_104 = arith.constant 9.99999974E-6 : f32
    %235 = vector.broadcast %cst_104 : f32 to vector<32x1xf32>
    %236 = arith.addf %232, %235 : vector<32x1xf32>
    %237 = math.rsqrt %236 : vector<32x1xf32>
    %238 = vector.broadcast %237 : vector<32x1xf32> to vector<32x32xf32>
    %239 = arith.mulf %234, %238 : vector<32x32xf32>
    %240 = vector.broadcast %217 : vector<1x32xf32> to vector<32x32xf32>
    %241 = arith.mulf %239, %240 : vector<32x32xf32>
    %242 = vector.broadcast %219 : vector<1x32xf32> to vector<32x32xf32>
    %243 = arith.addf %241, %242 : vector<32x32xf32>
    %244 = arith.truncf %243 : vector<32x32xf32> to vector<32x32xbf16>
    %c0_105 = arith.constant 0 : index
    %c0_106 = arith.constant 0 : index
    %c0_107 = arith.constant 0 : index
    %245 = vector.load %arg14[%c0_105, %c0_106, %c0_107] : memref<2x32x1024xbf16, #tpu.memory_space<vmem>>, vector<1x32x1024xbf16>
    %246 = vector.shape_cast %245 : vector<1x32x1024xbf16> to vector<32x1024xbf16>
    %cst_108 = arith.constant dense<0.000000e+00> : vector<32x1024xf32>
    %247 = tpu.matmul %244, %246, %cst_108 {dimension_numbers = #tpu.dot_dimension_numbers<[1], [0], [0], [1], [0, 0, 1, 1], [], []>} : vector<32x32xbf16>, vector<32x1024xbf16>, vector<32x1024xf32> -> vector<32x1024xf32>
    %c0_109 = arith.constant 0 : index
    %c0_110 = arith.constant 0 : index
    %c0_111 = arith.constant 0 : index
    %248 = vector.load %arg15[%c0_109, %c0_110, %c0_111] : memref<2x1x1024xf32, #tpu.memory_space<vmem>>, vector<1x1x1024xf32>
    %249 = vector.shape_cast %248 : vector<1x1x1024xf32> to vector<1x1024xf32>
    %250 = vector.broadcast %249 : vector<1x1024xf32> to vector<32x1024xf32>
    %251 = arith.addf %247, %250 : vector<32x1024xf32>
    %cst_112 = arith.constant 0.000000e+00 : f32
    %252 = vector.broadcast %cst_112 : f32 to vector<32x1024xf32>
    %253 = arith.maximumf %251, %252 : vector<32x1024xf32>
    %254 = arith.truncf %253 : vector<32x1024xf32> to vector<32x1024xbf16>
    %c0_113 = arith.constant 0 : index
    %c0_114 = arith.constant 0 : index
    %c0_115 = arith.constant 0 : index
    %255 = vector.load %arg16[%c0_113, %c0_114, %c0_115] : memref<2x1024x32xbf16, #tpu.memory_space<vmem>>, vector<1x1024x32xbf16>
    %256 = vector.shape_cast %255 : vector<1x1024x32xbf16> to vector<1024x32xbf16>
    %cst_116 = arith.constant dense<0.000000e+00> : vector<32x32xf32>
    %257 = tpu.matmul %254, %256, %cst_116 {dimension_numbers = #tpu.dot_dimension_numbers<[1], [0], [0], [1], [0, 0, 1, 1], [], []>} : vector<32x1024xbf16>, vector<1024x32xbf16>, vector<32x32xf32> -> vector<32x32xf32>
    %c0_117 = arith.constant 0 : index
    %c0_118 = arith.constant 0 : index
    %c0_119 = arith.constant 0 : index
    %258 = vector.load %arg17[%c0_117, %c0_118, %c0_119] : memref<2x1x32xf32, #tpu.memory_space<vmem>>, vector<1x1x32xf32>
    %259 = vector.shape_cast %258 : vector<1x1x32xf32> to vector<1x32xf32>
    %260 = vector.broadcast %259 : vector<1x32xf32> to vector<32x32xf32>
    %261 = arith.addf %257, %260 : vector<32x32xf32>
    %262 = arith.addf %243, %261 : vector<32x32xf32>
    %c0_120 = arith.constant 0 : index
    %c0_121 = arith.constant 0 : index
    %c0_122 = arith.constant 0 : index
    %263 = vector.load %arg18[%c0_120, %c0_121, %c0_122] : memref<2x1x32xf32, #tpu.memory_space<vmem>>, vector<1x1x32xf32>
    %264 = vector.shape_cast %263 : vector<1x1x32xf32> to vector<1x32xf32>
    %c0_123 = arith.constant 0 : index
    %c0_124 = arith.constant 0 : index
    %c0_125 = arith.constant 0 : index
    %265 = vector.load %arg19[%c0_123, %c0_124, %c0_125] : memref<2x1x32xf32, #tpu.memory_space<vmem>>, vector<1x1x32xf32>
    %266 = vector.shape_cast %265 : vector<1x1x32xf32> to vector<1x32xf32>
    %cst_126 = arith.constant dense<0.000000e+00> : vector<32xf32>
    %267 = vector.multi_reduction <add>, %262, %cst_126 [1] : vector<32x32xf32> to vector<32xf32>
    %268 = vector.shape_cast %267 : vector<32xf32> to vector<32x1xf32>
    %cst_127 = arith.constant 3.200000e+01 : f32
    %269 = vector.broadcast %cst_127 : f32 to vector<32x1xf32>
    %270 = arith.divf %268, %269 : vector<32x1xf32>
    %271 = vector.broadcast %270 : vector<32x1xf32> to vector<32x32xf32>
    %272 = arith.subf %262, %271 : vector<32x32xf32>
    %273 = vector.broadcast %270 : vector<32x1xf32> to vector<32x32xf32>
    %274 = arith.subf %262, %273 : vector<32x32xf32>
    %275 = arith.mulf %272, %274 : vector<32x32xf32>
    %cst_128 = arith.constant dense<0.000000e+00> : vector<32xf32>
    %276 = vector.multi_reduction <add>, %275, %cst_128 [1] : vector<32x32xf32> to vector<32xf32>
    %277 = vector.shape_cast %276 : vector<32xf32> to vector<32x1xf32>
    %cst_129 = arith.constant 3.200000e+01 : f32
    %278 = vector.broadcast %cst_129 : f32 to vector<32x1xf32>
    %279 = arith.divf %277, %278 : vector<32x1xf32>
    %280 = vector.broadcast %270 : vector<32x1xf32> to vector<32x32xf32>
    %281 = arith.subf %262, %280 : vector<32x32xf32>
    %cst_130 = arith.constant 9.99999974E-6 : f32
    %282 = vector.broadcast %cst_130 : f32 to vector<32x1xf32>
    %283 = arith.addf %279, %282 : vector<32x1xf32>
    %284 = math.rsqrt %283 : vector<32x1xf32>
    %285 = vector.broadcast %284 : vector<32x1xf32> to vector<32x32xf32>
    %286 = arith.mulf %281, %285 : vector<32x32xf32>
    %287 = vector.broadcast %264 : vector<1x32xf32> to vector<32x32xf32>
    %288 = arith.mulf %286, %287 : vector<32x32xf32>
    %289 = vector.broadcast %266 : vector<1x32xf32> to vector<32x32xf32>
    %290 = arith.addf %288, %289 : vector<32x32xf32>
    %291 = vector.shape_cast %290 : vector<32x32xf32> to vector<4x8x32xf32>
    %cst_131 = arith.constant dense<0.000000e+00> : vector<4x32xf32>
    %292 = vector.multi_reduction <add>, %291, %cst_131 [1] : vector<4x8x32xf32> to vector<4x32xf32>
    %cst_132 = arith.constant 8.000000e+00 : f32
    %293 = vector.broadcast %cst_132 : f32 to vector<4x32xf32>
    %294 = arith.divf %292, %293 : vector<4x32xf32>
    %c0_133 = arith.constant 0 : index
    %c0_134 = arith.constant 0 : index
    %295 = vector.load %arg28[%c0_133, %c0_134] : memref<8x32xf32, #tpu.memory_space<vmem>>, vector<4x32xf32>
    tpu.vector_store %arg28[%c0_133, %c0_134], %294 {strides = array<i32>} : memref<8x32xf32, #tpu.memory_space<vmem>>, vector<4x32xf32>,
    %296 = vector.extract_strided_slice %150 {offsets = [32, 0], sizes = [32, 32], strides = [1, 1]} : vector<64x32xf32> to vector<32x32xf32>
    %297 = arith.truncf %296 : vector<32x32xf32> to vector<32x32xbf16>
    %c1_135 = arith.constant 1 : index
    %c0_136 = arith.constant 0 : index
    %c0_137 = arith.constant 0 : index
    %298 = vector.load %arg8[%c1_135, %c0_136, %c0_137] : memref<2x32x96xbf16, #tpu.memory_space<vmem>>, vector<1x32x96xbf16>
    %299 = vector.shape_cast %298 : vector<1x32x96xbf16> to vector<32x96xbf16>
    %cst_138 = arith.constant dense<0.000000e+00> : vector<32x96xf32>
    %300 = tpu.matmul %297, %299, %cst_138 {dimension_numbers = #tpu.dot_dimension_numbers<[1], [0], [0], [1], [0, 0, 1, 1], [], []>} : vector<32x32xbf16>, vector<32x96xbf16>, vector<32x96xf32> -> vector<32x96xf32>
    %c1_139 = arith.constant 1 : index
    %c0_140 = arith.constant 0 : index
    %c0_141 = arith.constant 0 : index
    %301 = vector.load %arg9[%c1_139, %c0_140, %c0_141] : memref<2x1x96xf32, #tpu.memory_space<vmem>>, vector<1x1x96xf32>
    %302 = vector.shape_cast %301 : vector<1x1x96xf32> to vector<1x96xf32>
    %303 = vector.broadcast %302 : vector<1x96xf32> to vector<32x96xf32>
    %304 = arith.addf %300, %303 : vector<32x96xf32>
    %305 = vector.extract_strided_slice %304 {offsets = [0, 0], sizes = [32, 32], strides = [1, 1]} : vector<32x96xf32> to vector<32x32xf32>
    %306 = vector.shape_cast %305 : vector<32x32xf32> to vector<4x8x32xf32>
    %307 = arith.truncf %306 : vector<4x8x32xf32> to vector<4x8x32xbf16>
    %308 = vector.extract_strided_slice %304 {offsets = [0, 32], sizes = [32, 32], strides = [1, 1]} : vector<32x96xf32> to vector<32x32xf32>
    %309 = vector.shape_cast %308 : vector<32x32xf32> to vector<4x8x32xf32>
    %310 = arith.truncf %309 : vector<4x8x32xf32> to vector<4x8x32xbf16>
    %311 = vector.extract_strided_slice %304 {offsets = [0, 64], sizes = [32, 32], strides = [1, 1]} : vector<32x96xf32> to vector<32x32xf32>
    %312 = vector.shape_cast %311 : vector<32x32xf32> to vector<4x8x32xf32>
    %313 = arith.truncf %312 : vector<4x8x32xf32> to vector<4x8x32xbf16>
    %314 = vector.extract_strided_slice %307 {offsets = [0, 0, 0], sizes = [4, 8, 16], strides = [1, 1, 1]} : vector<4x8x32xbf16> to vector<4x8x16xbf16>
    %315 = vector.extract_strided_slice %310 {offsets = [0, 0, 0], sizes = [4, 8, 16], strides = [1, 1, 1]} : vector<4x8x32xbf16> to vector<4x8x16xbf16>
    "tpu.trace_start"() <{level = 10 : i32, message = "bsd,btd->bst"}> : () -> ()
    %cst_142 = arith.constant dense<0.000000e+00> : vector<4x8x8xf32>
    %316 = tpu.matmul %314, %315, %cst_142 {dimension_numbers = #tpu.dot_dimension_numbers<[2], [2], [1], [1], [0, 0, 0, 1, 1, 1], [0], [0]>} : vector<4x8x16xbf16>, vector<4x8x16xbf16>, vector<4x8x8xf32> -> vector<4x8x8xf32>
    "tpu.trace_stop"() : () -> ()
    %cst_143 = arith.constant dense<0xFF800000> : vector<4x8xf32>
    %317 = vector.multi_reduction <maximumf>, %316, %cst_143 [2] : vector<4x8x8xf32> to vector<4x8xf32>
    %318 = vector.shape_cast %317 : vector<4x8xf32> to vector<4x8x1xf32>
    %319 = vector.broadcast %318 : vector<4x8x1xf32> to vector<4x8x8xf32>
    %320 = arith.subf %316, %319 : vector<4x8x8xf32>
    %321 = math.exp %320 : vector<4x8x8xf32>
    %cst_144 = arith.constant dense<0.000000e+00> : vector<4x8xf32>
    %322 = vector.multi_reduction <add>, %321, %cst_144 [2] : vector<4x8x8xf32> to vector<4x8xf32>
    %323 = vector.shape_cast %322 : vector<4x8xf32> to vector<4x8x1xf32>
    %324 = tpu.reciprocal %323 {approx = true} : vector<4x8x1xf32> -> vector<4x8x1xf32>
    %325 = vector.broadcast %324 : vector<4x8x1xf32> to vector<4x8x8xf32>
    %326 = arith.mulf %321, %325 : vector<4x8x8xf32>
    %327 = arith.truncf %326 : vector<4x8x8xf32> to vector<4x8x8xbf16>
    %328 = vector.extract_strided_slice %313 {offsets = [0, 0, 0], sizes = [4, 8, 16], strides = [1, 1, 1]} : vector<4x8x32xbf16> to vector<4x8x16xbf16>
    "tpu.trace_start"() <{level = 10 : i32, message = "bst,btd->bsd"}> : () -> ()
    %cst_145 = arith.constant dense<0.000000e+00> : vector<4x8x16xf32>
    %329 = tpu.matmul %327, %328, %cst_145 {dimension_numbers = #tpu.dot_dimension_numbers<[2], [1], [1], [2], [0, 0, 0, 1, 1, 2], [0], [0]>} : vector<4x8x8xbf16>, vector<4x8x16xbf16>, vector<4x8x16xf32> -> vector<4x8x16xf32>
    "tpu.trace_stop"() : () -> ()
    %330 = vector.shape_cast %329 : vector<4x8x16xf32> to vector<32x16xf32>
    %331 = arith.truncf %330 : vector<32x16xf32> to vector<32x16xbf16>
    %c0_146 = arith.constant 0 : index
    %c0_147 = arith.constant 0 : index
    %332 = vector.load %arg27[%c0_146, %c0_147] : memref<32x32xbf16, #tpu.memory_space<vmem>>, vector<32x16xbf16>
    tpu.vector_store %arg27[%c0_146, %c0_147], %331 {strides = array<i32>} : memref<32x32xbf16, #tpu.memory_space<vmem>>, vector<32x16xbf16>,
    %333 = vector.extract_strided_slice %307 {offsets = [0, 0, 16], sizes = [4, 8, 16], strides = [1, 1, 1]} : vector<4x8x32xbf16> to vector<4x8x16xbf16>
    %334 = vector.extract_strided_slice %310 {offsets = [0, 0, 16], sizes = [4, 8, 16], strides = [1, 1, 1]} : vector<4x8x32xbf16> to vector<4x8x16xbf16>
    "tpu.trace_start"() <{level = 10 : i32, message = "bsd,btd->bst"}> : () -> ()
    %cst_148 = arith.constant dense<0.000000e+00> : vector<4x8x8xf32>
    %335 = tpu.matmul %333, %334, %cst_148 {dimension_numbers = #tpu.dot_dimension_numbers<[2], [2], [1], [1], [0, 0, 0, 1, 1, 1], [0], [0]>} : vector<4x8x16xbf16>, vector<4x8x16xbf16>, vector<4x8x8xf32> -> vector<4x8x8xf32>
    "tpu.trace_stop"() : () -> ()
    %cst_149 = arith.constant dense<0xFF800000> : vector<4x8xf32>
    %336 = vector.multi_reduction <maximumf>, %335, %cst_149 [2] : vector<4x8x8xf32> to vector<4x8xf32>
    %337 = vector.shape_cast %336 : vector<4x8xf32> to vector<4x8x1xf32>
    %338 = vector.broadcast %337 : vector<4x8x1xf32> to vector<4x8x8xf32>
    %339 = arith.subf %335, %338 : vector<4x8x8xf32>
    %340 = math.exp %339 : vector<4x8x8xf32>
    %cst_150 = arith.constant dense<0.000000e+00> : vector<4x8xf32>
    %341 = vector.multi_reduction <add>, %340, %cst_150 [2] : vector<4x8x8xf32> to vector<4x8xf32>
    %342 = vector.shape_cast %341 : vector<4x8xf32> to vector<4x8x1xf32>
    %343 = tpu.reciprocal %342 {approx = true} : vector<4x8x1xf32> -> vector<4x8x1xf32>
    %344 = vector.broadcast %343 : vector<4x8x1xf32> to vector<4x8x8xf32>
    %345 = arith.mulf %340, %344 : vector<4x8x8xf32>
    %346 = arith.truncf %345 : vector<4x8x8xf32> to vector<4x8x8xbf16>
    %347 = vector.extract_strided_slice %313 {offsets = [0, 0, 16], sizes = [4, 8, 16], strides = [1, 1, 1]} : vector<4x8x32xbf16> to vector<4x8x16xbf16>
    "tpu.trace_start"() <{level = 10 : i32, message = "bst,btd->bsd"}> : () -> ()
    %cst_151 = arith.constant dense<0.000000e+00> : vector<4x8x16xf32>
    %348 = tpu.matmul %346, %347, %cst_151 {dimension_numbers = #tpu.dot_dimension_numbers<[2], [1], [1], [2], [0, 0, 0, 1, 1, 2], [0], [0]>} : vector<4x8x8xbf16>, vector<4x8x16xbf16>, vector<4x8x16xf32> -> vector<4x8x16xf32>
    "tpu.trace_stop"() : () -> ()
    %349 = vector.shape_cast %348 : vector<4x8x16xf32> to vector<32x16xf32>
    %350 = arith.truncf %349 : vector<32x16xf32> to vector<32x16xbf16>
    %c0_152 = arith.constant 0 : index
    %c16_153 = arith.constant 16 : index
    %351 = vector.load %arg27[%c0_152, %c16_153] : memref<32x32xbf16, #tpu.memory_space<vmem>>, vector<32x16xbf16>
    tpu.vector_store %arg27[%c0_152, %c16_153], %350 {strides = array<i32>} : memref<32x32xbf16, #tpu.memory_space<vmem>>, vector<32x16xbf16>,
    %c0_154 = arith.constant 0 : index
    %c0_155 = arith.constant 0 : index
    %352 = vector.load %arg27[%c0_154, %c0_155] : memref<32x32xbf16, #tpu.memory_space<vmem>>, vector<32x32xbf16>
    %c1_156 = arith.constant 1 : index
    %c0_157 = arith.constant 0 : index
    %c0_158 = arith.constant 0 : index
    %353 = vector.load %arg10[%c1_156, %c0_157, %c0_158] : memref<2x32x32xbf16, #tpu.memory_space<vmem>>, vector<1x32x32xbf16>
    %354 = vector.shape_cast %353 : vector<1x32x32xbf16> to vector<32x32xbf16>
    %cst_159 = arith.constant dense<0.000000e+00> : vector<32x32xf32>
    %355 = tpu.matmul %352, %354, %cst_159 {dimension_numbers = #tpu.dot_dimension_numbers<[1], [0], [0], [1], [0, 0, 1, 1], [], []>} : vector<32x32xbf16>, vector<32x32xbf16>, vector<32x32xf32> -> vector<32x32xf32>
    %c1_160 = arith.constant 1 : index
    %c0_161 = arith.constant 0 : index
    %c0_162 = arith.constant 0 : index
    %356 = vector.load %arg11[%c1_160, %c0_161, %c0_162] : memref<2x1x32xf32, #tpu.memory_space<vmem>>, vector<1x1x32xf32>
    %357 = vector.shape_cast %356 : vector<1x1x32xf32> to vector<1x32xf32>
    %358 = vector.broadcast %357 : vector<1x32xf32> to vector<32x32xf32>
    %359 = arith.addf %355, %358 : vector<32x32xf32>
    %360 = arith.addf %296, %359 : vector<32x32xf32>
    %c1_163 = arith.constant 1 : index
    %c0_164 = arith.constant 0 : index
    %c0_165 = arith.constant 0 : index
    %361 = vector.load %arg12[%c1_163, %c0_164, %c0_165] : memref<2x1x32xf32, #tpu.memory_space<vmem>>, vector<1x1x32xf32>
    %362 = vector.shape_cast %361 : vector<1x1x32xf32> to vector<1x32xf32>
    %c1_166 = arith.constant 1 : index
    %c0_167 = arith.constant 0 : index
    %c0_168 = arith.constant 0 : index
    %363 = vector.load %arg13[%c1_166, %c0_167, %c0_168] : memref<2x1x32xf32, #tpu.memory_space<vmem>>, vector<1x1x32xf32>
    %364 = vector.shape_cast %363 : vector<1x1x32xf32> to vector<1x32xf32>
    %cst_169 = arith.constant dense<0.000000e+00> : vector<32xf32>
    %365 = vector.multi_reduction <add>, %360, %cst_169 [1] : vector<32x32xf32> to vector<32xf32>
    %366 = vector.shape_cast %365 : vector<32xf32> to vector<32x1xf32>
    %cst_170 = arith.constant 3.200000e+01 : f32
    %367 = vector.broadcast %cst_170 : f32 to vector<32x1xf32>
    %368 = arith.divf %366, %367 : vector<32x1xf32>
    %369 = vector.broadcast %368 : vector<32x1xf32> to vector<32x32xf32>
    %370 = arith.subf %360, %369 : vector<32x32xf32>
    %371 = vector.broadcast %368 : vector<32x1xf32> to vector<32x32xf32>
    %372 = arith.subf %360, %371 : vector<32x32xf32>
    %373 = arith.mulf %370, %372 : vector<32x32xf32>
    %cst_171 = arith.constant dense<0.000000e+00> : vector<32xf32>
    %374 = vector.multi_reduction <add>, %373, %cst_171 [1] : vector<32x32xf32> to vector<32xf32>
    %375 = vector.shape_cast %374 : vector<32xf32> to vector<32x1xf32>
    %cst_172 = arith.constant 3.200000e+01 : f32
    %376 = vector.broadcast %cst_172 : f32 to vector<32x1xf32>
    %377 = arith.divf %375, %376 : vector<32x1xf32>
    %378 = vector.broadcast %368 : vector<32x1xf32> to vector<32x32xf32>
    %379 = arith.subf %360, %378 : vector<32x32xf32>
    %cst_173 = arith.constant 9.99999974E-6 : f32
    %380 = vector.broadcast %cst_173 : f32 to vector<32x1xf32>
    %381 = arith.addf %377, %380 : vector<32x1xf32>
    %382 = math.rsqrt %381 : vector<32x1xf32>
    %383 = vector.broadcast %382 : vector<32x1xf32> to vector<32x32xf32>
    %384 = arith.mulf %379, %383 : vector<32x32xf32>
    %385 = vector.broadcast %362 : vector<1x32xf32> to vector<32x32xf32>
    %386 = arith.mulf %384, %385 : vector<32x32xf32>
    %387 = vector.broadcast %364 : vector<1x32xf32> to vector<32x32xf32>
    %388 = arith.addf %386, %387 : vector<32x32xf32>
    %389 = arith.truncf %388 : vector<32x32xf32> to vector<32x32xbf16>
    %c1_174 = arith.constant 1 : index
    %c0_175 = arith.constant 0 : index
    %c0_176 = arith.constant 0 : index
    %390 = vector.load %arg14[%c1_174, %c0_175, %c0_176] : memref<2x32x1024xbf16, #tpu.memory_space<vmem>>, vector<1x32x1024xbf16>
    %391 = vector.shape_cast %390 : vector<1x32x1024xbf16> to vector<32x1024xbf16>
    %cst_177 = arith.constant dense<0.000000e+00> : vector<32x1024xf32>
    %392 = tpu.matmul %389, %391, %cst_177 {dimension_numbers = #tpu.dot_dimension_numbers<[1], [0], [0], [1], [0, 0, 1, 1], [], []>} : vector<32x32xbf16>, vector<32x1024xbf16>, vector<32x1024xf32> -> vector<32x1024xf32>
    %c1_178 = arith.constant 1 : index
    %c0_179 = arith.constant 0 : index
    %c0_180 = arith.constant 0 : index
    %393 = vector.load %arg15[%c1_178, %c0_179, %c0_180] : memref<2x1x1024xf32, #tpu.memory_space<vmem>>, vector<1x1x1024xf32>
    %394 = vector.shape_cast %393 : vector<1x1x1024xf32> to vector<1x1024xf32>
    %395 = vector.broadcast %394 : vector<1x1024xf32> to vector<32x1024xf32>
    %396 = arith.addf %392, %395 : vector<32x1024xf32>
    %cst_181 = arith.constant 0.000000e+00 : f32
    %397 = vector.broadcast %cst_181 : f32 to vector<32x1024xf32>
    %398 = arith.maximumf %396, %397 : vector<32x1024xf32>
    %399 = arith.truncf %398 : vector<32x1024xf32> to vector<32x1024xbf16>
    %c1_182 = arith.constant 1 : index
    %c0_183 = arith.constant 0 : index
    %c0_184 = arith.constant 0 : index
    %400 = vector.load %arg16[%c1_182, %c0_183, %c0_184] : memref<2x1024x32xbf16, #tpu.memory_space<vmem>>, vector<1x1024x32xbf16>
    %401 = vector.shape_cast %400 : vector<1x1024x32xbf16> to vector<1024x32xbf16>
    %cst_185 = arith.constant dense<0.000000e+00> : vector<32x32xf32>
    %402 = tpu.matmul %399, %401, %cst_185 {dimension_numbers = #tpu.dot_dimension_numbers<[1], [0], [0], [1], [0, 0, 1, 1], [], []>} : vector<32x1024xbf16>, vector<1024x32xbf16>, vector<32x32xf32> -> vector<32x32xf32>
    %c1_186 = arith.constant 1 : index
    %c0_187 = arith.constant 0 : index
    %c0_188 = arith.constant 0 : index
    %403 = vector.load %arg17[%c1_186, %c0_187, %c0_188] : memref<2x1x32xf32, #tpu.memory_space<vmem>>, vector<1x1x32xf32>
    %404 = vector.shape_cast %403 : vector<1x1x32xf32> to vector<1x32xf32>
    %405 = vector.broadcast %404 : vector<1x32xf32> to vector<32x32xf32>
    %406 = arith.addf %402, %405 : vector<32x32xf32>
    %407 = arith.addf %388, %406 : vector<32x32xf32>
    %c1_189 = arith.constant 1 : index
    %c0_190 = arith.constant 0 : index
    %c0_191 = arith.constant 0 : index
    %408 = vector.load %arg18[%c1_189, %c0_190, %c0_191] : memref<2x1x32xf32, #tpu.memory_space<vmem>>, vector<1x1x32xf32>
    %409 = vector.shape_cast %408 : vector<1x1x32xf32> to vector<1x32xf32>
    %c1_192 = arith.constant 1 : index
    %c0_193 = arith.constant 0 : index
    %c0_194 = arith.constant 0 : index
    %410 = vector.load %arg19[%c1_192, %c0_193, %c0_194] : memref<2x1x32xf32, #tpu.memory_space<vmem>>, vector<1x1x32xf32>
    %411 = vector.shape_cast %410 : vector<1x1x32xf32> to vector<1x32xf32>
    %cst_195 = arith.constant dense<0.000000e+00> : vector<32xf32>
    %412 = vector.multi_reduction <add>, %407, %cst_195 [1] : vector<32x32xf32> to vector<32xf32>
    %413 = vector.shape_cast %412 : vector<32xf32> to vector<32x1xf32>
    %cst_196 = arith.constant 3.200000e+01 : f32
    %414 = vector.broadcast %cst_196 : f32 to vector<32x1xf32>
    %415 = arith.divf %413, %414 : vector<32x1xf32>
    %416 = vector.broadcast %415 : vector<32x1xf32> to vector<32x32xf32>
    %417 = arith.subf %407, %416 : vector<32x32xf32>
    %418 = vector.broadcast %415 : vector<32x1xf32> to vector<32x32xf32>
    %419 = arith.subf %407, %418 : vector<32x32xf32>
    %420 = arith.mulf %417, %419 : vector<32x32xf32>
    %cst_197 = arith.constant dense<0.000000e+00> : vector<32xf32>
    %421 = vector.multi_reduction <add>, %420, %cst_197 [1] : vector<32x32xf32> to vector<32xf32>
    %422 = vector.shape_cast %421 : vector<32xf32> to vector<32x1xf32>
    %cst_198 = arith.constant 3.200000e+01 : f32
    %423 = vector.broadcast %cst_198 : f32 to vector<32x1xf32>
    %424 = arith.divf %422, %423 : vector<32x1xf32>
    %425 = vector.broadcast %415 : vector<32x1xf32> to vector<32x32xf32>
    %426 = arith.subf %407, %425 : vector<32x32xf32>
    %cst_199 = arith.constant 9.99999974E-6 : f32
    %427 = vector.broadcast %cst_199 : f32 to vector<32x1xf32>
    %428 = arith.addf %424, %427 : vector<32x1xf32>
    %429 = math.rsqrt %428 : vector<32x1xf32>
    %430 = vector.broadcast %429 : vector<32x1xf32> to vector<32x32xf32>
    %431 = arith.mulf %426, %430 : vector<32x32xf32>
    %432 = vector.broadcast %409 : vector<1x32xf32> to vector<32x32xf32>
    %433 = arith.mulf %431, %432 : vector<32x32xf32>
    %434 = vector.broadcast %411 : vector<1x32xf32> to vector<32x32xf32>
    %435 = arith.addf %433, %434 : vector<32x32xf32>
    %436 = vector.shape_cast %435 : vector<32x32xf32> to vector<4x8x32xf32>
    %cst_200 = arith.constant dense<0.000000e+00> : vector<4x32xf32>
    %437 = vector.multi_reduction <add>, %436, %cst_200 [1] : vector<4x8x32xf32> to vector<4x32xf32>
    %cst_201 = arith.constant 8.000000e+00 : f32
    %438 = vector.broadcast %cst_201 : f32 to vector<4x32xf32>
    %439 = arith.divf %437, %438 : vector<4x32xf32>
    %c4_202 = arith.constant 4 : index
    %c0_203 = arith.constant 0 : index
    %440 = vector.load %arg28[%c4_202, %c0_203] : memref<8x32xf32, #tpu.memory_space<vmem>>, vector<4x32xf32>
    tpu.vector_store %arg28[%c4_202, %c0_203], %439 {strides = array<i32>} : memref<8x32xf32, #tpu.memory_space<vmem>>, vector<4x32xf32>,
    %c0_204 = arith.constant 0 : index
    %c0_205 = arith.constant 0 : index
    %441 = vector.load %arg28[%c0_204, %c0_205] : memref<8x32xf32, #tpu.memory_space<vmem>>, vector<8x32xf32>
    %442 = arith.truncf %441 : vector<8x32xf32> to vector<8x32xbf16>
    %c0_206 = arith.constant 0 : index
    %c0_207 = arith.constant 0 : index
    %443 = vector.load %arg20[%c0_206, %c0_207] : memref<32x32xbf16, #tpu.memory_space<vmem>>, vector<32x32xbf16>
    %cst_208 = arith.constant dense<0.000000e+00> : vector<8x32xf32>
    %444 = tpu.matmul %442, %443, %cst_208 {dimension_numbers = #tpu.dot_dimension_numbers<[1], [0], [0], [1], [0, 0, 1, 1], [], []>} : vector<8x32xbf16>, vector<32x32xbf16>, vector<8x32xf32> -> vector<8x32xf32>
    %c0_209 = arith.constant 0 : index
    %c0_210 = arith.constant 0 : index
    %445 = vector.load %arg21[%c0_209, %c0_210] : memref<1x32xf32, #tpu.memory_space<vmem>>, vector<1x32xf32>
    %446 = vector.broadcast %445 : vector<1x32xf32> to vector<8x32xf32>
    %447 = arith.addf %444, %446 : vector<8x32xf32>
    %cst_211 = arith.constant 0.000000e+00 : f32
    %448 = vector.broadcast %cst_211 : f32 to vector<8x32xf32>
    %449 = arith.maximumf %447, %448 : vector<8x32xf32>
    %450 = arith.truncf %449 : vector<8x32xf32> to vector<8x32xbf16>
    %c0_212 = arith.constant 0 : index
    %c0_213 = arith.constant 0 : index
    %451 = vector.load %arg22[%c0_212, %c0_213] : memref<32x10xbf16, #tpu.memory_space<vmem>>, vector<32x10xbf16>
    %cst_214 = arith.constant dense<0.000000e+00> : vector<8x10xf32>
    %452 = tpu.matmul %450, %451, %cst_214 {dimension_numbers = #tpu.dot_dimension_numbers<[1], [0], [0], [1], [0, 0, 1, 1], [], []>} : vector<8x32xbf16>, vector<32x10xbf16>, vector<8x10xf32> -> vector<8x10xf32>
    %c0_215 = arith.constant 0 : index
    %c0_216 = arith.constant 0 : index
    %453 = vector.load %arg23[%c0_215, %c0_216] : memref<1x10xf32, #tpu.memory_space<vmem>>, vector<1x10xf32>
    %454 = vector.broadcast %453 : vector<1x10xf32> to vector<8x10xf32>
    %455 = arith.addf %452, %454 : vector<8x10xf32>
    %c0_217 = arith.constant 0 : index
    %c0_218 = arith.constant 0 : index
    %456 = vector.load %arg24[%c0_217, %c0_218] : memref<8x10xf32, #tpu.memory_space<vmem>>, vector<8x10xf32>
    tpu.vector_store %arg24[%c0_217, %c0_218], %455 {strides = array<i32>} : memref<8x10xf32, #tpu.memory_space<vmem>>, vector<8x10xf32>,
    return
  }
}

</mosaic_0001>

<llo_original>
// kernel: scmoanno_pretrain.1
$region0: #{scmoanno_pretrain.1}
  #allocation0 [shape = 'u32[]', space=smem, size = 0x4, offset = 0x4, fixed_abs, tag = 'smem constant byte address 0x4 - core index']
  #allocation1 [shape = 'u32[144,128]{1,0:T(1,128)}', space=vmem, size = 0x12000, scoped, tag = 'internal scratch']
  #allocation2 [shape = 'bf16[8,256]{1,0:T(8,128)(2,1)}', space=vmem, size = 0x1000, scoped, tag = 'scratch operand']
  #allocation3 [shape = 'f32[8,8,32]{2,1,0:T(8,128)}', space=vmem, size = 0x8000, scoped, tag = 'scratch operand']
  #allocation4 [shape = 'bf16[32,32]{1,0:T(16,128)(2,1)}', space=vmem, size = 0x2000, scoped, tag = 'scratch operand']
  #allocation5 [shape = 'f32[8,32]{1,0:T(8,128)}', space=vmem, size = 0x1000, scoped, tag = 'scratch operand']
  %s0 = inlined_call_operand.vmem [shape: f32[8,256], index: 0, kind: input, shape index: {}]
  %s1 = inlined_call_operand.vmem [shape: f32[64,32], index: 1, kind: input, shape index: {}]
  %s2 = inlined_call_operand.vmem [shape: bf16[256,256], index: 2, kind: input, shape index: {}]
  %s3 = inlined_call_operand.vmem [shape: f32[1,256], index: 3, kind: input, shape index: {}]
  %s4 = inlined_call_operand.vmem [shape: bf16[256,512], index: 4, kind: input, shape index: {}]
  %s5 = inlined_call_operand.vmem [shape: f32[1,512], index: 5, kind: input, shape index: {}]
  %s6 = inlined_call_operand.vmem [shape: bf16[256,256], index: 6, kind: input, shape index: {}]
  %s7 = inlined_call_operand.vmem [shape: f32[1,256], index: 7, kind: input, shape index: {}]
  %s8 = inlined_call_operand.vmem [shape: bf16[2,32,96], index: 8, kind: input, shape index: {}]
  %s9 = inlined_call_operand.vmem [shape: f32[2,1,96], index: 9, kind: input, shape index: {}]
  %s10 = inlined_call_operand.vmem [shape: bf16[2,32,32], index: 10, kind: input, shape index: {}]
  %s11 = inlined_call_operand.vmem [shape: f32[2,1,32], index: 11, kind: input, shape index: {}]
  %s12 = inlined_call_operand.vmem [shape: f32[2,1,32], index: 12, kind: input, shape index: {}]
  %s13 = inlined_call_operand.vmem [shape: f32[2,1,32], index: 13, kind: input, shape index: {}]
  %s14 = inlined_call_operand.vmem [shape: bf16[2,32,1024], index: 14, kind: input, shape index: {}]
  %s15 = inlined_call_operand.vmem [shape: f32[2,1,1024], index: 15, kind: input, shape index: {}]
  %s16 = inlined_call_operand.vmem [shape: bf16[2,1024,32], index: 16, kind: input, shape index: {}]
  %s17 = inlined_call_operand.vmem [shape: f32[2,1,32], index: 17, kind: input, shape index: {}]
  %s18 = inlined_call_operand.vmem [shape: f32[2,1,32], index: 18, kind: input, shape index: {}]
  %s19 = inlined_call_operand.vmem [shape: f32[2,1,32], index: 19, kind: input, shape index: {}]
  %s20 = inlined_call_operand.vmem [shape: bf16[32,32], index: 20, kind: input, shape index: {}]
  %s21 = inlined_call_operand.vmem [shape: f32[1,32], index: 21, kind: input, shape index: {}]
  %s22 = inlined_call_operand.vmem [shape: bf16[32,10], index: 22, kind: input, shape index: {}]
  %s23 = inlined_call_operand.vmem [shape: f32[1,10], index: 23, kind: input, shape index: {}]
  %s24 = inlined_call_operand.vmem [shape: f32[8,10], index: 24, kind: output, shape index: {}]
  %s25 = sld [smem:[#allocation0]]
  $region106: #{scmoanno_pretrain.1} parent=0
    _
  %s27 = ssub.s32 1, %s25
  %s28 = scalar_select 0, %s27, %s25
  // Predicated region
  $region2: #{scmoanno_pretrain.1} parent=0 // pred_check
    _
  $region3: #{scmoanno_pretrain.1} parent=0 // pred_check_branch
    %30 = sbr.rel (0) target = $region5
  $region4: #{scmoanno_pretrain.1} parent=0 // pred_region
    _
  $region5: #{scmoanno_pretrain.1} parent=0 // pred_fallthru
    _
  // Predicated region
  $region6: #{scmoanno_pretrain.1} parent=0 // pred_check
    _
  $region7: #{scmoanno_pretrain.1} parent=0 // pred_check_branch
    %32 = sbr.rel (0) target = $region9
  $region8: #{scmoanno_pretrain.1} parent=0 // pred_region
    _
  $region9: #{scmoanno_pretrain.1} parent=0 // pred_fallthru
    _
  // Predicated region
  $region10: #{scmoanno_pretrain.1} parent=0 // pred_check
    _
  $region11: #{scmoanno_pretrain.1} parent=0 // pred_check_branch
    %34 = sbr.rel (0) target = $region13
  $region12: #{scmoanno_pretrain.1} parent=0 // pred_region
    _
  $region13: #{scmoanno_pretrain.1} parent=0 // pred_fallthru
    _
  // Predicated region
  $region14: #{scmoanno_pretrain.1} parent=0 // pred_check
    _
  $region15: #{scmoanno_pretrain.1} parent=0 // pred_check_branch
    %36 = sbr.rel (0) target = $region17
  $region16: #{scmoanno_pretrain.1} parent=0 // pred_region
    _
  $region17: #{scmoanno_pretrain.1} parent=0 // pred_fallthru
    _
  // Predicated region
  $region18: #{scmoanno_pretrain.1} parent=0 // pred_check
    _
  $region19: #{scmoanno_pretrain.1} parent=0 // pred_check_branch
    %38 = sbr.rel (0) target = $region21
  $region20: #{scmoanno_pretrain.1} parent=0 // pred_region
    _
  $region21: #{scmoanno_pretrain.1} parent=0 // pred_fallthru
    _
  // Predicated region
  $region22: #{scmoanno_pretrain.1} parent=0 // pred_check
    _
  $region23: #{scmoanno_pretrain.1} parent=0 // pred_check_branch
    %40 = sbr.rel (0) target = $region25
  $region24: #{scmoanno_pretrain.1} parent=0 // pred_region
    _
  $region25: #{scmoanno_pretrain.1} parent=0 // pred_fallthru
    _
  // Predicated region
  $region26: #{scmoanno_pretrain.1} parent=0 // pred_check
    _
  $region27: #{scmoanno_pretrain.1} parent=0 // pred_check_branch
    %42 = sbr.rel (0) target = $region29
  $region28: #{scmoanno_pretrain.1} parent=0 // pred_region
    _
  $region29: #{scmoanno_pretrain.1} parent=0 // pred_fallthru
    _
  // Predicated region
  $region30: #{scmoanno_pretrain.1} parent=0 // pred_check
    _
  $region31: #{scmoanno_pretrain.1} parent=0 // pred_check_branch
    %44 = sbr.rel (0) target = $region33
  $region32: #{scmoanno_pretrain.1} parent=0 // pred_region
    _
  $region33: #{scmoanno_pretrain.1} parent=0 // pred_fallthru
    _
  // Predicated region
  $region34: #{scmoanno_pretrain.1} parent=0 // pred_check
    _
  $region35: #{scmoanno_pretrain.1} parent=0 // pred_check_branch
    %46 = sbr.rel (0) target = $region37
  $region36: #{scmoanno_pretrain.1} parent=0 // pred_region
    _
  $region37: #{scmoanno_pretrain.1} parent=0 // pred_fallthru
    _
  // Predicated region
  $region38: #{scmoanno_pretrain.1} parent=0 // pred_check
    _
  $region39: #{scmoanno_pretrain.1} parent=0 // pred_check_branch
    %48 = sbr.rel (0) target = $region41
  $region40: #{scmoanno_pretrain.1} parent=0 // pred_region
    _
  $region41: #{scmoanno_pretrain.1} parent=0 // pred_fallthru
    _
  // Predicated region
  $region42: #{scmoanno_pretrain.1} parent=0 // pred_check
    _
  $region43: #{scmoanno_pretrain.1} parent=0 // pred_check_branch
    %50 = sbr.rel (0) target = $region45
  $region44: #{scmoanno_pretrain.1} parent=0 // pred_region
    _
  $region45: #{scmoanno_pretrain.1} parent=0 // pred_fallthru
    _
  // Predicated region
  $region46: #{scmoanno_pretrain.1} parent=0 // pred_check
    _
  $region47: #{scmoanno_pretrain.1} parent=0 // pred_check_branch
    %52 = sbr.rel (0) target = $region49
  $region48: #{scmoanno_pretrain.1} parent=0 // pred_region
    _
  $region49: #{scmoanno_pretrain.1} parent=0 // pred_fallthru
    _
  // Predicated region
  $region50: #{scmoanno_pretrain.1} parent=0 // pred_check
    _
  $region51: #{scmoanno_pretrain.1} parent=0 // pred_check_branch
    %54 = sbr.rel (0) target = $region53
  $region52: #{scmoanno_pretrain.1} parent=0 // pred_region
    _
  $region53: #{scmoanno_pretrain.1} parent=0 // pred_fallthru
    _
  // Predicated region
  $region54: #{scmoanno_pretrain.1} parent=0 // pred_check
    _
  $region55: #{scmoanno_pretrain.1} parent=0 // pred_check_branch
    %56 = sbr.rel (0) target = $region57
  $region56: #{scmoanno_pretrain.1} parent=0 // pred_region
    _
  $region57: #{scmoanno_pretrain.1} parent=0 // pred_fallthru
    _
  // Predicated region
  $region58: #{scmoanno_pretrain.1} parent=0 // pred_check
    _
  $region59: #{scmoanno_pretrain.1} parent=0 // pred_check_branch
    %58 = sbr.rel (0) target = $region61
  $region60: #{scmoanno_pretrain.1} parent=0 // pred_region
    _
  $region61: #{scmoanno_pretrain.1} parent=0 // pred_fallthru
    _
  // Predicated region
  $region62: #{scmoanno_pretrain.1} parent=0 // pred_check
    _
  $region63: #{scmoanno_pretrain.1} parent=0 // pred_check_branch
    %60 = sbr.rel (0) target = $region65
  $region64: #{scmoanno_pretrain.1} parent=0 // pred_region
    _
  $region65: #{scmoanno_pretrain.1} parent=0 // pred_fallthru
    _
  // Predicated region
  $region66: #{scmoanno_pretrain.1} parent=0 // pred_check
    _
  $region67: #{scmoanno_pretrain.1} parent=0 // pred_check_branch
    %62 = sbr.rel (0) target = $region69
  $region68: #{scmoanno_pretrain.1} parent=0 // pred_region
    _
  $region69: #{scmoanno_pretrain.1} parent=0 // pred_fallthru
    _
  // Predicated region
  $region70: #{scmoanno_pretrain.1} parent=0 // pred_check
    _
  $region71: #{scmoanno_pretrain.1} parent=0 // pred_check_branch
    %64 = sbr.rel (0) target = $region73
  $region72: #{scmoanno_pretrain.1} parent=0 // pred_region
    _
  $region73: #{scmoanno_pretrain.1} parent=0 // pred_fallthru
    _
  // Predicated region
  $region74: #{scmoanno_pretrain.1} parent=0 // pred_check
    _
  $region75: #{scmoanno_pretrain.1} parent=0 // pred_check_branch
    %66 = sbr.rel (0) target = $region77
  $region76: #{scmoanno_pretrain.1} parent=0 // pred_region
    _
  $region77: #{scmoanno_pretrain.1} parent=0 // pred_fallthru
    _
  // Predicated region
  $region78: #{scmoanno_pretrain.1} parent=0 // pred_check
    _
  $region79: #{scmoanno_pretrain.1} parent=0 // pred_check_branch
    %68 = sbr.rel (0) target = $region81
  $region80: #{scmoanno_pretrain.1} parent=0 // pred_region
    _
  $region81: #{scmoanno_pretrain.1} parent=0 // pred_fallthru
    _
  // Predicated region
  $region82: #{scmoanno_pretrain.1} parent=0 // pred_check
    _
  $region83: #{scmoanno_pretrain.1} parent=0 // pred_check_branch
    %70 = sbr.rel (0) target = $region85
  $region84: #{scmoanno_pretrain.1} parent=0 // pred_region
    _
  $region85: #{scmoanno_pretrain.1} parent=0 // pred_fallthru
    _
  // Predicated region
  $region86: #{scmoanno_pretrain.1} parent=0 // pred_check
    _
  $region87: #{scmoanno_pretrain.1} parent=0 // pred_check_branch
    %72 = sbr.rel (0) target = $region89
  $region88: #{scmoanno_pretrain.1} parent=0 // pred_region
    _
  $region89: #{scmoanno_pretrain.1} parent=0 // pred_fallthru
    _
  // Predicated region
  $region90: #{scmoanno_pretrain.1} parent=0 // pred_check
    _
  $region91: #{scmoanno_pretrain.1} parent=0 // pred_check_branch
    %74 = sbr.rel (0) target = $region93
  $region92: #{scmoanno_pretrain.1} parent=0 // pred_region
    _
  $region93: #{scmoanno_pretrain.1} parent=0 // pred_fallthru
    _
  // Predicated region
  $region94: #{scmoanno_pretrain.1} parent=0 // pred_check
    _
  $region95: #{scmoanno_pretrain.1} parent=0 // pred_check_branch
    %76 = sbr.rel (0) target = $region97
  $region96: #{scmoanno_pretrain.1} parent=0 // pred_region
    _
  $region97: #{scmoanno_pretrain.1} parent=0 // pred_fallthru
    _
  %v78 = vld [vmem:[%s0] sm:$0xff]
  %v79 = vld [vmem:[%s0 + $0x8] sm:$0xff]
  %v80 = vpack.c.bf16 %v78, %v78
  %v81 = vpack.c.bf16 %v79, %v79
  %v82 = vld [vmem:[%s2] sm:$0xff]
  %v83 = vld [vmem:[%s2 + $0x8] sm:$0xff]
  %v84 = vld [vmem:[%s2 + $0x10] sm:$0xff]
  %v85 = vld [vmem:[%s2 + $0x18] sm:$0xff]
  %v86 = vld [vmem:[%s2 + $0x20] sm:$0xff]
  %v87 = vld [vmem:[%s2 + $0x28] sm:$0xff]
  %v88 = vld [vmem:[%s2 + $0x30] sm:$0xff]
  %v89 = vld [vmem:[%s2 + $0x38] sm:$0xff]
  %v90 = vld [vmem:[%s2 + $0x40] sm:$0xff]
  %v91 = vld [vmem:[%s2 + $0x48] sm:$0xff]
  %v92 = vld [vmem:[%s2 + $0x50] sm:$0xff]
  %v93 = vld [vmem:[%s2 + $0x58] sm:$0xff]
  %v94 = vld [vmem:[%s2 + $0x60] sm:$0xff]
  %v95 = vld [vmem:[%s2 + $0x68] sm:$0xff]
  %v96 = vld [vmem:[%s2 + $0x70] sm:$0xff]
  %v97 = vld [vmem:[%s2 + $0x78] sm:$0xff]
  %v98 = vld [vmem:[%s2 + $0x80] sm:$0xff]
  %v99 = vld [vmem:[%s2 + $0x88] sm:$0xff]
  %v100 = vld [vmem:[%s2 + $0x90] sm:$0xff]
  %v101 = vld [vmem:[%s2 + $0x98] sm:$0xff]
  %v102 = vld [vmem:[%s2 + $0xa0] sm:$0xff]
  %v103 = vld [vmem:[%s2 + $0xa8] sm:$0xff]
  %v104 = vld [vmem:[%s2 + $0xb0] sm:$0xff]
  %v105 = vld [vmem:[%s2 + $0xb8] sm:$0xff]
  %v106 = vld [vmem:[%s2 + $0xc0] sm:$0xff]
  %v107 = vld [vmem:[%s2 + $0xc8] sm:$0xff]
  %v108 = vld [vmem:[%s2 + $0xd0] sm:$0xff]
  %v109 = vld [vmem:[%s2 + $0xd8] sm:$0xff]
  %v110 = vld [vmem:[%s2 + $0xe0] sm:$0xff]
  %v111 = vld [vmem:[%s2 + $0xe8] sm:$0xff]
  %v112 = vld [vmem:[%s2 + $0xf0] sm:$0xff]
  %v113 = vld [vmem:[%s2 + $0xf8] sm:$0xff]
  %v114 = vld [vmem:[%s3] sm:$0x3]
  %v116 = vlaneseq
  %v117 = vshrl.u32 %v116, 7
  %v118 = vsub.s32 0, %v117
  %v119 = vrot.slane %v114, %v118
  %v120 = vlaneseq
  %v121 = vshrl.u32 %v120, 7
  %v122 = vsub.s32 1, %v121
  %v123 = vrot.slane %v114, %v122
  %v158 = vunpack.c.l.b16 %v82
  %v159 = vunpack.c.h.b16 %v82
  %v160 = vunpack.c.l.b16 %v83
  %v161 = vunpack.c.h.b16 %v83
  %v162 = vunpack.c.l.b16 %v84
  %v163 = vunpack.c.h.b16 %v84
  %v164 = vunpack.c.l.b16 %v85
  %v165 = vunpack.c.h.b16 %v85
  %v166 = vunpack.c.l.b16 %v86
  %v167 = vunpack.c.h.b16 %v86
  %v168 = vunpack.c.l.b16 %v87
  %v169 = vunpack.c.h.b16 %v87
  %v170 = vunpack.c.l.b16 %v88
  %v171 = vunpack.c.h.b16 %v88
  %v172 = vunpack.c.l.b16 %v89
  %v173 = vunpack.c.h.b16 %v89
  %v174 = vunpack.c.l.b16 %v90
  %v175 = vunpack.c.h.b16 %v90
  %v176 = vunpack.c.l.b16 %v91
  %v177 = vunpack.c.h.b16 %v91
  %v178 = vunpack.c.l.b16 %v92
  %v179 = vunpack.c.h.b16 %v92
  %v180 = vunpack.c.l.b16 %v93
  %v181 = vunpack.c.h.b16 %v93
  %v182 = vunpack.c.l.b16 %v94
  %v183 = vunpack.c.h.b16 %v94
  %v184 = vunpack.c.l.b16 %v95
  %v185 = vunpack.c.h.b16 %v95
  %v186 = vunpack.c.l.b16 %v96
  %v187 = vunpack.c.h.b16 %v96
  %v188 = vunpack.c.l.b16 %v97
  %v189 = vunpack.c.h.b16 %v97
  %v190 = vunpack.c.l.b16 %v98
  %v191 = vunpack.c.h.b16 %v98
  %v192 = vunpack.c.l.b16 %v99
  %v193 = vunpack.c.h.b16 %v99
  %v194 = vunpack.c.l.b16 %v100
  %v195 = vunpack.c.h.b16 %v100
  %v196 = vunpack.c.l.b16 %v101
  %v197 = vunpack.c.h.b16 %v101
  %v198 = vunpack.c.l.b16 %v102
  %v199 = vunpack.c.h.b16 %v102
  %v200 = vunpack.c.l.b16 %v103
  %v201 = vunpack.c.h.b16 %v103
  %v202 = vunpack.c.l.b16 %v104
  %v203 = vunpack.c.h.b16 %v104
  %v204 = vunpack.c.l.b16 %v105
  %v205 = vunpack.c.h.b16 %v105
  %v206 = vunpack.c.l.b16 %v106
  %v207 = vunpack.c.h.b16 %v106
  %v208 = vunpack.c.l.b16 %v107
  %v209 = vunpack.c.h.b16 %v107
  %v210 = vunpack.c.l.b16 %v108
  %v211 = vunpack.c.h.b16 %v108
  %v212 = vunpack.c.l.b16 %v109
  %v213 = vunpack.c.h.b16 %v109
  %v214 = vunpack.c.l.b16 %v110
  %v215 = vunpack.c.h.b16 %v110
  %v216 = vunpack.c.l.b16 %v111
  %v217 = vunpack.c.h.b16 %v111
  %v218 = vunpack.c.l.b16 %v112
  %v219 = vunpack.c.h.b16 %v112
  %v220 = vunpack.c.l.b16 %v113
  %v221 = vunpack.c.h.b16 %v113
  %v222 = vpack.c.b16 %v160, %v158
  %v223 = vpack.c.b16 %v161, %v159
  %v224 = vpack.c.b16 %v164, %v162
  %v225 = vpack.c.b16 %v165, %v163
  %v226 = vpack.c.b16 %v168, %v166
  %v227 = vpack.c.b16 %v169, %v167
  %v228 = vpack.c.b16 %v172, %v170
  %v229 = vpack.c.b16 %v173, %v171
  %v230 = vpack.c.b16 %v176, %v174
  %v231 = vpack.c.b16 %v177, %v175
  %v232 = vpack.c.b16 %v180, %v178
  %v233 = vpack.c.b16 %v181, %v179
  %v234 = vpack.c.b16 %v184, %v182
  %v235 = vpack.c.b16 %v185, %v183
  %v236 = vpack.c.b16 %v188, %v186
  %v237 = vpack.c.b16 %v189, %v187
  %v238 = vpack.c.b16 %v192, %v190
  %v239 = vpack.c.b16 %v193, %v191
  %v240 = vpack.c.b16 %v196, %v194
  %v241 = vpack.c.b16 %v197, %v195
  %v242 = vpack.c.b16 %v200, %v198
  %v243 = vpack.c.b16 %v201, %v199
  %v244 = vpack.c.b16 %v204, %v202
  %v245 = vpack.c.b16 %v205, %v203
  %v246 = vpack.c.b16 %v208, %v206
  %v247 = vpack.c.b16 %v209, %v207
  %v248 = vpack.c.b16 %v212, %v210
  %v249 = vpack.c.b16 %v213, %v211
  %v250 = vpack.c.b16 %v216, %v214
  %v251 = vpack.c.b16 %v217, %v215
  %v252 = vpack.c.b16 %v220, %v218
  %v253 = vpack.c.b16 %v221, %v219
  %286 = vmatprep.subr.bf16.mxu0 %v223
  %287 = vmatpush1.bf16.msra.mxu0 %v222
  %288 = vmatprep.subr.bf16.mxu0 %v225
  %289 = vmatpush1.bf16.msra.mxu0 %v224
  %290 = vmatprep.subr.bf16.mxu0 %v227
  %291 = vmatpush1.bf16.msra.mxu0 %v226
  %292 = vmatprep.subr.bf16.mxu0 %v229
  %293 = vmatpush1.bf16.msra.mxu0 %v228
  %294 = vmatprep.subr.bf16.mxu0 %v231
  %295 = vmatpush1.bf16.msra.mxu0 %v230
  %296 = vmatprep.subr.bf16.mxu0 %v233
  %297 = vmatpush1.bf16.msra.mxu0 %v232
  %298 = vmatprep.subr.bf16.mxu0 %v235
  %299 = vmatpush1.bf16.msra.mxu0 %v234
  %300 = vmatprep.subr.bf16.mxu0 %v237
  %301 = vmatpush1.bf16.msra.mxu0 %v236
  %302 = vmatprep.subr.bf16.mxu0 %v239
  %303 = vmatpush1.bf16.msra.mxu0 %v238
  %304 = vmatprep.subr.bf16.mxu0 %v241
  %305 = vmatpush1.bf16.msra.mxu0 %v240
  %306 = vmatprep.subr.bf16.mxu0 %v243
  %307 = vmatpush1.bf16.msra.mxu0 %v242
  %308 = vmatprep.subr.bf16.mxu0 %v245
  %309 = vmatpush1.bf16.msra.mxu0 %v244
  %310 = vmatprep.subr.bf16.mxu0 %v247
  %311 = vmatpush1.bf16.msra.mxu0 %v246
  %312 = vmatprep.subr.bf16.mxu0 %v249
  %313 = vmatpush1.bf16.msra.mxu0 %v248
  %314 = vmatprep.subr.bf16.mxu0 %v251
  %315 = vmatpush1.bf16.msra.mxu0 %v250
  %316 = vmatprep.subr.bf16.mxu0 %v253
  %317 = vmatpush1.bf16.msra.mxu0 %v252
  %318 = vmatprep.mubr.bf16.mxu0 %v81
  %319 = vmatmul.mubr.bf16.gmra.mrb[0].mxu0 %v80
  %v320 = vpop.f32.mrb[0].mxu0
  %v321 = vadd.f32 %v119, %v320
  %v322 = vpop.f32.mrb[0].mxu0
  %v323 = vadd.f32 %v123, %v322
  %v324 = vpop.f32.mrb[0].mxu0
  %v325 = vpop.f32.mrb[0].mxu0
  %326 = vdwg.mxu0
  %v327 = vpack.c.bf16 %v321, %v321
  %v328 = vpack.c.bf16 %v323, %v323
  %v329 = vld [vmem:[%s4] sm:$0xff]
  %v330 = vld [vmem:[%s4 + $0x8] sm:$0xff]
  %v331 = vld [vmem:[%s4 + $0x10] sm:$0xff]
  %v332 = vld [vmem:[%s4 + $0x18] sm:$0xff]
  %v333 = vld [vmem:[%s4 + $0x20] sm:$0xff]
  %v334 = vld [vmem:[%s4 + $0x28] sm:$0xff]
  %v335 = vld [vmem:[%s4 + $0x30] sm:$0xff]
  %v336 = vld [vmem:[%s4 + $0x38] sm:$0xff]
  %v337 = vld [vmem:[%s4 + $0x40] sm:$0xff]
  %v338 = vld [vmem:[%s4 + $0x48] sm:$0xff]
  %v339 = vld [vmem:[%s4 + $0x50] sm:$0xff]
  %v340 = vld [vmem:[%s4 + $0x58] sm:$0xff]
  %v341 = vld [vmem:[%s4 + $0x60] sm:$0xff]
  %v342 = vld [vmem:[%s4 + $0x68] sm:$0xff]
  %v343 = vld [vmem:[%s4 + $0x70] sm:$0xff]
  %v344 = vld [vmem:[%s4 + $0x78] sm:$0xff]
  %v345 = vld [vmem:[%s4 + $0x80] sm:$0xff]
  %v346 = vld [vmem:[%s4 + $0x88] sm:$0xff]
  %v347 = vld [vmem:[%s4 + $0x90] sm:$0xff]
  %v348 = vld [vmem:[%s4 + $0x98] sm:$0xff]
  %v349 = vld [vmem:[%s4 + $0xa0] sm:$0xff]
  %v350 = vld [vmem:[%s4 + $0xa8] sm:$0xff]
  %v351 = vld [vmem:[%s4 + $0xb0] sm:$0xff]
  %v352 = vld [vmem:[%s4 + $0xb8] sm:$0xff]
  %v353 = vld [vmem:[%s4 + $0xc0] sm:$0xff]
  %v354 = vld [vmem:[%s4 + $0xc8] sm:$0xff]
  %v355 = vld [vmem:[%s4 + $0xd0] sm:$0xff]
  %v356 = vld [vmem:[%s4 + $0xd8] sm:$0xff]
  %v357 = vld [vmem:[%s4 + $0xe0] sm:$0xff]
  %v358 = vld [vmem:[%s4 + $0xe8] sm:$0xff]
  %v359 = vld [vmem:[%s4 + $0xf0] sm:$0xff]
  %v360 = vld [vmem:[%s4 + $0xf8] sm:$0xff]
  %v361 = vld [vmem:[%s4 + $0x100] sm:$0xff]
  %v362 = vld [vmem:[%s4 + $0x108] sm:$0xff]
  %v363 = vld [vmem:[%s4 + $0x110] sm:$0xff]
  %v364 = vld [vmem:[%s4 + $0x118] sm:$0xff]
  %v365 = vld [vmem:[%s4 + $0x120] sm:$0xff]
  %v366 = vld [vmem:[%s4 + $0x128] sm:$0xff]
  %v367 = vld [vmem:[%s4 + $0x130] sm:$0xff]
  %v368 = vld [vmem:[%s4 + $0x138] sm:$0xff]
  %v369 = vld [vmem:[%s4 + $0x140] sm:$0xff]
  %v370 = vld [vmem:[%s4 + $0x148] sm:$0xff]
  %v371 = vld [vmem:[%s4 + $0x150] sm:$0xff]
  %v372 = vld [vmem:[%s4 + $0x158] sm:$0xff]
  %v373 = vld [vmem:[%s4 + $0x160] sm:$0xff]
  %v374 = vld [vmem:[%s4 + $0x168] sm:$0xff]
  %v375 = vld [vmem:[%s4 + $0x170] sm:$0xff]
  %v376 = vld [vmem:[%s4 + $0x178] sm:$0xff]
  %v377 = vld [vmem:[%s4 + $0x180] sm:$0xff]
  %v378 = vld [vmem:[%s4 + $0x188] sm:$0xff]
  %v379 = vld [vmem:[%s4 + $0x190] sm:$0xff]
  %v380 = vld [vmem:[%s4 + $0x198] sm:$0xff]
  %v381 = vld [vmem:[%s4 + $0x1a0] sm:$0xff]
  %v382 = vld [vmem:[%s4 + $0x1a8] sm:$0xff]
  %v383 = vld [vmem:[%s4 + $0x1b0] sm:$0xff]
  %v384 = vld [vmem:[%s4 + $0x1b8] sm:$0xff]
  %v385 = vld [vmem:[%s4 + $0x1c0] sm:$0xff]
  %v386 = vld [vmem:[%s4 + $0x1c8] sm:$0xff]
  %v387 = vld [vmem:[%s4 + $0x1d0] sm:$0xff]
  %v388 = vld [vmem:[%s4 + $0x1d8] sm:$0xff]
  %v389 = vld [vmem:[%s4 + $0x1e0] sm:$0xff]
  %v390 = vld [vmem:[%s4 + $0x1e8] sm:$0xff]
  %v391 = vld [vmem:[%s4 + $0x1f0] sm:$0xff]
  %v392 = vld [vmem:[%s4 + $0x1f8] sm:$0xff]
  %v393 = vld [vmem:[%s5] sm:$0xf]
  %v395 = vlaneseq
  %v396 = vshrl.u32 %v395, 7
  %v397 = vsub.s32 0, %v396
  %v398 = vrot.slane %v393, %v397
  %v399 = vlaneseq
  %v400 = vshrl.u32 %v399, 7
  %v401 = vsub.s32 1, %v400
  %v402 = vrot.slane %v393, %v401
  %v403 = vlaneseq
  %v404 = vshrl.u32 %v403, 7
  %v405 = vsub.s32 2, %v404
  %v406 = vrot.slane %v393, %v405
  %v407 = vlaneseq
  %v408 = vshrl.u32 %v407, 7
  %v409 = vsub.s32 3, %v408
  %v410 = vrot.slane %v393, %v409
  %v479 = vunpack.c.l.b16 %v329
  %v480 = vunpack.c.h.b16 %v329
  %v481 = vunpack.c.l.b16 %v330
  %v482 = vunpack.c.h.b16 %v330
  %v483 = vunpack.c.l.b16 %v331
  %v484 = vunpack.c.h.b16 %v331
  %v485 = vunpack.c.l.b16 %v332
  %v486 = vunpack.c.h.b16 %v332
  %v487 = vunpack.c.l.b16 %v333
  %v488 = vunpack.c.h.b16 %v333
  %v489 = vunpack.c.l.b16 %v334
  %v490 = vunpack.c.h.b16 %v334
  %v491 = vunpack.c.l.b16 %v335
  %v492 = vunpack.c.h.b16 %v335
  %v493 = vunpack.c.l.b16 %v336
  %v494 = vunpack.c.h.b16 %v336
  %v495 = vunpack.c.l.b16 %v337
  %v496 = vunpack.c.h.b16 %v337
  %v497 = vunpack.c.l.b16 %v338
  %v498 = vunpack.c.h.b16 %v338
  %v499 = vunpack.c.l.b16 %v339
  %v500 = vunpack.c.h.b16 %v339
  %v501 = vunpack.c.l.b16 %v340
  %v502 = vunpack.c.h.b16 %v340
  %v503 = vunpack.c.l.b16 %v341
  %v504 = vunpack.c.h.b16 %v341
  %v505 = vunpack.c.l.b16 %v342
  %v506 = vunpack.c.h.b16 %v342
  %v507 = vunpack.c.l.b16 %v343
  %v508 = vunpack.c.h.b16 %v343
  %v509 = vunpack.c.l.b16 %v344
  %v510 = vunpack.c.h.b16 %v344
  %v511 = vunpack.c.l.b16 %v345
  %v512 = vunpack.c.h.b16 %v345
  %v513 = vunpack.c.l.b16 %v346
  %v514 = vunpack.c.h.b16 %v346
  %v515 = vunpack.c.l.b16 %v347
  %v516 = vunpack.c.h.b16 %v347
  %v517 = vunpack.c.l.b16 %v348
  %v518 = vunpack.c.h.b16 %v348
  %v519 = vunpack.c.l.b16 %v349
  %v520 = vunpack.c.h.b16 %v349
  %v521 = vunpack.c.l.b16 %v350
  %v522 = vunpack.c.h.b16 %v350
  %v523 = vunpack.c.l.b16 %v351
  %v524 = vunpack.c.h.b16 %v351
  %v525 = vunpack.c.l.b16 %v352
  %v526 = vunpack.c.h.b16 %v352
  %v527 = vunpack.c.l.b16 %v353
  %v528 = vunpack.c.h.b16 %v353
  %v529 = vunpack.c.l.b16 %v354
  %v530 = vunpack.c.h.b16 %v354
  %v531 = vunpack.c.l.b16 %v355
  %v532 = vunpack.c.h.b16 %v355
  %v533 = vunpack.c.l.b16 %v356
  %v534 = vunpack.c.h.b16 %v356
  %v535 = vunpack.c.l.b16 %v357
  %v536 = vunpack.c.h.b16 %v357
  %v537 = vunpack.c.l.b16 %v358
  %v538 = vunpack.c.h.b16 %v358
  %v539 = vunpack.c.l.b16 %v359
  %v540 = vunpack.c.h.b16 %v359
  %v541 = vunpack.c.l.b16 %v360
  %v542 = vunpack.c.h.b16 %v360
  %v543 = vunpack.c.l.b16 %v361
  %v544 = vunpack.c.h.b16 %v361
  %v545 = vunpack.c.l.b16 %v362
  %v546 = vunpack.c.h.b16 %v362
  %v547 = vunpack.c.l.b16 %v363
  %v548 = vunpack.c.h.b16 %v363
  %v549 = vunpack.c.l.b16 %v364
  %v550 = vunpack.c.h.b16 %v364
  %v551 = vunpack.c.l.b16 %v365
  %v552 = vunpack.c.h.b16 %v365
  %v553 = vunpack.c.l.b16 %v366
  %v554 = vunpack.c.h.b16 %v366
  %v555 = vunpack.c.l.b16 %v367
  %v556 = vunpack.c.h.b16 %v367
  %v557 = vunpack.c.l.b16 %v368
  %v558 = vunpack.c.h.b16 %v368
  %v559 = vunpack.c.l.b16 %v369
  %v560 = vunpack.c.h.b16 %v369
  %v561 = vunpack.c.l.b16 %v370
  %v562 = vunpack.c.h.b16 %v370
  %v563 = vunpack.c.l.b16 %v371
  %v564 = vunpack.c.h.b16 %v371
  %v565 = vunpack.c.l.b16 %v372
  %v566 = vunpack.c.h.b16 %v372
  %v567 = vunpack.c.l.b16 %v373
  %v568 = vunpack.c.h.b16 %v373
  %v569 = vunpack.c.l.b16 %v374
  %v570 = vunpack.c.h.b16 %v374
  %v571 = vunpack.c.l.b16 %v375
  %v572 = vunpack.c.h.b16 %v375
  %v573 = vunpack.c.l.b16 %v376
  %v574 = vunpack.c.h.b16 %v376
  %v575 = vunpack.c.l.b16 %v377
  %v576 = vunpack.c.h.b16 %v377
  %v577 = vunpack.c.l.b16 %v378
  %v578 = vunpack.c.h.b16 %v378
  %v579 = vunpack.c.l.b16 %v379
  %v580 = vunpack.c.h.b16 %v379
  %v581 = vunpack.c.l.b16 %v380
  %v582 = vunpack.c.h.b16 %v380
  %v583 = vunpack.c.l.b16 %v381
  %v584 = vunpack.c.h.b16 %v381
  %v585 = vunpack.c.l.b16 %v382
  %v586 = vunpack.c.h.b16 %v382
  %v587 = vunpack.c.l.b16 %v383
  %v588 = vunpack.c.h.b16 %v383
  %v589 = vunpack.c.l.b16 %v384
  %v590 = vunpack.c.h.b16 %v384
  %v591 = vunpack.c.l.b16 %v385
  %v592 = vunpack.c.h.b16 %v385
  %v593 = vunpack.c.l.b16 %v386
  %v594 = vunpack.c.h.b16 %v386
  %v595 = vunpack.c.l.b16 %v387
  %v596 = vunpack.c.h.b16 %v387
  %v597 = vunpack.c.l.b16 %v388
  %v598 = vunpack.c.h.b16 %v388
  %v599 = vunpack.c.l.b16 %v389
  %v600 = vunpack.c.h.b16 %v389
  %v601 = vunpack.c.l.b16 %v390
  %v602 = vunpack.c.h.b16 %v390
  %v603 = vunpack.c.l.b16 %v391
  %v604 = vunpack.c.h.b16 %v391
  %v605 = vunpack.c.l.b16 %v392
  %v606 = vunpack.c.h.b16 %v392
  %v607 = vpack.c.b16 %v483, %v479
  %v608 = vpack.c.b16 %v484, %v480
  %v609 = vpack.c.b16 %v485, %v481
  %v610 = vpack.c.b16 %v486, %v482
  %v611 = vpack.c.b16 %v491, %v487
  %v612 = vpack.c.b16 %v492, %v488
  %v613 = vpack.c.b16 %v493, %v489
  %v614 = vpack.c.b16 %v494, %v490
  %v615 = vpack.c.b16 %v499, %v495
  %v616 = vpack.c.b16 %v500, %v496
  %v617 = vpack.c.b16 %v501, %v497
  %v618 = vpack.c.b16 %v502, %v498
  %v619 = vpack.c.b16 %v507, %v503
  %v620 = vpack.c.b16 %v508, %v504
  %v621 = vpack.c.b16 %v509, %v505
  %v622 = vpack.c.b16 %v510, %v506
  %v623 = vpack.c.b16 %v515, %v511
  %v624 = vpack.c.b16 %v516, %v512
  %v625 = vpack.c.b16 %v517, %v513
  %v626 = vpack.c.b16 %v518, %v514
  %v627 = vpack.c.b16 %v523, %v519
  %v628 = vpack.c.b16 %v524, %v520
  %v629 = vpack.c.b16 %v525, %v521
  %v630 = vpack.c.b16 %v526, %v522
  %v631 = vpack.c.b16 %v531, %v527
  %v632 = vpack.c.b16 %v532, %v528
  %v633 = vpack.c.b16 %v533, %v529
  %v634 = vpack.c.b16 %v534, %v530
  %v635 = vpack.c.b16 %v539, %v535
  %v636 = vpack.c.b16 %v540, %v536
  %v637 = vpack.c.b16 %v541, %v537
  %v638 = vpack.c.b16 %v542, %v538
  %v639 = vpack.c.b16 %v547, %v543
  %v640 = vpack.c.b16 %v548, %v544
  %v641 = vpack.c.b16 %v549, %v545
  %v642 = vpack.c.b16 %v550, %v546
  %v643 = vpack.c.b16 %v555, %v551
  %v644 = vpack.c.b16 %v556, %v552
  %v645 = vpack.c.b16 %v557, %v553
  %v646 = vpack.c.b16 %v558, %v554
  %v647 = vpack.c.b16 %v563, %v559
  %v648 = vpack.c.b16 %v564, %v560
  %v649 = vpack.c.b16 %v565, %v561
  %v650 = vpack.c.b16 %v566, %v562
  %v651 = vpack.c.b16 %v571, %v567
  %v652 = vpack.c.b16 %v572, %v568
  %v653 = vpack.c.b16 %v573, %v569
  %v654 = vpack.c.b16 %v574, %v570
  %v655 = vpack.c.b16 %v579, %v575
  %v656 = vpack.c.b16 %v580, %v576
  %v657 = vpack.c.b16 %v581, %v577
  %v658 = vpack.c.b16 %v582, %v578
  %v659 = vpack.c.b16 %v587, %v583
  %v660 = vpack.c.b16 %v588, %v584
  %v661 = vpack.c.b16 %v589, %v585
  %v662 = vpack.c.b16 %v590, %v586
  %v663 = vpack.c.b16 %v595, %v591
  %v664 = vpack.c.b16 %v596, %v592
  %v665 = vpack.c.b16 %v597, %v593
  %v666 = vpack.c.b16 %v598, %v594
  %v667 = vpack.c.b16 %v603, %v599
  %v668 = vpack.c.b16 %v604, %v600
  %v669 = vpack.c.b16 %v605, %v601
  %v670 = vpack.c.b16 %v606, %v602
  %735 = vmatprep.subr.bf16.mxu0 %v608
  %736 = vmatpush1.bf16.msra.mxu0 %v607
  %737 = vmatprep.subr.bf16.mxu0 %v612
  %738 = vmatpush1.bf16.msra.mxu0 %v611
  %739 = vmatprep.subr.bf16.mxu0 %v616
  %740 = vmatpush1.bf16.msra.mxu0 %v615
  %741 = vmatprep.subr.bf16.mxu0 %v620
  %742 = vmatpush1.bf16.msra.mxu0 %v619
  %743 = vmatprep.subr.bf16.mxu0 %v624
  %744 = vmatpush1.bf16.msra.mxu0 %v623
  %745 = vmatprep.subr.bf16.mxu0 %v628
  %746 = vmatpush1.bf16.msra.mxu0 %v627
  %747 = vmatprep.subr.bf16.mxu0 %v632
  %748 = vmatpush1.bf16.msra.mxu0 %v631
  %749 = vmatprep.subr.bf16.mxu0 %v636
  %750 = vmatpush1.bf16.msra.mxu0 %v635
  %751 = vmatprep.subr.bf16.mxu0 %v640
  %752 = vmatpush1.bf16.msra.mxu0 %v639
  %753 = vmatprep.subr.bf16.mxu0 %v644
  %754 = vmatpush1.bf16.msra.mxu0 %v643
  %755 = vmatprep.subr.bf16.mxu0 %v648
  %756 = vmatpush1.bf16.msra.mxu0 %v647
  %757 = vmatprep.subr.bf16.mxu0 %v652
  %758 = vmatpush1.bf16.msra.mxu0 %v651
  %759 = vmatprep.subr.bf16.mxu0 %v656
  %760 = vmatpush1.bf16.msra.mxu0 %v655
  %761 = vmatprep.subr.bf16.mxu0 %v660
  %762 = vmatpush1.bf16.msra.mxu0 %v659
  %763 = vmatprep.subr.bf16.mxu0 %v664
  %764 = vmatpush1.bf16.msra.mxu0 %v663
  %765 = vmatprep.subr.bf16.mxu0 %v668
  %766 = vmatpush1.bf16.msra.mxu0 %v667
  %767 = vmatprep.mubr.bf16.mxu0 %v81
  %768 = vmatmul.mubr.bf16.gmra.mrb[0].mxu0 %v80
  %v769 = vpop.f32.mrb[0].mxu0
  %v770 = vadd.f32 %v398, %v769
  %v771 = vpop.f32.mrb[0].mxu0
  %v772 = vadd.f32 %v402, %v771
  %v773 = vpop.f32.mrb[0].mxu0
  %v774 = vpop.f32.mrb[0].mxu0
  %775 = vdwg.mxu0
  %776 = vmatprep.subr.bf16.mxu0 %v610
  %777 = vmatpush1.bf16.msra.mxu0 %v609
  %778 = vmatprep.subr.bf16.mxu0 %v614
  %779 = vmatpush1.bf16.msra.mxu0 %v613
  %780 = vmatprep.subr.bf16.mxu0 %v618
  %781 = vmatpush1.bf16.msra.mxu0 %v617
  %782 = vmatprep.subr.bf16.mxu0 %v622
  %783 = vmatpush1.bf16.msra.mxu0 %v621
  %784 = vmatprep.subr.bf16.mxu0 %v626
  %785 = vmatpush1.bf16.msra.mxu0 %v625
  %786 = vmatprep.subr.bf16.mxu0 %v630
  %787 = vmatpush1.bf16.msra.mxu0 %v629
  %788 = vmatprep.subr.bf16.mxu0 %v634
  %789 = vmatpush1.bf16.msra.mxu0 %v633
  %790 = vmatprep.subr.bf16.mxu0 %v638
  %791 = vmatpush1.bf16.msra.mxu0 %v637
  %792 = vmatprep.subr.bf16.mxu0 %v642
  %793 = vmatpush1.bf16.msra.mxu0 %v641
  %794 = vmatprep.subr.bf16.mxu0 %v646
  %795 = vmatpush1.bf16.msra.mxu0 %v645
  %796 = vmatprep.subr.bf16.mxu0 %v650
  %797 = vmatpush1.bf16.msra.mxu0 %v649
  %798 = vmatprep.subr.bf16.mxu0 %v654
  %799 = vmatpush1.bf16.msra.mxu0 %v653
  %800 = vmatprep.subr.bf16.mxu0 %v658
  %801 = vmatpush1.bf16.msra.mxu0 %v657
  %802 = vmatprep.subr.bf16.mxu0 %v662
  %803 = vmatpush1.bf16.msra.mxu0 %v661
  %804 = vmatprep.subr.bf16.mxu0 %v666
  %805 = vmatpush1.bf16.msra.mxu0 %v665
  %806 = vmatprep.subr.bf16.mxu0 %v670
  %807 = vmatpush1.bf16.msra.mxu0 %v669
  %808 = vmatprep.mubr.bf16.mxu0 %v81
  %809 = vmatmul.mubr.bf16.gmra.mrb[0].mxu0 %v80
  %v810 = vpop.f32.mrb[0].mxu0
  %v811 = vadd.f32 %v406, %v810
  %v812 = vpop.f32.mrb[0].mxu0
  %v813 = vadd.f32 %v410, %v812
  %v814 = vpop.f32.mrb[0].mxu0
  %v815 = vpop.f32.mrb[0].mxu0
  %816 = vdwg.mxu0
  %v817 = vpack.c.bf16 %v770, %v770
  %v818 = vpack.c.bf16 %v772, %v772
  %v819 = vpack.c.bf16 %v811, %v811
  %v820 = vpack.c.bf16 %v813, %v813
  %v821 = vlaneseq
  %v822 = vshrl.u32 %v821, 7
  %vm823 = vcmp.ge.s32.totalorder %v822, 4
  %v824 = vlaneseq
  %v825 = vand.u32 %v824, 127
  %vm826 = vcmp.ge.s32.totalorder %v825, 4
  %vm827 = vmxor %vm823, %vm826
  %vm828 = vcmask 523264
  %v830 = vsel %vm828, %v327, 0
  %v833 = vsel %vm828, %v817, 0
  %835 = vmatprep.subr.bf16.mxu0 0
  %836 = vmatpush1.bf16.xpose.msra.mxu0 %v833
  %837 = vmatprep.subr.bf16.mxu0 0
  %838 = vmatpush1.bf16.xpose.msra.mxu0 0
  %839 = vmatprep.subr.bf16.mxu0 0
  %840 = vmatpush1.bf16.xpose.msra.mxu0 0
  %841 = vmatprep.subr.bf16.mxu0 0
  %842 = vmatpush1.bf16.xpose.msra.mxu0 0
  %843 = vmatprep.subr.bf16.mxu0 0
  %844 = vmatpush1.bf16.xpose.msra.mxu0 0
  %845 = vmatprep.subr.bf16.mxu0 0
  %846 = vmatpush1.bf16.xpose.msra.mxu0 0
  %847 = vmatprep.subr.bf16.mxu0 0
  %848 = vmatpush1.bf16.xpose.msra.mxu0 0
  %849 = vmatprep.subr.bf16.mxu0 0
  %850 = vmatpush1.bf16.xpose.msra.mxu0 0
  %851 = vmatprep.subr.bf16.mxu0 0
  %852 = vmatpush1.bf16.xpose.msra.mxu0 0
  %853 = vmatprep.subr.bf16.mxu0 0
  %854 = vmatpush1.bf16.xpose.msra.mxu0 0
  %855 = vmatprep.subr.bf16.mxu0 0
  %856 = vmatpush1.bf16.xpose.msra.mxu0 0
  %857 = vmatprep.subr.bf16.mxu0 0
  %858 = vmatpush1.bf16.xpose.msra.mxu0 0
  %859 = vmatprep.subr.bf16.mxu0 0
  %860 = vmatpush1.bf16.xpose.msra.mxu0 0
  %861 = vmatprep.subr.bf16.mxu0 0
  %862 = vmatpush1.bf16.xpose.msra.mxu0 0
  %863 = vmatprep.subr.bf16.mxu0 0
  %864 = vmatpush1.bf16.xpose.msra.mxu0 0
  %865 = vmatprep.subr.bf16.mxu0 0
  %866 = vmatpush1.bf16.xpose.msra.mxu0 0
  %867 = vmatprep.mubr.bf16.mxu0 0
  %868 = vmatmul.mubr.bf16.gmra.mrb[0].mxu0 %v830
  %v869 = vpop.f32.mrb[0].mxu0
  %v870 = vadd.f32 0.0, %v869
  %v871 = vpop.f32.mrb[0].mxu0
  %v872 = vpop.f32.mrb[0].mxu0
  %v873 = vpop.f32.mrb[0].mxu0
  %874 = vdwg.mxu0
  %v875 = vsel %vm827, %v870, -1e+30
  %vm876 = vcmask 64512
  %v877 = vsel %vm876, %v875, -inf
  %878 = vmax.xlane.f32.xlu0 %v877
  %v879 = vpop.xlane.xlu0 %878
  %v880 = vsub.f32 %v875, %v879
  %v881 = vmul.f32 %v880, 1.442695
  %v882 = vpow.pop %v881
  %v883 = vsel %vm876, %v882, 0.0
  %884 = vadd.xlane.f32.xlu0 %v883
  %v885 = vpop.xlane.xlu0 %884
  %v886 = vrcp.pop %v885
  %v887 = vmul.f32 %v882, %v886
  %v888 = vpack.c.bf16 %v887, %v887
  %v890 = vsel %vm876, %v888, 0
  %vm892 = vcmask 1043456
  %v894 = vsel %vm892, %v819, 0
  %896 = vmatprep.subr.bf16.mxu0 0
  %897 = vmatpush1.bf16.msra.mxu0 %v894
  %898 = vmatprep.subr.bf16.mxu0 0
  %899 = vmatpush1.bf16.msra.mxu0 0
  %900 = vmatprep.subr.bf16.mxu0 0
  %901 = vmatpush1.bf16.msra.mxu0 0
  %902 = vmatprep.subr.bf16.mxu0 0
  %903 = vmatpush1.bf16.msra.mxu0 0
  %904 = vmatprep.subr.bf16.mxu0 0
  %905 = vmatpush1.bf16.msra.mxu0 0
  %906 = vmatprep.subr.bf16.mxu0 0
  %907 = vmatpush1.bf16.msra.mxu0 0
  %908 = vmatprep.subr.bf16.mxu0 0
  %909 = vmatpush1.bf16.msra.mxu0 0
  %910 = vmatprep.subr.bf16.mxu0 0
  %911 = vmatpush1.bf16.msra.mxu0 0
  %912 = vmatprep.subr.bf16.mxu0 0
  %913 = vmatpush1.bf16.msra.mxu0 0
  %914 = vmatprep.subr.bf16.mxu0 0
  %915 = vmatpush1.bf16.msra.mxu0 0
  %916 = vmatprep.subr.bf16.mxu0 0
  %917 = vmatpush1.bf16.msra.mxu0 0
  %918 = vmatprep.subr.bf16.mxu0 0
  %919 = vmatpush1.bf16.msra.mxu0 0
  %920 = vmatprep.subr.bf16.mxu0 0
  %921 = vmatpush1.bf16.msra.mxu0 0
  %922 = vmatprep.subr.bf16.mxu0 0
  %923 = vmatpush1.bf16.msra.mxu0 0
  %924 = vmatprep.subr.bf16.mxu0 0
  %925 = vmatpush1.bf16.msra.mxu0 0
  %926 = vmatprep.subr.bf16.mxu0 0
  %927 = vmatpush1.bf16.msra.mxu0 0
  %928 = vmatprep.mubr.bf16.mxu0 0
  %929 = vmatmul.mubr.bf16.gmra.mrb[0].mxu0 %v890
  %v930 = vpop.f32.mrb[0].mxu0
  %v931 = vadd.f32 0.0, %v930
  %v932 = vpop.f32.mrb[0].mxu0
  %v933 = vpop.f32.mrb[0].mxu0
  %v934 = vpop.f32.mrb[0].mxu0
  %935 = vdwg.mxu0
  %v936 = vpack.c.bf16 %v931, %v931
  %vm937 = vcmask 519168
  %938 = vst.msk [vmem:[#allocation2] sm:$0xf] %vm937, %v936
  %940 = vrot.lane.b32.xlu0 %v327, 64
  %v941 = vpop.permute.xlu0 %940
  %943 = vrot.lane.b32.xlu0 %v817, 64
  %v944 = vpop.permute.xlu0 %943
  %v946 = vsel %vm828, %v941, 0
  %v949 = vsel %vm828, %v944, 0
  %951 = vmatprep.subr.bf16.mxu0 0
  %952 = vmatpush1.bf16.xpose.msra.mxu0 %v949
  %953 = vmatprep.subr.bf16.mxu0 0
  %954 = vmatpush1.bf16.xpose.msra.mxu0 0
  %955 = vmatprep.subr.bf16.mxu0 0
  %956 = vmatpush1.bf16.xpose.msra.mxu0 0
  %957 = vmatprep.subr.bf16.mxu0 0
  %958 = vmatpush1.bf16.xpose.msra.mxu0 0
  %959 = vmatprep.subr.bf16.mxu0 0
  %960 = vmatpush1.bf16.xpose.msra.mxu0 0
  %961 = vmatprep.subr.bf16.mxu0 0
  %962 = vmatpush1.bf16.xpose.msra.mxu0 0
  %963 = vmatprep.subr.bf16.mxu0 0
  %964 = vmatpush1.bf16.xpose.msra.mxu0 0
  %965 = vmatprep.subr.bf16.mxu0 0
  %966 = vmatpush1.bf16.xpose.msra.mxu0 0
  %967 = vmatprep.subr.bf16.mxu0 0
  %968 = vmatpush1.bf16.xpose.msra.mxu0 0
  %969 = vmatprep.subr.bf16.mxu0 0
  %970 = vmatpush1.bf16.xpose.msra.mxu0 0
  %971 = vmatprep.subr.bf16.mxu0 0
  %972 = vmatpush1.bf16.xpose.msra.mxu0 0
  %973 = vmatprep.subr.bf16.mxu0 0
  %974 = vmatpush1.bf16.xpose.msra.mxu0 0
  %975 = vmatprep.subr.bf16.mxu0 0
  %976 = vmatpush1.bf16.xpose.msra.mxu0 0
  %977 = vmatprep.subr.bf16.mxu0 0
  %978 = vmatpush1.bf16.xpose.msra.mxu0 0
  %979 = vmatprep.subr.bf16.mxu0 0
  %980 = vmatpush1.bf16.xpose.msra.mxu0 0
  %981 = vmatprep.subr.bf16.mxu0 0
  %982 = vmatpush1.bf16.xpose.msra.mxu0 0
  %983 = vmatprep.mubr.bf16.mxu0 0
  %984 = vmatmul.mubr.bf16.gmra.mrb[0].mxu0 %v946
  %v985 = vpop.f32.mrb[0].mxu0
  %v986 = vadd.f32 0.0, %v985
  %v987 = vpop.f32.mrb[0].mxu0
  %v988 = vpop.f32.mrb[0].mxu0
  %v989 = vpop.f32.mrb[0].mxu0
  %990 = vdwg.mxu0
  %v991 = vsel %vm827, %v986, -1e+30
  %v992 = vsel %vm876, %v991, -inf
  %993 = vmax.xlane.f32.xlu0 %v992
  %v994 = vpop.xlane.xlu0 %993
  %v995 = vsub.f32 %v991, %v994
  %v996 = vmul.f32 %v995, 1.442695
  %v997 = vpow.pop %v996
  %v998 = vsel %vm876, %v997, 0.0
  %999 = vadd.xlane.f32.xlu0 %v998
  %v1000 = vpop.xlane.xlu0 %999
  %v1001 = vrcp.pop %v1000
  %v1002 = vmul.f32 %v997, %v1001
  %v1003 = vpack.c.bf16 %v1002, %v1002
  %1005 = vrot.lane.b32.xlu0 %v819, 64
  %v1006 = vpop.permute.xlu0 %1005
  %v1008 = vsel %vm876, %v1003, 0
  %v1011 = vsel %vm892, %v1006, 0
  %1013 = vmatprep.subr.bf16.mxu0 0
  %1014 = vmatpush1.bf16.msra.mxu0 %v1011
  %1015 = vmatprep.subr.bf16.mxu0 0
  %1016 = vmatpush1.bf16.msra.mxu0 0
  %1017 = vmatprep.subr.bf16.mxu0 0
  %1018 = vmatpush1.bf16.msra.mxu0 0
  %1019 = vmatprep.subr.bf16.mxu0 0
  %1020 = vmatpush1.bf16.msra.mxu0 0
  %1021 = vmatprep.subr.bf16.mxu0 0
  %1022 = vmatpush1.bf16.msra.mxu0 0
  %1023 = vmatprep.subr.bf16.mxu0 0
  %1024 = vmatpush1.bf16.msra.mxu0 0
  %1025 = vmatprep.subr.bf16.mxu0 0
  %1026 = vmatpush1.bf16.msra.mxu0 0
  %1027 = vmatprep.subr.bf16.mxu0 0
  %1028 = vmatpush1.bf16.msra.mxu0 0
  %1029 = vmatprep.subr.bf16.mxu0 0
  %1030 = vmatpush1.bf16.msra.mxu0 0
  %1031 = vmatprep.subr.bf16.mxu0 0
  %1032 = vmatpush1.bf16.msra.mxu0 0
  %1033 = vmatprep.subr.bf16.mxu0 0
  %1034 = vmatpush1.bf16.msra.mxu0 0
  %1035 = vmatprep.subr.bf16.mxu0 0
  %1036 = vmatpush1.bf16.msra.mxu0 0
  %1037 = vmatprep.subr.bf16.mxu0 0
  %1038 = vmatpush1.bf16.msra.mxu0 0
  %1039 = vmatprep.subr.bf16.mxu0 0
  %1040 = vmatpush1.bf16.msra.mxu0 0
  %1041 = vmatprep.subr.bf16.mxu0 0
  %1042 = vmatpush1.bf16.msra.mxu0 0
  %1043 = vmatprep.subr.bf16.mxu0 0
  %1044 = vmatpush1.bf16.msra.mxu0 0
  %1045 = vmatprep.mubr.bf16.mxu0 0
  %1046 = vmatmul.mubr.bf16.gmra.mrb[0].mxu0 %v1008
  %v1047 = vpop.f32.mrb[0].mxu0
  %v1048 = vadd.f32 0.0, %v1047
  %v1049 = vpop.f32.mrb[0].mxu0
  %v1050 = vpop.f32.mrb[0].mxu0
  %v1051 = vpop.f32.mrb[0].mxu0
  %1052 = vdwg.mxu0
  %v1053 = vpack.c.bf16 %v1048, %v1048
  %v1055 = vunpack.c.l.b16 %v1053
  %v1056 = vpack.c.b16 %v1055, %v1055
  %1057 = vrot.lane.b32.xlu0 %v1056, 64
  %v1058 = vpop.permute.xlu0 %1057
  %vm1060 = vcmask 1043968
  %1061 = vst.msk [vmem:[#allocation2] sm:$0xf] %vm1060, %v1058
  %v1063 = vsel %vm828, %v328, 0
  %v1066 = vsel %vm828, %v818, 0
  %1068 = vmatprep.subr.bf16.mxu0 0
  %1069 = vmatpush1.bf16.xpose.msra.mxu0 %v1066
  %1070 = vmatprep.subr.bf16.mxu0 0
  %1071 = vmatpush1.bf16.xpose.msra.mxu0 0
  %1072 = vmatprep.subr.bf16.mxu0 0
  %1073 = vmatpush1.bf16.xpose.msra.mxu0 0
  %1074 = vmatprep.subr.bf16.mxu0 0
  %1075 = vmatpush1.bf16.xpose.msra.mxu0 0
  %1076 = vmatprep.subr.bf16.mxu0 0
  %1077 = vmatpush1.bf16.xpose.msra.mxu0 0
  %1078 = vmatprep.subr.bf16.mxu0 0
  %1079 = vmatpush1.bf16.xpose.msra.mxu0 0
  %1080 = vmatprep.subr.bf16.mxu0 0
  %1081 = vmatpush1.bf16.xpose.msra.mxu0 0
  %1082 = vmatprep.subr.bf16.mxu0 0
  %1083 = vmatpush1.bf16.xpose.msra.mxu0 0
  %1084 = vmatprep.subr.bf16.mxu0 0
  %1085 = vmatpush1.bf16.xpose.msra.mxu0 0
  %1086 = vmatprep.subr.bf16.mxu0 0
  %1087 = vmatpush1.bf16.xpose.msra.mxu0 0
  %1088 = vmatprep.subr.bf16.mxu0 0
  %1089 = vmatpush1.bf16.xpose.msra.mxu0 0
  %1090 = vmatprep.subr.bf16.mxu0 0
  %1091 = vmatpush1.bf16.xpose.msra.mxu0 0
  %1092 = vmatprep.subr.bf16.mxu0 0
  %1093 = vmatpush1.bf16.xpose.msra.mxu0 0
  %1094 = vmatprep.subr.bf16.mxu0 0
  %1095 = vmatpush1.bf16.xpose.msra.mxu0 0
  %1096 = vmatprep.subr.bf16.mxu0 0
  %1097 = vmatpush1.bf16.xpose.msra.mxu0 0
  %1098 = vmatprep.subr.bf16.mxu0 0
  %1099 = vmatpush1.bf16.xpose.msra.mxu0 0
  %1100 = vmatprep.mubr.bf16.mxu0 0
  %1101 = vmatmul.mubr.bf16.gmra.mrb[0].mxu0 %v1063
  %v1102 = vpop.f32.mrb[0].mxu0
  %v1103 = vadd.f32 0.0, %v1102
  %v1104 = vpop.f32.mrb[0].mxu0
  %v1105 = vpop.f32.mrb[0].mxu0
  %v1106 = vpop.f32.mrb[0].mxu0
  %1107 = vdwg.mxu0
  %v1108 = vsel %vm827, %v1103, -1e+30
  %v1109 = vsel %vm876, %v1108, -inf
  %1110 = vmax.xlane.f32.xlu0 %v1109
  %v1111 = vpop.xlane.xlu0 %1110
  %v1112 = vsub.f32 %v1108, %v1111
  %v1113 = vmul.f32 %v1112, 1.442695
  %v1114 = vpow.pop %v1113
  %v1115 = vsel %vm876, %v1114, 0.0
  %1116 = vadd.xlane.f32.xlu0 %v1115
  %v1117 = vpop.xlane.xlu0 %1116
  %v1118 = vrcp.pop %v1117
  %v1119 = vmul.f32 %v1114, %v1118
  %v1120 = vpack.c.bf16 %v1119, %v1119
  %v1122 = vsel %vm876, %v1120, 0
  %v1125 = vsel %vm892, %v820, 0
  %1127 = vmatprep.subr.bf16.mxu0 0
  %1128 = vmatpush1.bf16.msra.mxu0 %v1125
  %1129 = vmatprep.subr.bf16.mxu0 0
  %1130 = vmatpush1.bf16.msra.mxu0 0
  %1131 = vmatprep.subr.bf16.mxu0 0
  %1132 = vmatpush1.bf16.msra.mxu0 0
  %1133 = vmatprep.subr.bf16.mxu0 0
  %1134 = vmatpush1.bf16.msra.mxu0 0
  %1135 = vmatprep.subr.bf16.mxu0 0
  %1136 = vmatpush1.bf16.msra.mxu0 0
  %1137 = vmatprep.subr.bf16.mxu0 0
  %1138 = vmatpush1.bf16.msra.mxu0 0
  %1139 = vmatprep.subr.bf16.mxu0 0
  %1140 = vmatpush1.bf16.msra.mxu0 0
  %1141 = vmatprep.subr.bf16.mxu0 0
  %1142 = vmatpush1.bf16.msra.mxu0 0
  %1143 = vmatprep.subr.bf16.mxu0 0
  %1144 = vmatpush1.bf16.msra.mxu0 0
  %1145 = vmatprep.subr.bf16.mxu0 0
  %1146 = vmatpush1.bf16.msra.mxu0 0
  %1147 = vmatprep.subr.bf16.mxu0 0
  %1148 = vmatpush1.bf16.msra.mxu0 0
  %1149 = vmatprep.subr.bf16.mxu0 0
  %1150 = vmatpush1.bf16.msra.mxu0 0
  %1151 = vmatprep.subr.bf16.mxu0 0
  %1152 = vmatpush1.bf16.msra.mxu0 0
  %1153 = vmatprep.subr.bf16.mxu0 0
  %1154 = vmatpush1.bf16.msra.mxu0 0
  %1155 = vmatprep.subr.bf16.mxu0 0
  %1156 = vmatpush1.bf16.msra.mxu0 0
  %1157 = vmatprep.subr.bf16.mxu0 0
  %1158 = vmatpush1.bf16.msra.mxu0 0
  %1159 = vmatprep.mubr.bf16.mxu0 0
  %1160 = vmatmul.mubr.bf16.gmra.mrb[0].mxu0 %v1122
  %v1161 = vpop.f32.mrb[0].mxu0
  %v1162 = vadd.f32 0.0, %v1161
  %v1163 = vpop.f32.mrb[0].mxu0
  %v1164 = vpop.f32.mrb[0].mxu0
  %v1165 = vpop.f32.mrb[0].mxu0
  %1166 = vdwg.mxu0
  %v1167 = vpack.c.bf16 %v1162, %v1162
  %1168 = vst.msk [vmem:[#allocation2 + $0x4] sm:$0xf] %vm937, %v1167
  %1170 = vrot.lane.b32.xlu0 %v328, 64
  %v1171 = vpop.permute.xlu0 %1170
  %1173 = vrot.lane.b32.xlu0 %v818, 64
  %v1174 = vpop.permute.xlu0 %1173
  %v1176 = vsel %vm828, %v1171, 0
  %v1179 = vsel %vm828, %v1174, 0
  %1181 = vmatprep.subr.bf16.mxu0 0
  %1182 = vmatpush1.bf16.xpose.msra.mxu0 %v1179
  %1183 = vmatprep.subr.bf16.mxu0 0
  %1184 = vmatpush1.bf16.xpose.msra.mxu0 0
  %1185 = vmatprep.subr.bf16.mxu0 0
  %1186 = vmatpush1.bf16.xpose.msra.mxu0 0
  %1187 = vmatprep.subr.bf16.mxu0 0
  %1188 = vmatpush1.bf16.xpose.msra.mxu0 0
  %1189 = vmatprep.subr.bf16.mxu0 0
  %1190 = vmatpush1.bf16.xpose.msra.mxu0 0
  %1191 = vmatprep.subr.bf16.mxu0 0
  %1192 = vmatpush1.bf16.xpose.msra.mxu0 0
  %1193 = vmatprep.subr.bf16.mxu0 0
  %1194 = vmatpush1.bf16.xpose.msra.mxu0 0
  %1195 = vmatprep.subr.bf16.mxu0 0
  %1196 = vmatpush1.bf16.xpose.msra.mxu0 0
  %1197 = vmatprep.subr.bf16.mxu0 0
  %1198 = vmatpush1.bf16.xpose.msra.mxu0 0
  %1199 = vmatprep.subr.bf16.mxu0 0
  %1200 = vmatpush1.bf16.xpose.msra.mxu0 0
  %1201 = vmatprep.subr.bf16.mxu0 0
  %1202 = vmatpush1.bf16.xpose.msra.mxu0 0
  %1203 = vmatprep.subr.bf16.mxu0 0
  %1204 = vmatpush1.bf16.xpose.msra.mxu0 0
  %1205 = vmatprep.subr.bf16.mxu0 0
  %1206 = vmatpush1.bf16.xpose.msra.mxu0 0
  %1207 = vmatprep.subr.bf16.mxu0 0
  %1208 = vmatpush1.bf16.xpose.msra.mxu0 0
  %1209 = vmatprep.subr.bf16.mxu0 0
  %1210 = vmatpush1.bf16.xpose.msra.mxu0 0
  %1211 = vmatprep.subr.bf16.mxu0 0
  %1212 = vmatpush1.bf16.xpose.msra.mxu0 0
  %1213 = vmatprep.mubr.bf16.mxu0 0
  %1214 = vmatmul.mubr.bf16.gmra.mrb[0].mxu0 %v1176
  %v1215 = vpop.f32.mrb[0].mxu0
  %v1216 = vadd.f32 0.0, %v1215
  %v1217 = vpop.f32.mrb[0].mxu0
  %v1218 = vpop.f32.mrb[0].mxu0
  %v1219 = vpop.f32.mrb[0].mxu0
  %1220 = vdwg.mxu0
  %v1221 = vsel %vm827, %v1216, -1e+30
  %v1222 = vsel %vm876, %v1221, -inf
  %1223 = vmax.xlane.f32.xlu0 %v1222
  %v1224 = vpop.xlane.xlu0 %1223
  %v1225 = vsub.f32 %v1221, %v1224
  %v1226 = vmul.f32 %v1225, 1.442695
  %v1227 = vpow.pop %v1226
  %v1228 = vsel %vm876, %v1227, 0.0
  %1229 = vadd.xlane.f32.xlu0 %v1228
  %v1230 = vpop.xlane.xlu0 %1229
  %v1231 = vrcp.pop %v1230
  %v1232 = vmul.f32 %v1227, %v1231
  %v1233 = vpack.c.bf16 %v1232, %v1232
  %1235 = vrot.lane.b32.xlu0 %v820, 64
  %v1236 = vpop.permute.xlu0 %1235
  %v1238 = vsel %vm876, %v1233, 0
  %v1241 = vsel %vm892, %v1236, 0
  %1243 = vmatprep.subr.bf16.mxu0 0
  %1244 = vmatpush1.bf16.msra.mxu0 %v1241
  %1245 = vmatprep.subr.bf16.mxu0 0
  %1246 = vmatpush1.bf16.msra.mxu0 0
  %1247 = vmatprep.subr.bf16.mxu0 0
  %1248 = vmatpush1.bf16.msra.mxu0 0
  %1249 = vmatprep.subr.bf16.mxu0 0
  %1250 = vmatpush1.bf16.msra.mxu0 0
  %1251 = vmatprep.subr.bf16.mxu0 0
  %1252 = vmatpush1.bf16.msra.mxu0 0
  %1253 = vmatprep.subr.bf16.mxu0 0
  %1254 = vmatpush1.bf16.msra.mxu0 0
  %1255 = vmatprep.subr.bf16.mxu0 0
  %1256 = vmatpush1.bf16.msra.mxu0 0
  %1257 = vmatprep.subr.bf16.mxu0 0
  %1258 = vmatpush1.bf16.msra.mxu0 0
  %1259 = vmatprep.subr.bf16.mxu0 0
  %1260 = vmatpush1.bf16.msra.mxu0 0
  %1261 = vmatprep.subr.bf16.mxu0 0
  %1262 = vmatpush1.bf16.msra.mxu0 0
  %1263 = vmatprep.subr.bf16.mxu0 0
  %1264 = vmatpush1.bf16.msra.mxu0 0
  %1265 = vmatprep.subr.bf16.mxu0 0
  %1266 = vmatpush1.bf16.msra.mxu0 0
  %1267 = vmatprep.subr.bf16.mxu0 0
  %1268 = vmatpush1.bf16.msra.mxu0 0
  %1269 = vmatprep.subr.bf16.mxu0 0
  %1270 = vmatpush1.bf16.msra.mxu0 0
  %1271 = vmatprep.subr.bf16.mxu0 0
  %1272 = vmatpush1.bf16.msra.mxu0 0
  %1273 = vmatprep.subr.bf16.mxu0 0
  %1274 = vmatpush1.bf16.msra.mxu0 0
  %1275 = vmatprep.mubr.bf16.mxu0 0
  %1276 = vmatmul.mubr.bf16.gmra.mrb[0].mxu0 %v1238
  %v1277 = vpop.f32.mrb[0].mxu0
  %v1278 = vadd.f32 0.0, %v1277
  %v1279 = vpop.f32.mrb[0].mxu0
  %v1280 = vpop.f32.mrb[0].mxu0
  %v1281 = vpop.f32.mrb[0].mxu0
  %1282 = vdwg.mxu0
  %v1283 = vpack.c.bf16 %v1278, %v1278
  %v1285 = vunpack.c.l.b16 %v1283
  %v1286 = vpack.c.b16 %v1285, %v1285
  %1287 = vrot.lane.b32.xlu0 %v1286, 64
  %v1288 = vpop.permute.xlu0 %1287
  %1290 = vst.msk [vmem:[#allocation2 + $0x4] sm:$0xf] %vm1060, %v1288
  %v1291 = vld [vmem:[#allocation2] sm:$0xff]
  %v1292 = vld [vmem:[%s6] sm:$0xff]
  %v1293 = vld [vmem:[%s6 + $0x8] sm:$0xff]
  %v1294 = vld [vmem:[%s6 + $0x10] sm:$0xff]
  %v1295 = vld [vmem:[%s6 + $0x18] sm:$0xff]
  %v1296 = vld [vmem:[%s6 + $0x20] sm:$0xff]
  %v1297 = vld [vmem:[%s6 + $0x28] sm:$0xff]
  %v1298 = vld [vmem:[%s6 + $0x30] sm:$0xff]
  %v1299 = vld [vmem:[%s6 + $0x38] sm:$0xff]
  %v1300 = vld [vmem:[%s6 + $0x40] sm:$0xff]
  %v1301 = vld [vmem:[%s6 + $0x48] sm:$0xff]
  %v1302 = vld [vmem:[%s6 + $0x50] sm:$0xff]
  %v1303 = vld [vmem:[%s6 + $0x58] sm:$0xff]
  %v1304 = vld [vmem:[%s6 + $0x60] sm:$0xff]
  %v1305 = vld [vmem:[%s6 + $0x68] sm:$0xff]
  %v1306 = vld [vmem:[%s6 + $0x70] sm:$0xff]
  %v1307 = vld [vmem:[%s6 + $0x78] sm:$0xff]
  %v1308 = vld [vmem:[%s6 + $0x80] sm:$0xff]
  %v1309 = vld [vmem:[%s6 + $0x88] sm:$0xff]
  %v1310 = vld [vmem:[%s6 + $0x90] sm:$0xff]
  %v1311 = vld [vmem:[%s6 + $0x98] sm:$0xff]
  %v1312 = vld [vmem:[%s6 + $0xa0] sm:$0xff]
  %v1313 = vld [vmem:[%s6 + $0xa8] sm:$0xff]
  %v1314 = vld [vmem:[%s6 + $0xb0] sm:$0xff]
  %v1315 = vld [vmem:[%s6 + $0xb8] sm:$0xff]
  %v1316 = vld [vmem:[%s6 + $0xc0] sm:$0xff]
  %v1317 = vld [vmem:[%s6 + $0xc8] sm:$0xff]
  %v1318 = vld [vmem:[%s6 + $0xd0] sm:$0xff]
  %v1319 = vld [vmem:[%s6 + $0xd8] sm:$0xff]
  %v1320 = vld [vmem:[%s6 + $0xe0] sm:$0xff]
  %v1321 = vld [vmem:[%s6 + $0xe8] sm:$0xff]
  %v1322 = vld [vmem:[%s6 + $0xf0] sm:$0xff]
  %v1323 = vld [vmem:[%s6 + $0xf8] sm:$0xff]
  %v1324 = vld [vmem:[%s7] sm:$0x3]
  %v1326 = vlaneseq
  %v1327 = vshrl.u32 %v1326, 7
  %v1328 = vsub.s32 0, %v1327
  %v1329 = vrot.slane %v1324, %v1328
  %v1330 = vlaneseq
  %v1331 = vshrl.u32 %v1330, 7
  %v1332 = vsub.s32 1, %v1331
  %v1333 = vrot.slane %v1324, %v1332
  %v1337 = vunpack.c.l.b16 %v1291
  %v1338 = vunpack.c.h.b16 %v1291
  %v1339 = vpack.c.b16 %v1337, %v1337
  %v1340 = vpack.c.b16 %v1338, %v1338
  %v1375 = vunpack.c.l.b16 %v1292
  %v1376 = vunpack.c.h.b16 %v1292
  %v1377 = vunpack.c.l.b16 %v1293
  %v1378 = vunpack.c.h.b16 %v1293
  %v1379 = vunpack.c.l.b16 %v1294
  %v1380 = vunpack.c.h.b16 %v1294
  %v1381 = vunpack.c.l.b16 %v1295
  %v1382 = vunpack.c.h.b16 %v1295
  %v1383 = vunpack.c.l.b16 %v1296
  %v1384 = vunpack.c.h.b16 %v1296
  %v1385 = vunpack.c.l.b16 %v1297
  %v1386 = vunpack.c.h.b16 %v1297
  %v1387 = vunpack.c.l.b16 %v1298
  %v1388 = vunpack.c.h.b16 %v1298
  %v1389 = vunpack.c.l.b16 %v1299
  %v1390 = vunpack.c.h.b16 %v1299
  %v1391 = vunpack.c.l.b16 %v1300
  %v1392 = vunpack.c.h.b16 %v1300
  %v1393 = vunpack.c.l.b16 %v1301
  %v1394 = vunpack.c.h.b16 %v1301
  %v1395 = vunpack.c.l.b16 %v1302
  %v1396 = vunpack.c.h.b16 %v1302
  %v1397 = vunpack.c.l.b16 %v1303
  %v1398 = vunpack.c.h.b16 %v1303
  %v1399 = vunpack.c.l.b16 %v1304
  %v1400 = vunpack.c.h.b16 %v1304
  %v1401 = vunpack.c.l.b16 %v1305
  %v1402 = vunpack.c.h.b16 %v1305
  %v1403 = vunpack.c.l.b16 %v1306
  %v1404 = vunpack.c.h.b16 %v1306
  %v1405 = vunpack.c.l.b16 %v1307
  %v1406 = vunpack.c.h.b16 %v1307
  %v1407 = vunpack.c.l.b16 %v1308
  %v1408 = vunpack.c.h.b16 %v1308
  %v1409 = vunpack.c.l.b16 %v1309
  %v1410 = vunpack.c.h.b16 %v1309
  %v1411 = vunpack.c.l.b16 %v1310
  %v1412 = vunpack.c.h.b16 %v1310
  %v1413 = vunpack.c.l.b16 %v1311
  %v1414 = vunpack.c.h.b16 %v1311
  %v1415 = vunpack.c.l.b16 %v1312
  %v1416 = vunpack.c.h.b16 %v1312
  %v1417 = vunpack.c.l.b16 %v1313
  %v1418 = vunpack.c.h.b16 %v1313
  %v1419 = vunpack.c.l.b16 %v1314
  %v1420 = vunpack.c.h.b16 %v1314
  %v1421 = vunpack.c.l.b16 %v1315
  %v1422 = vunpack.c.h.b16 %v1315
  %v1423 = vunpack.c.l.b16 %v1316
  %v1424 = vunpack.c.h.b16 %v1316
  %v1425 = vunpack.c.l.b16 %v1317
  %v1426 = vunpack.c.h.b16 %v1317
  %v1427 = vunpack.c.l.b16 %v1318
  %v1428 = vunpack.c.h.b16 %v1318
  %v1429 = vunpack.c.l.b16 %v1319
  %v1430 = vunpack.c.h.b16 %v1319
  %v1431 = vunpack.c.l.b16 %v1320
  %v1432 = vunpack.c.h.b16 %v1320
  %v1433 = vunpack.c.l.b16 %v1321
  %v1434 = vunpack.c.h.b16 %v1321
  %v1435 = vunpack.c.l.b16 %v1322
  %v1436 = vunpack.c.h.b16 %v1322
  %v1437 = vunpack.c.l.b16 %v1323
  %v1438 = vunpack.c.h.b16 %v1323
  %v1439 = vpack.c.b16 %v1377, %v1375
  %v1440 = vpack.c.b16 %v1378, %v1376
  %v1441 = vpack.c.b16 %v1381, %v1379
  %v1442 = vpack.c.b16 %v1382, %v1380
  %v1443 = vpack.c.b16 %v1385, %v1383
  %v1444 = vpack.c.b16 %v1386, %v1384
  %v1445 = vpack.c.b16 %v1389, %v1387
  %v1446 = vpack.c.b16 %v1390, %v1388
  %v1447 = vpack.c.b16 %v1393, %v1391
  %v1448 = vpack.c.b16 %v1394, %v1392
  %v1449 = vpack.c.b16 %v1397, %v1395
  %v1450 = vpack.c.b16 %v1398, %v1396
  %v1451 = vpack.c.b16 %v1401, %v1399
  %v1452 = vpack.c.b16 %v1402, %v1400
  %v1453 = vpack.c.b16 %v1405, %v1403
  %v1454 = vpack.c.b16 %v1406, %v1404
  %v1455 = vpack.c.b16 %v1409, %v1407
  %v1456 = vpack.c.b16 %v1410, %v1408
  %v1457 = vpack.c.b16 %v1413, %v1411
  %v1458 = vpack.c.b16 %v1414, %v1412
  %v1459 = vpack.c.b16 %v1417, %v1415
  %v1460 = vpack.c.b16 %v1418, %v1416
  %v1461 = vpack.c.b16 %v1421, %v1419
  %v1462 = vpack.c.b16 %v1422, %v1420
  %v1463 = vpack.c.b16 %v1425, %v1423
  %v1464 = vpack.c.b16 %v1426, %v1424
  %v1465 = vpack.c.b16 %v1429, %v1427
  %v1466 = vpack.c.b16 %v1430, %v1428
  %v1467 = vpack.c.b16 %v1433, %v1431
  %v1468 = vpack.c.b16 %v1434, %v1432
  %v1469 = vpack.c.b16 %v1437, %v1435
  %v1470 = vpack.c.b16 %v1438, %v1436
  %1503 = vmatprep.subr.bf16.mxu0 %v1440
  %1504 = vmatpush1.bf16.msra.mxu0 %v1439
  %1505 = vmatprep.subr.bf16.mxu0 %v1442
  %1506 = vmatpush1.bf16.msra.mxu0 %v1441
  %1507 = vmatprep.subr.bf16.mxu0 %v1444
  %1508 = vmatpush1.bf16.msra.mxu0 %v1443
  %1509 = vmatprep.subr.bf16.mxu0 %v1446
  %1510 = vmatpush1.bf16.msra.mxu0 %v1445
  %1511 = vmatprep.subr.bf16.mxu0 %v1448
  %1512 = vmatpush1.bf16.msra.mxu0 %v1447
  %1513 = vmatprep.subr.bf16.mxu0 %v1450
  %1514 = vmatpush1.bf16.msra.mxu0 %v1449
  %1515 = vmatprep.subr.bf16.mxu0 %v1452
  %1516 = vmatpush1.bf16.msra.mxu0 %v1451
  %1517 = vmatprep.subr.bf16.mxu0 %v1454
  %1518 = vmatpush1.bf16.msra.mxu0 %v1453
  %1519 = vmatprep.subr.bf16.mxu0 %v1456
  %1520 = vmatpush1.bf16.msra.mxu0 %v1455
  %1521 = vmatprep.subr.bf16.mxu0 %v1458
  %1522 = vmatpush1.bf16.msra.mxu0 %v1457
  %1523 = vmatprep.subr.bf16.mxu0 %v1460
  %1524 = vmatpush1.bf16.msra.mxu0 %v1459
  %1525 = vmatprep.subr.bf16.mxu0 %v1462
  %1526 = vmatpush1.bf16.msra.mxu0 %v1461
  %1527 = vmatprep.subr.bf16.mxu0 %v1464
  %1528 = vmatpush1.bf16.msra.mxu0 %v1463
  %1529 = vmatprep.subr.bf16.mxu0 %v1466
  %1530 = vmatpush1.bf16.msra.mxu0 %v1465
  %1531 = vmatprep.subr.bf16.mxu0 %v1468
  %1532 = vmatpush1.bf16.msra.mxu0 %v1467
  %1533 = vmatprep.subr.bf16.mxu0 %v1470
  %1534 = vmatpush1.bf16.msra.mxu0 %v1469
  %1535 = vmatprep.mubr.bf16.mxu0 %v1340
  %1536 = vmatmul.mubr.bf16.gmra.mrb[0].mxu0 %v1339
  %v1537 = vpop.f32.mrb[0].mxu0
  %v1538 = vadd.f32 %v1329, %v1537
  %v1539 = vpop.f32.mrb[0].mxu0
  %v1540 = vadd.f32 %v1333, %v1539
  %v1541 = vpop.f32.mrb[0].mxu0
  %v1542 = vpop.f32.mrb[0].mxu0
  %1543 = vdwg.mxu0
  %v1544 = vmul.f32 %v78, 0.5
  %v1545 = vmul.f32 %v79, 0.5
  %v1546 = vmul.f32 %v1538, 0.5
  %v1547 = vmul.f32 %v1540, 0.5
  %v1548 = vadd.f32 %v1544, %v1546
  %v1549 = vadd.f32 %v1545, %v1547
  %v1551 = vcombine.high %v1548, %v1548
  %v1553 = vunpack.c.l.s4 1966171168
  %v1554 = vunpack.c.0.s8 %v1553
  %v1555 = vlaneseq
  %v1556 = vshrl.u32 %v1555, 7
  %v1557 = vsub.s32 %v1554, %v1556
  %v1558 = vrot.slane %v1548, %v1557
  %v1560 = vunpack.c.l.s4 1966171168
  %v1561 = vunpack.c.0.s8 %v1560
  %v1562 = vlaneseq
  %v1563 = vshrl.u32 %v1562, 7
  %v1564 = vsub.s32 %v1561, %v1563
  %v1565 = vrot.slane %v1551, %v1564
  %v1566 = vcombine.high %v1558, %v1558
  %v1567 = vcombine.high %v1565, %v1565
  %v1569 = vunpack.c.l.s4 1966171168
  %v1570 = vunpack.c.0.s8 %v1569
  %v1571 = vlaneseq
  %v1572 = vshrl.u32 %v1571, 7
  %v1573 = vsub.s32 %v1570, %v1572
  %v1574 = vrot.slane %v1558, %v1573
  %v1576 = vunpack.c.l.s4 1966171168
  %v1577 = vunpack.c.0.s8 %v1576
  %v1578 = vlaneseq
  %v1579 = vshrl.u32 %v1578, 7
  %v1580 = vsub.s32 %v1577, %v1579
  %v1581 = vrot.slane %v1565, %v1580
  %v1583 = vunpack.c.l.s4 1966171168
  %v1584 = vunpack.c.0.s8 %v1583
  %v1585 = vlaneseq
  %v1586 = vshrl.u32 %v1585, 7
  %v1587 = vsub.s32 %v1584, %v1586
  %v1588 = vrot.slane %v1566, %v1587
  %v1590 = vunpack.c.l.s4 1966171168
  %v1591 = vunpack.c.0.s8 %v1590
  %v1592 = vlaneseq
  %v1593 = vshrl.u32 %v1592, 7
  %v1594 = vsub.s32 %v1591, %v1593
  %v1595 = vrot.slane %v1567, %v1594
  %v1596 = vcombine.high %v1574, %v1574
  %v1597 = vcombine.high %v1581, %v1581
  %v1598 = vcombine.high %v1588, %v1588
  %v1599 = vcombine.high %v1595, %v1595
  %vm1608 = vcmask 253952
  %1609 = vst.msk [vmem:[#allocation3] sm:$0x1] %vm1608, %v1574
  %1610 = vst.msk [vmem:[#allocation3 + $0x8] sm:$0x1] %vm1608, %v1588
  %1611 = vst.msk [vmem:[#allocation3 + $0x10] sm:$0x1] %vm1608, %v1596
  %1612 = vst.msk [vmem:[#allocation3 + $0x18] sm:$0x1] %vm1608, %v1598
  %1613 = vst.msk [vmem:[#allocation3 + $0x20] sm:$0x1] %vm1608, %v1581
  %1614 = vst.msk [vmem:[#allocation3 + $0x28] sm:$0x1] %vm1608, %v1595
  %1615 = vst.msk [vmem:[#allocation3 + $0x30] sm:$0x1] %vm1608, %v1597
  %1616 = vst.msk [vmem:[#allocation3 + $0x38] sm:$0x1] %vm1608, %v1599
  %v1617 = vlaneseq
  %v1618 = vshrl.u32 %v1617, 7
  %v1619 = vsub.s32 0, %v1618
  %v1620 = vrot.slane %v1574, %v1619
  %v1621 = vlaneseq
  %v1622 = vshrl.u32 %v1621, 7
  %v1623 = vsub.s32 0, %v1622
  %v1624 = vrot.slane %v1588, %v1623
  %v1625 = vlaneseq
  %v1626 = vshrl.u32 %v1625, 7
  %v1627 = vsub.s32 0, %v1626
  %v1628 = vrot.slane %v1596, %v1627
  %v1629 = vlaneseq
  %v1630 = vshrl.u32 %v1629, 7
  %v1631 = vsub.s32 0, %v1630
  %v1632 = vrot.slane %v1598, %v1631
  %v1633 = vlaneseq
  %v1634 = vshrl.u32 %v1633, 7
  %v1635 = vsub.s32 0, %v1634
  %v1636 = vrot.slane %v1581, %v1635
  %v1637 = vlaneseq
  %v1638 = vshrl.u32 %v1637, 7
  %v1639 = vsub.s32 0, %v1638
  %v1640 = vrot.slane %v1595, %v1639
  %v1641 = vlaneseq
  %v1642 = vshrl.u32 %v1641, 7
  %v1643 = vsub.s32 0, %v1642
  %v1644 = vrot.slane %v1597, %v1643
  %v1645 = vlaneseq
  %v1646 = vshrl.u32 %v1645, 7
  %v1647 = vsub.s32 0, %v1646
  %v1648 = vrot.slane %v1599, %v1647
  %1649 = vrot.lane.b32.xlu0 %v1620, 96
  %v1650 = vpop.permute.xlu0 %1649
  %1651 = vrot.lane.b32.xlu0 %v1624, 96
  %v1652 = vpop.permute.xlu0 %1651
  %1653 = vrot.lane.b32.xlu0 %v1628, 96
  %v1654 = vpop.permute.xlu0 %1653
  %1655 = vrot.lane.b32.xlu0 %v1632, 96
  %v1656 = vpop.permute.xlu0 %1655
  %1657 = vrot.lane.b32.xlu0 %v1636, 96
  %v1658 = vpop.permute.xlu0 %1657
  %1659 = vrot.lane.b32.xlu0 %v1640, 96
  %v1660 = vpop.permute.xlu0 %1659
  %1661 = vrot.lane.b32.xlu0 %v1644, 96
  %v1662 = vpop.permute.xlu0 %1661
  %1663 = vrot.lane.b32.xlu0 %v1648, 96
  %v1664 = vpop.permute.xlu0 %1663
  %1673 = vst.msk [vmem:[#allocation3 + $0x1] sm:$0x1] %vm1608, %v1650
  %1674 = vst.msk [vmem:[#allocation3 + $0x9] sm:$0x1] %vm1608, %v1652
  %1675 = vst.msk [vmem:[#allocation3 + $0x11] sm:$0x1] %vm1608, %v1654
  %1676 = vst.msk [vmem:[#allocation3 + $0x19] sm:$0x1] %vm1608, %v1656
  %1677 = vst.msk [vmem:[#allocation3 + $0x21] sm:$0x1] %vm1608, %v1658
  %1678 = vst.msk [vmem:[#allocation3 + $0x29] sm:$0x1] %vm1608, %v1660
  %1679 = vst.msk [vmem:[#allocation3 + $0x31] sm:$0x1] %vm1608, %v1662
  %1680 = vst.msk [vmem:[#allocation3 + $0x39] sm:$0x1] %vm1608, %v1664
  %1681 = vrot.lane.b32.xlu0 %v1620, 64
  %v1682 = vpop.permute.xlu0 %1681
  %1683 = vrot.lane.b32.xlu0 %v1624, 64
  %v1684 = vpop.permute.xlu0 %1683
  %1685 = vrot.lane.b32.xlu0 %v1628, 64
  %v1686 = vpop.permute.xlu0 %1685
  %1687 = vrot.lane.b32.xlu0 %v1632, 64
  %v1688 = vpop.permute.xlu0 %1687
  %1689 = vrot.lane.b32.xlu0 %v1636, 64
  %v1690 = vpop.permute.xlu0 %1689
  %1691 = vrot.lane.b32.xlu0 %v1640, 64
  %v1692 = vpop.permute.xlu0 %1691
  %1693 = vrot.lane.b32.xlu0 %v1644, 64
  %v1694 = vpop.permute.xlu0 %1693
  %1695 = vrot.lane.b32.xlu0 %v1648, 64
  %v1696 = vpop.permute.xlu0 %1695
  %1705 = vst.msk [vmem:[#allocation3 + $0x2] sm:$0x1] %vm1608, %v1682
  %1706 = vst.msk [vmem:[#allocation3 + $0xa] sm:$0x1] %vm1608, %v1684
  %1707 = vst.msk [vmem:[#allocation3 + $0x12] sm:$0x1] %vm1608, %v1686
  %1708 = vst.msk [vmem:[#allocation3 + $0x1a] sm:$0x1] %vm1608, %v1688
  %1709 = vst.msk [vmem:[#allocation3 + $0x22] sm:$0x1] %vm1608, %v1690
  %1710 = vst.msk [vmem:[#allocation3 + $0x2a] sm:$0x1] %vm1608, %v1692
  %1711 = vst.msk [vmem:[#allocation3 + $0x32] sm:$0x1] %vm1608, %v1694
  %1712 = vst.msk [vmem:[#allocation3 + $0x3a] sm:$0x1] %vm1608, %v1696
  %1713 = vrot.lane.b32.xlu0 %v1620, 32
  %v1714 = vpop.permute.xlu0 %1713
  %1715 = vrot.lane.b32.xlu0 %v1624, 32
  %v1716 = vpop.permute.xlu0 %1715
  %1717 = vrot.lane.b32.xlu0 %v1628, 32
  %v1718 = vpop.permute.xlu0 %1717
  %1719 = vrot.lane.b32.xlu0 %v1632, 32
  %v1720 = vpop.permute.xlu0 %1719
  %1721 = vrot.lane.b32.xlu0 %v1636, 32
  %v1722 = vpop.permute.xlu0 %1721
  %1723 = vrot.lane.b32.xlu0 %v1640, 32
  %v1724 = vpop.permute.xlu0 %1723
  %1725 = vrot.lane.b32.xlu0 %v1644, 32
  %v1726 = vpop.permute.xlu0 %1725
  %1727 = vrot.lane.b32.xlu0 %v1648, 32
  %v1728 = vpop.permute.xlu0 %1727
  %1737 = vst.msk [vmem:[#allocation3 + $0x3] sm:$0x1] %vm1608, %v1714
  %1738 = vst.msk [vmem:[#allocation3 + $0xb] sm:$0x1] %vm1608, %v1716
  %1739 = vst.msk [vmem:[#allocation3 + $0x13] sm:$0x1] %vm1608, %v1718
  %1740 = vst.msk [vmem:[#allocation3 + $0x1b] sm:$0x1] %vm1608, %v1720
  %1741 = vst.msk [vmem:[#allocation3 + $0x23] sm:$0x1] %vm1608, %v1722
  %1742 = vst.msk [vmem:[#allocation3 + $0x2b] sm:$0x1] %vm1608, %v1724
  %1743 = vst.msk [vmem:[#allocation3 + $0x33] sm:$0x1] %vm1608, %v1726
  %1744 = vst.msk [vmem:[#allocation3 + $0x3b] sm:$0x1] %vm1608, %v1728
  %v1746 = vcombine.high %v1549, %v1549
  %v1748 = vunpack.c.l.s4 1966171168
  %v1749 = vunpack.c.0.s8 %v1748
  %v1750 = vlaneseq
  %v1751 = vshrl.u32 %v1750, 7
  %v1752 = vsub.s32 %v1749, %v1751
  %v1753 = vrot.slane %v1549, %v1752
  %v1755 = vunpack.c.l.s4 1966171168
  %v1756 = vunpack.c.0.s8 %v1755
  %v1757 = vlaneseq
  %v1758 = vshrl.u32 %v1757, 7
  %v1759 = vsub.s32 %v1756, %v1758
  %v1760 = vrot.slane %v1746, %v1759
  %v1761 = vcombine.high %v1753, %v1753
  %v1762 = vcombine.high %v1760, %v1760
  %v1764 = vunpack.c.l.s4 1966171168
  %v1765 = vunpack.c.0.s8 %v1764
  %v1766 = vlaneseq
  %v1767 = vshrl.u32 %v1766, 7
  %v1768 = vsub.s32 %v1765, %v1767
  %v1769 = vrot.slane %v1753, %v1768
  %v1771 = vunpack.c.l.s4 1966171168
  %v1772 = vunpack.c.0.s8 %v1771
  %v1773 = vlaneseq
  %v1774 = vshrl.u32 %v1773, 7
  %v1775 = vsub.s32 %v1772, %v1774
  %v1776 = vrot.slane %v1760, %v1775
  %v1778 = vunpack.c.l.s4 1966171168
  %v1779 = vunpack.c.0.s8 %v1778
  %v1780 = vlaneseq
  %v1781 = vshrl.u32 %v1780, 7
  %v1782 = vsub.s32 %v1779, %v1781
  %v1783 = vrot.slane %v1761, %v1782
  %v1785 = vunpack.c.l.s4 1966171168
  %v1786 = vunpack.c.0.s8 %v1785
  %v1787 = vlaneseq
  %v1788 = vshrl.u32 %v1787, 7
  %v1789 = vsub.s32 %v1786, %v1788
  %v1790 = vrot.slane %v1762, %v1789
  %v1791 = vcombine.high %v1769, %v1769
  %v1792 = vcombine.high %v1776, %v1776
  %v1793 = vcombine.high %v1783, %v1783
  %v1794 = vcombine.high %v1790, %v1790
  %1803 = vst.msk [vmem:[#allocation3 + $0x4] sm:$0x1] %vm1608, %v1769
  %1804 = vst.msk [vmem:[#allocation3 + $0xc] sm:$0x1] %vm1608, %v1783
  %1805 = vst.msk [vmem:[#allocation3 + $0x14] sm:$0x1] %vm1608, %v1791
  %1806 = vst.msk [vmem:[#allocation3 + $0x1c] sm:$0x1] %vm1608, %v1793
  %1807 = vst.msk [vmem:[#allocation3 + $0x24] sm:$0x1] %vm1608, %v1776
  %1808 = vst.msk [vmem:[#allocation3 + $0x2c] sm:$0x1] %vm1608, %v1790
  %1809 = vst.msk [vmem:[#allocation3 + $0x34] sm:$0x1] %vm1608, %v1792
  %1810 = vst.msk [vmem:[#allocation3 + $0x3c] sm:$0x1] %vm1608, %v1794
  %v1811 = vlaneseq
  %v1812 = vshrl.u32 %v1811, 7
  %v1813 = vsub.s32 0, %v1812
  %v1814 = vrot.slane %v1769, %v1813
  %v1815 = vlaneseq
  %v1816 = vshrl.u32 %v1815, 7
  %v1817 = vsub.s32 0, %v1816
  %v1818 = vrot.slane %v1783, %v1817
  %v1819 = vlaneseq
  %v1820 = vshrl.u32 %v1819, 7
  %v1821 = vsub.s32 0, %v1820
  %v1822 = vrot.slane %v1791, %v1821
  %v1823 = vlaneseq
  %v1824 = vshrl.u32 %v1823, 7
  %v1825 = vsub.s32 0, %v1824
  %v1826 = vrot.slane %v1793, %v1825
  %v1827 = vlaneseq
  %v1828 = vshrl.u32 %v1827, 7
  %v1829 = vsub.s32 0, %v1828
  %v1830 = vrot.slane %v1776, %v1829
  %v1831 = vlaneseq
  %v1832 = vshrl.u32 %v1831, 7
  %v1833 = vsub.s32 0, %v1832
  %v1834 = vrot.slane %v1790, %v1833
  %v1835 = vlaneseq
  %v1836 = vshrl.u32 %v1835, 7
  %v1837 = vsub.s32 0, %v1836
  %v1838 = vrot.slane %v1792, %v1837
  %v1839 = vlaneseq
  %v1840 = vshrl.u32 %v1839, 7
  %v1841 = vsub.s32 0, %v1840
  %v1842 = vrot.slane %v1794, %v1841
  %1843 = vrot.lane.b32.xlu0 %v1814, 96
  %v1844 = vpop.permute.xlu0 %1843
  %1845 = vrot.lane.b32.xlu0 %v1818, 96
  %v1846 = vpop.permute.xlu0 %1845
  %1847 = vrot.lane.b32.xlu0 %v1822, 96
  %v1848 = vpop.permute.xlu0 %1847
  %1849 = vrot.lane.b32.xlu0 %v1826, 96
  %v1850 = vpop.permute.xlu0 %1849
  %1851 = vrot.lane.b32.xlu0 %v1830, 96
  %v1852 = vpop.permute.xlu0 %1851
  %1853 = vrot.lane.b32.xlu0 %v1834, 96
  %v1854 = vpop.permute.xlu0 %1853
  %1855 = vrot.lane.b32.xlu0 %v1838, 96
  %v1856 = vpop.permute.xlu0 %1855
  %1857 = vrot.lane.b32.xlu0 %v1842, 96
  %v1858 = vpop.permute.xlu0 %1857
  %1867 = vst.msk [vmem:[#allocation3 + $0x5] sm:$0x1] %vm1608, %v1844
  %1868 = vst.msk [vmem:[#allocation3 + $0xd] sm:$0x1] %vm1608, %v1846
  %1869 = vst.msk [vmem:[#allocation3 + $0x15] sm:$0x1] %vm1608, %v1848
  %1870 = vst.msk [vmem:[#allocation3 + $0x1d] sm:$0x1] %vm1608, %v1850
  %1871 = vst.msk [vmem:[#allocation3 + $0x25] sm:$0x1] %vm1608, %v1852
  %1872 = vst.msk [vmem:[#allocation3 + $0x2d] sm:$0x1] %vm1608, %v1854
  %1873 = vst.msk [vmem:[#allocation3 + $0x35] sm:$0x1] %vm1608, %v1856
  %1874 = vst.msk [vmem:[#allocation3 + $0x3d] sm:$0x1] %vm1608, %v1858
  %1875 = vrot.lane.b32.xlu0 %v1814, 64
  %v1876 = vpop.permute.xlu0 %1875
  %1877 = vrot.lane.b32.xlu0 %v1818, 64
  %v1878 = vpop.permute.xlu0 %1877
  %1879 = vrot.lane.b32.xlu0 %v1822, 64
  %v1880 = vpop.permute.xlu0 %1879
  %1881 = vrot.lane.b32.xlu0 %v1826, 64
  %v1882 = vpop.permute.xlu0 %1881
  %1883 = vrot.lane.b32.xlu0 %v1830, 64
  %v1884 = vpop.permute.xlu0 %1883
  %1885 = vrot.lane.b32.xlu0 %v1834, 64
  %v1886 = vpop.permute.xlu0 %1885
  %1887 = vrot.lane.b32.xlu0 %v1838, 64
  %v1888 = vpop.permute.xlu0 %1887
  %1889 = vrot.lane.b32.xlu0 %v1842, 64
  %v1890 = vpop.permute.xlu0 %1889
  %1899 = vst.msk [vmem:[#allocation3 + $0x6] sm:$0x1] %vm1608, %v1876
  %1900 = vst.msk [vmem:[#allocation3 + $0xe] sm:$0x1] %vm1608, %v1878
  %1901 = vst.msk [vmem:[#allocation3 + $0x16] sm:$0x1] %vm1608, %v1880
  %1902 = vst.msk [vmem:[#allocation3 + $0x1e] sm:$0x1] %vm1608, %v1882
  %1903 = vst.msk [vmem:[#allocation3 + $0x26] sm:$0x1] %vm1608, %v1884
  %1904 = vst.msk [vmem:[#allocation3 + $0x2e] sm:$0x1] %vm1608, %v1886
  %1905 = vst.msk [vmem:[#allocation3 + $0x36] sm:$0x1] %vm1608, %v1888
  %1906 = vst.msk [vmem:[#allocation3 + $0x3e] sm:$0x1] %vm1608, %v1890
  %1907 = vrot.lane.b32.xlu0 %v1814, 32
  %v1908 = vpop.permute.xlu0 %1907
  %1909 = vrot.lane.b32.xlu0 %v1818, 32
  %v1910 = vpop.permute.xlu0 %1909
  %1911 = vrot.lane.b32.xlu0 %v1822, 32
  %v1912 = vpop.permute.xlu0 %1911
  %1913 = vrot.lane.b32.xlu0 %v1826, 32
  %v1914 = vpop.permute.xlu0 %1913
  %1915 = vrot.lane.b32.xlu0 %v1830, 32
  %v1916 = vpop.permute.xlu0 %1915
  %1917 = vrot.lane.b32.xlu0 %v1834, 32
  %v1918 = vpop.permute.xlu0 %1917
  %1919 = vrot.lane.b32.xlu0 %v1838, 32
  %v1920 = vpop.permute.xlu0 %1919
  %1921 = vrot.lane.b32.xlu0 %v1842, 32
  %v1922 = vpop.permute.xlu0 %1921
  %1931 = vst.msk [vmem:[#allocation3 + $0x7] sm:$0x1] %vm1608, %v1908
  %1932 = vst.msk [vmem:[#allocation3 + $0xf] sm:$0x1] %vm1608, %v1910
  %1933 = vst.msk [vmem:[#allocation3 + $0x17] sm:$0x1] %vm1608, %v1912
  %1934 = vst.msk [vmem:[#allocation3 + $0x1f] sm:$0x1] %vm1608, %v1914
  %1935 = vst.msk [vmem:[#allocation3 + $0x27] sm:$0x1] %vm1608, %v1916
  %1936 = vst.msk [vmem:[#allocation3 + $0x2f] sm:$0x1] %vm1608, %v1918
  %1937 = vst.msk [vmem:[#allocation3 + $0x37] sm:$0x1] %vm1608, %v1920
  %1938 = vst.msk [vmem:[#allocation3 + $0x3f] sm:$0x1] %vm1608, %v1922
  %v1939 = vld [vmem:[#allocation3] sm:$0xff]
  %v1940 = vld [vmem:[#allocation3 + $0x8] sm:$0xff]
  %v1941 = vld [vmem:[#allocation3 + $0x10] sm:$0xff]
  %v1942 = vld [vmem:[#allocation3 + $0x18] sm:$0xff]
  %v1943 = vld [vmem:[#allocation3 + $0x20] sm:$0xff]
  %v1944 = vld [vmem:[#allocation3 + $0x28] sm:$0xff]
  %v1945 = vld [vmem:[#allocation3 + $0x30] sm:$0xff]
  %v1946 = vld [vmem:[#allocation3 + $0x38] sm:$0xff]
  %v1947 = vld [vmem:[%s1] sm:$0xff]
  %v1948 = vld [vmem:[%s1 + $0x8] sm:$0xff]
  %v1949 = vld [vmem:[%s1 + $0x10] sm:$0xff]
  %v1950 = vld [vmem:[%s1 + $0x18] sm:$0xff]
  %v1951 = vld [vmem:[%s1 + $0x20] sm:$0xff]
  %v1952 = vld [vmem:[%s1 + $0x28] sm:$0xff]
  %v1953 = vld [vmem:[%s1 + $0x30] sm:$0xff]
  %v1954 = vld [vmem:[%s1 + $0x38] sm:$0xff]
  %v1955 = vadd.f32 %v1939, %v1947
  %v1956 = vadd.f32 %v1940, %v1948
  %v1957 = vadd.f32 %v1941, %v1949
  %v1958 = vadd.f32 %v1942, %v1950
  %v1959 = vadd.f32 %v1943, %v1951
  %v1960 = vadd.f32 %v1944, %v1952
  %v1961 = vadd.f32 %v1945, %v1953
  %v1962 = vadd.f32 %v1946, %v1954
  %v1963 = vpack.c.bf16 %v1956, %v1955
  %v1964 = vpack.c.bf16 %v1958, %v1957
  %v1965 = vld [vmem:[%s8] sm:$0xf]
  %v1966 = vld [vmem:[%s8 + $0x4] sm:$0xf]
  %v1967 = vld [vmem:[%s8 + $0x8] sm:$0xf]
  %v1968 = vld [vmem:[%s8 + $0xc] sm:$0xf]
  %v1969 = vld [vmem:[%s9] sm:$0x1]
  %v1971 = vlaneseq
  %v1972 = vshrl.u32 %v1971, 7
  %v1973 = vsub.s32 0, %v1972
  %v1974 = vrot.slane %v1969, %v1973
  %v1980 = vunpack.c.l.b16 %v1965
  %v1981 = vunpack.c.l.b16 %v1966
  %v1982 = vunpack.c.l.b16 %v1967
  %v1983 = vunpack.c.l.b16 %v1968
  %v1984 = vpack.c.b16 %v1981, %v1980
  %v1985 = vpack.c.b16 %v1983, %v1982
  %vm1988 = vcmask 261120
  %v1990 = vsel %vm1988, %v1963, 0
  %v1993 = vsel %vm1988, %v1964, 0
  %1995 = vmatprep.subr.bf16.mxu0 0
  %1996 = vmatpush1.bf16.msra.mxu0 %v1984
  %1997 = vmatprep.subr.bf16.mxu0 0
  %1998 = vmatpush1.bf16.msra.mxu0 %v1985
  %1999 = vmatprep.subr.bf16.mxu0 0
  %2000 = vmatpush1.bf16.msra.mxu0 0
  %2001 = vmatprep.subr.bf16.mxu0 0
  %2002 = vmatpush1.bf16.msra.mxu0 0
  %2003 = vmatprep.subr.bf16.mxu0 0
  %2004 = vmatpush1.bf16.msra.mxu0 0
  %2005 = vmatprep.subr.bf16.mxu0 0
  %2006 = vmatpush1.bf16.msra.mxu0 0
  %2007 = vmatprep.subr.bf16.mxu0 0
  %2008 = vmatpush1.bf16.msra.mxu0 0
  %2009 = vmatprep.subr.bf16.mxu0 0
  %2010 = vmatpush1.bf16.msra.mxu0 0
  %2011 = vmatprep.subr.bf16.mxu0 0
  %2012 = vmatpush1.bf16.msra.mxu0 0
  %2013 = vmatprep.subr.bf16.mxu0 0
  %2014 = vmatpush1.bf16.msra.mxu0 0
  %2015 = vmatprep.subr.bf16.mxu0 0
  %2016 = vmatpush1.bf16.msra.mxu0 0
  %2017 = vmatprep.subr.bf16.mxu0 0
  %2018 = vmatpush1.bf16.msra.mxu0 0
  %2019 = vmatprep.subr.bf16.mxu0 0
  %2020 = vmatpush1.bf16.msra.mxu0 0
  %2021 = vmatprep.subr.bf16.mxu0 0
  %2022 = vmatpush1.bf16.msra.mxu0 0
  %2023 = vmatprep.subr.bf16.mxu0 0
  %2024 = vmatpush1.bf16.msra.mxu0 0
  %2025 = vmatprep.subr.bf16.mxu0 0
  %2026 = vmatpush1.bf16.msra.mxu0 0
  %2027 = vmatprep.mubr.bf16.mxu0 0
  %2028 = vmatmul.mubr.bf16.gmra.mrb[0].mxu0 %v1990
  %v2029 = vpop.f32.mrb[0].mxu0
  %v2030 = vadd.f32 %v1974, %v2029
  %v2031 = vpop.f32.mrb[0].mxu0
  %v2032 = vpop.f32.mrb[0].mxu0
  %v2033 = vadd.f32 %v1974, %v2032
  %v2034 = vpop.f32.mrb[0].mxu0
  %2035 = vmatprep.mubr.bf16.mxu0 0
  %2036 = vmatmul.mubr.bf16.gmra.mrb[0].mxu0 %v1993
  %v2037 = vpop.f32.mrb[0].mxu0
  %v2038 = vadd.f32 %v1974, %v2037
  %v2039 = vpop.f32.mrb[0].mxu0
  %v2040 = vpop.f32.mrb[0].mxu0
  %v2041 = vadd.f32 %v1974, %v2040
  %v2042 = vpop.f32.mrb[0].mxu0
  %2043 = vdwg.mxu0
  %v2044 = vpack.c.bf16 %v2030, %v2030
  %v2045 = vpack.c.bf16 %v2033, %v2033
  %v2046 = vpack.c.bf16 %v2038, %v2038
  %v2047 = vpack.c.bf16 %v2041, %v2041
  %2049 = vrot.lane.b32.xlu0 %v2044, 96
  %v2050 = vpop.permute.xlu0 %2049
  %vm2051 = vcmask 130048
  %v2053 = vsel %vm2051, %v2044, 0
  %v2056 = vsel %vm2051, %v2050, 0
  %2058 = vmatprep.subr.bf16.mxu0 0
  %2059 = vmatpush1.bf16.xpose.msra.mxu0 %v2056
  %2060 = vmatprep.subr.bf16.mxu0 0
  %2061 = vmatpush1.bf16.xpose.msra.mxu0 0
  %2062 = vmatprep.subr.bf16.mxu0 0
  %2063 = vmatpush1.bf16.xpose.msra.mxu0 0
  %2064 = vmatprep.subr.bf16.mxu0 0
  %2065 = vmatpush1.bf16.xpose.msra.mxu0 0
  %2066 = vmatprep.subr.bf16.mxu0 0
  %2067 = vmatpush1.bf16.xpose.msra.mxu0 0
  %2068 = vmatprep.subr.bf16.mxu0 0
  %2069 = vmatpush1.bf16.xpose.msra.mxu0 0
  %2070 = vmatprep.subr.bf16.mxu0 0
  %2071 = vmatpush1.bf16.xpose.msra.mxu0 0
  %2072 = vmatprep.subr.bf16.mxu0 0
  %2073 = vmatpush1.bf16.xpose.msra.mxu0 0
  %2074 = vmatprep.subr.bf16.mxu0 0
  %2075 = vmatpush1.bf16.xpose.msra.mxu0 0
  %2076 = vmatprep.subr.bf16.mxu0 0
  %2077 = vmatpush1.bf16.xpose.msra.mxu0 0
  %2078 = vmatprep.subr.bf16.mxu0 0
  %2079 = vmatpush1.bf16.xpose.msra.mxu0 0
  %2080 = vmatprep.subr.bf16.mxu0 0
  %2081 = vmatpush1.bf16.xpose.msra.mxu0 0
  %2082 = vmatprep.subr.bf16.mxu0 0
  %2083 = vmatpush1.bf16.xpose.msra.mxu0 0
  %2084 = vmatprep.subr.bf16.mxu0 0
  %2085 = vmatpush1.bf16.xpose.msra.mxu0 0
  %2086 = vmatprep.subr.bf16.mxu0 0
  %2087 = vmatpush1.bf16.xpose.msra.mxu0 0
  %2088 = vmatprep.subr.bf16.mxu0 0
  %2089 = vmatpush1.bf16.xpose.msra.mxu0 0
  %2090 = vmatprep.mubr.bf16.mxu0 0
  %2091 = vmatmul.mubr.bf16.gmra.mrb[0].mxu0 %v2053
  %v2092 = vpop.f32.mrb[0].mxu0
  %v2093 = vadd.f32 0.0, %v2092
  %v2094 = vpop.f32.mrb[0].mxu0
  %v2095 = vpop.f32.mrb[0].mxu0
  %v2096 = vpop.f32.mrb[0].mxu0
  %2097 = vdwg.mxu0
  %2099 = vrot.lane.b32.xlu0 %v2045, 96
  %v2100 = vpop.permute.xlu0 %2099
  %v2102 = vsel %vm2051, %v2045, 0
  %v2105 = vsel %vm2051, %v2100, 0
  %2107 = vmatprep.subr.bf16.mxu0 0
  %2108 = vmatpush1.bf16.xpose.msra.mxu0 %v2105
  %2109 = vmatprep.subr.bf16.mxu0 0
  %2110 = vmatpush1.bf16.xpose.msra.mxu0 0
  %2111 = vmatprep.subr.bf16.mxu0 0
  %2112 = vmatpush1.bf16.xpose.msra.mxu0 0
  %2113 = vmatprep.subr.bf16.mxu0 0
  %2114 = vmatpush1.bf16.xpose.msra.mxu0 0
  %2115 = vmatprep.subr.bf16.mxu0 0
  %2116 = vmatpush1.bf16.xpose.msra.mxu0 0
  %2117 = vmatprep.subr.bf16.mxu0 0
  %2118 = vmatpush1.bf16.xpose.msra.mxu0 0
  %2119 = vmatprep.subr.bf16.mxu0 0
  %2120 = vmatpush1.bf16.xpose.msra.mxu0 0
  %2121 = vmatprep.subr.bf16.mxu0 0
  %2122 = vmatpush1.bf16.xpose.msra.mxu0 0
  %2123 = vmatprep.subr.bf16.mxu0 0
  %2124 = vmatpush1.bf16.xpose.msra.mxu0 0
  %2125 = vmatprep.subr.bf16.mxu0 0
  %2126 = vmatpush1.bf16.xpose.msra.mxu0 0
  %2127 = vmatprep.subr.bf16.mxu0 0
  %2128 = vmatpush1.bf16.xpose.msra.mxu0 0
  %2129 = vmatprep.subr.bf16.mxu0 0
  %2130 = vmatpush1.bf16.xpose.msra.mxu0 0
  %2131 = vmatprep.subr.bf16.mxu0 0
  %2132 = vmatpush1.bf16.xpose.msra.mxu0 0
  %2133 = vmatprep.subr.bf16.mxu0 0
  %2134 = vmatpush1.bf16.xpose.msra.mxu0 0
  %2135 = vmatprep.subr.bf16.mxu0 0
  %2136 = vmatpush1.bf16.xpose.msra.mxu0 0
  %2137 = vmatprep.subr.bf16.mxu0 0
  %2138 = vmatpush1.bf16.xpose.msra.mxu0 0
  %2139 = vmatprep.mubr.bf16.mxu0 0
  %2140 = vmatmul.mubr.bf16.gmra.mrb[0].mxu0 %v2102
  %v2141 = vpop.f32.mrb[0].mxu0
  %v2142 = vadd.f32 0.0, %v2141
  %v2143 = vpop.f32.mrb[0].mxu0
  %v2144 = vpop.f32.mrb[0].mxu0
  %v2145 = vpop.f32.mrb[0].mxu0
  %2146 = vdwg.mxu0
  %2148 = vrot.lane.b32.xlu0 %v2046, 96
  %v2149 = vpop.permute.xlu0 %2148
  %v2151 = vsel %vm2051, %v2046, 0
  %v2154 = vsel %vm2051, %v2149, 0
  %2156 = vmatprep.subr.bf16.mxu0 0
  %2157 = vmatpush1.bf16.xpose.msra.mxu0 %v2154
  %2158 = vmatprep.subr.bf16.mxu0 0
  %2159 = vmatpush1.bf16.xpose.msra.mxu0 0
  %2160 = vmatprep.subr.bf16.mxu0 0
  %2161 = vmatpush1.bf16.xpose.msra.mxu0 0
  %2162 = vmatprep.subr.bf16.mxu0 0
  %2163 = vmatpush1.bf16.xpose.msra.mxu0 0
  %2164 = vmatprep.subr.bf16.mxu0 0
  %2165 = vmatpush1.bf16.xpose.msra.mxu0 0
  %2166 = vmatprep.subr.bf16.mxu0 0
  %2167 = vmatpush1.bf16.xpose.msra.mxu0 0
  %2168 = vmatprep.subr.bf16.mxu0 0
  %2169 = vmatpush1.bf16.xpose.msra.mxu0 0
  %2170 = vmatprep.subr.bf16.mxu0 0
  %2171 = vmatpush1.bf16.xpose.msra.mxu0 0
  %2172 = vmatprep.subr.bf16.mxu0 0
  %2173 = vmatpush1.bf16.xpose.msra.mxu0 0
  %2174 = vmatprep.subr.bf16.mxu0 0
  %2175 = vmatpush1.bf16.xpose.msra.mxu0 0
  %2176 = vmatprep.subr.bf16.mxu0 0
  %2177 = vmatpush1.bf16.xpose.msra.mxu0 0
  %2178 = vmatprep.subr.bf16.mxu0 0
  %2179 = vmatpush1.bf16.xpose.msra.mxu0 0
  %2180 = vmatprep.subr.bf16.mxu0 0
  %2181 = vmatpush1.bf16.xpose.msra.mxu0 0
  %2182 = vmatprep.subr.bf16.mxu0 0
  %2183 = vmatpush1.bf16.xpose.msra.mxu0 0
  %2184 = vmatprep.subr.bf16.mxu0 0
  %2185 = vmatpush1.bf16.xpose.msra.mxu0 0
  %2186 = vmatprep.subr.bf16.mxu0 0
  %2187 = vmatpush1.bf16.xpose.msra.mxu0 0
  %2188 = vmatprep.mubr.bf16.mxu0 0
  %2189 = vmatmul.mubr.bf16.gmra.mrb[0].mxu0 %v2151
  %v2190 = vpop.f32.mrb[0].mxu0
  %v2191 = vadd.f32 0.0, %v2190
  %v2192 = vpop.f32.mrb[0].mxu0
  %v2193 = vpop.f32.mrb[0].mxu0
  %v2194 = vpop.f32.mrb[0].mxu0
  %2195 = vdwg.mxu0
  %2197 = vrot.lane.b32.xlu0 %v2047, 96
  %v2198 = vpop.permute.xlu0 %2197
  %v2200 = vsel %vm2051, %v2047, 0
  %v2203 = vsel %vm2051, %v2198, 0
  %2205 = vmatprep.subr.bf16.mxu0 0
  %2206 = vmatpush1.bf16.xpose.msra.mxu0 %v2203
  %2207 = vmatprep.subr.bf16.mxu0 0
  %2208 = vmatpush1.bf16.xpose.msra.mxu0 0
  %2209 = vmatprep.subr.bf16.mxu0 0
  %2210 = vmatpush1.bf16.xpose.msra.mxu0 0
  %2211 = vmatprep.subr.bf16.mxu0 0
  %2212 = vmatpush1.bf16.xpose.msra.mxu0 0
  %2213 = vmatprep.subr.bf16.mxu0 0
  %2214 = vmatpush1.bf16.xpose.msra.mxu0 0
  %2215 = vmatprep.subr.bf16.mxu0 0
  %2216 = vmatpush1.bf16.xpose.msra.mxu0 0
  %2217 = vmatprep.subr.bf16.mxu0 0
  %2218 = vmatpush1.bf16.xpose.msra.mxu0 0
  %2219 = vmatprep.subr.bf16.mxu0 0
  %2220 = vmatpush1.bf16.xpose.msra.mxu0 0
  %2221 = vmatprep.subr.bf16.mxu0 0
  %2222 = vmatpush1.bf16.xpose.msra.mxu0 0
  %2223 = vmatprep.subr.bf16.mxu0 0
  %2224 = vmatpush1.bf16.xpose.msra.mxu0 0
  %2225 = vmatprep.subr.bf16.mxu0 0
  %2226 = vmatpush1.bf16.xpose.msra.mxu0 0
  %2227 = vmatprep.subr.bf16.mxu0 0
  %2228 = vmatpush1.bf16.xpose.msra.mxu0 0
  %2229 = vmatprep.subr.bf16.mxu0 0
  %2230 = vmatpush1.bf16.xpose.msra.mxu0 0
  %2231 = vmatprep.subr.bf16.mxu0 0
  %2232 = vmatpush1.bf16.xpose.msra.mxu0 0
  %2233 = vmatprep.subr.bf16.mxu0 0
  %2234 = vmatpush1.bf16.xpose.msra.mxu0 0
  %2235 = vmatprep.subr.bf16.mxu0 0
  %2236 = vmatpush1.bf16.xpose.msra.mxu0 0
  %2237 = vmatprep.mubr.bf16.mxu0 0
  %2238 = vmatmul.mubr.bf16.gmra.mrb[0].mxu0 %v2200
  %v2239 = vpop.f32.mrb[0].mxu0
  %v2240 = vadd.f32 0.0, %v2239
  %v2241 = vpop.f32.mrb[0].mxu0
  %v2242 = vpop.f32.mrb[0].mxu0
  %v2243 = vpop.f32.mrb[0].mxu0
  %2244 = vdwg.mxu0
  %v2245 = vsel %vm876, %v2093, -inf
  %2246 = vmax.xlane.f32.xlu0 %v2245
  %v2247 = vpop.xlane.xlu0 %2246
  %v2248 = vsel %vm876, %v2142, -inf
  %2249 = vmax.xlane.f32.xlu0 %v2248
  %v2250 = vpop.xlane.xlu0 %2249
  %v2251 = vsel %vm876, %v2191, -inf
  %2252 = vmax.xlane.f32.xlu0 %v2251
  %v2253 = vpop.xlane.xlu0 %2252
  %v2254 = vsel %vm876, %v2240, -inf
  %2255 = vmax.xlane.f32.xlu0 %v2254
  %v2256 = vpop.xlane.xlu0 %2255
  %v2257 = vsub.f32 %v2093, %v2247
  %v2258 = vsub.f32 %v2142, %v2250
  %v2259 = vsub.f32 %v2191, %v2253
  %v2260 = vsub.f32 %v2240, %v2256
  %v2261 = vmul.f32 %v2257, 1.442695
  %v2262 = vpow.pop %v2261
  %v2263 = vmul.f32 %v2258, 1.442695
  %v2264 = vpow.pop %v2263
  %v2265 = vmul.f32 %v2259, 1.442695
  %v2266 = vpow.pop %v2265
  %v2267 = vmul.f32 %v2260, 1.442695
  %v2268 = vpow.pop %v2267
  %v2269 = vsel %vm876, %v2262, 0.0
  %2270 = vadd.xlane.f32.xlu0 %v2269
  %v2271 = vpop.xlane.xlu0 %2270
  %v2272 = vsel %vm876, %v2264, 0.0
  %2273 = vadd.xlane.f32.xlu0 %v2272
  %v2274 = vpop.xlane.xlu0 %2273
  %v2275 = vsel %vm876, %v2266, 0.0
  %2276 = vadd.xlane.f32.xlu0 %v2275
  %v2277 = vpop.xlane.xlu0 %2276
  %v2278 = vsel %vm876, %v2268, 0.0
  %2279 = vadd.xlane.f32.xlu0 %v2278
  %v2280 = vpop.xlane.xlu0 %2279
  %v2281 = vrcp.pop %v2271
  %v2282 = vrcp.pop %v2274
  %v2283 = vrcp.pop %v2277
  %v2284 = vrcp.pop %v2280
  %v2285 = vmul.f32 %v2262, %v2281
  %v2286 = vmul.f32 %v2264, %v2282
  %v2287 = vmul.f32 %v2266, %v2283
  %v2288 = vmul.f32 %v2268, %v2284
  %v2289 = vpack.c.bf16 %v2285, %v2285
  %v2290 = vpack.c.bf16 %v2286, %v2286
  %v2291 = vpack.c.bf16 %v2287, %v2287
  %v2292 = vpack.c.bf16 %v2288, %v2288
  %2293 = vrot.lane.b32.xlu0 %v2044, 64
  %v2294 = vpop.permute.xlu0 %2293
  %v2296 = vsel %vm876, %v2289, 0
  %v2299 = vsel %vm892, %v2294, 0
  %2301 = vmatprep.subr.bf16.mxu0 0
  %2302 = vmatpush1.bf16.msra.mxu0 %v2299
  %2303 = vmatprep.subr.bf16.mxu0 0
  %2304 = vmatpush1.bf16.msra.mxu0 0
  %2305 = vmatprep.subr.bf16.mxu0 0
  %2306 = vmatpush1.bf16.msra.mxu0 0
  %2307 = vmatprep.subr.bf16.mxu0 0
  %2308 = vmatpush1.bf16.msra.mxu0 0
  %2309 = vmatprep.subr.bf16.mxu0 0
  %2310 = vmatpush1.bf16.msra.mxu0 0
  %2311 = vmatprep.subr.bf16.mxu0 0
  %2312 = vmatpush1.bf16.msra.mxu0 0
  %2313 = vmatprep.subr.bf16.mxu0 0
  %2314 = vmatpush1.bf16.msra.mxu0 0
  %2315 = vmatprep.subr.bf16.mxu0 0
  %2316 = vmatpush1.bf16.msra.mxu0 0
  %2317 = vmatprep.subr.bf16.mxu0 0
  %2318 = vmatpush1.bf16.msra.mxu0 0
  %2319 = vmatprep.subr.bf16.mxu0 0
  %2320 = vmatpush1.bf16.msra.mxu0 0
  %2321 = vmatprep.subr.bf16.mxu0 0
  %2322 = vmatpush1.bf16.msra.mxu0 0
  %2323 = vmatprep.subr.bf16.mxu0 0
  %2324 = vmatpush1.bf16.msra.mxu0 0
  %2325 = vmatprep.subr.bf16.mxu0 0
  %2326 = vmatpush1.bf16.msra.mxu0 0
  %2327 = vmatprep.subr.bf16.mxu0 0
  %2328 = vmatpush1.bf16.msra.mxu0 0
  %2329 = vmatprep.subr.bf16.mxu0 0
  %2330 = vmatpush1.bf16.msra.mxu0 0
  %2331 = vmatprep.subr.bf16.mxu0 0
  %2332 = vmatpush1.bf16.msra.mxu0 0
  %2333 = vmatprep.mubr.bf16.mxu0 0
  %2334 = vmatmul.mubr.bf16.gmra.mrb[0].mxu0 %v2296
  %v2335 = vpop.f32.mrb[0].mxu0
  %v2336 = vadd.f32 0.0, %v2335
  %v2337 = vpop.f32.mrb[0].mxu0
  %v2338 = vpop.f32.mrb[0].mxu0
  %v2339 = vpop.f32.mrb[0].mxu0
  %2340 = vdwg.mxu0
  %2341 = vrot.lane.b32.xlu0 %v2045, 64
  %v2342 = vpop.permute.xlu0 %2341
  %v2344 = vsel %vm876, %v2290, 0
  %v2347 = vsel %vm892, %v2342, 0
  %2349 = vmatprep.subr.bf16.mxu0 0
  %2350 = vmatpush1.bf16.msra.mxu0 %v2347
  %2351 = vmatprep.subr.bf16.mxu0 0
  %2352 = vmatpush1.bf16.msra.mxu0 0
  %2353 = vmatprep.subr.bf16.mxu0 0
  %2354 = vmatpush1.bf16.msra.mxu0 0
  %2355 = vmatprep.subr.bf16.mxu0 0
  %2356 = vmatpush1.bf16.msra.mxu0 0
  %2357 = vmatprep.subr.bf16.mxu0 0
  %2358 = vmatpush1.bf16.msra.mxu0 0
  %2359 = vmatprep.subr.bf16.mxu0 0
  %2360 = vmatpush1.bf16.msra.mxu0 0
  %2361 = vmatprep.subr.bf16.mxu0 0
  %2362 = vmatpush1.bf16.msra.mxu0 0
  %2363 = vmatprep.subr.bf16.mxu0 0
  %2364 = vmatpush1.bf16.msra.mxu0 0
  %2365 = vmatprep.subr.bf16.mxu0 0
  %2366 = vmatpush1.bf16.msra.mxu0 0
  %2367 = vmatprep.subr.bf16.mxu0 0
  %2368 = vmatpush1.bf16.msra.mxu0 0
  %2369 = vmatprep.subr.bf16.mxu0 0
  %2370 = vmatpush1.bf16.msra.mxu0 0
  %2371 = vmatprep.subr.bf16.mxu0 0
  %2372 = vmatpush1.bf16.msra.mxu0 0
  %2373 = vmatprep.subr.bf16.mxu0 0
  %2374 = vmatpush1.bf16.msra.mxu0 0
  %2375 = vmatprep.subr.bf16.mxu0 0
  %2376 = vmatpush1.bf16.msra.mxu0 0
  %2377 = vmatprep.subr.bf16.mxu0 0
  %2378 = vmatpush1.bf16.msra.mxu0 0
  %2379 = vmatprep.subr.bf16.mxu0 0
  %2380 = vmatpush1.bf16.msra.mxu0 0
  %2381 = vmatprep.mubr.bf16.mxu0 0
  %2382 = vmatmul.mubr.bf16.gmra.mrb[0].mxu0 %v2344
  %v2383 = vpop.f32.mrb[0].mxu0
  %v2384 = vadd.f32 0.0, %v2383
  %v2385 = vpop.f32.mrb[0].mxu0
  %v2386 = vpop.f32.mrb[0].mxu0
  %v2387 = vpop.f32.mrb[0].mxu0
  %2388 = vdwg.mxu0
  %2389 = vrot.lane.b32.xlu0 %v2046, 64
  %v2390 = vpop.permute.xlu0 %2389
  %v2392 = vsel %vm876, %v2291, 0
  %v2395 = vsel %vm892, %v2390, 0
  %2397 = vmatprep.subr.bf16.mxu0 0
  %2398 = vmatpush1.bf16.msra.mxu0 %v2395
  %2399 = vmatprep.subr.bf16.mxu0 0
  %2400 = vmatpush1.bf16.msra.mxu0 0
  %2401 = vmatprep.subr.bf16.mxu0 0
  %2402 = vmatpush1.bf16.msra.mxu0 0
  %2403 = vmatprep.subr.bf16.mxu0 0
  %2404 = vmatpush1.bf16.msra.mxu0 0
  %2405 = vmatprep.subr.bf16.mxu0 0
  %2406 = vmatpush1.bf16.msra.mxu0 0
  %2407 = vmatprep.subr.bf16.mxu0 0
  %2408 = vmatpush1.bf16.msra.mxu0 0
  %2409 = vmatprep.subr.bf16.mxu0 0
  %2410 = vmatpush1.bf16.msra.mxu0 0
  %2411 = vmatprep.subr.bf16.mxu0 0
  %2412 = vmatpush1.bf16.msra.mxu0 0
  %2413 = vmatprep.subr.bf16.mxu0 0
  %2414 = vmatpush1.bf16.msra.mxu0 0
  %2415 = vmatprep.subr.bf16.mxu0 0
  %2416 = vmatpush1.bf16.msra.mxu0 0
  %2417 = vmatprep.subr.bf16.mxu0 0
  %2418 = vmatpush1.bf16.msra.mxu0 0
  %2419 = vmatprep.subr.bf16.mxu0 0
  %2420 = vmatpush1.bf16.msra.mxu0 0
  %2421 = vmatprep.subr.bf16.mxu0 0
  %2422 = vmatpush1.bf16.msra.mxu0 0
  %2423 = vmatprep.subr.bf16.mxu0 0
  %2424 = vmatpush1.bf16.msra.mxu0 0
  %2425 = vmatprep.subr.bf16.mxu0 0
  %2426 = vmatpush1.bf16.msra.mxu0 0
  %2427 = vmatprep.subr.bf16.mxu0 0
  %2428 = vmatpush1.bf16.msra.mxu0 0
  %2429 = vmatprep.mubr.bf16.mxu0 0
  %2430 = vmatmul.mubr.bf16.gmra.mrb[0].mxu0 %v2392
  %v2431 = vpop.f32.mrb[0].mxu0
  %v2432 = vadd.f32 0.0, %v2431
  %v2433 = vpop.f32.mrb[0].mxu0
  %v2434 = vpop.f32.mrb[0].mxu0
  %v2435 = vpop.f32.mrb[0].mxu0
  %2436 = vdwg.mxu0
  %2437 = vrot.lane.b32.xlu0 %v2047, 64
  %v2438 = vpop.permute.xlu0 %2437
  %v2440 = vsel %vm876, %v2292, 0
  %v2443 = vsel %vm892, %v2438, 0
  %2445 = vmatprep.subr.bf16.mxu0 0
  %2446 = vmatpush1.bf16.msra.mxu0 %v2443
  %2447 = vmatprep.subr.bf16.mxu0 0
  %2448 = vmatpush1.bf16.msra.mxu0 0
  %2449 = vmatprep.subr.bf16.mxu0 0
  %2450 = vmatpush1.bf16.msra.mxu0 0
  %2451 = vmatprep.subr.bf16.mxu0 0
  %2452 = vmatpush1.bf16.msra.mxu0 0
  %2453 = vmatprep.subr.bf16.mxu0 0
  %2454 = vmatpush1.bf16.msra.mxu0 0
  %2455 = vmatprep.subr.bf16.mxu0 0
  %2456 = vmatpush1.bf16.msra.mxu0 0
  %2457 = vmatprep.subr.bf16.mxu0 0
  %2458 = vmatpush1.bf16.msra.mxu0 0
  %2459 = vmatprep.subr.bf16.mxu0 0
  %2460 = vmatpush1.bf16.msra.mxu0 0
  %2461 = vmatprep.subr.bf16.mxu0 0
  %2462 = vmatpush1.bf16.msra.mxu0 0
  %2463 = vmatprep.subr.bf16.mxu0 0
  %2464 = vmatpush1.bf16.msra.mxu0 0
  %2465 = vmatprep.subr.bf16.mxu0 0
  %2466 = vmatpush1.bf16.msra.mxu0 0
  %2467 = vmatprep.subr.bf16.mxu0 0
  %2468 = vmatpush1.bf16.msra.mxu0 0
  %2469 = vmatprep.subr.bf16.mxu0 0
  %2470 = vmatpush1.bf16.msra.mxu0 0
  %2471 = vmatprep.subr.bf16.mxu0 0
  %2472 = vmatpush1.bf16.msra.mxu0 0
  %2473 = vmatprep.subr.bf16.mxu0 0
  %2474 = vmatpush1.bf16.msra.mxu0 0
  %2475 = vmatprep.subr.bf16.mxu0 0
  %2476 = vmatpush1.bf16.msra.mxu0 0
  %2477 = vmatprep.mubr.bf16.mxu0 0
  %2478 = vmatmul.mubr.bf16.gmra.mrb[0].mxu0 %v2440
  %v2479 = vpop.f32.mrb[0].mxu0
  %v2480 = vadd.f32 0.0, %v2479
  %v2481 = vpop.f32.mrb[0].mxu0
  %v2482 = vpop.f32.mrb[0].mxu0
  %v2483 = vpop.f32.mrb[0].mxu0
  %2484 = vdwg.mxu0
  %v2485 = vpack.c.bf16 %v2384, %v2336
  %v2486 = vpack.c.bf16 %v2480, %v2432
  %2487 = vst.msk [vmem:[#allocation4] sm:$0xff] %vm2051, %v2485
  %2488 = vst.msk [vmem:[#allocation4 + $0x8] sm:$0xff] %vm2051, %v2486
  %2489 = vrot.lane.b32.xlu0 %v2044, 112
  %v2490 = vpop.permute.xlu0 %2489
  %2491 = vrot.lane.b32.xlu0 %v2044, 80
  %v2492 = vpop.permute.xlu0 %2491
  %v2494 = vsel %vm2051, %v2490, 0
  %v2497 = vsel %vm2051, %v2492, 0
  %2499 = vmatprep.subr.bf16.mxu0 0
  %2500 = vmatpush1.bf16.xpose.msra.mxu0 %v2497
  %2501 = vmatprep.subr.bf16.mxu0 0
  %2502 = vmatpush1.bf16.xpose.msra.mxu0 0
  %2503 = vmatprep.subr.bf16.mxu0 0
  %2504 = vmatpush1.bf16.xpose.msra.mxu0 0
  %2505 = vmatprep.subr.bf16.mxu0 0
  %2506 = vmatpush1.bf16.xpose.msra.mxu0 0
  %2507 = vmatprep.subr.bf16.mxu0 0
  %2508 = vmatpush1.bf16.xpose.msra.mxu0 0
  %2509 = vmatprep.subr.bf16.mxu0 0
  %2510 = vmatpush1.bf16.xpose.msra.mxu0 0
  %2511 = vmatprep.subr.bf16.mxu0 0
  %2512 = vmatpush1.bf16.xpose.msra.mxu0 0
  %2513 = vmatprep.subr.bf16.mxu0 0
  %2514 = vmatpush1.bf16.xpose.msra.mxu0 0
  %2515 = vmatprep.subr.bf16.mxu0 0
  %2516 = vmatpush1.bf16.xpose.msra.mxu0 0
  %2517 = vmatprep.subr.bf16.mxu0 0
  %2518 = vmatpush1.bf16.xpose.msra.mxu0 0
  %2519 = vmatprep.subr.bf16.mxu0 0
  %2520 = vmatpush1.bf16.xpose.msra.mxu0 0
  %2521 = vmatprep.subr.bf16.mxu0 0
  %2522 = vmatpush1.bf16.xpose.msra.mxu0 0
  %2523 = vmatprep.subr.bf16.mxu0 0
  %2524 = vmatpush1.bf16.xpose.msra.mxu0 0
  %2525 = vmatprep.subr.bf16.mxu0 0
  %2526 = vmatpush1.bf16.xpose.msra.mxu0 0
  %2527 = vmatprep.subr.bf16.mxu0 0
  %2528 = vmatpush1.bf16.xpose.msra.mxu0 0
  %2529 = vmatprep.subr.bf16.mxu0 0
  %2530 = vmatpush1.bf16.xpose.msra.mxu0 0
  %2531 = vmatprep.mubr.bf16.mxu0 0
  %2532 = vmatmul.mubr.bf16.gmra.mrb[0].mxu0 %v2494
  %v2533 = vpop.f32.mrb[0].mxu0
  %v2534 = vadd.f32 0.0, %v2533
  %v2535 = vpop.f32.mrb[0].mxu0
  %v2536 = vpop.f32.mrb[0].mxu0
  %v2537 = vpop.f32.mrb[0].mxu0
  %2538 = vdwg.mxu0
  %2539 = vrot.lane.b32.xlu0 %v2045, 112
  %v2540 = vpop.permute.xlu0 %2539
  %2541 = vrot.lane.b32.xlu0 %v2045, 80
  %v2542 = vpop.permute.xlu0 %2541
  %v2544 = vsel %vm2051, %v2540, 0
  %v2547 = vsel %vm2051, %v2542, 0
  %2549 = vmatprep.subr.bf16.mxu0 0
  %2550 = vmatpush1.bf16.xpose.msra.mxu0 %v2547
  %2551 = vmatprep.subr.bf16.mxu0 0
  %2552 = vmatpush1.bf16.xpose.msra.mxu0 0
  %2553 = vmatprep.subr.bf16.mxu0 0
  %2554 = vmatpush1.bf16.xpose.msra.mxu0 0
  %2555 = vmatprep.subr.bf16.mxu0 0
  %2556 = vmatpush1.bf16.xpose.msra.mxu0 0
  %2557 = vmatprep.subr.bf16.mxu0 0
  %2558 = vmatpush1.bf16.xpose.msra.mxu0 0
  %2559 = vmatprep.subr.bf16.mxu0 0
  %2560 = vmatpush1.bf16.xpose.msra.mxu0 0
  %2561 = vmatprep.subr.bf16.mxu0 0
  %2562 = vmatpush1.bf16.xpose.msra.mxu0 0
  %2563 = vmatprep.subr.bf16.mxu0 0
  %2564 = vmatpush1.bf16.xpose.msra.mxu0 0
  %2565 = vmatprep.subr.bf16.mxu0 0
  %2566 = vmatpush1.bf16.xpose.msra.mxu0 0
  %2567 = vmatprep.subr.bf16.mxu0 0
  %2568 = vmatpush1.bf16.xpose.msra.mxu0 0
  %2569 = vmatprep.subr.bf16.mxu0 0
  %2570 = vmatpush1.bf16.xpose.msra.mxu0 0
  %2571 = vmatprep.subr.bf16.mxu0 0
  %2572 = vmatpush1.bf16.xpose.msra.mxu0 0
  %2573 = vmatprep.subr.bf16.mxu0 0
  %2574 = vmatpush1.bf16.xpose.msra.mxu0 0
  %2575 = vmatprep.subr.bf16.mxu0 0
  %2576 = vmatpush1.bf16.xpose.msra.mxu0 0
  %2577 = vmatprep.subr.bf16.mxu0 0
  %2578 = vmatpush1.bf16.xpose.msra.mxu0 0
  %2579 = vmatprep.subr.bf16.mxu0 0
  %2580 = vmatpush1.bf16.xpose.msra.mxu0 0
  %2581 = vmatprep.mubr.bf16.mxu0 0
  %2582 = vmatmul.mubr.bf16.gmra.mrb[0].mxu0 %v2544
  %v2583 = vpop.f32.mrb[0].mxu0
  %v2584 = vadd.f32 0.0, %v2583
  %v2585 = vpop.f32.mrb[0].mxu0
  %v2586 = vpop.f32.mrb[0].mxu0
  %v2587 = vpop.f32.mrb[0].mxu0
  %2588 = vdwg.mxu0
  %2589 = vrot.lane.b32.xlu0 %v2046, 112
  %v2590 = vpop.permute.xlu0 %2589
  %2591 = vrot.lane.b32.xlu0 %v2046, 80
  %v2592 = vpop.permute.xlu0 %2591
  %v2594 = vsel %vm2051, %v2590, 0
  %v2597 = vsel %vm2051, %v2592, 0
  %2599 = vmatprep.subr.bf16.mxu0 0
  %2600 = vmatpush1.bf16.xpose.msra.mxu0 %v2597
  %2601 = vmatprep.subr.bf16.mxu0 0
  %2602 = vmatpush1.bf16.xpose.msra.mxu0 0
  %2603 = vmatprep.subr.bf16.mxu0 0
  %2604 = vmatpush1.bf16.xpose.msra.mxu0 0
  %2605 = vmatprep.subr.bf16.mxu0 0
  %2606 = vmatpush1.bf16.xpose.msra.mxu0 0
  %2607 = vmatprep.subr.bf16.mxu0 0
  %2608 = vmatpush1.bf16.xpose.msra.mxu0 0
  %2609 = vmatprep.subr.bf16.mxu0 0
  %2610 = vmatpush1.bf16.xpose.msra.mxu0 0
  %2611 = vmatprep.subr.bf16.mxu0 0
  %2612 = vmatpush1.bf16.xpose.msra.mxu0 0
  %2613 = vmatprep.subr.bf16.mxu0 0
  %2614 = vmatpush1.bf16.xpose.msra.mxu0 0
  %2615 = vmatprep.subr.bf16.mxu0 0
  %2616 = vmatpush1.bf16.xpose.msra.mxu0 0
  %2617 = vmatprep.subr.bf16.mxu0 0
  %2618 = vmatpush1.bf16.xpose.msra.mxu0 0
  %2619 = vmatprep.subr.bf16.mxu0 0
  %2620 = vmatpush1.bf16.xpose.msra.mxu0 0
  %2621 = vmatprep.subr.bf16.mxu0 0
  %2622 = vmatpush1.bf16.xpose.msra.mxu0 0
  %2623 = vmatprep.subr.bf16.mxu0 0
  %2624 = vmatpush1.bf16.xpose.msra.mxu0 0
  %2625 = vmatprep.subr.bf16.mxu0 0
  %2626 = vmatpush1.bf16.xpose.msra.mxu0 0
  %2627 = vmatprep.subr.bf16.mxu0 0
  %2628 = vmatpush1.bf16.xpose.msra.mxu0 0
  %2629 = vmatprep.subr.bf16.mxu0 0
  %2630 = vmatpush1.bf16.xpose.msra.mxu0 0
  %2631 = vmatprep.mubr.bf16.mxu0 0
  %2632 = vmatmul.mubr.bf16.gmra.mrb[0].mxu0 %v2594
  %v2633 = vpop.f32.mrb[0].mxu0
  %v2634 = vadd.f32 0.0, %v2633
  %v2635 = vpop.f32.mrb[0].mxu0
  %v2636 = vpop.f32.mrb[0].mxu0
  %v2637 = vpop.f32.mrb[0].mxu0
  %2638 = vdwg.mxu0
  %2639 = vrot.lane.b32.xlu0 %v2047, 112
  %v2640 = vpop.permute.xlu0 %2639
  %2641 = vrot.lane.b32.xlu0 %v2047, 80
  %v2642 = vpop.permute.xlu0 %2641
  %v2644 = vsel %vm2051, %v2640, 0
  %v2647 = vsel %vm2051, %v2642, 0
  %2649 = vmatprep.subr.bf16.mxu0 0
  %2650 = vmatpush1.bf16.xpose.msra.mxu0 %v2647
  %2651 = vmatprep.subr.bf16.mxu0 0
  %2652 = vmatpush1.bf16.xpose.msra.mxu0 0
  %2653 = vmatprep.subr.bf16.mxu0 0
  %2654 = vmatpush1.bf16.xpose.msra.mxu0 0
  %2655 = vmatprep.subr.bf16.mxu0 0
  %2656 = vmatpush1.bf16.xpose.msra.mxu0 0
  %2657 = vmatprep.subr.bf16.mxu0 0
  %2658 = vmatpush1.bf16.xpose.msra.mxu0 0
  %2659 = vmatprep.subr.bf16.mxu0 0
  %2660 = vmatpush1.bf16.xpose.msra.mxu0 0
  %2661 = vmatprep.subr.bf16.mxu0 0
  %2662 = vmatpush1.bf16.xpose.msra.mxu0 0
  %2663 = vmatprep.subr.bf16.mxu0 0
  %2664 = vmatpush1.bf16.xpose.msra.mxu0 0
  %2665 = vmatprep.subr.bf16.mxu0 0
  %2666 = vmatpush1.bf16.xpose.msra.mxu0 0
  %2667 = vmatprep.subr.bf16.mxu0 0
  %2668 = vmatpush1.bf16.xpose.msra.mxu0 0
  %2669 = vmatprep.subr.bf16.mxu0 0
  %2670 = vmatpush1.bf16.xpose.msra.mxu0 0
  %2671 = vmatprep.subr.bf16.mxu0 0
  %2672 = vmatpush1.bf16.xpose.msra.mxu0 0
  %2673 = vmatprep.subr.bf16.mxu0 0
  %2674 = vmatpush1.bf16.xpose.msra.mxu0 0
  %2675 = vmatprep.subr.bf16.mxu0 0
  %2676 = vmatpush1.bf16.xpose.msra.mxu0 0
  %2677 = vmatprep.subr.bf16.mxu0 0
  %2678 = vmatpush1.bf16.xpose.msra.mxu0 0
  %2679 = vmatprep.subr.bf16.mxu0 0
  %2680 = vmatpush1.bf16.xpose.msra.mxu0 0
  %2681 = vmatprep.mubr.bf16.mxu0 0
  %2682 = vmatmul.mubr.bf16.gmra.mrb[0].mxu0 %v2644
  %v2683 = vpop.f32.mrb[0].mxu0
  %v2684 = vadd.f32 0.0, %v2683
  %v2685 = vpop.f32.mrb[0].mxu0
  %v2686 = vpop.f32.mrb[0].mxu0
  %v2687 = vpop.f32.mrb[0].mxu0
  %2688 = vdwg.mxu0
  %v2689 = vsel %vm876, %v2534, -inf
  %2690 = vmax.xlane.f32.xlu0 %v2689
  %v2691 = vpop.xlane.xlu0 %2690
  %v2692 = vsel %vm876, %v2584, -inf
  %2693 = vmax.xlane.f32.xlu0 %v2692
  %v2694 = vpop.xlane.xlu0 %2693
  %v2695 = vsel %vm876, %v2634, -inf
  %2696 = vmax.xlane.f32.xlu0 %v2695
  %v2697 = vpop.xlane.xlu0 %2696
  %v2698 = vsel %vm876, %v2684, -inf
  %2699 = vmax.xlane.f32.xlu0 %v2698
  %v2700 = vpop.xlane.xlu0 %2699
  %v2701 = vsub.f32 %v2534, %v2691
  %v2702 = vsub.f32 %v2584, %v2694
  %v2703 = vsub.f32 %v2634, %v2697
  %v2704 = vsub.f32 %v2684, %v2700
  %v2705 = vmul.f32 %v2701, 1.442695
  %v2706 = vpow.pop %v2705
  %v2707 = vmul.f32 %v2702, 1.442695
  %v2708 = vpow.pop %v2707
  %v2709 = vmul.f32 %v2703, 1.442695
  %v2710 = vpow.pop %v2709
  %v2711 = vmul.f32 %v2704, 1.442695
  %v2712 = vpow.pop %v2711
  %v2713 = vsel %vm876, %v2706, 0.0
  %2714 = vadd.xlane.f32.xlu0 %v2713
  %v2715 = vpop.xlane.xlu0 %2714
  %v2716 = vsel %vm876, %v2708, 0.0
  %2717 = vadd.xlane.f32.xlu0 %v2716
  %v2718 = vpop.xlane.xlu0 %2717
  %v2719 = vsel %vm876, %v2710, 0.0
  %2720 = vadd.xlane.f32.xlu0 %v2719
  %v2721 = vpop.xlane.xlu0 %2720
  %v2722 = vsel %vm876, %v2712, 0.0
  %2723 = vadd.xlane.f32.xlu0 %v2722
  %v2724 = vpop.xlane.xlu0 %2723
  %v2725 = vrcp.pop %v2715
  %v2726 = vrcp.pop %v2718
  %v2727 = vrcp.pop %v2721
  %v2728 = vrcp.pop %v2724
  %v2729 = vmul.f32 %v2706, %v2725
  %v2730 = vmul.f32 %v2708, %v2726
  %v2731 = vmul.f32 %v2710, %v2727
  %v2732 = vmul.f32 %v2712, %v2728
  %v2733 = vpack.c.bf16 %v2729, %v2729
  %v2734 = vpack.c.bf16 %v2730, %v2730
  %v2735 = vpack.c.bf16 %v2731, %v2731
  %v2736 = vpack.c.bf16 %v2732, %v2732
  %2737 = vrot.lane.b32.xlu0 %v2044, 48
  %v2738 = vpop.permute.xlu0 %2737
  %v2740 = vsel %vm876, %v2733, 0
  %v2743 = vsel %vm892, %v2738, 0
  %2745 = vmatprep.subr.bf16.mxu0 0
  %2746 = vmatpush1.bf16.msra.mxu0 %v2743
  %2747 = vmatprep.subr.bf16.mxu0 0
  %2748 = vmatpush1.bf16.msra.mxu0 0
  %2749 = vmatprep.subr.bf16.mxu0 0
  %2750 = vmatpush1.bf16.msra.mxu0 0
  %2751 = vmatprep.subr.bf16.mxu0 0
  %2752 = vmatpush1.bf16.msra.mxu0 0
  %2753 = vmatprep.subr.bf16.mxu0 0
  %2754 = vmatpush1.bf16.msra.mxu0 0
  %2755 = vmatprep.subr.bf16.mxu0 0
  %2756 = vmatpush1.bf16.msra.mxu0 0
  %2757 = vmatprep.subr.bf16.mxu0 0
  %2758 = vmatpush1.bf16.msra.mxu0 0
  %2759 = vmatprep.subr.bf16.mxu0 0
  %2760 = vmatpush1.bf16.msra.mxu0 0
  %2761 = vmatprep.subr.bf16.mxu0 0
  %2762 = vmatpush1.bf16.msra.mxu0 0
  %2763 = vmatprep.subr.bf16.mxu0 0
  %2764 = vmatpush1.bf16.msra.mxu0 0
  %2765 = vmatprep.subr.bf16.mxu0 0
  %2766 = vmatpush1.bf16.msra.mxu0 0
  %2767 = vmatprep.subr.bf16.mxu0 0
  %2768 = vmatpush1.bf16.msra.mxu0 0
  %2769 = vmatprep.subr.bf16.mxu0 0
  %2770 = vmatpush1.bf16.msra.mxu0 0
  %2771 = vmatprep.subr.bf16.mxu0 0
  %2772 = vmatpush1.bf16.msra.mxu0 0
  %2773 = vmatprep.subr.bf16.mxu0 0
  %2774 = vmatpush1.bf16.msra.mxu0 0
  %2775 = vmatprep.subr.bf16.mxu0 0
  %2776 = vmatpush1.bf16.msra.mxu0 0
  %2777 = vmatprep.mubr.bf16.mxu0 0
  %2778 = vmatmul.mubr.bf16.gmra.mrb[0].mxu0 %v2740
  %v2779 = vpop.f32.mrb[0].mxu0
  %v2780 = vadd.f32 0.0, %v2779
  %v2781 = vpop.f32.mrb[0].mxu0
  %v2782 = vpop.f32.mrb[0].mxu0
  %v2783 = vpop.f32.mrb[0].mxu0
  %2784 = vdwg.mxu0
  %2785 = vrot.lane.b32.xlu0 %v2045, 48
  %v2786 = vpop.permute.xlu0 %2785
  %v2788 = vsel %vm876, %v2734, 0
  %v2791 = vsel %vm892, %v2786, 0
  %2793 = vmatprep.subr.bf16.mxu0 0
  %2794 = vmatpush1.bf16.msra.mxu0 %v2791
  %2795 = vmatprep.subr.bf16.mxu0 0
  %2796 = vmatpush1.bf16.msra.mxu0 0
  %2797 = vmatprep.subr.bf16.mxu0 0
  %2798 = vmatpush1.bf16.msra.mxu0 0
  %2799 = vmatprep.subr.bf16.mxu0 0
  %2800 = vmatpush1.bf16.msra.mxu0 0
  %2801 = vmatprep.subr.bf16.mxu0 0
  %2802 = vmatpush1.bf16.msra.mxu0 0
  %2803 = vmatprep.subr.bf16.mxu0 0
  %2804 = vmatpush1.bf16.msra.mxu0 0
  %2805 = vmatprep.subr.bf16.mxu0 0
  %2806 = vmatpush1.bf16.msra.mxu0 0
  %2807 = vmatprep.subr.bf16.mxu0 0
  %2808 = vmatpush1.bf16.msra.mxu0 0
  %2809 = vmatprep.subr.bf16.mxu0 0
  %2810 = vmatpush1.bf16.msra.mxu0 0
  %2811 = vmatprep.subr.bf16.mxu0 0
  %2812 = vmatpush1.bf16.msra.mxu0 0
  %2813 = vmatprep.subr.bf16.mxu0 0
  %2814 = vmatpush1.bf16.msra.mxu0 0
  %2815 = vmatprep.subr.bf16.mxu0 0
  %2816 = vmatpush1.bf16.msra.mxu0 0
  %2817 = vmatprep.subr.bf16.mxu0 0
  %2818 = vmatpush1.bf16.msra.mxu0 0
  %2819 = vmatprep.subr.bf16.mxu0 0
  %2820 = vmatpush1.bf16.msra.mxu0 0
  %2821 = vmatprep.subr.bf16.mxu0 0
  %2822 = vmatpush1.bf16.msra.mxu0 0
  %2823 = vmatprep.subr.bf16.mxu0 0
  %2824 = vmatpush1.bf16.msra.mxu0 0
  %2825 = vmatprep.mubr.bf16.mxu0 0
  %2826 = vmatmul.mubr.bf16.gmra.mrb[0].mxu0 %v2788
  %v2827 = vpop.f32.mrb[0].mxu0
  %v2828 = vadd.f32 0.0, %v2827
  %v2829 = vpop.f32.mrb[0].mxu0
  %v2830 = vpop.f32.mrb[0].mxu0
  %v2831 = vpop.f32.mrb[0].mxu0
  %2832 = vdwg.mxu0
  %2833 = vrot.lane.b32.xlu0 %v2046, 48
  %v2834 = vpop.permute.xlu0 %2833
  %v2836 = vsel %vm876, %v2735, 0
  %v2839 = vsel %vm892, %v2834, 0
  %2841 = vmatprep.subr.bf16.mxu0 0
  %2842 = vmatpush1.bf16.msra.mxu0 %v2839
  %2843 = vmatprep.subr.bf16.mxu0 0
  %2844 = vmatpush1.bf16.msra.mxu0 0
  %2845 = vmatprep.subr.bf16.mxu0 0
  %2846 = vmatpush1.bf16.msra.mxu0 0
  %2847 = vmatprep.subr.bf16.mxu0 0
  %2848 = vmatpush1.bf16.msra.mxu0 0
  %2849 = vmatprep.subr.bf16.mxu0 0
  %2850 = vmatpush1.bf16.msra.mxu0 0
  %2851 = vmatprep.subr.bf16.mxu0 0
  %2852 = vmatpush1.bf16.msra.mxu0 0
  %2853 = vmatprep.subr.bf16.mxu0 0
  %2854 = vmatpush1.bf16.msra.mxu0 0
  %2855 = vmatprep.subr.bf16.mxu0 0
  %2856 = vmatpush1.bf16.msra.mxu0 0
  %2857 = vmatprep.subr.bf16.mxu0 0
  %2858 = vmatpush1.bf16.msra.mxu0 0
  %2859 = vmatprep.subr.bf16.mxu0 0
  %2860 = vmatpush1.bf16.msra.mxu0 0
  %2861 = vmatprep.subr.bf16.mxu0 0
  %2862 = vmatpush1.bf16.msra.mxu0 0
  %2863 = vmatprep.subr.bf16.mxu0 0
  %2864 = vmatpush1.bf16.msra.mxu0 0
  %2865 = vmatprep.subr.bf16.mxu0 0
  %2866 = vmatpush1.bf16.msra.mxu0 0
  %2867 = vmatprep.subr.bf16.mxu0 0
  %2868 = vmatpush1.bf16.msra.mxu0 0
  %2869 = vmatprep.subr.bf16.mxu0 0
  %2870 = vmatpush1.bf16.msra.mxu0 0
  %2871 = vmatprep.subr.bf16.mxu0 0
  %2872 = vmatpush1.bf16.msra.mxu0 0
  %2873 = vmatprep.mubr.bf16.mxu0 0
  %2874 = vmatmul.mubr.bf16.gmra.mrb[0].mxu0 %v2836
  %v2875 = vpop.f32.mrb[0].mxu0
  %v2876 = vadd.f32 0.0, %v2875
  %v2877 = vpop.f32.mrb[0].mxu0
  %v2878 = vpop.f32.mrb[0].mxu0
  %v2879 = vpop.f32.mrb[0].mxu0
  %2880 = vdwg.mxu0
  %2881 = vrot.lane.b32.xlu0 %v2047, 48
  %v2882 = vpop.permute.xlu0 %2881
  %v2884 = vsel %vm876, %v2736, 0
  %v2887 = vsel %vm892, %v2882, 0
  %2889 = vmatprep.subr.bf16.mxu0 0
  %2890 = vmatpush1.bf16.msra.mxu0 %v2887
  %2891 = vmatprep.subr.bf16.mxu0 0
  %2892 = vmatpush1.bf16.msra.mxu0 0
  %2893 = vmatprep.subr.bf16.mxu0 0
  %2894 = vmatpush1.bf16.msra.mxu0 0
  %2895 = vmatprep.subr.bf16.mxu0 0
  %2896 = vmatpush1.bf16.msra.mxu0 0
  %2897 = vmatprep.subr.bf16.mxu0 0
  %2898 = vmatpush1.bf16.msra.mxu0 0
  %2899 = vmatprep.subr.bf16.mxu0 0
  %2900 = vmatpush1.bf16.msra.mxu0 0
  %2901 = vmatprep.subr.bf16.mxu0 0
  %2902 = vmatpush1.bf16.msra.mxu0 0
  %2903 = vmatprep.subr.bf16.mxu0 0
  %2904 = vmatpush1.bf16.msra.mxu0 0
  %2905 = vmatprep.subr.bf16.mxu0 0
  %2906 = vmatpush1.bf16.msra.mxu0 0
  %2907 = vmatprep.subr.bf16.mxu0 0
  %2908 = vmatpush1.bf16.msra.mxu0 0
  %2909 = vmatprep.subr.bf16.mxu0 0
  %2910 = vmatpush1.bf16.msra.mxu0 0
  %2911 = vmatprep.subr.bf16.mxu0 0
  %2912 = vmatpush1.bf16.msra.mxu0 0
  %2913 = vmatprep.subr.bf16.mxu0 0
  %2914 = vmatpush1.bf16.msra.mxu0 0
  %2915 = vmatprep.subr.bf16.mxu0 0
  %2916 = vmatpush1.bf16.msra.mxu0 0
  %2917 = vmatprep.subr.bf16.mxu0 0
  %2918 = vmatpush1.bf16.msra.mxu0 0
  %2919 = vmatprep.subr.bf16.mxu0 0
  %2920 = vmatpush1.bf16.msra.mxu0 0
  %2921 = vmatprep.mubr.bf16.mxu0 0
  %2922 = vmatmul.mubr.bf16.gmra.mrb[0].mxu0 %v2884
  %v2923 = vpop.f32.mrb[0].mxu0
  %v2924 = vadd.f32 0.0, %v2923
  %v2925 = vpop.f32.mrb[0].mxu0
  %v2926 = vpop.f32.mrb[0].mxu0
  %v2927 = vpop.f32.mrb[0].mxu0
  %2928 = vdwg.mxu0
  %v2929 = vpack.c.bf16 %v2828, %v2780
  %v2930 = vpack.c.bf16 %v2924, %v2876
  %2933 = vrot.lane.b32.xlu0 %v2929, 16
  %v2934 = vpop.permute.xlu0 %2933
  %2935 = vrot.lane.b32.xlu0 %v2930, 16
  %v2936 = vpop.permute.xlu0 %2935
  %vm2939 = vcmask 261248
  %2940 = vst.msk [vmem:[#allocation4] sm:$0xff] %vm2939, %v2934
  %2941 = vst.msk [vmem:[#allocation4 + $0x8] sm:$0xff] %vm2939, %v2936
  %v2942 = vld [vmem:[#allocation4] sm:$0xff]
  %v2943 = vld [vmem:[#allocation4 + $0x8] sm:$0xff]
  %v2944 = vld [vmem:[%s10] sm:$0xf]
  %v2945 = vld [vmem:[%s10 + $0x4] sm:$0xf]
  %v2946 = vld [vmem:[%s10 + $0x8] sm:$0xf]
  %v2947 = vld [vmem:[%s10 + $0xc] sm:$0xf]
  %v2948 = vld [vmem:[%s11] sm:$0x1]
  %v2950 = vlaneseq
  %v2951 = vshrl.u32 %v2950, 7
  %v2952 = vsub.s32 0, %v2951
  %v2953 = vrot.slane %v2948, %v2952
  %v2959 = vunpack.c.l.b16 %v2944
  %v2960 = vunpack.c.l.b16 %v2945
  %v2961 = vunpack.c.l.b16 %v2946
  %v2962 = vunpack.c.l.b16 %v2947
  %v2963 = vpack.c.b16 %v2960, %v2959
  %v2964 = vpack.c.b16 %v2962, %v2961
  %v2968 = vsel %vm1988, %v2942, 0
  %v2971 = vsel %vm1988, %v2943, 0
  %2973 = vmatprep.subr.bf16.mxu0 0
  %2974 = vmatpush1.bf16.msra.mxu0 %v2963
  %2975 = vmatprep.subr.bf16.mxu0 0
  %2976 = vmatpush1.bf16.msra.mxu0 %v2964
  %2977 = vmatprep.subr.bf16.mxu0 0
  %2978 = vmatpush1.bf16.msra.mxu0 0
  %2979 = vmatprep.subr.bf16.mxu0 0
  %2980 = vmatpush1.bf16.msra.mxu0 0
  %2981 = vmatprep.subr.bf16.mxu0 0
  %2982 = vmatpush1.bf16.msra.mxu0 0
  %2983 = vmatprep.subr.bf16.mxu0 0
  %2984 = vmatpush1.bf16.msra.mxu0 0
  %2985 = vmatprep.subr.bf16.mxu0 0
  %2986 = vmatpush1.bf16.msra.mxu0 0
  %2987 = vmatprep.subr.bf16.mxu0 0
  %2988 = vmatpush1.bf16.msra.mxu0 0
  %2989 = vmatprep.subr.bf16.mxu0 0
  %2990 = vmatpush1.bf16.msra.mxu0 0
  %2991 = vmatprep.subr.bf16.mxu0 0
  %2992 = vmatpush1.bf16.msra.mxu0 0
  %2993 = vmatprep.subr.bf16.mxu0 0
  %2994 = vmatpush1.bf16.msra.mxu0 0
  %2995 = vmatprep.subr.bf16.mxu0 0
  %2996 = vmatpush1.bf16.msra.mxu0 0
  %2997 = vmatprep.subr.bf16.mxu0 0
  %2998 = vmatpush1.bf16.msra.mxu0 0
  %2999 = vmatprep.subr.bf16.mxu0 0
  %3000 = vmatpush1.bf16.msra.mxu0 0
  %3001 = vmatprep.subr.bf16.mxu0 0
  %3002 = vmatpush1.bf16.msra.mxu0 0
  %3003 = vmatprep.subr.bf16.mxu0 0
  %3004 = vmatpush1.bf16.msra.mxu0 0
  %3005 = vmatprep.mubr.bf16.mxu0 0
  %3006 = vmatmul.mubr.bf16.gmra.mrb[0].mxu0 %v2968
  %v3007 = vpop.f32.mrb[0].mxu0
  %v3008 = vadd.f32 %v2953, %v3007
  %v3009 = vpop.f32.mrb[0].mxu0
  %v3010 = vpop.f32.mrb[0].mxu0
  %v3011 = vadd.f32 %v2953, %v3010
  %v3012 = vpop.f32.mrb[0].mxu0
  %3013 = vmatprep.mubr.bf16.mxu0 0
  %3014 = vmatmul.mubr.bf16.gmra.mrb[0].mxu0 %v2971
  %v3015 = vpop.f32.mrb[0].mxu0
  %v3016 = vadd.f32 %v2953, %v3015
  %v3017 = vpop.f32.mrb[0].mxu0
  %v3018 = vpop.f32.mrb[0].mxu0
  %v3019 = vadd.f32 %v2953, %v3018
  %v3020 = vpop.f32.mrb[0].mxu0
  %3021 = vdwg.mxu0
  %v3022 = vadd.f32 %v1955, %v3008
  %v3023 = vadd.f32 %v1956, %v3011
  %v3024 = vadd.f32 %v1957, %v3016
  %v3025 = vadd.f32 %v1958, %v3019
  %v3026 = vld [vmem:[%s12] sm:$0x1]
  %v3027 = vld [vmem:[%s13] sm:$0x1]
  %v3028 = vsel %vm1988, %v3022, 0.0
  %3029 = vadd.xlane.f32.xlu0 %v3028
  %v3030 = vpop.xlane.xlu0 %3029
  %v3031 = vsel %vm1988, %v3023, 0.0
  %3032 = vadd.xlane.f32.xlu0 %v3031
  %v3033 = vpop.xlane.xlu0 %3032
  %v3034 = vsel %vm1988, %v3024, 0.0
  %3035 = vadd.xlane.f32.xlu0 %v3034
  %v3036 = vpop.xlane.xlu0 %3035
  %v3037 = vsel %vm1988, %v3025, 0.0
  %3038 = vadd.xlane.f32.xlu0 %v3037
  %v3039 = vpop.xlane.xlu0 %3038
  %v3040 = vrcp.pop 32.0
  %v3041 = vmul.f32 %v3030, %v3040
  %v3042 = vmul.f32 %v3033, %v3040
  %v3043 = vmul.f32 %v3036, %v3040
  %v3044 = vmul.f32 %v3039, %v3040
  %v3045 = vsub.f32 %v3022, %v3041
  %v3046 = vsub.f32 %v3023, %v3042
  %v3047 = vsub.f32 %v3024, %v3043
  %v3048 = vsub.f32 %v3025, %v3044
  %v3049 = vmul.f32 %v3045, %v3045
  %v3050 = vmul.f32 %v3046, %v3046
  %v3051 = vmul.f32 %v3047, %v3047
  %v3052 = vmul.f32 %v3048, %v3048
  %v3053 = vsel %vm1988, %v3049, 0.0
  %3054 = vadd.xlane.f32.xlu0 %v3053
  %v3055 = vpop.xlane.xlu0 %3054
  %v3056 = vsel %vm1988, %v3050, 0.0
  %3057 = vadd.xlane.f32.xlu0 %v3056
  %v3058 = vpop.xlane.xlu0 %3057
  %v3059 = vsel %vm1988, %v3051, 0.0
  %3060 = vadd.xlane.f32.xlu0 %v3059
  %v3061 = vpop.xlane.xlu0 %3060
  %v3062 = vsel %vm1988, %v3052, 0.0
  %3063 = vadd.xlane.f32.xlu0 %v3062
  %v3064 = vpop.xlane.xlu0 %3063
  %v3065 = vmul.f32 %v3055, %v3040
  %v3066 = vmul.f32 %v3058, %v3040
  %v3067 = vmul.f32 %v3061, %v3040
  %v3068 = vmul.f32 %v3064, %v3040
  %v3069 = vadd.f32 %v3065, 1e-05
  %v3070 = vadd.f32 %v3066, 1e-05
  %v3071 = vadd.f32 %v3067, 1e-05
  %v3072 = vadd.f32 %v3068, 1e-05
  %v3073 = vrsqrt.pop %v3069
  %v3074 = vrsqrt.pop %v3070
  %v3075 = vrsqrt.pop %v3071
  %v3076 = vrsqrt.pop %v3072
  %v3077 = vmul.f32 %v3045, %v3073
  %v3078 = vmul.f32 %v3046, %v3074
  %v3079 = vmul.f32 %v3047, %v3075
  %v3080 = vmul.f32 %v3048, %v3076
  %v3082 = vlaneseq
  %v3083 = vshrl.u32 %v3082, 7
  %v3084 = vsub.s32 0, %v3083
  %v3085 = vrot.slane %v3026, %v3084
  %v3087 = vmul.f32 %v3077, %v3085
  %v3088 = vmul.f32 %v3078, %v3085
  %v3089 = vmul.f32 %v3079, %v3085
  %v3090 = vmul.f32 %v3080, %v3085
  %v3092 = vlaneseq
  %v3093 = vshrl.u32 %v3092, 7
  %v3094 = vsub.s32 0, %v3093
  %v3095 = vrot.slane %v3027, %v3094
  %v3097 = vadd.f32 %v3087, %v3095
  %v3098 = vadd.f32 %v3088, %v3095
  %v3099 = vadd.f32 %v3089, %v3095
  %v3100 = vadd.f32 %v3090, %v3095
  %v3101 = vpack.c.bf16 %v3098, %v3097
  %v3102 = vpack.c.bf16 %v3100, %v3099
  %v3103 = vld [vmem:[%s14] sm:$0xff]
  %v3104 = vld [vmem:[%s14 + $0x8] sm:$0xff]
  %v3105 = vld [vmem:[%s14 + $0x10] sm:$0xff]
  %v3106 = vld [vmem:[%s14 + $0x18] sm:$0xff]
  %v3107 = vld [vmem:[%s14 + $0x20] sm:$0xff]
  %v3108 = vld [vmem:[%s14 + $0x28] sm:$0xff]
  %v3109 = vld [vmem:[%s14 + $0x30] sm:$0xff]
  %v3110 = vld [vmem:[%s14 + $0x38] sm:$0xff]
  %v3111 = vld [vmem:[%s14 + $0x40] sm:$0xff]
  %v3112 = vld [vmem:[%s14 + $0x48] sm:$0xff]
  %v3113 = vld [vmem:[%s14 + $0x50] sm:$0xff]
  %v3114 = vld [vmem:[%s14 + $0x58] sm:$0xff]
  %v3115 = vld [vmem:[%s14 + $0x60] sm:$0xff]
  %v3116 = vld [vmem:[%s14 + $0x68] sm:$0xff]
  %v3117 = vld [vmem:[%s14 + $0x70] sm:$0xff]
  %v3118 = vld [vmem:[%s14 + $0x78] sm:$0xff]
  %v3119 = vld [vmem:[%s15] sm:$0xff]
  %v3121 = vlaneseq
  %v3122 = vshrl.u32 %v3121, 7
  %v3123 = vsub.s32 0, %v3122
  %v3124 = vrot.slane %v3119, %v3123
  %v3125 = vlaneseq
  %v3126 = vshrl.u32 %v3125, 7
  %v3127 = vsub.s32 1, %v3126
  %v3128 = vrot.slane %v3119, %v3127
  %v3129 = vlaneseq
  %v3130 = vshrl.u32 %v3129, 7
  %v3131 = vsub.s32 2, %v3130
  %v3132 = vrot.slane %v3119, %v3131
  %v3133 = vlaneseq
  %v3134 = vshrl.u32 %v3133, 7
  %v3135 = vsub.s32 3, %v3134
  %v3136 = vrot.slane %v3119, %v3135
  %v3137 = vlaneseq
  %v3138 = vshrl.u32 %v3137, 7
  %v3139 = vsub.s32 4, %v3138
  %v3140 = vrot.slane %v3119, %v3139
  %v3141 = vlaneseq
  %v3142 = vshrl.u32 %v3141, 7
  %v3143 = vsub.s32 5, %v3142
  %v3144 = vrot.slane %v3119, %v3143
  %v3145 = vlaneseq
  %v3146 = vshrl.u32 %v3145, 7
  %v3147 = vsub.s32 6, %v3146
  %v3148 = vrot.slane %v3119, %v3147
  %v3149 = vlaneseq
  %v3150 = vshrl.u32 %v3149, 7
  %v3151 = vsub.s32 7, %v3150
  %v3152 = vrot.slane %v3119, %v3151
  %v3177 = vunpack.c.l.b16 %v3103
  %v3178 = vunpack.c.h.b16 %v3103
  %v3179 = vunpack.c.l.b16 %v3104
  %v3180 = vunpack.c.h.b16 %v3104
  %v3181 = vunpack.c.l.b16 %v3105
  %v3182 = vunpack.c.h.b16 %v3105
  %v3183 = vunpack.c.l.b16 %v3106
  %v3184 = vunpack.c.h.b16 %v3106
  %v3185 = vunpack.c.l.b16 %v3107
  %v3186 = vunpack.c.h.b16 %v3107
  %v3187 = vunpack.c.l.b16 %v3108
  %v3188 = vunpack.c.h.b16 %v3108
  %v3189 = vunpack.c.l.b16 %v3109
  %v3190 = vunpack.c.h.b16 %v3109
  %v3191 = vunpack.c.l.b16 %v3110
  %v3192 = vunpack.c.h.b16 %v3110
  %v3193 = vunpack.c.l.b16 %v3111
  %v3194 = vunpack.c.h.b16 %v3111
  %v3195 = vunpack.c.l.b16 %v3112
  %v3196 = vunpack.c.h.b16 %v3112
  %v3197 = vunpack.c.l.b16 %v3113
  %v3198 = vunpack.c.h.b16 %v3113
  %v3199 = vunpack.c.l.b16 %v3114
  %v3200 = vunpack.c.h.b16 %v3114
  %v3201 = vunpack.c.l.b16 %v3115
  %v3202 = vunpack.c.h.b16 %v3115
  %v3203 = vunpack.c.l.b16 %v3116
  %v3204 = vunpack.c.h.b16 %v3116
  %v3205 = vunpack.c.l.b16 %v3117
  %v3206 = vunpack.c.h.b16 %v3117
  %v3207 = vunpack.c.l.b16 %v3118
  %v3208 = vunpack.c.h.b16 %v3118
  %v3209 = vpack.c.b16 %v3185, %v3177
  %v3210 = vpack.c.b16 %v3186, %v3178
  %v3211 = vpack.c.b16 %v3187, %v3179
  %v3212 = vpack.c.b16 %v3188, %v3180
  %v3213 = vpack.c.b16 %v3189, %v3181
  %v3214 = vpack.c.b16 %v3190, %v3182
  %v3215 = vpack.c.b16 %v3191, %v3183
  %v3216 = vpack.c.b16 %v3192, %v3184
  %v3217 = vpack.c.b16 %v3201, %v3193
  %v3218 = vpack.c.b16 %v3202, %v3194
  %v3219 = vpack.c.b16 %v3203, %v3195
  %v3220 = vpack.c.b16 %v3204, %v3196
  %v3221 = vpack.c.b16 %v3205, %v3197
  %v3222 = vpack.c.b16 %v3206, %v3198
  %v3223 = vpack.c.b16 %v3207, %v3199
  %v3224 = vpack.c.b16 %v3208, %v3200
  %v3242 = vsel %vm1988, %v3101, 0
  %v3245 = vsel %vm1988, %v3102, 0
  %3247 = vmatprep.subr.bf16.mxu0 %v3210
  %3248 = vmatpush1.bf16.msra.mxu0 %v3209
  %3249 = vmatprep.subr.bf16.mxu0 %v3218
  %3250 = vmatpush1.bf16.msra.mxu0 %v3217
  %3251 = vmatprep.subr.bf16.mxu0 0
  %3252 = vmatpush1.bf16.msra.mxu0 0
  %3253 = vmatprep.subr.bf16.mxu0 0
  %3254 = vmatpush1.bf16.msra.mxu0 0
  %3255 = vmatprep.subr.bf16.mxu0 0
  %3256 = vmatpush1.bf16.msra.mxu0 0
  %3257 = vmatprep.subr.bf16.mxu0 0
  %3258 = vmatpush1.bf16.msra.mxu0 0
  %3259 = vmatprep.subr.bf16.mxu0 0
  %3260 = vmatpush1.bf16.msra.mxu0 0
  %3261 = vmatprep.subr.bf16.mxu0 0
  %3262 = vmatpush1.bf16.msra.mxu0 0
  %3263 = vmatprep.subr.bf16.mxu0 0
  %3264 = vmatpush1.bf16.msra.mxu0 0
  %3265 = vmatprep.subr.bf16.mxu0 0
  %3266 = vmatpush1.bf16.msra.mxu0 0
  %3267 = vmatprep.subr.bf16.mxu0 0
  %3268 = vmatpush1.bf16.msra.mxu0 0
  %3269 = vmatprep.subr.bf16.mxu0 0
  %3270 = vmatpush1.bf16.msra.mxu0 0
  %3271 = vmatprep.subr.bf16.mxu0 0
  %3272 = vmatpush1.bf16.msra.mxu0 0
  %3273 = vmatprep.subr.bf16.mxu0 0
  %3274 = vmatpush1.bf16.msra.mxu0 0
  %3275 = vmatprep.subr.bf16.mxu0 0
  %3276 = vmatpush1.bf16.msra.mxu0 0
  %3277 = vmatprep.subr.bf16.mxu0 0
  %3278 = vmatpush1.bf16.msra.mxu0 0
  %3279 = vmatprep.mubr.bf16.mxu0 0
  %3280 = vmatmul.mubr.bf16.gmra.mrb[0].mxu0 %v3242
  %v3281 = vpop.f32.mrb[0].mxu0
  %v3282 = vadd.f32 %v3124, %v3281
  %v3283 = vpop.f32.mrb[0].mxu0
  %v3284 = vadd.f32 %v3128, %v3283
  %v3285 = vpop.f32.mrb[0].mxu0
  %v3286 = vadd.f32 %v3124, %v3285
  %v3287 = vpop.f32.mrb[0].mxu0
  %v3288 = vadd.f32 %v3128, %v3287
  %3289 = vmatprep.mubr.bf16.mxu0 0
  %3290 = vmatmul.mubr.bf16.gmra.mrb[0].mxu0 %v3245
  %v3291 = vpop.f32.mrb[0].mxu0
  %v3292 = vadd.f32 %v3124, %v3291
  %v3293 = vpop.f32.mrb[0].mxu0
  %v3294 = vadd.f32 %v3128, %v3293
  %v3295 = vpop.f32.mrb[0].mxu0
  %v3296 = vadd.f32 %v3124, %v3295
  %v3297 = vpop.f32.mrb[0].mxu0
  %v3298 = vadd.f32 %v3128, %v3297
  %3299 = vdwg.mxu0
  %3300 = vmatprep.subr.bf16.mxu0 %v3212
  %3301 = vmatpush1.bf16.msra.mxu0 %v3211
  %3302 = vmatprep.subr.bf16.mxu0 %v3220
  %3303 = vmatpush1.bf16.msra.mxu0 %v3219
  %3304 = vmatprep.subr.bf16.mxu0 0
  %3305 = vmatpush1.bf16.msra.mxu0 0
  %3306 = vmatprep.subr.bf16.mxu0 0
  %3307 = vmatpush1.bf16.msra.mxu0 0
  %3308 = vmatprep.subr.bf16.mxu0 0
  %3309 = vmatpush1.bf16.msra.mxu0 0
  %3310 = vmatprep.subr.bf16.mxu0 0
  %3311 = vmatpush1.bf16.msra.mxu0 0
  %3312 = vmatprep.subr.bf16.mxu0 0
  %3313 = vmatpush1.bf16.msra.mxu0 0
  %3314 = vmatprep.subr.bf16.mxu0 0
  %3315 = vmatpush1.bf16.msra.mxu0 0
  %3316 = vmatprep.subr.bf16.mxu0 0
  %3317 = vmatpush1.bf16.msra.mxu0 0
  %3318 = vmatprep.subr.bf16.mxu0 0
  %3319 = vmatpush1.bf16.msra.mxu0 0
  %3320 = vmatprep.subr.bf16.mxu0 0
  %3321 = vmatpush1.bf16.msra.mxu0 0
  %3322 = vmatprep.subr.bf16.mxu0 0
  %3323 = vmatpush1.bf16.msra.mxu0 0
  %3324 = vmatprep.subr.bf16.mxu0 0
  %3325 = vmatpush1.bf16.msra.mxu0 0
  %3326 = vmatprep.subr.bf16.mxu0 0
  %3327 = vmatpush1.bf16.msra.mxu0 0
  %3328 = vmatprep.subr.bf16.mxu0 0
  %3329 = vmatpush1.bf16.msra.mxu0 0
  %3330 = vmatprep.subr.bf16.mxu0 0
  %3331 = vmatpush1.bf16.msra.mxu0 0
  %3332 = vmatprep.mubr.bf16.mxu0 0
  %3333 = vmatmul.mubr.bf16.gmra.mrb[0].mxu0 %v3242
  %v3334 = vpop.f32.mrb[0].mxu0
  %v3335 = vadd.f32 %v3132, %v3334
  %v3336 = vpop.f32.mrb[0].mxu0
  %v3337 = vadd.f32 %v3136, %v3336
  %v3338 = vpop.f32.mrb[0].mxu0
  %v3339 = vadd.f32 %v3132, %v3338
  %v3340 = vpop.f32.mrb[0].mxu0
  %v3341 = vadd.f32 %v3136, %v3340
  %3342 = vmatprep.mubr.bf16.mxu0 0
  %3343 = vmatmul.mubr.bf16.gmra.mrb[0].mxu0 %v3245
  %v3344 = vpop.f32.mrb[0].mxu0
  %v3345 = vadd.f32 %v3132, %v3344
  %v3346 = vpop.f32.mrb[0].mxu0
  %v3347 = vadd.f32 %v3136, %v3346
  %v3348 = vpop.f32.mrb[0].mxu0
  %v3349 = vadd.f32 %v3132, %v3348
  %v3350 = vpop.f32.mrb[0].mxu0
  %v3351 = vadd.f32 %v3136, %v3350
  %3352 = vdwg.mxu0
  %3353 = vmatprep.subr.bf16.mxu0 %v3214
  %3354 = vmatpush1.bf16.msra.mxu0 %v3213
  %3355 = vmatprep.subr.bf16.mxu0 %v3222
  %3356 = vmatpush1.bf16.msra.mxu0 %v3221
  %3357 = vmatprep.subr.bf16.mxu0 0
  %3358 = vmatpush1.bf16.msra.mxu0 0
  %3359 = vmatprep.subr.bf16.mxu0 0
  %3360 = vmatpush1.bf16.msra.mxu0 0
  %3361 = vmatprep.subr.bf16.mxu0 0
  %3362 = vmatpush1.bf16.msra.mxu0 0
  %3363 = vmatprep.subr.bf16.mxu0 0
  %3364 = vmatpush1.bf16.msra.mxu0 0
  %3365 = vmatprep.subr.bf16.mxu0 0
  %3366 = vmatpush1.bf16.msra.mxu0 0
  %3367 = vmatprep.subr.bf16.mxu0 0
  %3368 = vmatpush1.bf16.msra.mxu0 0
  %3369 = vmatprep.subr.bf16.mxu0 0
  %3370 = vmatpush1.bf16.msra.mxu0 0
  %3371 = vmatprep.subr.bf16.mxu0 0
  %3372 = vmatpush1.bf16.msra.mxu0 0
  %3373 = vmatprep.subr.bf16.mxu0 0
  %3374 = vmatpush1.bf16.msra.mxu0 0
  %3375 = vmatprep.subr.bf16.mxu0 0
  %3376 = vmatpush1.bf16.msra.mxu0 0
  %3377 = vmatprep.subr.bf16.mxu0 0
  %3378 = vmatpush1.bf16.msra.mxu0 0
  %3379 = vmatprep.subr.bf16.mxu0 0
  %3380 = vmatpush1.bf16.msra.mxu0 0
  %3381 = vmatprep.subr.bf16.mxu0 0
  %3382 = vmatpush1.bf16.msra.mxu0 0
  %3383 = vmatprep.subr.bf16.mxu0 0
  %3384 = vmatpush1.bf16.msra.mxu0 0
  %3385 = vmatprep.mubr.bf16.mxu0 0
  %3386 = vmatmul.mubr.bf16.gmra.mrb[0].mxu0 %v3242
  %v3387 = vpop.f32.mrb[0].mxu0
  %v3388 = vadd.f32 %v3140, %v3387
  %v3389 = vpop.f32.mrb[0].mxu0
  %v3390 = vadd.f32 %v3144, %v3389
  %v3391 = vpop.f32.mrb[0].mxu0
  %v3392 = vadd.f32 %v3140, %v3391
  %v3393 = vpop.f32.mrb[0].mxu0
  %v3394 = vadd.f32 %v3144, %v3393
  %3395 = vmatprep.mubr.bf16.mxu0 0
  %3396 = vmatmul.mubr.bf16.gmra.mrb[0].mxu0 %v3245
  %v3397 = vpop.f32.mrb[0].mxu0
  %v3398 = vadd.f32 %v3140, %v3397
  %v3399 = vpop.f32.mrb[0].mxu0
  %v3400 = vadd.f32 %v3144, %v3399
  %v3401 = vpop.f32.mrb[0].mxu0
  %v3402 = vadd.f32 %v3140, %v3401
  %v3403 = vpop.f32.mrb[0].mxu0
  %v3404 = vadd.f32 %v3144, %v3403
  %3405 = vdwg.mxu0
  %3406 = vmatprep.subr.bf16.mxu0 %v3216
  %3407 = vmatpush1.bf16.msra.mxu0 %v3215
  %3408 = vmatprep.subr.bf16.mxu0 %v3224
  %3409 = vmatpush1.bf16.msra.mxu0 %v3223
  %3410 = vmatprep.subr.bf16.mxu0 0
  %3411 = vmatpush1.bf16.msra.mxu0 0
  %3412 = vmatprep.subr.bf16.mxu0 0
  %3413 = vmatpush1.bf16.msra.mxu0 0
  %3414 = vmatprep.subr.bf16.mxu0 0
  %3415 = vmatpush1.bf16.msra.mxu0 0
  %3416 = vmatprep.subr.bf16.mxu0 0
  %3417 = vmatpush1.bf16.msra.mxu0 0
  %3418 = vmatprep.subr.bf16.mxu0 0
  %3419 = vmatpush1.bf16.msra.mxu0 0
  %3420 = vmatprep.subr.bf16.mxu0 0
  %3421 = vmatpush1.bf16.msra.mxu0 0
  %3422 = vmatprep.subr.bf16.mxu0 0
  %3423 = vmatpush1.bf16.msra.mxu0 0
  %3424 = vmatprep.subr.bf16.mxu0 0
  %3425 = vmatpush1.bf16.msra.mxu0 0
  %3426 = vmatprep.subr.bf16.mxu0 0
  %3427 = vmatpush1.bf16.msra.mxu0 0
  %3428 = vmatprep.subr.bf16.mxu0 0
  %3429 = vmatpush1.bf16.msra.mxu0 0
  %3430 = vmatprep.subr.bf16.mxu0 0
  %3431 = vmatpush1.bf16.msra.mxu0 0
  %3432 = vmatprep.subr.bf16.mxu0 0
  %3433 = vmatpush1.bf16.msra.mxu0 0
  %3434 = vmatprep.subr.bf16.mxu0 0
  %3435 = vmatpush1.bf16.msra.mxu0 0
  %3436 = vmatprep.subr.bf16.mxu0 0
  %3437 = vmatpush1.bf16.msra.mxu0 0
  %3438 = vmatprep.mubr.bf16.mxu0 0
  %3439 = vmatmul.mubr.bf16.gmra.mrb[0].mxu0 %v3242
  %v3440 = vpop.f32.mrb[0].mxu0
  %v3441 = vadd.f32 %v3148, %v3440
  %v3442 = vpop.f32.mrb[0].mxu0
  %v3443 = vadd.f32 %v3152, %v3442
  %v3444 = vpop.f32.mrb[0].mxu0
  %v3445 = vadd.f32 %v3148, %v3444
  %v3446 = vpop.f32.mrb[0].mxu0
  %v3447 = vadd.f32 %v3152, %v3446
  %3448 = vmatprep.mubr.bf16.mxu0 0
  %3449 = vmatmul.mubr.bf16.gmra.mrb[0].mxu0 %v3245
  %v3450 = vpop.f32.mrb[0].mxu0
  %v3451 = vadd.f32 %v3148, %v3450
  %v3452 = vpop.f32.mrb[0].mxu0
  %v3453 = vadd.f32 %v3152, %v3452
  %v3454 = vpop.f32.mrb[0].mxu0
  %v3455 = vadd.f32 %v3148, %v3454
  %v3456 = vpop.f32.mrb[0].mxu0
  %v3457 = vadd.f32 %v3152, %v3456
  %3458 = vdwg.mxu0
  %v3459 = vmax.f32 %v3282, 0.0
  %v3460 = vmax.f32 %v3284, 0.0
  %v3461 = vmax.f32 %v3335, 0.0
  %v3462 = vmax.f32 %v3337, 0.0
  %v3463 = vmax.f32 %v3388, 0.0
  %v3464 = vmax.f32 %v3390, 0.0
  %v3465 = vmax.f32 %v3441, 0.0
  %v3466 = vmax.f32 %v3443, 0.0
  %v3467 = vmax.f32 %v3286, 0.0
  %v3468 = vmax.f32 %v3288, 0.0
  %v3469 = vmax.f32 %v3339, 0.0
  %v3470 = vmax.f32 %v3341, 0.0
  %v3471 = vmax.f32 %v3392, 0.0
  %v3472 = vmax.f32 %v3394, 0.0
  %v3473 = vmax.f32 %v3445, 0.0
  %v3474 = vmax.f32 %v3447, 0.0
  %v3475 = vmax.f32 %v3292, 0.0
  %v3476 = vmax.f32 %v3294, 0.0
  %v3477 = vmax.f32 %v3345, 0.0
  %v3478 = vmax.f32 %v3347, 0.0
  %v3479 = vmax.f32 %v3398, 0.0
  %v3480 = vmax.f32 %v3400, 0.0
  %v3481 = vmax.f32 %v3451, 0.0
  %v3482 = vmax.f32 %v3453, 0.0
  %v3483 = vmax.f32 %v3296, 0.0
  %v3484 = vmax.f32 %v3298, 0.0
  %v3485 = vmax.f32 %v3349, 0.0
  %v3486 = vmax.f32 %v3351, 0.0
  %v3487 = vmax.f32 %v3402, 0.0
  %v3488 = vmax.f32 %v3404, 0.0
  %v3489 = vmax.f32 %v3455, 0.0
  %v3490 = vmax.f32 %v3457, 0.0
  %v3491 = vpack.c.bf16 %v3467, %v3459
  %v3492 = vpack.c.bf16 %v3468, %v3460
  %v3493 = vpack.c.bf16 %v3469, %v3461
  %v3494 = vpack.c.bf16 %v3470, %v3462
  %v3495 = vpack.c.bf16 %v3471, %v3463
  %v3496 = vpack.c.bf16 %v3472, %v3464
  %v3497 = vpack.c.bf16 %v3473, %v3465
  %v3498 = vpack.c.bf16 %v3474, %v3466
  %v3499 = vpack.c.bf16 %v3483, %v3475
  %v3500 = vpack.c.bf16 %v3484, %v3476
  %v3501 = vpack.c.bf16 %v3485, %v3477
  %v3502 = vpack.c.bf16 %v3486, %v3478
  %v3503 = vpack.c.bf16 %v3487, %v3479
  %v3504 = vpack.c.bf16 %v3488, %v3480
  %v3505 = vpack.c.bf16 %v3489, %v3481
  %v3506 = vpack.c.bf16 %v3490, %v3482
  %v3507 = vld [vmem:[%s16] sm:$0xf]
  %v3508 = vld [vmem:[%s16 + $0x4] sm:$0xf]
  %v3509 = vld [vmem:[%s16 + $0x8] sm:$0xf]
  %v3510 = vld [vmem:[%s16 + $0xc] sm:$0xf]
  %v3511 = vld [vmem:[%s16 + $0x10] sm:$0xf]
  %v3512 = vld [vmem:[%s16 + $0x14] sm:$0xf]
  %v3513 = vld [vmem:[%s16 + $0x18] sm:$0xf]
  %v3514 = vld [vmem:[%s16 + $0x1c] sm:$0xf]
  %v3515 = vld [vmem:[%s16 + $0x20] sm:$0xf]
  %v3516 = vld [vmem:[%s16 + $0x24] sm:$0xf]
  %v3517 = vld [vmem:[%s16 + $0x28] sm:$0xf]
  %v3518 = vld [vmem:[%s16 + $0x2c] sm:$0xf]
  %v3519 = vld [vmem:[%s16 + $0x30] sm:$0xf]
  %v3520 = vld [vmem:[%s16 + $0x34] sm:$0xf]
  %v3521 = vld [vmem:[%s16 + $0x38] sm:$0xf]
  %v3522 = vld [vmem:[%s16 + $0x3c] sm:$0xf]
  %v3523 = vld [vmem:[%s16 + $0x40] sm:$0xf]
  %v3524 = vld [vmem:[%s16 + $0x44] sm:$0xf]
  %v3525 = vld [vmem:[%s16 + $0x48] sm:$0xf]
  %v3526 = vld [vmem:[%s16 + $0x4c] sm:$0xf]
  %v3527 = vld [vmem:[%s16 + $0x50] sm:$0xf]
  %v3528 = vld [vmem:[%s16 + $0x54] sm:$0xf]
  %v3529 = vld [vmem:[%s16 + $0x58] sm:$0xf]
  %v3530 = vld [vmem:[%s16 + $0x5c] sm:$0xf]
  %v3531 = vld [vmem:[%s16 + $0x60] sm:$0xf]
  %v3532 = vld [vmem:[%s16 + $0x64] sm:$0xf]
  %v3533 = vld [vmem:[%s16 + $0x68] sm:$0xf]
  %v3534 = vld [vmem:[%s16 + $0x6c] sm:$0xf]
  %v3535 = vld [vmem:[%s16 + $0x70] sm:$0xf]
  %v3536 = vld [vmem:[%s16 + $0x74] sm:$0xf]
  %v3537 = vld [vmem:[%s16 + $0x78] sm:$0xf]
  %v3538 = vld [vmem:[%s16 + $0x7c] sm:$0xf]
  %v3539 = vld [vmem:[%s16 + $0x80] sm:$0xf]
  %v3540 = vld [vmem:[%s16 + $0x84] sm:$0xf]
  %v3541 = vld [vmem:[%s16 + $0x88] sm:$0xf]
  %v3542 = vld [vmem:[%s16 + $0x8c] sm:$0xf]
  %v3543 = vld [vmem:[%s16 + $0x90] sm:$0xf]
  %v3544 = vld [vmem:[%s16 + $0x94] sm:$0xf]
  %v3545 = vld [vmem:[%s16 + $0x98] sm:$0xf]
  %v3546 = vld [vmem:[%s16 + $0x9c] sm:$0xf]
  %v3547 = vld [vmem:[%s16 + $0xa0] sm:$0xf]
  %v3548 = vld [vmem:[%s16 + $0xa4] sm:$0xf]
  %v3549 = vld [vmem:[%s16 + $0xa8] sm:$0xf]
  %v3550 = vld [vmem:[%s16 + $0xac] sm:$0xf]
  %v3551 = vld [vmem:[%s16 + $0xb0] sm:$0xf]
  %v3552 = vld [vmem:[%s16 + $0xb4] sm:$0xf]
  %v3553 = vld [vmem:[%s16 + $0xb8] sm:$0xf]
  %v3554 = vld [vmem:[%s16 + $0xbc] sm:$0xf]
  %v3555 = vld [vmem:[%s16 + $0xc0] sm:$0xf]
  %v3556 = vld [vmem:[%s16 + $0xc4] sm:$0xf]
  %v3557 = vld [vmem:[%s16 + $0xc8] sm:$0xf]
  %v3558 = vld [vmem:[%s16 + $0xcc] sm:$0xf]
  %v3559 = vld [vmem:[%s16 + $0xd0] sm:$0xf]
  %v3560 = vld [vmem:[%s16 + $0xd4] sm:$0xf]
  %v3561 = vld [vmem:[%s16 + $0xd8] sm:$0xf]
  %v3562 = vld [vmem:[%s16 + $0xdc] sm:$0xf]
  %v3563 = vld [vmem:[%s16 + $0xe0] sm:$0xf]
  %v3564 = vld [vmem:[%s16 + $0xe4] sm:$0xf]
  %v3565 = vld [vmem:[%s16 + $0xe8] sm:$0xf]
  %v3566 = vld [vmem:[%s16 + $0xec] sm:$0xf]
  %v3567 = vld [vmem:[%s16 + $0xf0] sm:$0xf]
  %v3568 = vld [vmem:[%s16 + $0xf4] sm:$0xf]
  %v3569 = vld [vmem:[%s16 + $0xf8] sm:$0xf]
  %v3570 = vld [vmem:[%s16 + $0xfc] sm:$0xf]
  %v3571 = vld [vmem:[%s16 + $0x100] sm:$0xf]
  %v3572 = vld [vmem:[%s16 + $0x104] sm:$0xf]
  %v3573 = vld [vmem:[%s16 + $0x108] sm:$0xf]
  %v3574 = vld [vmem:[%s16 + $0x10c] sm:$0xf]
  %v3575 = vld [vmem:[%s16 + $0x110] sm:$0xf]
  %v3576 = vld [vmem:[%s16 + $0x114] sm:$0xf]
  %v3577 = vld [vmem:[%s16 + $0x118] sm:$0xf]
  %v3578 = vld [vmem:[%s16 + $0x11c] sm:$0xf]
  %v3579 = vld [vmem:[%s16 + $0x120] sm:$0xf]
  %v3580 = vld [vmem:[%s16 + $0x124] sm:$0xf]
  %v3581 = vld [vmem:[%s16 + $0x128] sm:$0xf]
  %v3582 = vld [vmem:[%s16 + $0x12c] sm:$0xf]
  %v3583 = vld [vmem:[%s16 + $0x130] sm:$0xf]
  %v3584 = vld [vmem:[%s16 + $0x134] sm:$0xf]
  %v3585 = vld [vmem:[%s16 + $0x138] sm:$0xf]
  %v3586 = vld [vmem:[%s16 + $0x13c] sm:$0xf]
  %v3587 = vld [vmem:[%s16 + $0x140] sm:$0xf]
  %v3588 = vld [vmem:[%s16 + $0x144] sm:$0xf]
  %v3589 = vld [vmem:[%s16 + $0x148] sm:$0xf]
  %v3590 = vld [vmem:[%s16 + $0x14c] sm:$0xf]
  %v3591 = vld [vmem:[%s16 + $0x150] sm:$0xf]
  %v3592 = vld [vmem:[%s16 + $0x154] sm:$0xf]
  %v3593 = vld [vmem:[%s16 + $0x158] sm:$0xf]
  %v3594 = vld [vmem:[%s16 + $0x15c] sm:$0xf]
  %v3595 = vld [vmem:[%s16 + $0x160] sm:$0xf]
  %v3596 = vld [vmem:[%s16 + $0x164] sm:$0xf]
  %v3597 = vld [vmem:[%s16 + $0x168] sm:$0xf]
  %v3598 = vld [vmem:[%s16 + $0x16c] sm:$0xf]
  %v3599 = vld [vmem:[%s16 + $0x170] sm:$0xf]
  %v3600 = vld [vmem:[%s16 + $0x174] sm:$0xf]
  %v3601 = vld [vmem:[%s16 + $0x178] sm:$0xf]
  %v3602 = vld [vmem:[%s16 + $0x17c] sm:$0xf]
  %v3603 = vld [vmem:[%s16 + $0x180] sm:$0xf]
  %v3604 = vld [vmem:[%s16 + $0x184] sm:$0xf]
  %v3605 = vld [vmem:[%s16 + $0x188] sm:$0xf]
  %v3606 = vld [vmem:[%s16 + $0x18c] sm:$0xf]
  %v3607 = vld [vmem:[%s16 + $0x190] sm:$0xf]
  %v3608 = vld [vmem:[%s16 + $0x194] sm:$0xf]
  %v3609 = vld [vmem:[%s16 + $0x198] sm:$0xf]
  %v3610 = vld [vmem:[%s16 + $0x19c] sm:$0xf]
  %v3611 = vld [vmem:[%s16 + $0x1a0] sm:$0xf]
  %v3612 = vld [vmem:[%s16 + $0x1a4] sm:$0xf]
  %v3613 = vld [vmem:[%s16 + $0x1a8] sm:$0xf]
  %v3614 = vld [vmem:[%s16 + $0x1ac] sm:$0xf]
  %v3615 = vld [vmem:[%s16 + $0x1b0] sm:$0xf]
  %v3616 = vld [vmem:[%s16 + $0x1b4] sm:$0xf]
  %v3617 = vld [vmem:[%s16 + $0x1b8] sm:$0xf]
  %v3618 = vld [vmem:[%s16 + $0x1bc] sm:$0xf]
  %v3619 = vld [vmem:[%s16 + $0x1c0] sm:$0xf]
  %v3620 = vld [vmem:[%s16 + $0x1c4] sm:$0xf]
  %v3621 = vld [vmem:[%s16 + $0x1c8] sm:$0xf]
  %v3622 = vld [vmem:[%s16 + $0x1cc] sm:$0xf]
  %v3623 = vld [vmem:[%s16 + $0x1d0] sm:$0xf]
  %v3624 = vld [vmem:[%s16 + $0x1d4] sm:$0xf]
  %v3625 = vld [vmem:[%s16 + $0x1d8] sm:$0xf]
  %v3626 = vld [vmem:[%s16 + $0x1dc] sm:$0xf]
  %v3627 = vld [vmem:[%s16 + $0x1e0] sm:$0xf]
  %v3628 = vld [vmem:[%s16 + $0x1e4] sm:$0xf]
  %v3629 = vld [vmem:[%s16 + $0x1e8] sm:$0xf]
  %v3630 = vld [vmem:[%s16 + $0x1ec] sm:$0xf]
  %v3631 = vld [vmem:[%s16 + $0x1f0] sm:$0xf]
  %v3632 = vld [vmem:[%s16 + $0x1f4] sm:$0xf]
  %v3633 = vld [vmem:[%s16 + $0x1f8] sm:$0xf]
  %v3634 = vld [vmem:[%s16 + $0x1fc] sm:$0xf]
  %v3635 = vld [vmem:[%s17] sm:$0x1]
  %v3637 = vlaneseq
  %v3638 = vshrl.u32 %v3637, 7
  %v3639 = vsub.s32 0, %v3638
  %v3640 = vrot.slane %v3635, %v3639
  %v3770 = vunpack.c.l.b16 %v3507
  %v3771 = vunpack.c.l.b16 %v3508
  %v3772 = vunpack.c.l.b16 %v3509
  %v3773 = vunpack.c.l.b16 %v3510
  %v3774 = vunpack.c.l.b16 %v3511
  %v3775 = vunpack.c.l.b16 %v3512
  %v3776 = vunpack.c.l.b16 %v3513
  %v3777 = vunpack.c.l.b16 %v3514
  %v3778 = vunpack.c.l.b16 %v3515
  %v3779 = vunpack.c.l.b16 %v3516
  %v3780 = vunpack.c.l.b16 %v3517
  %v3781 = vunpack.c.l.b16 %v3518
  %v3782 = vunpack.c.l.b16 %v3519
  %v3783 = vunpack.c.l.b16 %v3520
  %v3784 = vunpack.c.l.b16 %v3521
  %v3785 = vunpack.c.l.b16 %v3522
  %v3786 = vunpack.c.l.b16 %v3523
  %v3787 = vunpack.c.l.b16 %v3524
  %v3788 = vunpack.c.l.b16 %v3525
  %v3789 = vunpack.c.l.b16 %v3526
  %v3790 = vunpack.c.l.b16 %v3527
  %v3791 = vunpack.c.l.b16 %v3528
  %v3792 = vunpack.c.l.b16 %v3529
  %v3793 = vunpack.c.l.b16 %v3530
  %v3794 = vunpack.c.l.b16 %v3531
  %v3795 = vunpack.c.l.b16 %v3532
  %v3796 = vunpack.c.l.b16 %v3533
  %v3797 = vunpack.c.l.b16 %v3534
  %v3798 = vunpack.c.l.b16 %v3535
  %v3799 = vunpack.c.l.b16 %v3536
  %v3800 = vunpack.c.l.b16 %v3537
  %v3801 = vunpack.c.l.b16 %v3538
  %v3802 = vunpack.c.l.b16 %v3539
  %v3803 = vunpack.c.l.b16 %v3540
  %v3804 = vunpack.c.l.b16 %v3541
  %v3805 = vunpack.c.l.b16 %v3542
  %v3806 = vunpack.c.l.b16 %v3543
  %v3807 = vunpack.c.l.b16 %v3544
  %v3808 = vunpack.c.l.b16 %v3545
  %v3809 = vunpack.c.l.b16 %v3546
  %v3810 = vunpack.c.l.b16 %v3547
  %v3811 = vunpack.c.l.b16 %v3548
  %v3812 = vunpack.c.l.b16 %v3549
  %v3813 = vunpack.c.l.b16 %v3550
  %v3814 = vunpack.c.l.b16 %v3551
  %v3815 = vunpack.c.l.b16 %v3552
  %v3816 = vunpack.c.l.b16 %v3553
  %v3817 = vunpack.c.l.b16 %v3554
  %v3818 = vunpack.c.l.b16 %v3555
  %v3819 = vunpack.c.l.b16 %v3556
  %v3820 = vunpack.c.l.b16 %v3557
  %v3821 = vunpack.c.l.b16 %v3558
  %v3822 = vunpack.c.l.b16 %v3559
  %v3823 = vunpack.c.l.b16 %v3560
  %v3824 = vunpack.c.l.b16 %v3561
  %v3825 = vunpack.c.l.b16 %v3562
  %v3826 = vunpack.c.l.b16 %v3563
  %v3827 = vunpack.c.l.b16 %v3564
  %v3828 = vunpack.c.l.b16 %v3565
  %v3829 = vunpack.c.l.b16 %v3566
  %v3830 = vunpack.c.l.b16 %v3567
  %v3831 = vunpack.c.l.b16 %v3568
  %v3832 = vunpack.c.l.b16 %v3569
  %v3833 = vunpack.c.l.b16 %v3570
  %v3834 = vunpack.c.l.b16 %v3571
  %v3835 = vunpack.c.l.b16 %v3572
  %v3836 = vunpack.c.l.b16 %v3573
  %v3837 = vunpack.c.l.b16 %v3574
  %v3838 = vunpack.c.l.b16 %v3575
  %v3839 = vunpack.c.l.b16 %v3576
  %v3840 = vunpack.c.l.b16 %v3577
  %v3841 = vunpack.c.l.b16 %v3578
  %v3842 = vunpack.c.l.b16 %v3579
  %v3843 = vunpack.c.l.b16 %v3580
  %v3844 = vunpack.c.l.b16 %v3581
  %v3845 = vunpack.c.l.b16 %v3582
  %v3846 = vunpack.c.l.b16 %v3583
  %v3847 = vunpack.c.l.b16 %v3584
  %v3848 = vunpack.c.l.b16 %v3585
  %v3849 = vunpack.c.l.b16 %v3586
  %v3850 = vunpack.c.l.b16 %v3587
  %v3851 = vunpack.c.l.b16 %v3588
  %v3852 = vunpack.c.l.b16 %v3589
  %v3853 = vunpack.c.l.b16 %v3590
  %v3854 = vunpack.c.l.b16 %v3591
  %v3855 = vunpack.c.l.b16 %v3592
  %v3856 = vunpack.c.l.b16 %v3593
  %v3857 = vunpack.c.l.b16 %v3594
  %v3858 = vunpack.c.l.b16 %v3595
  %v3859 = vunpack.c.l.b16 %v3596
  %v3860 = vunpack.c.l.b16 %v3597
  %v3861 = vunpack.c.l.b16 %v3598
  %v3862 = vunpack.c.l.b16 %v3599
  %v3863 = vunpack.c.l.b16 %v3600
  %v3864 = vunpack.c.l.b16 %v3601
  %v3865 = vunpack.c.l.b16 %v3602
  %v3866 = vunpack.c.l.b16 %v3603
  %v3867 = vunpack.c.l.b16 %v3604
  %v3868 = vunpack.c.l.b16 %v3605
  %v3869 = vunpack.c.l.b16 %v3606
  %v3870 = vunpack.c.l.b16 %v3607
  %v3871 = vunpack.c.l.b16 %v3608
  %v3872 = vunpack.c.l.b16 %v3609
  %v3873 = vunpack.c.l.b16 %v3610
  %v3874 = vunpack.c.l.b16 %v3611
  %v3875 = vunpack.c.l.b16 %v3612
  %v3876 = vunpack.c.l.b16 %v3613
  %v3877 = vunpack.c.l.b16 %v3614
  %v3878 = vunpack.c.l.b16 %v3615
  %v3879 = vunpack.c.l.b16 %v3616
  %v3880 = vunpack.c.l.b16 %v3617
  %v3881 = vunpack.c.l.b16 %v3618
  %v3882 = vunpack.c.l.b16 %v3619
  %v3883 = vunpack.c.l.b16 %v3620
  %v3884 = vunpack.c.l.b16 %v3621
  %v3885 = vunpack.c.l.b16 %v3622
  %v3886 = vunpack.c.l.b16 %v3623
  %v3887 = vunpack.c.l.b16 %v3624
  %v3888 = vunpack.c.l.b16 %v3625
  %v3889 = vunpack.c.l.b16 %v3626
  %v3890 = vunpack.c.l.b16 %v3627
  %v3891 = vunpack.c.l.b16 %v3628
  %v3892 = vunpack.c.l.b16 %v3629
  %v3893 = vunpack.c.l.b16 %v3630
  %v3894 = vunpack.c.l.b16 %v3631
  %v3895 = vunpack.c.l.b16 %v3632
  %v3896 = vunpack.c.l.b16 %v3633
  %v3897 = vunpack.c.l.b16 %v3634
  %v3898 = vpack.c.b16 %v3771, %v3770
  %v3899 = vpack.c.b16 %v3773, %v3772
  %v3900 = vpack.c.b16 %v3775, %v3774
  %v3901 = vpack.c.b16 %v3777, %v3776
  %v3902 = vpack.c.b16 %v3779, %v3778
  %v3903 = vpack.c.b16 %v3781, %v3780
  %v3904 = vpack.c.b16 %v3783, %v3782
  %v3905 = vpack.c.b16 %v3785, %v3784
  %v3906 = vpack.c.b16 %v3787, %v3786
  %v3907 = vpack.c.b16 %v3789, %v3788
  %v3908 = vpack.c.b16 %v3791, %v3790
  %v3909 = vpack.c.b16 %v3793, %v3792
  %v3910 = vpack.c.b16 %v3795, %v3794
  %v3911 = vpack.c.b16 %v3797, %v3796
  %v3912 = vpack.c.b16 %v3799, %v3798
  %v3913 = vpack.c.b16 %v3801, %v3800
  %v3914 = vpack.c.b16 %v3803, %v3802
  %v3915 = vpack.c.b16 %v3805, %v3804
  %v3916 = vpack.c.b16 %v3807, %v3806
  %v3917 = vpack.c.b16 %v3809, %v3808
  %v3918 = vpack.c.b16 %v3811, %v3810
  %v3919 = vpack.c.b16 %v3813, %v3812
  %v3920 = vpack.c.b16 %v3815, %v3814
  %v3921 = vpack.c.b16 %v3817, %v3816
  %v3922 = vpack.c.b16 %v3819, %v3818
  %v3923 = vpack.c.b16 %v3821, %v3820
  %v3924 = vpack.c.b16 %v3823, %v3822
  %v3925 = vpack.c.b16 %v3825, %v3824
  %v3926 = vpack.c.b16 %v3827, %v3826
  %v3927 = vpack.c.b16 %v3829, %v3828
  %v3928 = vpack.c.b16 %v3831, %v3830
  %v3929 = vpack.c.b16 %v3833, %v3832
  %v3930 = vpack.c.b16 %v3835, %v3834
  %v3931 = vpack.c.b16 %v3837, %v3836
  %v3932 = vpack.c.b16 %v3839, %v3838
  %v3933 = vpack.c.b16 %v3841, %v3840
  %v3934 = vpack.c.b16 %v3843, %v3842
  %v3935 = vpack.c.b16 %v3845, %v3844
  %v3936 = vpack.c.b16 %v3847, %v3846
  %v3937 = vpack.c.b16 %v3849, %v3848
  %v3938 = vpack.c.b16 %v3851, %v3850
  %v3939 = vpack.c.b16 %v3853, %v3852
  %v3940 = vpack.c.b16 %v3855, %v3854
  %v3941 = vpack.c.b16 %v3857, %v3856
  %v3942 = vpack.c.b16 %v3859, %v3858
  %v3943 = vpack.c.b16 %v3861, %v3860
  %v3944 = vpack.c.b16 %v3863, %v3862
  %v3945 = vpack.c.b16 %v3865, %v3864
  %v3946 = vpack.c.b16 %v3867, %v3866
  %v3947 = vpack.c.b16 %v3869, %v3868
  %v3948 = vpack.c.b16 %v3871, %v3870
  %v3949 = vpack.c.b16 %v3873, %v3872
  %v3950 = vpack.c.b16 %v3875, %v3874
  %v3951 = vpack.c.b16 %v3877, %v3876
  %v3952 = vpack.c.b16 %v3879, %v3878
  %v3953 = vpack.c.b16 %v3881, %v3880
  %v3954 = vpack.c.b16 %v3883, %v3882
  %v3955 = vpack.c.b16 %v3885, %v3884
  %v3956 = vpack.c.b16 %v3887, %v3886
  %v3957 = vpack.c.b16 %v3889, %v3888
  %v3958 = vpack.c.b16 %v3891, %v3890
  %v3959 = vpack.c.b16 %v3893, %v3892
  %v3960 = vpack.c.b16 %v3895, %v3894
  %v3961 = vpack.c.b16 %v3897, %v3896
  %4026 = vmatprep.subr.bf16.mxu0 0
  %4027 = vmatpush1.bf16.msra.mxu0 %v3898
  %4028 = vmatprep.subr.bf16.mxu0 0
  %4029 = vmatpush1.bf16.msra.mxu0 %v3899
  %4030 = vmatprep.subr.bf16.mxu0 0
  %4031 = vmatpush1.bf16.msra.mxu0 %v3900
  %4032 = vmatprep.subr.bf16.mxu0 0
  %4033 = vmatpush1.bf16.msra.mxu0 %v3901
  %4034 = vmatprep.subr.bf16.mxu0 0
  %4035 = vmatpush1.bf16.msra.mxu0 %v3902
  %4036 = vmatprep.subr.bf16.mxu0 0
  %4037 = vmatpush1.bf16.msra.mxu0 %v3903
  %4038 = vmatprep.subr.bf16.mxu0 0
  %4039 = vmatpush1.bf16.msra.mxu0 %v3904
  %4040 = vmatprep.subr.bf16.mxu0 0
  %4041 = vmatpush1.bf16.msra.mxu0 %v3905
  %4042 = vmatprep.subr.bf16.mxu0 0
  %4043 = vmatpush1.bf16.msra.mxu0 %v3906
  %4044 = vmatprep.subr.bf16.mxu0 0
  %4045 = vmatpush1.bf16.msra.mxu0 %v3907
  %4046 = vmatprep.subr.bf16.mxu0 0
  %4047 = vmatpush1.bf16.msra.mxu0 %v3908
  %4048 = vmatprep.subr.bf16.mxu0 0
  %4049 = vmatpush1.bf16.msra.mxu0 %v3909
  %4050 = vmatprep.subr.bf16.mxu0 0
  %4051 = vmatpush1.bf16.msra.mxu0 %v3910
  %4052 = vmatprep.subr.bf16.mxu0 0
  %4053 = vmatpush1.bf16.msra.mxu0 %v3911
  %4054 = vmatprep.subr.bf16.mxu0 0
  %4055 = vmatpush1.bf16.msra.mxu0 %v3912
  %4056 = vmatprep.subr.bf16.mxu0 0
  %4057 = vmatpush1.bf16.msra.mxu0 %v3913
  %4058 = vmatprep.mubr.bf16.mxu0 %v3492
  %4059 = vmatmul.mubr.bf16.gmra.mrb[0].mxu0 %v3491
  %v4060 = vpop.f32.mrb[0].mxu0
  %v4061 = vadd.f32 %v3640, %v4060
  %v4062 = vpop.f32.mrb[0].mxu0
  %v4063 = vpop.f32.mrb[0].mxu0
  %v4064 = vadd.f32 %v3640, %v4063
  %v4065 = vpop.f32.mrb[0].mxu0
  %4066 = vmatprep.mubr.bf16.mxu0 %v3500
  %4067 = vmatmul.mubr.bf16.gmra.mrb[0].mxu0 %v3499
  %v4068 = vpop.f32.mrb[0].mxu0
  %v4069 = vadd.f32 %v3640, %v4068
  %v4070 = vpop.f32.mrb[0].mxu0
  %v4071 = vpop.f32.mrb[0].mxu0
  %v4072 = vadd.f32 %v3640, %v4071
  %v4073 = vpop.f32.mrb[0].mxu0
  %4074 = vdwg.mxu0
  %4075 = vmatprep.subr.bf16.mxu0 0
  %4076 = vmatpush1.bf16.msra.mxu0 %v3914
  %4077 = vmatprep.subr.bf16.mxu0 0
  %4078 = vmatpush1.bf16.msra.mxu0 %v3915
  %4079 = vmatprep.subr.bf16.mxu0 0
  %4080 = vmatpush1.bf16.msra.mxu0 %v3916
  %4081 = vmatprep.subr.bf16.mxu0 0
  %4082 = vmatpush1.bf16.msra.mxu0 %v3917
  %4083 = vmatprep.subr.bf16.mxu0 0
  %4084 = vmatpush1.bf16.msra.mxu0 %v3918
  %4085 = vmatprep.subr.bf16.mxu0 0
  %4086 = vmatpush1.bf16.msra.mxu0 %v3919
  %4087 = vmatprep.subr.bf16.mxu0 0
  %4088 = vmatpush1.bf16.msra.mxu0 %v3920
  %4089 = vmatprep.subr.bf16.mxu0 0
  %4090 = vmatpush1.bf16.msra.mxu0 %v3921
  %4091 = vmatprep.subr.bf16.mxu0 0
  %4092 = vmatpush1.bf16.msra.mxu0 %v3922
  %4093 = vmatprep.subr.bf16.mxu0 0
  %4094 = vmatpush1.bf16.msra.mxu0 %v3923
  %4095 = vmatprep.subr.bf16.mxu0 0
  %4096 = vmatpush1.bf16.msra.mxu0 %v3924
  %4097 = vmatprep.subr.bf16.mxu0 0
  %4098 = vmatpush1.bf16.msra.mxu0 %v3925
  %4099 = vmatprep.subr.bf16.mxu0 0
  %4100 = vmatpush1.bf16.msra.mxu0 %v3926
  %4101 = vmatprep.subr.bf16.mxu0 0
  %4102 = vmatpush1.bf16.msra.mxu0 %v3927
  %4103 = vmatprep.subr.bf16.mxu0 0
  %4104 = vmatpush1.bf16.msra.mxu0 %v3928
  %4105 = vmatprep.subr.bf16.mxu0 0
  %4106 = vmatpush1.bf16.msra.mxu0 %v3929
  %4107 = vmatprep.mubr.bf16.mxu0 %v3494
  %4108 = vmatmul.mubr.bf16.gmra.mrb[0].mxu0 %v3493
  %v4109 = vpop.f32.mrb[0].mxu0
  %v4110 = vadd.f32 %v4061, %v4109
  %v4111 = vpop.f32.mrb[0].mxu0
  %v4112 = vpop.f32.mrb[0].mxu0
  %v4113 = vadd.f32 %v4064, %v4112
  %v4114 = vpop.f32.mrb[0].mxu0
  %4115 = vmatprep.mubr.bf16.mxu0 %v3502
  %4116 = vmatmul.mubr.bf16.gmra.mrb[0].mxu0 %v3501
  %v4117 = vpop.f32.mrb[0].mxu0
  %v4118 = vadd.f32 %v4069, %v4117
  %v4119 = vpop.f32.mrb[0].mxu0
  %v4120 = vpop.f32.mrb[0].mxu0
  %v4121 = vadd.f32 %v4072, %v4120
  %v4122 = vpop.f32.mrb[0].mxu0
  %4123 = vdwg.mxu0
  %4124 = vmatprep.subr.bf16.mxu0 0
  %4125 = vmatpush1.bf16.msra.mxu0 %v3930
  %4126 = vmatprep.subr.bf16.mxu0 0
  %4127 = vmatpush1.bf16.msra.mxu0 %v3931
  %4128 = vmatprep.subr.bf16.mxu0 0
  %4129 = vmatpush1.bf16.msra.mxu0 %v3932
  %4130 = vmatprep.subr.bf16.mxu0 0
  %4131 = vmatpush1.bf16.msra.mxu0 %v3933
  %4132 = vmatprep.subr.bf16.mxu0 0
  %4133 = vmatpush1.bf16.msra.mxu0 %v3934
  %4134 = vmatprep.subr.bf16.mxu0 0
  %4135 = vmatpush1.bf16.msra.mxu0 %v3935
  %4136 = vmatprep.subr.bf16.mxu0 0
  %4137 = vmatpush1.bf16.msra.mxu0 %v3936
  %4138 = vmatprep.subr.bf16.mxu0 0
  %4139 = vmatpush1.bf16.msra.mxu0 %v3937
  %4140 = vmatprep.subr.bf16.mxu0 0
  %4141 = vmatpush1.bf16.msra.mxu0 %v3938
  %4142 = vmatprep.subr.bf16.mxu0 0
  %4143 = vmatpush1.bf16.msra.mxu0 %v3939
  %4144 = vmatprep.subr.bf16.mxu0 0
  %4145 = vmatpush1.bf16.msra.mxu0 %v3940
  %4146 = vmatprep.subr.bf16.mxu0 0
  %4147 = vmatpush1.bf16.msra.mxu0 %v3941
  %4148 = vmatprep.subr.bf16.mxu0 0
  %4149 = vmatpush1.bf16.msra.mxu0 %v3942
  %4150 = vmatprep.subr.bf16.mxu0 0
  %4151 = vmatpush1.bf16.msra.mxu0 %v3943
  %4152 = vmatprep.subr.bf16.mxu0 0
  %4153 = vmatpush1.bf16.msra.mxu0 %v3944
  %4154 = vmatprep.subr.bf16.mxu0 0
  %4155 = vmatpush1.bf16.msra.mxu0 %v3945
  %4156 = vmatprep.mubr.bf16.mxu0 %v3496
  %4157 = vmatmul.mubr.bf16.gmra.mrb[0].mxu0 %v3495
  %v4158 = vpop.f32.mrb[0].mxu0
  %v4159 = vadd.f32 %v4110, %v4158
  %v4160 = vpop.f32.mrb[0].mxu0
  %v4161 = vpop.f32.mrb[0].mxu0
  %v4162 = vadd.f32 %v4113, %v4161
  %v4163 = vpop.f32.mrb[0].mxu0
  %4164 = vmatprep.mubr.bf16.mxu0 %v3504
  %4165 = vmatmul.mubr.bf16.gmra.mrb[0].mxu0 %v3503
  %v4166 = vpop.f32.mrb[0].mxu0
  %v4167 = vadd.f32 %v4118, %v4166
  %v4168 = vpop.f32.mrb[0].mxu0
  %v4169 = vpop.f32.mrb[0].mxu0
  %v4170 = vadd.f32 %v4121, %v4169
  %v4171 = vpop.f32.mrb[0].mxu0
  %4172 = vdwg.mxu0
  %4173 = vmatprep.subr.bf16.mxu0 0
  %4174 = vmatpush1.bf16.msra.mxu0 %v3946
  %4175 = vmatprep.subr.bf16.mxu0 0
  %4176 = vmatpush1.bf16.msra.mxu0 %v3947
  %4177 = vmatprep.subr.bf16.mxu0 0
  %4178 = vmatpush1.bf16.msra.mxu0 %v3948
  %4179 = vmatprep.subr.bf16.mxu0 0
  %4180 = vmatpush1.bf16.msra.mxu0 %v3949
  %4181 = vmatprep.subr.bf16.mxu0 0
  %4182 = vmatpush1.bf16.msra.mxu0 %v3950
  %4183 = vmatprep.subr.bf16.mxu0 0
  %4184 = vmatpush1.bf16.msra.mxu0 %v3951
  %4185 = vmatprep.subr.bf16.mxu0 0
  %4186 = vmatpush1.bf16.msra.mxu0 %v3952
  %4187 = vmatprep.subr.bf16.mxu0 0
  %4188 = vmatpush1.bf16.msra.mxu0 %v3953
  %4189 = vmatprep.subr.bf16.mxu0 0
  %4190 = vmatpush1.bf16.msra.mxu0 %v3954
  %4191 = vmatprep.subr.bf16.mxu0 0
  %4192 = vmatpush1.bf16.msra.mxu0 %v3955
  %4193 = vmatprep.subr.bf16.mxu0 0
  %4194 = vmatpush1.bf16.msra.mxu0 %v3956
  %4195 = vmatprep.subr.bf16.mxu0 0
  %4196 = vmatpush1.bf16.msra.mxu0 %v3957
  %4197 = vmatprep.subr.bf16.mxu0 0
  %4198 = vmatpush1.bf16.msra.mxu0 %v3958
  %4199 = vmatprep.subr.bf16.mxu0 0
  %4200 = vmatpush1.bf16.msra.mxu0 %v3959
  %4201 = vmatprep.subr.bf16.mxu0 0
  %4202 = vmatpush1.bf16.msra.mxu0 %v3960
  %4203 = vmatprep.subr.bf16.mxu0 0
  %4204 = vmatpush1.bf16.msra.mxu0 %v3961
  %4205 = vmatprep.mubr.bf16.mxu0 %v3498
  %4206 = vmatmul.mubr.bf16.gmra.mrb[0].mxu0 %v3497
  %v4207 = vpop.f32.mrb[0].mxu0
  %v4208 = vadd.f32 %v4159, %v4207
  %v4209 = vpop.f32.mrb[0].mxu0
  %v4210 = vpop.f32.mrb[0].mxu0
  %v4211 = vadd.f32 %v4162, %v4210
  %v4212 = vpop.f32.mrb[0].mxu0
  %4213 = vmatprep.mubr.bf16.mxu0 %v3506
  %4214 = vmatmul.mubr.bf16.gmra.mrb[0].mxu0 %v3505
  %v4215 = vpop.f32.mrb[0].mxu0
  %v4216 = vadd.f32 %v4167, %v4215
  %v4217 = vpop.f32.mrb[0].mxu0
  %v4218 = vpop.f32.mrb[0].mxu0
  %v4219 = vadd.f32 %v4170, %v4218
  %v4220 = vpop.f32.mrb[0].mxu0
  %4221 = vdwg.mxu0
  %v4222 = vadd.f32 %v3097, %v4208
  %v4223 = vadd.f32 %v3098, %v4211
  %v4224 = vadd.f32 %v3099, %v4216
  %v4225 = vadd.f32 %v3100, %v4219
  %v4226 = vld [vmem:[%s18] sm:$0x1]
  %v4227 = vld [vmem:[%s19] sm:$0x1]
  %v4228 = vsel %vm1988, %v4222, 0.0
  %4229 = vadd.xlane.f32.xlu0 %v4228
  %v4230 = vpop.xlane.xlu0 %4229
  %v4231 = vsel %vm1988, %v4223, 0.0
  %4232 = vadd.xlane.f32.xlu0 %v4231
  %v4233 = vpop.xlane.xlu0 %4232
  %v4234 = vsel %vm1988, %v4224, 0.0
  %4235 = vadd.xlane.f32.xlu0 %v4234
  %v4236 = vpop.xlane.xlu0 %4235
  %v4237 = vsel %vm1988, %v4225, 0.0
  %4238 = vadd.xlane.f32.xlu0 %v4237
  %v4239 = vpop.xlane.xlu0 %4238
  %v4240 = vmul.f32 %v4230, %v3040
  %v4241 = vmul.f32 %v4233, %v3040
  %v4242 = vmul.f32 %v4236, %v3040
  %v4243 = vmul.f32 %v4239, %v3040
  %v4244 = vsub.f32 %v4222, %v4240
  %v4245 = vsub.f32 %v4223, %v4241
  %v4246 = vsub.f32 %v4224, %v4242
  %v4247 = vsub.f32 %v4225, %v4243
  %v4248 = vmul.f32 %v4244, %v4244
  %v4249 = vmul.f32 %v4245, %v4245
  %v4250 = vmul.f32 %v4246, %v4246
  %v4251 = vmul.f32 %v4247, %v4247
  %v4252 = vsel %vm1988, %v4248, 0.0
  %4253 = vadd.xlane.f32.xlu0 %v4252
  %v4254 = vpop.xlane.xlu0 %4253
  %v4255 = vsel %vm1988, %v4249, 0.0
  %4256 = vadd.xlane.f32.xlu0 %v4255
  %v4257 = vpop.xlane.xlu0 %4256
  %v4258 = vsel %vm1988, %v4250, 0.0
  %4259 = vadd.xlane.f32.xlu0 %v4258
  %v4260 = vpop.xlane.xlu0 %4259
  %v4261 = vsel %vm1988, %v4251, 0.0
  %4262 = vadd.xlane.f32.xlu0 %v4261
  %v4263 = vpop.xlane.xlu0 %4262
  %v4264 = vmul.f32 %v4254, %v3040
  %v4265 = vmul.f32 %v4257, %v3040
  %v4266 = vmul.f32 %v4260, %v3040
  %v4267 = vmul.f32 %v4263, %v3040
  %v4268 = vadd.f32 %v4264, 1e-05
  %v4269 = vadd.f32 %v4265, 1e-05
  %v4270 = vadd.f32 %v4266, 1e-05
  %v4271 = vadd.f32 %v4267, 1e-05
  %v4272 = vrsqrt.pop %v4268
  %v4273 = vrsqrt.pop %v4269
  %v4274 = vrsqrt.pop %v4270
  %v4275 = vrsqrt.pop %v4271
  %v4276 = vmul.f32 %v4244, %v4272
  %v4277 = vmul.f32 %v4245, %v4273
  %v4278 = vmul.f32 %v4246, %v4274
  %v4279 = vmul.f32 %v4247, %v4275
  %v4281 = vlaneseq
  %v4282 = vshrl.u32 %v4281, 7
  %v4283 = vsub.s32 0, %v4282
  %v4284 = vrot.slane %v4226, %v4283
  %v4286 = vmul.f32 %v4276, %v4284
  %v4287 = vmul.f32 %v4277, %v4284
  %v4288 = vmul.f32 %v4278, %v4284
  %v4289 = vmul.f32 %v4279, %v4284
  %v4291 = vlaneseq
  %v4292 = vshrl.u32 %v4291, 7
  %v4293 = vsub.s32 0, %v4292
  %v4294 = vrot.slane %v4227, %v4293
  %v4296 = vadd.f32 %v4286, %v4294
  %v4297 = vadd.f32 %v4287, %v4294
  %v4298 = vadd.f32 %v4288, %v4294
  %v4299 = vadd.f32 %v4289, %v4294
  %v4300 = vsel %vm1988, %v4296, 0.0
  %v4301 = vrot.slane %v4300, 4
  %v4302 = vadd.f32 %v4300, %v4301
  %v4303 = vrot.slane %v4302, 2
  %v4304 = vadd.f32 %v4302, %v4303
  %v4305 = vrot.slane %v4304, 1
  %v4306 = vadd.f32 %v4304, %v4305
  %v4307 = vsel %vm1988, %v4297, 0.0
  %v4308 = vrot.slane %v4307, 4
  %v4309 = vadd.f32 %v4307, %v4308
  %v4310 = vrot.slane %v4309, 2
  %v4311 = vadd.f32 %v4309, %v4310
  %v4312 = vrot.slane %v4311, 1
  %v4313 = vadd.f32 %v4311, %v4312
  %v4314 = vsel %vm1988, %v4298, 0.0
  %v4315 = vrot.slane %v4314, 4
  %v4316 = vadd.f32 %v4314, %v4315
  %v4317 = vrot.slane %v4316, 2
  %v4318 = vadd.f32 %v4316, %v4317
  %v4319 = vrot.slane %v4318, 1
  %v4320 = vadd.f32 %v4318, %v4319
  %v4321 = vsel %vm1988, %v4299, 0.0
  %v4322 = vrot.slane %v4321, 4
  %v4323 = vadd.f32 %v4321, %v4322
  %v4324 = vrot.slane %v4323, 2
  %v4325 = vadd.f32 %v4323, %v4324
  %v4326 = vrot.slane %v4325, 1
  %v4327 = vadd.f32 %v4325, %v4326
  %v4328 = vrcp.pop 8.0
  %v4329 = vmul.f32 %v4306, %v4328
  %v4330 = vmul.f32 %v4313, %v4328
  %v4331 = vmul.f32 %v4320, %v4328
  %v4332 = vmul.f32 %v4327, %v4328
  %vm4337 = vcmask 1041409
  %v4338 = vsel %vm4337, %v4330, %v4329
  %vm4339 = vcmask 1042434
  %v4340 = vsel %vm4339, %v4331, %v4338
  %vm4341 = vcmask 1043459
  %v4342 = vsel %vm4341, %v4332, %v4340
  %vm4344 = vcmask 257024
  %4345 = vst.msk [vmem:[#allocation5] sm:$0xf] %vm4344, %v4342
  %v4346 = vpack.c.bf16 %v1960, %v1959
  %v4347 = vpack.c.bf16 %v1962, %v1961
  %s4348 = scalar_lea.vmem %s8, 16
  %v4349 = vld [vmem:[%s4348] sm:$0xf]
  %v4350 = vld [vmem:[%s4348 + $0x4] sm:$0xf]
  %v4351 = vld [vmem:[%s4348 + $0x8] sm:$0xf]
  %v4352 = vld [vmem:[%s4348 + $0xc] sm:$0xf]
  %s4353 = scalar_lea.vmem %s9, 1
  %v4354 = vld [vmem:[%s4353] sm:$0x1]
  %v4356 = vlaneseq
  %v4357 = vshrl.u32 %v4356, 7
  %v4358 = vsub.s32 0, %v4357
  %v4359 = vrot.slane %v4354, %v4358
  %v4365 = vunpack.c.l.b16 %v4349
  %v4366 = vunpack.c.l.b16 %v4350
  %v4367 = vunpack.c.l.b16 %v4351
  %v4368 = vunpack.c.l.b16 %v4352
  %v4369 = vpack.c.b16 %v4366, %v4365
  %v4370 = vpack.c.b16 %v4368, %v4367
  %v4374 = vsel %vm1988, %v4346, 0
  %v4377 = vsel %vm1988, %v4347, 0
  %4379 = vmatprep.subr.bf16.mxu0 0
  %4380 = vmatpush1.bf16.msra.mxu0 %v4369
  %4381 = vmatprep.subr.bf16.mxu0 0
  %4382 = vmatpush1.bf16.msra.mxu0 %v4370
  %4383 = vmatprep.subr.bf16.mxu0 0
  %4384 = vmatpush1.bf16.msra.mxu0 0
  %4385 = vmatprep.subr.bf16.mxu0 0
  %4386 = vmatpush1.bf16.msra.mxu0 0
  %4387 = vmatprep.subr.bf16.mxu0 0
  %4388 = vmatpush1.bf16.msra.mxu0 0
  %4389 = vmatprep.subr.bf16.mxu0 0
  %4390 = vmatpush1.bf16.msra.mxu0 0
  %4391 = vmatprep.subr.bf16.mxu0 0
  %4392 = vmatpush1.bf16.msra.mxu0 0
  %4393 = vmatprep.subr.bf16.mxu0 0
  %4394 = vmatpush1.bf16.msra.mxu0 0
  %4395 = vmatprep.subr.bf16.mxu0 0
  %4396 = vmatpush1.bf16.msra.mxu0 0
  %4397 = vmatprep.subr.bf16.mxu0 0
  %4398 = vmatpush1.bf16.msra.mxu0 0
  %4399 = vmatprep.subr.bf16.mxu0 0
  %4400 = vmatpush1.bf16.msra.mxu0 0
  %4401 = vmatprep.subr.bf16.mxu0 0
  %4402 = vmatpush1.bf16.msra.mxu0 0
  %4403 = vmatprep.subr.bf16.mxu0 0
  %4404 = vmatpush1.bf16.msra.mxu0 0
  %4405 = vmatprep.subr.bf16.mxu0 0
  %4406 = vmatpush1.bf16.msra.mxu0 0
  %4407 = vmatprep.subr.bf16.mxu0 0
  %4408 = vmatpush1.bf16.msra.mxu0 0
  %4409 = vmatprep.subr.bf16.mxu0 0
  %4410 = vmatpush1.bf16.msra.mxu0 0
  %4411 = vmatprep.mubr.bf16.mxu0 0
  %4412 = vmatmul.mubr.bf16.gmra.mrb[0].mxu0 %v4374
  %v4413 = vpop.f32.mrb[0].mxu0
  %v4414 = vadd.f32 %v4359, %v4413
  %v4415 = vpop.f32.mrb[0].mxu0
  %v4416 = vpop.f32.mrb[0].mxu0
  %v4417 = vadd.f32 %v4359, %v4416
  %v4418 = vpop.f32.mrb[0].mxu0
  %4419 = vmatprep.mubr.bf16.mxu0 0
  %4420 = vmatmul.mubr.bf16.gmra.mrb[0].mxu0 %v4377
  %v4421 = vpop.f32.mrb[0].mxu0
  %v4422 = vadd.f32 %v4359, %v4421
  %v4423 = vpop.f32.mrb[0].mxu0
  %v4424 = vpop.f32.mrb[0].mxu0
  %v4425 = vadd.f32 %v4359, %v4424
  %v4426 = vpop.f32.mrb[0].mxu0
  %4427 = vdwg.mxu0
  %v4428 = vpack.c.bf16 %v4414, %v4414
  %v4429 = vpack.c.bf16 %v4417, %v4417
  %v4430 = vpack.c.bf16 %v4422, %v4422
  %v4431 = vpack.c.bf16 %v4425, %v4425
  %4433 = vrot.lane.b32.xlu0 %v4428, 96
  %v4434 = vpop.permute.xlu0 %4433
  %v4436 = vsel %vm2051, %v4428, 0
  %v4439 = vsel %vm2051, %v4434, 0
  %4441 = vmatprep.subr.bf16.mxu0 0
  %4442 = vmatpush1.bf16.xpose.msra.mxu0 %v4439
  %4443 = vmatprep.subr.bf16.mxu0 0
  %4444 = vmatpush1.bf16.xpose.msra.mxu0 0
  %4445 = vmatprep.subr.bf16.mxu0 0
  %4446 = vmatpush1.bf16.xpose.msra.mxu0 0
  %4447 = vmatprep.subr.bf16.mxu0 0
  %4448 = vmatpush1.bf16.xpose.msra.mxu0 0
  %4449 = vmatprep.subr.bf16.mxu0 0
  %4450 = vmatpush1.bf16.xpose.msra.mxu0 0
  %4451 = vmatprep.subr.bf16.mxu0 0
  %4452 = vmatpush1.bf16.xpose.msra.mxu0 0
  %4453 = vmatprep.subr.bf16.mxu0 0
  %4454 = vmatpush1.bf16.xpose.msra.mxu0 0
  %4455 = vmatprep.subr.bf16.mxu0 0
  %4456 = vmatpush1.bf16.xpose.msra.mxu0 0
  %4457 = vmatprep.subr.bf16.mxu0 0
  %4458 = vmatpush1.bf16.xpose.msra.mxu0 0
  %4459 = vmatprep.subr.bf16.mxu0 0
  %4460 = vmatpush1.bf16.xpose.msra.mxu0 0
  %4461 = vmatprep.subr.bf16.mxu0 0
  %4462 = vmatpush1.bf16.xpose.msra.mxu0 0
  %4463 = vmatprep.subr.bf16.mxu0 0
  %4464 = vmatpush1.bf16.xpose.msra.mxu0 0
  %4465 = vmatprep.subr.bf16.mxu0 0
  %4466 = vmatpush1.bf16.xpose.msra.mxu0 0
  %4467 = vmatprep.subr.bf16.mxu0 0
  %4468 = vmatpush1.bf16.xpose.msra.mxu0 0
  %4469 = vmatprep.subr.bf16.mxu0 0
  %4470 = vmatpush1.bf16.xpose.msra.mxu0 0
  %4471 = vmatprep.subr.bf16.mxu0 0
  %4472 = vmatpush1.bf16.xpose.msra.mxu0 0
  %4473 = vmatprep.mubr.bf16.mxu0 0
  %4474 = vmatmul.mubr.bf16.gmra.mrb[0].mxu0 %v4436
  %v4475 = vpop.f32.mrb[0].mxu0
  %v4476 = vadd.f32 0.0, %v4475
  %v4477 = vpop.f32.mrb[0].mxu0
  %v4478 = vpop.f32.mrb[0].mxu0
  %v4479 = vpop.f32.mrb[0].mxu0
  %4480 = vdwg.mxu0
  %4482 = vrot.lane.b32.xlu0 %v4429, 96
  %v4483 = vpop.permute.xlu0 %4482
  %v4485 = vsel %vm2051, %v4429, 0
  %v4488 = vsel %vm2051, %v4483, 0
  %4490 = vmatprep.subr.bf16.mxu0 0
  %4491 = vmatpush1.bf16.xpose.msra.mxu0 %v4488
  %4492 = vmatprep.subr.bf16.mxu0 0
  %4493 = vmatpush1.bf16.xpose.msra.mxu0 0
  %4494 = vmatprep.subr.bf16.mxu0 0
  %4495 = vmatpush1.bf16.xpose.msra.mxu0 0
  %4496 = vmatprep.subr.bf16.mxu0 0
  %4497 = vmatpush1.bf16.xpose.msra.mxu0 0
  %4498 = vmatprep.subr.bf16.mxu0 0
  %4499 = vmatpush1.bf16.xpose.msra.mxu0 0
  %4500 = vmatprep.subr.bf16.mxu0 0
  %4501 = vmatpush1.bf16.xpose.msra.mxu0 0
  %4502 = vmatprep.subr.bf16.mxu0 0
  %4503 = vmatpush1.bf16.xpose.msra.mxu0 0
  %4504 = vmatprep.subr.bf16.mxu0 0
  %4505 = vmatpush1.bf16.xpose.msra.mxu0 0
  %4506 = vmatprep.subr.bf16.mxu0 0
  %4507 = vmatpush1.bf16.xpose.msra.mxu0 0
  %4508 = vmatprep.subr.bf16.mxu0 0
  %4509 = vmatpush1.bf16.xpose.msra.mxu0 0
  %4510 = vmatprep.subr.bf16.mxu0 0
  %4511 = vmatpush1.bf16.xpose.msra.mxu0 0
  %4512 = vmatprep.subr.bf16.mxu0 0
  %4513 = vmatpush1.bf16.xpose.msra.mxu0 0
  %4514 = vmatprep.subr.bf16.mxu0 0
  %4515 = vmatpush1.bf16.xpose.msra.mxu0 0
  %4516 = vmatprep.subr.bf16.mxu0 0
  %4517 = vmatpush1.bf16.xpose.msra.mxu0 0
  %4518 = vmatprep.subr.bf16.mxu0 0
  %4519 = vmatpush1.bf16.xpose.msra.mxu0 0
  %4520 = vmatprep.subr.bf16.mxu0 0
  %4521 = vmatpush1.bf16.xpose.msra.mxu0 0
  %4522 = vmatprep.mubr.bf16.mxu0 0
  %4523 = vmatmul.mubr.bf16.gmra.mrb[0].mxu0 %v4485
  %v4524 = vpop.f32.mrb[0].mxu0
  %v4525 = vadd.f32 0.0, %v4524
  %v4526 = vpop.f32.mrb[0].mxu0
  %v4527 = vpop.f32.mrb[0].mxu0
  %v4528 = vpop.f32.mrb[0].mxu0
  %4529 = vdwg.mxu0
  %4531 = vrot.lane.b32.xlu0 %v4430, 96
  %v4532 = vpop.permute.xlu0 %4531
  %v4534 = vsel %vm2051, %v4430, 0
  %v4537 = vsel %vm2051, %v4532, 0
  %4539 = vmatprep.subr.bf16.mxu0 0
  %4540 = vmatpush1.bf16.xpose.msra.mxu0 %v4537
  %4541 = vmatprep.subr.bf16.mxu0 0
  %4542 = vmatpush1.bf16.xpose.msra.mxu0 0
  %4543 = vmatprep.subr.bf16.mxu0 0
  %4544 = vmatpush1.bf16.xpose.msra.mxu0 0
  %4545 = vmatprep.subr.bf16.mxu0 0
  %4546 = vmatpush1.bf16.xpose.msra.mxu0 0
  %4547 = vmatprep.subr.bf16.mxu0 0
  %4548 = vmatpush1.bf16.xpose.msra.mxu0 0
  %4549 = vmatprep.subr.bf16.mxu0 0
  %4550 = vmatpush1.bf16.xpose.msra.mxu0 0
  %4551 = vmatprep.subr.bf16.mxu0 0
  %4552 = vmatpush1.bf16.xpose.msra.mxu0 0
  %4553 = vmatprep.subr.bf16.mxu0 0
  %4554 = vmatpush1.bf16.xpose.msra.mxu0 0
  %4555 = vmatprep.subr.bf16.mxu0 0
  %4556 = vmatpush1.bf16.xpose.msra.mxu0 0
  %4557 = vmatprep.subr.bf16.mxu0 0
  %4558 = vmatpush1.bf16.xpose.msra.mxu0 0
  %4559 = vmatprep.subr.bf16.mxu0 0
  %4560 = vmatpush1.bf16.xpose.msra.mxu0 0
  %4561 = vmatprep.subr.bf16.mxu0 0
  %4562 = vmatpush1.bf16.xpose.msra.mxu0 0
  %4563 = vmatprep.subr.bf16.mxu0 0
  %4564 = vmatpush1.bf16.xpose.msra.mxu0 0
  %4565 = vmatprep.subr.bf16.mxu0 0
  %4566 = vmatpush1.bf16.xpose.msra.mxu0 0
  %4567 = vmatprep.subr.bf16.mxu0 0
  %4568 = vmatpush1.bf16.xpose.msra.mxu0 0
  %4569 = vmatprep.subr.bf16.mxu0 0
  %4570 = vmatpush1.bf16.xpose.msra.mxu0 0
  %4571 = vmatprep.mubr.bf16.mxu0 0
  %4572 = vmatmul.mubr.bf16.gmra.mrb[0].mxu0 %v4534
  %v4573 = vpop.f32.mrb[0].mxu0
  %v4574 = vadd.f32 0.0, %v4573
  %v4575 = vpop.f32.mrb[0].mxu0
  %v4576 = vpop.f32.mrb[0].mxu0
  %v4577 = vpop.f32.mrb[0].mxu0
  %4578 = vdwg.mxu0
  %4580 = vrot.lane.b32.xlu0 %v4431, 96
  %v4581 = vpop.permute.xlu0 %4580
  %v4583 = vsel %vm2051, %v4431, 0
  %v4586 = vsel %vm2051, %v4581, 0
  %4588 = vmatprep.subr.bf16.mxu0 0
  %4589 = vmatpush1.bf16.xpose.msra.mxu0 %v4586
  %4590 = vmatprep.subr.bf16.mxu0 0
  %4591 = vmatpush1.bf16.xpose.msra.mxu0 0
  %4592 = vmatprep.subr.bf16.mxu0 0
  %4593 = vmatpush1.bf16.xpose.msra.mxu0 0
  %4594 = vmatprep.subr.bf16.mxu0 0
  %4595 = vmatpush1.bf16.xpose.msra.mxu0 0
  %4596 = vmatprep.subr.bf16.mxu0 0
  %4597 = vmatpush1.bf16.xpose.msra.mxu0 0
  %4598 = vmatprep.subr.bf16.mxu0 0
  %4599 = vmatpush1.bf16.xpose.msra.mxu0 0
  %4600 = vmatprep.subr.bf16.mxu0 0
  %4601 = vmatpush1.bf16.xpose.msra.mxu0 0
  %4602 = vmatprep.subr.bf16.mxu0 0
  %4603 = vmatpush1.bf16.xpose.msra.mxu0 0
  %4604 = vmatprep.subr.bf16.mxu0 0
  %4605 = vmatpush1.bf16.xpose.msra.mxu0 0
  %4606 = vmatprep.subr.bf16.mxu0 0
  %4607 = vmatpush1.bf16.xpose.msra.mxu0 0
  %4608 = vmatprep.subr.bf16.mxu0 0
  %4609 = vmatpush1.bf16.xpose.msra.mxu0 0
  %4610 = vmatprep.subr.bf16.mxu0 0
  %4611 = vmatpush1.bf16.xpose.msra.mxu0 0
  %4612 = vmatprep.subr.bf16.mxu0 0
  %4613 = vmatpush1.bf16.xpose.msra.mxu0 0
  %4614 = vmatprep.subr.bf16.mxu0 0
  %4615 = vmatpush1.bf16.xpose.msra.mxu0 0
  %4616 = vmatprep.subr.bf16.mxu0 0
  %4617 = vmatpush1.bf16.xpose.msra.mxu0 0
  %4618 = vmatprep.subr.bf16.mxu0 0
  %4619 = vmatpush1.bf16.xpose.msra.mxu0 0
  %4620 = vmatprep.mubr.bf16.mxu0 0
  %4621 = vmatmul.mubr.bf16.gmra.mrb[0].mxu0 %v4583
  %v4622 = vpop.f32.mrb[0].mxu0
  %v4623 = vadd.f32 0.0, %v4622
  %v4624 = vpop.f32.mrb[0].mxu0
  %v4625 = vpop.f32.mrb[0].mxu0
  %v4626 = vpop.f32.mrb[0].mxu0
  %4627 = vdwg.mxu0
  %v4628 = vsel %vm876, %v4476, -inf
  %4629 = vmax.xlane.f32.xlu0 %v4628
  %v4630 = vpop.xlane.xlu0 %4629
  %v4631 = vsel %vm876, %v4525, -inf
  %4632 = vmax.xlane.f32.xlu0 %v4631
  %v4633 = vpop.xlane.xlu0 %4632
  %v4634 = vsel %vm876, %v4574, -inf
  %4635 = vmax.xlane.f32.xlu0 %v4634
  %v4636 = vpop.xlane.xlu0 %4635
  %v4637 = vsel %vm876, %v4623, -inf
  %4638 = vmax.xlane.f32.xlu0 %v4637
  %v4639 = vpop.xlane.xlu0 %4638
  %v4640 = vsub.f32 %v4476, %v4630
  %v4641 = vsub.f32 %v4525, %v4633
  %v4642 = vsub.f32 %v4574, %v4636
  %v4643 = vsub.f32 %v4623, %v4639
  %v4644 = vmul.f32 %v4640, 1.442695
  %v4645 = vpow.pop %v4644
  %v4646 = vmul.f32 %v4641, 1.442695
  %v4647 = vpow.pop %v4646
  %v4648 = vmul.f32 %v4642, 1.442695
  %v4649 = vpow.pop %v4648
  %v4650 = vmul.f32 %v4643, 1.442695
  %v4651 = vpow.pop %v4650
  %v4652 = vsel %vm876, %v4645, 0.0
  %4653 = vadd.xlane.f32.xlu0 %v4652
  %v4654 = vpop.xlane.xlu0 %4653
  %v4655 = vsel %vm876, %v4647, 0.0
  %4656 = vadd.xlane.f32.xlu0 %v4655
  %v4657 = vpop.xlane.xlu0 %4656
  %v4658 = vsel %vm876, %v4649, 0.0
  %4659 = vadd.xlane.f32.xlu0 %v4658
  %v4660 = vpop.xlane.xlu0 %4659
  %v4661 = vsel %vm876, %v4651, 0.0
  %4662 = vadd.xlane.f32.xlu0 %v4661
  %v4663 = vpop.xlane.xlu0 %4662
  %v4664 = vrcp.pop %v4654
  %v4665 = vrcp.pop %v4657
  %v4666 = vrcp.pop %v4660
  %v4667 = vrcp.pop %v4663
  %v4668 = vmul.f32 %v4645, %v4664
  %v4669 = vmul.f32 %v4647, %v4665
  %v4670 = vmul.f32 %v4649, %v4666
  %v4671 = vmul.f32 %v4651, %v4667
  %v4672 = vpack.c.bf16 %v4668, %v4668
  %v4673 = vpack.c.bf16 %v4669, %v4669
  %v4674 = vpack.c.bf16 %v4670, %v4670
  %v4675 = vpack.c.bf16 %v4671, %v4671
  %4676 = vrot.lane.b32.xlu0 %v4428, 64
  %v4677 = vpop.permute.xlu0 %4676
  %v4679 = vsel %vm876, %v4672, 0
  %v4682 = vsel %vm892, %v4677, 0
  %4684 = vmatprep.subr.bf16.mxu0 0
  %4685 = vmatpush1.bf16.msra.mxu0 %v4682
  %4686 = vmatprep.subr.bf16.mxu0 0
  %4687 = vmatpush1.bf16.msra.mxu0 0
  %4688 = vmatprep.subr.bf16.mxu0 0
  %4689 = vmatpush1.bf16.msra.mxu0 0
  %4690 = vmatprep.subr.bf16.mxu0 0
  %4691 = vmatpush1.bf16.msra.mxu0 0
  %4692 = vmatprep.subr.bf16.mxu0 0
  %4693 = vmatpush1.bf16.msra.mxu0 0
  %4694 = vmatprep.subr.bf16.mxu0 0
  %4695 = vmatpush1.bf16.msra.mxu0 0
  %4696 = vmatprep.subr.bf16.mxu0 0
  %4697 = vmatpush1.bf16.msra.mxu0 0
  %4698 = vmatprep.subr.bf16.mxu0 0
  %4699 = vmatpush1.bf16.msra.mxu0 0
  %4700 = vmatprep.subr.bf16.mxu0 0
  %4701 = vmatpush1.bf16.msra.mxu0 0
  %4702 = vmatprep.subr.bf16.mxu0 0
  %4703 = vmatpush1.bf16.msra.mxu0 0
  %4704 = vmatprep.subr.bf16.mxu0 0
  %4705 = vmatpush1.bf16.msra.mxu0 0
  %4706 = vmatprep.subr.bf16.mxu0 0
  %4707 = vmatpush1.bf16.msra.mxu0 0
  %4708 = vmatprep.subr.bf16.mxu0 0
  %4709 = vmatpush1.bf16.msra.mxu0 0
  %4710 = vmatprep.subr.bf16.mxu0 0
  %4711 = vmatpush1.bf16.msra.mxu0 0
  %4712 = vmatprep.subr.bf16.mxu0 0
  %4713 = vmatpush1.bf16.msra.mxu0 0
  %4714 = vmatprep.subr.bf16.mxu0 0
  %4715 = vmatpush1.bf16.msra.mxu0 0
  %4716 = vmatprep.mubr.bf16.mxu0 0
  %4717 = vmatmul.mubr.bf16.gmra.mrb[0].mxu0 %v4679
  %v4718 = vpop.f32.mrb[0].mxu0
  %v4719 = vadd.f32 0.0, %v4718
  %v4720 = vpop.f32.mrb[0].mxu0
  %v4721 = vpop.f32.mrb[0].mxu0
  %v4722 = vpop.f32.mrb[0].mxu0
  %4723 = vdwg.mxu0
  %4724 = vrot.lane.b32.xlu0 %v4429, 64
  %v4725 = vpop.permute.xlu0 %4724
  %v4727 = vsel %vm876, %v4673, 0
  %v4730 = vsel %vm892, %v4725, 0
  %4732 = vmatprep.subr.bf16.mxu0 0
  %4733 = vmatpush1.bf16.msra.mxu0 %v4730
  %4734 = vmatprep.subr.bf16.mxu0 0
  %4735 = vmatpush1.bf16.msra.mxu0 0
  %4736 = vmatprep.subr.bf16.mxu0 0
  %4737 = vmatpush1.bf16.msra.mxu0 0
  %4738 = vmatprep.subr.bf16.mxu0 0
  %4739 = vmatpush1.bf16.msra.mxu0 0
  %4740 = vmatprep.subr.bf16.mxu0 0
  %4741 = vmatpush1.bf16.msra.mxu0 0
  %4742 = vmatprep.subr.bf16.mxu0 0
  %4743 = vmatpush1.bf16.msra.mxu0 0
  %4744 = vmatprep.subr.bf16.mxu0 0
  %4745 = vmatpush1.bf16.msra.mxu0 0
  %4746 = vmatprep.subr.bf16.mxu0 0
  %4747 = vmatpush1.bf16.msra.mxu0 0
  %4748 = vmatprep.subr.bf16.mxu0 0
  %4749 = vmatpush1.bf16.msra.mxu0 0
  %4750 = vmatprep.subr.bf16.mxu0 0
  %4751 = vmatpush1.bf16.msra.mxu0 0
  %4752 = vmatprep.subr.bf16.mxu0 0
  %4753 = vmatpush1.bf16.msra.mxu0 0
  %4754 = vmatprep.subr.bf16.mxu0 0
  %4755 = vmatpush1.bf16.msra.mxu0 0
  %4756 = vmatprep.subr.bf16.mxu0 0
  %4757 = vmatpush1.bf16.msra.mxu0 0
  %4758 = vmatprep.subr.bf16.mxu0 0
  %4759 = vmatpush1.bf16.msra.mxu0 0
  %4760 = vmatprep.subr.bf16.mxu0 0
  %4761 = vmatpush1.bf16.msra.mxu0 0
  %4762 = vmatprep.subr.bf16.mxu0 0
  %4763 = vmatpush1.bf16.msra.mxu0 0
  %4764 = vmatprep.mubr.bf16.mxu0 0
  %4765 = vmatmul.mubr.bf16.gmra.mrb[0].mxu0 %v4727
  %v4766 = vpop.f32.mrb[0].mxu0
  %v4767 = vadd.f32 0.0, %v4766
  %v4768 = vpop.f32.mrb[0].mxu0
  %v4769 = vpop.f32.mrb[0].mxu0
  %v4770 = vpop.f32.mrb[0].mxu0
  %4771 = vdwg.mxu0
  %4772 = vrot.lane.b32.xlu0 %v4430, 64
  %v4773 = vpop.permute.xlu0 %4772
  %v4775 = vsel %vm876, %v4674, 0
  %v4778 = vsel %vm892, %v4773, 0
  %4780 = vmatprep.subr.bf16.mxu0 0
  %4781 = vmatpush1.bf16.msra.mxu0 %v4778
  %4782 = vmatprep.subr.bf16.mxu0 0
  %4783 = vmatpush1.bf16.msra.mxu0 0
  %4784 = vmatprep.subr.bf16.mxu0 0
  %4785 = vmatpush1.bf16.msra.mxu0 0
  %4786 = vmatprep.subr.bf16.mxu0 0
  %4787 = vmatpush1.bf16.msra.mxu0 0
  %4788 = vmatprep.subr.bf16.mxu0 0
  %4789 = vmatpush1.bf16.msra.mxu0 0
  %4790 = vmatprep.subr.bf16.mxu0 0
  %4791 = vmatpush1.bf16.msra.mxu0 0
  %4792 = vmatprep.subr.bf16.mxu0 0
  %4793 = vmatpush1.bf16.msra.mxu0 0
  %4794 = vmatprep.subr.bf16.mxu0 0
  %4795 = vmatpush1.bf16.msra.mxu0 0
  %4796 = vmatprep.subr.bf16.mxu0 0
  %4797 = vmatpush1.bf16.msra.mxu0 0
  %4798 = vmatprep.subr.bf16.mxu0 0
  %4799 = vmatpush1.bf16.msra.mxu0 0
  %4800 = vmatprep.subr.bf16.mxu0 0
  %4801 = vmatpush1.bf16.msra.mxu0 0
  %4802 = vmatprep.subr.bf16.mxu0 0
  %4803 = vmatpush1.bf16.msra.mxu0 0
  %4804 = vmatprep.subr.bf16.mxu0 0
  %4805 = vmatpush1.bf16.msra.mxu0 0
  %4806 = vmatprep.subr.bf16.mxu0 0
  %4807 = vmatpush1.bf16.msra.mxu0 0
  %4808 = vmatprep.subr.bf16.mxu0 0
  %4809 = vmatpush1.bf16.msra.mxu0 0
  %4810 = vmatprep.subr.bf16.mxu0 0
  %4811 = vmatpush1.bf16.msra.mxu0 0
  %4812 = vmatprep.mubr.bf16.mxu0 0
  %4813 = vmatmul.mubr.bf16.gmra.mrb[0].mxu0 %v4775
  %v4814 = vpop.f32.mrb[0].mxu0
  %v4815 = vadd.f32 0.0, %v4814
  %v4816 = vpop.f32.mrb[0].mxu0
  %v4817 = vpop.f32.mrb[0].mxu0
  %v4818 = vpop.f32.mrb[0].mxu0
  %4819 = vdwg.mxu0
  %4820 = vrot.lane.b32.xlu0 %v4431, 64
  %v4821 = vpop.permute.xlu0 %4820
  %v4823 = vsel %vm876, %v4675, 0
  %v4826 = vsel %vm892, %v4821, 0
  %4828 = vmatprep.subr.bf16.mxu0 0
  %4829 = vmatpush1.bf16.msra.mxu0 %v4826
  %4830 = vmatprep.subr.bf16.mxu0 0
  %4831 = vmatpush1.bf16.msra.mxu0 0
  %4832 = vmatprep.subr.bf16.mxu0 0
  %4833 = vmatpush1.bf16.msra.mxu0 0
  %4834 = vmatprep.subr.bf16.mxu0 0
  %4835 = vmatpush1.bf16.msra.mxu0 0
  %4836 = vmatprep.subr.bf16.mxu0 0
  %4837 = vmatpush1.bf16.msra.mxu0 0
  %4838 = vmatprep.subr.bf16.mxu0 0
  %4839 = vmatpush1.bf16.msra.mxu0 0
  %4840 = vmatprep.subr.bf16.mxu0 0
  %4841 = vmatpush1.bf16.msra.mxu0 0
  %4842 = vmatprep.subr.bf16.mxu0 0
  %4843 = vmatpush1.bf16.msra.mxu0 0
  %4844 = vmatprep.subr.bf16.mxu0 0
  %4845 = vmatpush1.bf16.msra.mxu0 0
  %4846 = vmatprep.subr.bf16.mxu0 0
  %4847 = vmatpush1.bf16.msra.mxu0 0
  %4848 = vmatprep.subr.bf16.mxu0 0
  %4849 = vmatpush1.bf16.msra.mxu0 0
  %4850 = vmatprep.subr.bf16.mxu0 0
  %4851 = vmatpush1.bf16.msra.mxu0 0
  %4852 = vmatprep.subr.bf16.mxu0 0
  %4853 = vmatpush1.bf16.msra.mxu0 0
  %4854 = vmatprep.subr.bf16.mxu0 0
  %4855 = vmatpush1.bf16.msra.mxu0 0
  %4856 = vmatprep.subr.bf16.mxu0 0
  %4857 = vmatpush1.bf16.msra.mxu0 0
  %4858 = vmatprep.subr.bf16.mxu0 0
  %4859 = vmatpush1.bf16.msra.mxu0 0
  %4860 = vmatprep.mubr.bf16.mxu0 0
  %4861 = vmatmul.mubr.bf16.gmra.mrb[0].mxu0 %v4823
  %v4862 = vpop.f32.mrb[0].mxu0
  %v4863 = vadd.f32 0.0, %v4862
  %v4864 = vpop.f32.mrb[0].mxu0
  %v4865 = vpop.f32.mrb[0].mxu0
  %v4866 = vpop.f32.mrb[0].mxu0
  %4867 = vdwg.mxu0
  %v4868 = vpack.c.bf16 %v4767, %v4719
  %v4869 = vpack.c.bf16 %v4863, %v4815
  %4870 = vst.msk [vmem:[#allocation4] sm:$0xff] %vm2051, %v4868
  %4871 = vst.msk [vmem:[#allocation4 + $0x8] sm:$0xff] %vm2051, %v4869
  %4872 = vrot.lane.b32.xlu0 %v4428, 112
  %v4873 = vpop.permute.xlu0 %4872
  %4874 = vrot.lane.b32.xlu0 %v4428, 80
  %v4875 = vpop.permute.xlu0 %4874
  %v4877 = vsel %vm2051, %v4873, 0
  %v4880 = vsel %vm2051, %v4875, 0
  %4882 = vmatprep.subr.bf16.mxu0 0
  %4883 = vmatpush1.bf16.xpose.msra.mxu0 %v4880
  %4884 = vmatprep.subr.bf16.mxu0 0
  %4885 = vmatpush1.bf16.xpose.msra.mxu0 0
  %4886 = vmatprep.subr.bf16.mxu0 0
  %4887 = vmatpush1.bf16.xpose.msra.mxu0 0
  %4888 = vmatprep.subr.bf16.mxu0 0
  %4889 = vmatpush1.bf16.xpose.msra.mxu0 0
  %4890 = vmatprep.subr.bf16.mxu0 0
  %4891 = vmatpush1.bf16.xpose.msra.mxu0 0
  %4892 = vmatprep.subr.bf16.mxu0 0
  %4893 = vmatpush1.bf16.xpose.msra.mxu0 0
  %4894 = vmatprep.subr.bf16.mxu0 0
  %4895 = vmatpush1.bf16.xpose.msra.mxu0 0
  %4896 = vmatprep.subr.bf16.mxu0 0
  %4897 = vmatpush1.bf16.xpose.msra.mxu0 0
  %4898 = vmatprep.subr.bf16.mxu0 0
  %4899 = vmatpush1.bf16.xpose.msra.mxu0 0
  %4900 = vmatprep.subr.bf16.mxu0 0
  %4901 = vmatpush1.bf16.xpose.msra.mxu0 0
  %4902 = vmatprep.subr.bf16.mxu0 0
  %4903 = vmatpush1.bf16.xpose.msra.mxu0 0
  %4904 = vmatprep.subr.bf16.mxu0 0
  %4905 = vmatpush1.bf16.xpose.msra.mxu0 0
  %4906 = vmatprep.subr.bf16.mxu0 0
  %4907 = vmatpush1.bf16.xpose.msra.mxu0 0
  %4908 = vmatprep.subr.bf16.mxu0 0
  %4909 = vmatpush1.bf16.xpose.msra.mxu0 0
  %4910 = vmatprep.subr.bf16.mxu0 0
  %4911 = vmatpush1.bf16.xpose.msra.mxu0 0
  %4912 = vmatprep.subr.bf16.mxu0 0
  %4913 = vmatpush1.bf16.xpose.msra.mxu0 0
  %4914 = vmatprep.mubr.bf16.mxu0 0
  %4915 = vmatmul.mubr.bf16.gmra.mrb[0].mxu0 %v4877
  %v4916 = vpop.f32.mrb[0].mxu0
  %v4917 = vadd.f32 0.0, %v4916
  %v4918 = vpop.f32.mrb[0].mxu0
  %v4919 = vpop.f32.mrb[0].mxu0
  %v4920 = vpop.f32.mrb[0].mxu0
  %4921 = vdwg.mxu0
  %4922 = vrot.lane.b32.xlu0 %v4429, 112
  %v4923 = vpop.permute.xlu0 %4922
  %4924 = vrot.lane.b32.xlu0 %v4429, 80
  %v4925 = vpop.permute.xlu0 %4924
  %v4927 = vsel %vm2051, %v4923, 0
  %v4930 = vsel %vm2051, %v4925, 0
  %4932 = vmatprep.subr.bf16.mxu0 0
  %4933 = vmatpush1.bf16.xpose.msra.mxu0 %v4930
  %4934 = vmatprep.subr.bf16.mxu0 0
  %4935 = vmatpush1.bf16.xpose.msra.mxu0 0
  %4936 = vmatprep.subr.bf16.mxu0 0
  %4937 = vmatpush1.bf16.xpose.msra.mxu0 0
  %4938 = vmatprep.subr.bf16.mxu0 0
  %4939 = vmatpush1.bf16.xpose.msra.mxu0 0
  %4940 = vmatprep.subr.bf16.mxu0 0
  %4941 = vmatpush1.bf16.xpose.msra.mxu0 0
  %4942 = vmatprep.subr.bf16.mxu0 0
  %4943 = vmatpush1.bf16.xpose.msra.mxu0 0
  %4944 = vmatprep.subr.bf16.mxu0 0
  %4945 = vmatpush1.bf16.xpose.msra.mxu0 0
  %4946 = vmatprep.subr.bf16.mxu0 0
  %4947 = vmatpush1.bf16.xpose.msra.mxu0 0
  %4948 = vmatprep.subr.bf16.mxu0 0
  %4949 = vmatpush1.bf16.xpose.msra.mxu0 0
  %4950 = vmatprep.subr.bf16.mxu0 0
  %4951 = vmatpush1.bf16.xpose.msra.mxu0 0
  %4952 = vmatprep.subr.bf16.mxu0 0
  %4953 = vmatpush1.bf16.xpose.msra.mxu0 0
  %4954 = vmatprep.subr.bf16.mxu0 0
  %4955 = vmatpush1.bf16.xpose.msra.mxu0 0
  %4956 = vmatprep.subr.bf16.mxu0 0
  %4957 = vmatpush1.bf16.xpose.msra.mxu0 0
  %4958 = vmatprep.subr.bf16.mxu0 0
  %4959 = vmatpush1.bf16.xpose.msra.mxu0 0
  %4960 = vmatprep.subr.bf16.mxu0 0
  %4961 = vmatpush1.bf16.xpose.msra.mxu0 0
  %4962 = vmatprep.subr.bf16.mxu0 0
  %4963 = vmatpush1.bf16.xpose.msra.mxu0 0
  %4964 = vmatprep.mubr.bf16.mxu0 0
  %4965 = vmatmul.mubr.bf16.gmra.mrb[0].mxu0 %v4927
  %v4966 = vpop.f32.mrb[0].mxu0
  %v4967 = vadd.f32 0.0, %v4966
  %v4968 = vpop.f32.mrb[0].mxu0
  %v4969 = vpop.f32.mrb[0].mxu0
  %v4970 = vpop.f32.mrb[0].mxu0
  %4971 = vdwg.mxu0
  %4972 = vrot.lane.b32.xlu0 %v4430, 112
  %v4973 = vpop.permute.xlu0 %4972
  %4974 = vrot.lane.b32.xlu0 %v4430, 80
  %v4975 = vpop.permute.xlu0 %4974
  %v4977 = vsel %vm2051, %v4973, 0
  %v4980 = vsel %vm2051, %v4975, 0
  %4982 = vmatprep.subr.bf16.mxu0 0
  %4983 = vmatpush1.bf16.xpose.msra.mxu0 %v4980
  %4984 = vmatprep.subr.bf16.mxu0 0
  %4985 = vmatpush1.bf16.xpose.msra.mxu0 0
  %4986 = vmatprep.subr.bf16.mxu0 0
  %4987 = vmatpush1.bf16.xpose.msra.mxu0 0
  %4988 = vmatprep.subr.bf16.mxu0 0
  %4989 = vmatpush1.bf16.xpose.msra.mxu0 0
  %4990 = vmatprep.subr.bf16.mxu0 0
  %4991 = vmatpush1.bf16.xpose.msra.mxu0 0
  %4992 = vmatprep.subr.bf16.mxu0 0
  %4993 = vmatpush1.bf16.xpose.msra.mxu0 0
  %4994 = vmatprep.subr.bf16.mxu0 0
  %4995 = vmatpush1.bf16.xpose.msra.mxu0 0
  %4996 = vmatprep.subr.bf16.mxu0 0
  %4997 = vmatpush1.bf16.xpose.msra.mxu0 0
  %4998 = vmatprep.subr.bf16.mxu0 0
  %4999 = vmatpush1.bf16.xpose.msra.mxu0 0
  %5000 = vmatprep.subr.bf16.mxu0 0
  %5001 = vmatpush1.bf16.xpose.msra.mxu0 0
  %5002 = vmatprep.subr.bf16.mxu0 0
  %5003 = vmatpush1.bf16.xpose.msra.mxu0 0
  %5004 = vmatprep.subr.bf16.mxu0 0
  %5005 = vmatpush1.bf16.xpose.msra.mxu0 0
  %5006 = vmatprep.subr.bf16.mxu0 0
  %5007 = vmatpush1.bf16.xpose.msra.mxu0 0
  %5008 = vmatprep.subr.bf16.mxu0 0
  %5009 = vmatpush1.bf16.xpose.msra.mxu0 0
  %5010 = vmatprep.subr.bf16.mxu0 0
  %5011 = vmatpush1.bf16.xpose.msra.mxu0 0
  %5012 = vmatprep.subr.bf16.mxu0 0
  %5013 = vmatpush1.bf16.xpose.msra.mxu0 0
  %5014 = vmatprep.mubr.bf16.mxu0 0
  %5015 = vmatmul.mubr.bf16.gmra.mrb[0].mxu0 %v4977
  %v5016 = vpop.f32.mrb[0].mxu0
  %v5017 = vadd.f32 0.0, %v5016
  %v5018 = vpop.f32.mrb[0].mxu0
  %v5019 = vpop.f32.mrb[0].mxu0
  %v5020 = vpop.f32.mrb[0].mxu0
  %5021 = vdwg.mxu0
  %5022 = vrot.lane.b32.xlu0 %v4431, 112
  %v5023 = vpop.permute.xlu0 %5022
  %5024 = vrot.lane.b32.xlu0 %v4431, 80
  %v5025 = vpop.permute.xlu0 %5024
  %v5027 = vsel %vm2051, %v5023, 0
  %v5030 = vsel %vm2051, %v5025, 0
  %5032 = vmatprep.subr.bf16.mxu0 0
  %5033 = vmatpush1.bf16.xpose.msra.mxu0 %v5030
  %5034 = vmatprep.subr.bf16.mxu0 0
  %5035 = vmatpush1.bf16.xpose.msra.mxu0 0
  %5036 = vmatprep.subr.bf16.mxu0 0
  %5037 = vmatpush1.bf16.xpose.msra.mxu0 0
  %5038 = vmatprep.subr.bf16.mxu0 0
  %5039 = vmatpush1.bf16.xpose.msra.mxu0 0
  %5040 = vmatprep.subr.bf16.mxu0 0
  %5041 = vmatpush1.bf16.xpose.msra.mxu0 0
  %5042 = vmatprep.subr.bf16.mxu0 0
  %5043 = vmatpush1.bf16.xpose.msra.mxu0 0
  %5044 = vmatprep.subr.bf16.mxu0 0
  %5045 = vmatpush1.bf16.xpose.msra.mxu0 0
  %5046 = vmatprep.subr.bf16.mxu0 0
  %5047 = vmatpush1.bf16.xpose.msra.mxu0 0
  %5048 = vmatprep.subr.bf16.mxu0 0
  %5049 = vmatpush1.bf16.xpose.msra.mxu0 0
  %5050 = vmatprep.subr.bf16.mxu0 0
  %5051 = vmatpush1.bf16.xpose.msra.mxu0 0
  %5052 = vmatprep.subr.bf16.mxu0 0
  %5053 = vmatpush1.bf16.xpose.msra.mxu0 0
  %5054 = vmatprep.subr.bf16.mxu0 0
  %5055 = vmatpush1.bf16.xpose.msra.mxu0 0
  %5056 = vmatprep.subr.bf16.mxu0 0
  %5057 = vmatpush1.bf16.xpose.msra.mxu0 0
  %5058 = vmatprep.subr.bf16.mxu0 0
  %5059 = vmatpush1.bf16.xpose.msra.mxu0 0
  %5060 = vmatprep.subr.bf16.mxu0 0
  %5061 = vmatpush1.bf16.xpose.msra.mxu0 0
  %5062 = vmatprep.subr.bf16.mxu0 0
  %5063 = vmatpush1.bf16.xpose.msra.mxu0 0
  %5064 = vmatprep.mubr.bf16.mxu0 0
  %5065 = vmatmul.mubr.bf16.gmra.mrb[0].mxu0 %v5027
  %v5066 = vpop.f32.mrb[0].mxu0
  %v5067 = vadd.f32 0.0, %v5066
  %v5068 = vpop.f32.mrb[0].mxu0
  %v5069 = vpop.f32.mrb[0].mxu0
  %v5070 = vpop.f32.mrb[0].mxu0
  %5071 = vdwg.mxu0
  %v5072 = vsel %vm876, %v4917, -inf
  %5073 = vmax.xlane.f32.xlu0 %v5072
  %v5074 = vpop.xlane.xlu0 %5073
  %v5075 = vsel %vm876, %v4967, -inf
  %5076 = vmax.xlane.f32.xlu0 %v5075
  %v5077 = vpop.xlane.xlu0 %5076
  %v5078 = vsel %vm876, %v5017, -inf
  %5079 = vmax.xlane.f32.xlu0 %v5078
  %v5080 = vpop.xlane.xlu0 %5079
  %v5081 = vsel %vm876, %v5067, -inf
  %5082 = vmax.xlane.f32.xlu0 %v5081
  %v5083 = vpop.xlane.xlu0 %5082
  %v5084 = vsub.f32 %v4917, %v5074
  %v5085 = vsub.f32 %v4967, %v5077
  %v5086 = vsub.f32 %v5017, %v5080
  %v5087 = vsub.f32 %v5067, %v5083
  %v5088 = vmul.f32 %v5084, 1.442695
  %v5089 = vpow.pop %v5088
  %v5090 = vmul.f32 %v5085, 1.442695
  %v5091 = vpow.pop %v5090
  %v5092 = vmul.f32 %v5086, 1.442695
  %v5093 = vpow.pop %v5092
  %v5094 = vmul.f32 %v5087, 1.442695
  %v5095 = vpow.pop %v5094
  %v5096 = vsel %vm876, %v5089, 0.0
  %5097 = vadd.xlane.f32.xlu0 %v5096
  %v5098 = vpop.xlane.xlu0 %5097
  %v5099 = vsel %vm876, %v5091, 0.0
  %5100 = vadd.xlane.f32.xlu0 %v5099
  %v5101 = vpop.xlane.xlu0 %5100
  %v5102 = vsel %vm876, %v5093, 0.0
  %5103 = vadd.xlane.f32.xlu0 %v5102
  %v5104 = vpop.xlane.xlu0 %5103
  %v5105 = vsel %vm876, %v5095, 0.0
  %5106 = vadd.xlane.f32.xlu0 %v5105
  %v5107 = vpop.xlane.xlu0 %5106
  %v5108 = vrcp.pop %v5098
  %v5109 = vrcp.pop %v5101
  %v5110 = vrcp.pop %v5104
  %v5111 = vrcp.pop %v5107
  %v5112 = vmul.f32 %v5089, %v5108
  %v5113 = vmul.f32 %v5091, %v5109
  %v5114 = vmul.f32 %v5093, %v5110
  %v5115 = vmul.f32 %v5095, %v5111
  %v5116 = vpack.c.bf16 %v5112, %v5112
  %v5117 = vpack.c.bf16 %v5113, %v5113
  %v5118 = vpack.c.bf16 %v5114, %v5114
  %v5119 = vpack.c.bf16 %v5115, %v5115
  %5120 = vrot.lane.b32.xlu0 %v4428, 48
  %v5121 = vpop.permute.xlu0 %5120
  %v5123 = vsel %vm876, %v5116, 0
  %v5126 = vsel %vm892, %v5121, 0
  %5128 = vmatprep.subr.bf16.mxu0 0
  %5129 = vmatpush1.bf16.msra.mxu0 %v5126
  %5130 = vmatprep.subr.bf16.mxu0 0
  %5131 = vmatpush1.bf16.msra.mxu0 0
  %5132 = vmatprep.subr.bf16.mxu0 0
  %5133 = vmatpush1.bf16.msra.mxu0 0
  %5134 = vmatprep.subr.bf16.mxu0 0
  %5135 = vmatpush1.bf16.msra.mxu0 0
  %5136 = vmatprep.subr.bf16.mxu0 0
  %5137 = vmatpush1.bf16.msra.mxu0 0
  %5138 = vmatprep.subr.bf16.mxu0 0
  %5139 = vmatpush1.bf16.msra.mxu0 0
  %5140 = vmatprep.subr.bf16.mxu0 0
  %5141 = vmatpush1.bf16.msra.mxu0 0
  %5142 = vmatprep.subr.bf16.mxu0 0
  %5143 = vmatpush1.bf16.msra.mxu0 0
  %5144 = vmatprep.subr.bf16.mxu0 0
  %5145 = vmatpush1.bf16.msra.mxu0 0
  %5146 = vmatprep.subr.bf16.mxu0 0
  %5147 = vmatpush1.bf16.msra.mxu0 0
  %5148 = vmatprep.subr.bf16.mxu0 0
  %5149 = vmatpush1.bf16.msra.mxu0 0
  %5150 = vmatprep.subr.bf16.mxu0 0
  %5151 = vmatpush1.bf16.msra.mxu0 0
  %5152 = vmatprep.subr.bf16.mxu0 0
  %5153 = vmatpush1.bf16.msra.mxu0 0
  %5154 = vmatprep.subr.bf16.mxu0 0
  %5155 = vmatpush1.bf16.msra.mxu0 0
  %5156 = vmatprep.subr.bf16.mxu0 0
  %5157 = vmatpush1.bf16.msra.mxu0 0
  %5158 = vmatprep.subr.bf16.mxu0 0
  %5159 = vmatpush1.bf16.msra.mxu0 0
  %5160 = vmatprep.mubr.bf16.mxu0 0
  %5161 = vmatmul.mubr.bf16.gmra.mrb[0].mxu0 %v5123
  %v5162 = vpop.f32.mrb[0].mxu0
  %v5163 = vadd.f32 0.0, %v5162
  %v5164 = vpop.f32.mrb[0].mxu0
  %v5165 = vpop.f32.mrb[0].mxu0
  %v5166 = vpop.f32.mrb[0].mxu0
  %5167 = vdwg.mxu0
  %5168 = vrot.lane.b32.xlu0 %v4429, 48
  %v5169 = vpop.permute.xlu0 %5168
  %v5171 = vsel %vm876, %v5117, 0
  %v5174 = vsel %vm892, %v5169, 0
  %5176 = vmatprep.subr.bf16.mxu0 0
  %5177 = vmatpush1.bf16.msra.mxu0 %v5174
  %5178 = vmatprep.subr.bf16.mxu0 0
  %5179 = vmatpush1.bf16.msra.mxu0 0
  %5180 = vmatprep.subr.bf16.mxu0 0
  %5181 = vmatpush1.bf16.msra.mxu0 0
  %5182 = vmatprep.subr.bf16.mxu0 0
  %5183 = vmatpush1.bf16.msra.mxu0 0
  %5184 = vmatprep.subr.bf16.mxu0 0
  %5185 = vmatpush1.bf16.msra.mxu0 0
  %5186 = vmatprep.subr.bf16.mxu0 0
  %5187 = vmatpush1.bf16.msra.mxu0 0
  %5188 = vmatprep.subr.bf16.mxu0 0
  %5189 = vmatpush1.bf16.msra.mxu0 0
  %5190 = vmatprep.subr.bf16.mxu0 0
  %5191 = vmatpush1.bf16.msra.mxu0 0
  %5192 = vmatprep.subr.bf16.mxu0 0
  %5193 = vmatpush1.bf16.msra.mxu0 0
  %5194 = vmatprep.subr.bf16.mxu0 0
  %5195 = vmatpush1.bf16.msra.mxu0 0
  %5196 = vmatprep.subr.bf16.mxu0 0
  %5197 = vmatpush1.bf16.msra.mxu0 0
  %5198 = vmatprep.subr.bf16.mxu0 0
  %5199 = vmatpush1.bf16.msra.mxu0 0
  %5200 = vmatprep.subr.bf16.mxu0 0
  %5201 = vmatpush1.bf16.msra.mxu0 0
  %5202 = vmatprep.subr.bf16.mxu0 0
  %5203 = vmatpush1.bf16.msra.mxu0 0
  %5204 = vmatprep.subr.bf16.mxu0 0
  %5205 = vmatpush1.bf16.msra.mxu0 0
  %5206 = vmatprep.subr.bf16.mxu0 0
  %5207 = vmatpush1.bf16.msra.mxu0 0
  %5208 = vmatprep.mubr.bf16.mxu0 0
  %5209 = vmatmul.mubr.bf16.gmra.mrb[0].mxu0 %v5171
  %v5210 = vpop.f32.mrb[0].mxu0
  %v5211 = vadd.f32 0.0, %v5210
  %v5212 = vpop.f32.mrb[0].mxu0
  %v5213 = vpop.f32.mrb[0].mxu0
  %v5214 = vpop.f32.mrb[0].mxu0
  %5215 = vdwg.mxu0
  %5216 = vrot.lane.b32.xlu0 %v4430, 48
  %v5217 = vpop.permute.xlu0 %5216
  %v5219 = vsel %vm876, %v5118, 0
  %v5222 = vsel %vm892, %v5217, 0
  %5224 = vmatprep.subr.bf16.mxu0 0
  %5225 = vmatpush1.bf16.msra.mxu0 %v5222
  %5226 = vmatprep.subr.bf16.mxu0 0
  %5227 = vmatpush1.bf16.msra.mxu0 0
  %5228 = vmatprep.subr.bf16.mxu0 0
  %5229 = vmatpush1.bf16.msra.mxu0 0
  %5230 = vmatprep.subr.bf16.mxu0 0
  %5231 = vmatpush1.bf16.msra.mxu0 0
  %5232 = vmatprep.subr.bf16.mxu0 0
  %5233 = vmatpush1.bf16.msra.mxu0 0
  %5234 = vmatprep.subr.bf16.mxu0 0
  %5235 = vmatpush1.bf16.msra.mxu0 0
  %5236 = vmatprep.subr.bf16.mxu0 0
  %5237 = vmatpush1.bf16.msra.mxu0 0
  %5238 = vmatprep.subr.bf16.mxu0 0
  %5239 = vmatpush1.bf16.msra.mxu0 0
  %5240 = vmatprep.subr.bf16.mxu0 0
  %5241 = vmatpush1.bf16.msra.mxu0 0
  %5242 = vmatprep.subr.bf16.mxu0 0
  %5243 = vmatpush1.bf16.msra.mxu0 0
  %5244 = vmatprep.subr.bf16.mxu0 0
  %5245 = vmatpush1.bf16.msra.mxu0 0
  %5246 = vmatprep.subr.bf16.mxu0 0
  %5247 = vmatpush1.bf16.msra.mxu0 0
  %5248 = vmatprep.subr.bf16.mxu0 0
  %5249 = vmatpush1.bf16.msra.mxu0 0
  %5250 = vmatprep.subr.bf16.mxu0 0
  %5251 = vmatpush1.bf16.msra.mxu0 0
  %5252 = vmatprep.subr.bf16.mxu0 0
  %5253 = vmatpush1.bf16.msra.mxu0 0
  %5254 = vmatprep.subr.bf16.mxu0 0
  %5255 = vmatpush1.bf16.msra.mxu0 0
  %5256 = vmatprep.mubr.bf16.mxu0 0
  %5257 = vmatmul.mubr.bf16.gmra.mrb[0].mxu0 %v5219
  %v5258 = vpop.f32.mrb[0].mxu0
  %v5259 = vadd.f32 0.0, %v5258
  %v5260 = vpop.f32.mrb[0].mxu0
  %v5261 = vpop.f32.mrb[0].mxu0
  %v5262 = vpop.f32.mrb[0].mxu0
  %5263 = vdwg.mxu0
  %5264 = vrot.lane.b32.xlu0 %v4431, 48
  %v5265 = vpop.permute.xlu0 %5264
  %v5267 = vsel %vm876, %v5119, 0
  %v5270 = vsel %vm892, %v5265, 0
  %5272 = vmatprep.subr.bf16.mxu0 0
  %5273 = vmatpush1.bf16.msra.mxu0 %v5270
  %5274 = vmatprep.subr.bf16.mxu0 0
  %5275 = vmatpush1.bf16.msra.mxu0 0
  %5276 = vmatprep.subr.bf16.mxu0 0
  %5277 = vmatpush1.bf16.msra.mxu0 0
  %5278 = vmatprep.subr.bf16.mxu0 0
  %5279 = vmatpush1.bf16.msra.mxu0 0
  %5280 = vmatprep.subr.bf16.mxu0 0
  %5281 = vmatpush1.bf16.msra.mxu0 0
  %5282 = vmatprep.subr.bf16.mxu0 0
  %5283 = vmatpush1.bf16.msra.mxu0 0
  %5284 = vmatprep.subr.bf16.mxu0 0
  %5285 = vmatpush1.bf16.msra.mxu0 0
  %5286 = vmatprep.subr.bf16.mxu0 0
  %5287 = vmatpush1.bf16.msra.mxu0 0
  %5288 = vmatprep.subr.bf16.mxu0 0
  %5289 = vmatpush1.bf16.msra.mxu0 0
  %5290 = vmatprep.subr.bf16.mxu0 0
  %5291 = vmatpush1.bf16.msra.mxu0 0
  %5292 = vmatprep.subr.bf16.mxu0 0
  %5293 = vmatpush1.bf16.msra.mxu0 0
  %5294 = vmatprep.subr.bf16.mxu0 0
  %5295 = vmatpush1.bf16.msra.mxu0 0
  %5296 = vmatprep.subr.bf16.mxu0 0
  %5297 = vmatpush1.bf16.msra.mxu0 0
  %5298 = vmatprep.subr.bf16.mxu0 0
  %5299 = vmatpush1.bf16.msra.mxu0 0
  %5300 = vmatprep.subr.bf16.mxu0 0
  %5301 = vmatpush1.bf16.msra.mxu0 0
  %5302 = vmatprep.subr.bf16.mxu0 0
  %5303 = vmatpush1.bf16.msra.mxu0 0
  %5304 = vmatprep.mubr.bf16.mxu0 0
  %5305 = vmatmul.mubr.bf16.gmra.mrb[0].mxu0 %v5267
  %v5306 = vpop.f32.mrb[0].mxu0
  %v5307 = vadd.f32 0.0, %v5306
  %v5308 = vpop.f32.mrb[0].mxu0
  %v5309 = vpop.f32.mrb[0].mxu0
  %v5310 = vpop.f32.mrb[0].mxu0
  %5311 = vdwg.mxu0
  %v5312 = vpack.c.bf16 %v5211, %v5163
  %v5313 = vpack.c.bf16 %v5307, %v5259
  %5316 = vrot.lane.b32.xlu0 %v5312, 16
  %v5317 = vpop.permute.xlu0 %5316
  %5318 = vrot.lane.b32.xlu0 %v5313, 16
  %v5319 = vpop.permute.xlu0 %5318
  %5322 = vst.msk [vmem:[#allocation4] sm:$0xff] %vm2939, %v5317
  %5323 = vst.msk [vmem:[#allocation4 + $0x8] sm:$0xff] %vm2939, %v5319
  %v5324 = vld [vmem:[#allocation4] sm:$0xff]
  %v5325 = vld [vmem:[#allocation4 + $0x8] sm:$0xff]
  %s5326 = scalar_lea.vmem %s10, 16
  %v5327 = vld [vmem:[%s5326] sm:$0xf]
  %v5328 = vld [vmem:[%s5326 + $0x4] sm:$0xf]
  %v5329 = vld [vmem:[%s5326 + $0x8] sm:$0xf]
  %v5330 = vld [vmem:[%s5326 + $0xc] sm:$0xf]
  %s5331 = scalar_lea.vmem %s11, 1
  %v5332 = vld [vmem:[%s5331] sm:$0x1]
  %v5334 = vlaneseq
  %v5335 = vshrl.u32 %v5334, 7
  %v5336 = vsub.s32 0, %v5335
  %v5337 = vrot.slane %v5332, %v5336
  %v5343 = vunpack.c.l.b16 %v5327
  %v5344 = vunpack.c.l.b16 %v5328
  %v5345 = vunpack.c.l.b16 %v5329
  %v5346 = vunpack.c.l.b16 %v5330
  %v5347 = vpack.c.b16 %v5344, %v5343
  %v5348 = vpack.c.b16 %v5346, %v5345
  %v5352 = vsel %vm1988, %v5324, 0
  %v5355 = vsel %vm1988, %v5325, 0
  %5357 = vmatprep.subr.bf16.mxu0 0
  %5358 = vmatpush1.bf16.msra.mxu0 %v5347
  %5359 = vmatprep.subr.bf16.mxu0 0
  %5360 = vmatpush1.bf16.msra.mxu0 %v5348
  %5361 = vmatprep.subr.bf16.mxu0 0
  %5362 = vmatpush1.bf16.msra.mxu0 0
  %5363 = vmatprep.subr.bf16.mxu0 0
  %5364 = vmatpush1.bf16.msra.mxu0 0
  %5365 = vmatprep.subr.bf16.mxu0 0
  %5366 = vmatpush1.bf16.msra.mxu0 0
  %5367 = vmatprep.subr.bf16.mxu0 0
  %5368 = vmatpush1.bf16.msra.mxu0 0
  %5369 = vmatprep.subr.bf16.mxu0 0
  %5370 = vmatpush1.bf16.msra.mxu0 0
  %5371 = vmatprep.subr.bf16.mxu0 0
  %5372 = vmatpush1.bf16.msra.mxu0 0
  %5373 = vmatprep.subr.bf16.mxu0 0
  %5374 = vmatpush1.bf16.msra.mxu0 0
  %5375 = vmatprep.subr.bf16.mxu0 0
  %5376 = vmatpush1.bf16.msra.mxu0 0
  %5377 = vmatprep.subr.bf16.mxu0 0
  %5378 = vmatpush1.bf16.msra.mxu0 0
  %5379 = vmatprep.subr.bf16.mxu0 0
  %5380 = vmatpush1.bf16.msra.mxu0 0
  %5381 = vmatprep.subr.bf16.mxu0 0
  %5382 = vmatpush1.bf16.msra.mxu0 0
  %5383 = vmatprep.subr.bf16.mxu0 0
  %5384 = vmatpush1.bf16.msra.mxu0 0
  %5385 = vmatprep.subr.bf16.mxu0 0
  %5386 = vmatpush1.bf16.msra.mxu0 0
  %5387 = vmatprep.subr.bf16.mxu0 0
  %5388 = vmatpush1.bf16.msra.mxu0 0
  %5389 = vmatprep.mubr.bf16.mxu0 0
  %5390 = vmatmul.mubr.bf16.gmra.mrb[0].mxu0 %v5352
  %v5391 = vpop.f32.mrb[0].mxu0
  %v5392 = vadd.f32 %v5337, %v5391
  %v5393 = vpop.f32.mrb[0].mxu0
  %v5394 = vpop.f32.mrb[0].mxu0
  %v5395 = vadd.f32 %v5337, %v5394
  %v5396 = vpop.f32.mrb[0].mxu0
  %5397 = vmatprep.mubr.bf16.mxu0 0
  %5398 = vmatmul.mubr.bf16.gmra.mrb[0].mxu0 %v5355
  %v5399 = vpop.f32.mrb[0].mxu0
  %v5400 = vadd.f32 %v5337, %v5399
  %v5401 = vpop.f32.mrb[0].mxu0
  %v5402 = vpop.f32.mrb[0].mxu0
  %v5403 = vadd.f32 %v5337, %v5402
  %v5404 = vpop.f32.mrb[0].mxu0
  %5405 = vdwg.mxu0
  %v5406 = vadd.f32 %v1959, %v5392
  %v5407 = vadd.f32 %v1960, %v5395
  %v5408 = vadd.f32 %v1961, %v5400
  %v5409 = vadd.f32 %v1962, %v5403
  %s5410 = scalar_lea.vmem %s12, 1
  %v5411 = vld [vmem:[%s5410] sm:$0x1]
  %s5412 = scalar_lea.vmem %s13, 1
  %v5413 = vld [vmem:[%s5412] sm:$0x1]
  %v5414 = vsel %vm1988, %v5406, 0.0
  %5415 = vadd.xlane.f32.xlu0 %v5414
  %v5416 = vpop.xlane.xlu0 %5415
  %v5417 = vsel %vm1988, %v5407, 0.0
  %5418 = vadd.xlane.f32.xlu0 %v5417
  %v5419 = vpop.xlane.xlu0 %5418
  %v5420 = vsel %vm1988, %v5408, 0.0
  %5421 = vadd.xlane.f32.xlu0 %v5420
  %v5422 = vpop.xlane.xlu0 %5421
  %v5423 = vsel %vm1988, %v5409, 0.0
  %5424 = vadd.xlane.f32.xlu0 %v5423
  %v5425 = vpop.xlane.xlu0 %5424
  %v5426 = vmul.f32 %v5416, %v3040
  %v5427 = vmul.f32 %v5419, %v3040
  %v5428 = vmul.f32 %v5422, %v3040
  %v5429 = vmul.f32 %v5425, %v3040
  %v5430 = vsub.f32 %v5406, %v5426
  %v5431 = vsub.f32 %v5407, %v5427
  %v5432 = vsub.f32 %v5408, %v5428
  %v5433 = vsub.f32 %v5409, %v5429
  %v5434 = vmul.f32 %v5430, %v5430
  %v5435 = vmul.f32 %v5431, %v5431
  %v5436 = vmul.f32 %v5432, %v5432
  %v5437 = vmul.f32 %v5433, %v5433
  %v5438 = vsel %vm1988, %v5434, 0.0
  %5439 = vadd.xlane.f32.xlu0 %v5438
  %v5440 = vpop.xlane.xlu0 %5439
  %v5441 = vsel %vm1988, %v5435, 0.0
  %5442 = vadd.xlane.f32.xlu0 %v5441
  %v5443 = vpop.xlane.xlu0 %5442
  %v5444 = vsel %vm1988, %v5436, 0.0
  %5445 = vadd.xlane.f32.xlu0 %v5444
  %v5446 = vpop.xlane.xlu0 %5445
  %v5447 = vsel %vm1988, %v5437, 0.0
  %5448 = vadd.xlane.f32.xlu0 %v5447
  %v5449 = vpop.xlane.xlu0 %5448
  %v5450 = vmul.f32 %v5440, %v3040
  %v5451 = vmul.f32 %v5443, %v3040
  %v5452 = vmul.f32 %v5446, %v3040
  %v5453 = vmul.f32 %v5449, %v3040
  %v5454 = vadd.f32 %v5450, 1e-05
  %v5455 = vadd.f32 %v5451, 1e-05
  %v5456 = vadd.f32 %v5452, 1e-05
  %v5457 = vadd.f32 %v5453, 1e-05
  %v5458 = vrsqrt.pop %v5454
  %v5459 = vrsqrt.pop %v5455
  %v5460 = vrsqrt.pop %v5456
  %v5461 = vrsqrt.pop %v5457
  %v5462 = vmul.f32 %v5430, %v5458
  %v5463 = vmul.f32 %v5431, %v5459
  %v5464 = vmul.f32 %v5432, %v5460
  %v5465 = vmul.f32 %v5433, %v5461
  %v5467 = vlaneseq
  %v5468 = vshrl.u32 %v5467, 7
  %v5469 = vsub.s32 0, %v5468
  %v5470 = vrot.slane %v5411, %v5469
  %v5472 = vmul.f32 %v5462, %v5470
  %v5473 = vmul.f32 %v5463, %v5470
  %v5474 = vmul.f32 %v5464, %v5470
  %v5475 = vmul.f32 %v5465, %v5470
  %v5477 = vlaneseq
  %v5478 = vshrl.u32 %v5477, 7
  %v5479 = vsub.s32 0, %v5478
  %v5480 = vrot.slane %v5413, %v5479
  %v5482 = vadd.f32 %v5472, %v5480
  %v5483 = vadd.f32 %v5473, %v5480
  %v5484 = vadd.f32 %v5474, %v5480
  %v5485 = vadd.f32 %v5475, %v5480
  %v5486 = vpack.c.bf16 %v5483, %v5482
  %v5487 = vpack.c.bf16 %v5485, %v5484
  %s5488 = scalar_lea.vmem %s14, 128
  %v5489 = vld [vmem:[%s5488] sm:$0xff]
  %v5490 = vld [vmem:[%s5488 + $0x8] sm:$0xff]
  %v5491 = vld [vmem:[%s5488 + $0x10] sm:$0xff]
  %v5492 = vld [vmem:[%s5488 + $0x18] sm:$0xff]
  %v5493 = vld [vmem:[%s5488 + $0x20] sm:$0xff]
  %v5494 = vld [vmem:[%s5488 + $0x28] sm:$0xff]
  %v5495 = vld [vmem:[%s5488 + $0x30] sm:$0xff]
  %v5496 = vld [vmem:[%s5488 + $0x38] sm:$0xff]
  %v5497 = vld [vmem:[%s5488 + $0x40] sm:$0xff]
  %v5498 = vld [vmem:[%s5488 + $0x48] sm:$0xff]
  %v5499 = vld [vmem:[%s5488 + $0x50] sm:$0xff]
  %v5500 = vld [vmem:[%s5488 + $0x58] sm:$0xff]
  %v5501 = vld [vmem:[%s5488 + $0x60] sm:$0xff]
  %v5502 = vld [vmem:[%s5488 + $0x68] sm:$0xff]
  %v5503 = vld [vmem:[%s5488 + $0x70] sm:$0xff]
  %v5504 = vld [vmem:[%s5488 + $0x78] sm:$0xff]
  %s5505 = scalar_lea.vmem %s15, 8
  %v5506 = vld [vmem:[%s5505] sm:$0xff]
  %v5508 = vlaneseq
  %v5509 = vshrl.u32 %v5508, 7
  %v5510 = vsub.s32 0, %v5509
  %v5511 = vrot.slane %v5506, %v5510
  %v5512 = vlaneseq
  %v5513 = vshrl.u32 %v5512, 7
  %v5514 = vsub.s32 1, %v5513
  %v5515 = vrot.slane %v5506, %v5514
  %v5516 = vlaneseq
  %v5517 = vshrl.u32 %v5516, 7
  %v5518 = vsub.s32 2, %v5517
  %v5519 = vrot.slane %v5506, %v5518
  %v5520 = vlaneseq
  %v5521 = vshrl.u32 %v5520, 7
  %v5522 = vsub.s32 3, %v5521
  %v5523 = vrot.slane %v5506, %v5522
  %v5524 = vlaneseq
  %v5525 = vshrl.u32 %v5524, 7
  %v5526 = vsub.s32 4, %v5525
  %v5527 = vrot.slane %v5506, %v5526
  %v5528 = vlaneseq
  %v5529 = vshrl.u32 %v5528, 7
  %v5530 = vsub.s32 5, %v5529
  %v5531 = vrot.slane %v5506, %v5530
  %v5532 = vlaneseq
  %v5533 = vshrl.u32 %v5532, 7
  %v5534 = vsub.s32 6, %v5533
  %v5535 = vrot.slane %v5506, %v5534
  %v5536 = vlaneseq
  %v5537 = vshrl.u32 %v5536, 7
  %v5538 = vsub.s32 7, %v5537
  %v5539 = vrot.slane %v5506, %v5538
  %v5564 = vunpack.c.l.b16 %v5489
  %v5565 = vunpack.c.h.b16 %v5489
  %v5566 = vunpack.c.l.b16 %v5490
  %v5567 = vunpack.c.h.b16 %v5490
  %v5568 = vunpack.c.l.b16 %v5491
  %v5569 = vunpack.c.h.b16 %v5491
  %v5570 = vunpack.c.l.b16 %v5492
  %v5571 = vunpack.c.h.b16 %v5492
  %v5572 = vunpack.c.l.b16 %v5493
  %v5573 = vunpack.c.h.b16 %v5493
  %v5574 = vunpack.c.l.b16 %v5494
  %v5575 = vunpack.c.h.b16 %v5494
  %v5576 = vunpack.c.l.b16 %v5495
  %v5577 = vunpack.c.h.b16 %v5495
  %v5578 = vunpack.c.l.b16 %v5496
  %v5579 = vunpack.c.h.b16 %v5496
  %v5580 = vunpack.c.l.b16 %v5497
  %v5581 = vunpack.c.h.b16 %v5497
  %v5582 = vunpack.c.l.b16 %v5498
  %v5583 = vunpack.c.h.b16 %v5498
  %v5584 = vunpack.c.l.b16 %v5499
  %v5585 = vunpack.c.h.b16 %v5499
  %v5586 = vunpack.c.l.b16 %v5500
  %v5587 = vunpack.c.h.b16 %v5500
  %v5588 = vunpack.c.l.b16 %v5501
  %v5589 = vunpack.c.h.b16 %v5501
  %v5590 = vunpack.c.l.b16 %v5502
  %v5591 = vunpack.c.h.b16 %v5502
  %v5592 = vunpack.c.l.b16 %v5503
  %v5593 = vunpack.c.h.b16 %v5503
  %v5594 = vunpack.c.l.b16 %v5504
  %v5595 = vunpack.c.h.b16 %v5504
  %v5596 = vpack.c.b16 %v5572, %v5564
  %v5597 = vpack.c.b16 %v5573, %v5565
  %v5598 = vpack.c.b16 %v5574, %v5566
  %v5599 = vpack.c.b16 %v5575, %v5567
  %v5600 = vpack.c.b16 %v5576, %v5568
  %v5601 = vpack.c.b16 %v5577, %v5569
  %v5602 = vpack.c.b16 %v5578, %v5570
  %v5603 = vpack.c.b16 %v5579, %v5571
  %v5604 = vpack.c.b16 %v5588, %v5580
  %v5605 = vpack.c.b16 %v5589, %v5581
  %v5606 = vpack.c.b16 %v5590, %v5582
  %v5607 = vpack.c.b16 %v5591, %v5583
  %v5608 = vpack.c.b16 %v5592, %v5584
  %v5609 = vpack.c.b16 %v5593, %v5585
  %v5610 = vpack.c.b16 %v5594, %v5586
  %v5611 = vpack.c.b16 %v5595, %v5587
  %v5629 = vsel %vm1988, %v5486, 0
  %v5632 = vsel %vm1988, %v5487, 0
  %5634 = vmatprep.subr.bf16.mxu0 %v5597
  %5635 = vmatpush1.bf16.msra.mxu0 %v5596
  %5636 = vmatprep.subr.bf16.mxu0 %v5605
  %5637 = vmatpush1.bf16.msra.mxu0 %v5604
  %5638 = vmatprep.subr.bf16.mxu0 0
  %5639 = vmatpush1.bf16.msra.mxu0 0
  %5640 = vmatprep.subr.bf16.mxu0 0
  %5641 = vmatpush1.bf16.msra.mxu0 0
  %5642 = vmatprep.subr.bf16.mxu0 0
  %5643 = vmatpush1.bf16.msra.mxu0 0
  %5644 = vmatprep.subr.bf16.mxu0 0
  %5645 = vmatpush1.bf16.msra.mxu0 0
  %5646 = vmatprep.subr.bf16.mxu0 0
  %5647 = vmatpush1.bf16.msra.mxu0 0
  %5648 = vmatprep.subr.bf16.mxu0 0
  %5649 = vmatpush1.bf16.msra.mxu0 0
  %5650 = vmatprep.subr.bf16.mxu0 0
  %5651 = vmatpush1.bf16.msra.mxu0 0
  %5652 = vmatprep.subr.bf16.mxu0 0
  %5653 = vmatpush1.bf16.msra.mxu0 0
  %5654 = vmatprep.subr.bf16.mxu0 0
  %5655 = vmatpush1.bf16.msra.mxu0 0
  %5656 = vmatprep.subr.bf16.mxu0 0
  %5657 = vmatpush1.bf16.msra.mxu0 0
  %5658 = vmatprep.subr.bf16.mxu0 0
  %5659 = vmatpush1.bf16.msra.mxu0 0
  %5660 = vmatprep.subr.bf16.mxu0 0
  %5661 = vmatpush1.bf16.msra.mxu0 0
  %5662 = vmatprep.subr.bf16.mxu0 0
  %5663 = vmatpush1.bf16.msra.mxu0 0
  %5664 = vmatprep.subr.bf16.mxu0 0
  %5665 = vmatpush1.bf16.msra.mxu0 0
  %5666 = vmatprep.mubr.bf16.mxu0 0
  %5667 = vmatmul.mubr.bf16.gmra.mrb[0].mxu0 %v5629
  %v5668 = vpop.f32.mrb[0].mxu0
  %v5669 = vadd.f32 %v5511, %v5668
  %v5670 = vpop.f32.mrb[0].mxu0
  %v5671 = vadd.f32 %v5515, %v5670
  %v5672 = vpop.f32.mrb[0].mxu0
  %v5673 = vadd.f32 %v5511, %v5672
  %v5674 = vpop.f32.mrb[0].mxu0
  %v5675 = vadd.f32 %v5515, %v5674
  %5676 = vmatprep.mubr.bf16.mxu0 0
  %5677 = vmatmul.mubr.bf16.gmra.mrb[0].mxu0 %v5632
  %v5678 = vpop.f32.mrb[0].mxu0
  %v5679 = vadd.f32 %v5511, %v5678
  %v5680 = vpop.f32.mrb[0].mxu0
  %v5681 = vadd.f32 %v5515, %v5680
  %v5682 = vpop.f32.mrb[0].mxu0
  %v5683 = vadd.f32 %v5511, %v5682
  %v5684 = vpop.f32.mrb[0].mxu0
  %v5685 = vadd.f32 %v5515, %v5684
  %5686 = vdwg.mxu0
  %5687 = vmatprep.subr.bf16.mxu0 %v5599
  %5688 = vmatpush1.bf16.msra.mxu0 %v5598
  %5689 = vmatprep.subr.bf16.mxu0 %v5607
  %5690 = vmatpush1.bf16.msra.mxu0 %v5606
  %5691 = vmatprep.subr.bf16.mxu0 0
  %5692 = vmatpush1.bf16.msra.mxu0 0
  %5693 = vmatprep.subr.bf16.mxu0 0
  %5694 = vmatpush1.bf16.msra.mxu0 0
  %5695 = vmatprep.subr.bf16.mxu0 0
  %5696 = vmatpush1.bf16.msra.mxu0 0
  %5697 = vmatprep.subr.bf16.mxu0 0
  %5698 = vmatpush1.bf16.msra.mxu0 0
  %5699 = vmatprep.subr.bf16.mxu0 0
  %5700 = vmatpush1.bf16.msra.mxu0 0
  %5701 = vmatprep.subr.bf16.mxu0 0
  %5702 = vmatpush1.bf16.msra.mxu0 0
  %5703 = vmatprep.subr.bf16.mxu0 0
  %5704 = vmatpush1.bf16.msra.mxu0 0
  %5705 = vmatprep.subr.bf16.mxu0 0
  %5706 = vmatpush1.bf16.msra.mxu0 0
  %5707 = vmatprep.subr.bf16.mxu0 0
  %5708 = vmatpush1.bf16.msra.mxu0 0
  %5709 = vmatprep.subr.bf16.mxu0 0
  %5710 = vmatpush1.bf16.msra.mxu0 0
  %5711 = vmatprep.subr.bf16.mxu0 0
  %5712 = vmatpush1.bf16.msra.mxu0 0
  %5713 = vmatprep.subr.bf16.mxu0 0
  %5714 = vmatpush1.bf16.msra.mxu0 0
  %5715 = vmatprep.subr.bf16.mxu0 0
  %5716 = vmatpush1.bf16.msra.mxu0 0
  %5717 = vmatprep.subr.bf16.mxu0 0
  %5718 = vmatpush1.bf16.msra.mxu0 0
  %5719 = vmatprep.mubr.bf16.mxu0 0
  %5720 = vmatmul.mubr.bf16.gmra.mrb[0].mxu0 %v5629
  %v5721 = vpop.f32.mrb[0].mxu0
  %v5722 = vadd.f32 %v5519, %v5721
  %v5723 = vpop.f32.mrb[0].mxu0
  %v5724 = vadd.f32 %v5523, %v5723
  %v5725 = vpop.f32.mrb[0].mxu0
  %v5726 = vadd.f32 %v5519, %v5725
  %v5727 = vpop.f32.mrb[0].mxu0
  %v5728 = vadd.f32 %v5523, %v5727
  %5729 = vmatprep.mubr.bf16.mxu0 0
  %5730 = vmatmul.mubr.bf16.gmra.mrb[0].mxu0 %v5632
  %v5731 = vpop.f32.mrb[0].mxu0
  %v5732 = vadd.f32 %v5519, %v5731
  %v5733 = vpop.f32.mrb[0].mxu0
  %v5734 = vadd.f32 %v5523, %v5733
  %v5735 = vpop.f32.mrb[0].mxu0
  %v5736 = vadd.f32 %v5519, %v5735
  %v5737 = vpop.f32.mrb[0].mxu0
  %v5738 = vadd.f32 %v5523, %v5737
  %5739 = vdwg.mxu0
  %5740 = vmatprep.subr.bf16.mxu0 %v5601
  %5741 = vmatpush1.bf16.msra.mxu0 %v5600
  %5742 = vmatprep.subr.bf16.mxu0 %v5609
  %5743 = vmatpush1.bf16.msra.mxu0 %v5608
  %5744 = vmatprep.subr.bf16.mxu0 0
  %5745 = vmatpush1.bf16.msra.mxu0 0
  %5746 = vmatprep.subr.bf16.mxu0 0
  %5747 = vmatpush1.bf16.msra.mxu0 0
  %5748 = vmatprep.subr.bf16.mxu0 0
  %5749 = vmatpush1.bf16.msra.mxu0 0
  %5750 = vmatprep.subr.bf16.mxu0 0
  %5751 = vmatpush1.bf16.msra.mxu0 0
  %5752 = vmatprep.subr.bf16.mxu0 0
  %5753 = vmatpush1.bf16.msra.mxu0 0
  %5754 = vmatprep.subr.bf16.mxu0 0
  %5755 = vmatpush1.bf16.msra.mxu0 0
  %5756 = vmatprep.subr.bf16.mxu0 0
  %5757 = vmatpush1.bf16.msra.mxu0 0
  %5758 = vmatprep.subr.bf16.mxu0 0
  %5759 = vmatpush1.bf16.msra.mxu0 0
  %5760 = vmatprep.subr.bf16.mxu0 0
  %5761 = vmatpush1.bf16.msra.mxu0 0
  %5762 = vmatprep.subr.bf16.mxu0 0
  %5763 = vmatpush1.bf16.msra.mxu0 0
  %5764 = vmatprep.subr.bf16.mxu0 0
  %5765 = vmatpush1.bf16.msra.mxu0 0
  %5766 = vmatprep.subr.bf16.mxu0 0
  %5767 = vmatpush1.bf16.msra.mxu0 0
  %5768 = vmatprep.subr.bf16.mxu0 0
  %5769 = vmatpush1.bf16.msra.mxu0 0
  %5770 = vmatprep.subr.bf16.mxu0 0
  %5771 = vmatpush1.bf16.msra.mxu0 0
  %5772 = vmatprep.mubr.bf16.mxu0 0
  %5773 = vmatmul.mubr.bf16.gmra.mrb[0].mxu0 %v5629
  %v5774 = vpop.f32.mrb[0].mxu0
  %v5775 = vadd.f32 %v5527, %v5774
  %v5776 = vpop.f32.mrb[0].mxu0
  %v5777 = vadd.f32 %v5531, %v5776
  %v5778 = vpop.f32.mrb[0].mxu0
  %v5779 = vadd.f32 %v5527, %v5778
  %v5780 = vpop.f32.mrb[0].mxu0
  %v5781 = vadd.f32 %v5531, %v5780
  %5782 = vmatprep.mubr.bf16.mxu0 0
  %5783 = vmatmul.mubr.bf16.gmra.mrb[0].mxu0 %v5632
  %v5784 = vpop.f32.mrb[0].mxu0
  %v5785 = vadd.f32 %v5527, %v5784
  %v5786 = vpop.f32.mrb[0].mxu0
  %v5787 = vadd.f32 %v5531, %v5786
  %v5788 = vpop.f32.mrb[0].mxu0
  %v5789 = vadd.f32 %v5527, %v5788
  %v5790 = vpop.f32.mrb[0].mxu0
  %v5791 = vadd.f32 %v5531, %v5790
  %5792 = vdwg.mxu0
  %5793 = vmatprep.subr.bf16.mxu0 %v5603
  %5794 = vmatpush1.bf16.msra.mxu0 %v5602
  %5795 = vmatprep.subr.bf16.mxu0 %v5611
  %5796 = vmatpush1.bf16.msra.mxu0 %v5610
  %5797 = vmatprep.subr.bf16.mxu0 0
  %5798 = vmatpush1.bf16.msra.mxu0 0
  %5799 = vmatprep.subr.bf16.mxu0 0
  %5800 = vmatpush1.bf16.msra.mxu0 0
  %5801 = vmatprep.subr.bf16.mxu0 0
  %5802 = vmatpush1.bf16.msra.mxu0 0
  %5803 = vmatprep.subr.bf16.mxu0 0
  %5804 = vmatpush1.bf16.msra.mxu0 0
  %5805 = vmatprep.subr.bf16.mxu0 0
  %5806 = vmatpush1.bf16.msra.mxu0 0
  %5807 = vmatprep.subr.bf16.mxu0 0
  %5808 = vmatpush1.bf16.msra.mxu0 0
  %5809 = vmatprep.subr.bf16.mxu0 0
  %5810 = vmatpush1.bf16.msra.mxu0 0
  %5811 = vmatprep.subr.bf16.mxu0 0
  %5812 = vmatpush1.bf16.msra.mxu0 0
  %5813 = vmatprep.subr.bf16.mxu0 0
  %5814 = vmatpush1.bf16.msra.mxu0 0
  %5815 = vmatprep.subr.bf16.mxu0 0
  %5816 = vmatpush1.bf16.msra.mxu0 0
  %5817 = vmatprep.subr.bf16.mxu0 0
  %5818 = vmatpush1.bf16.msra.mxu0 0
  %5819 = vmatprep.subr.bf16.mxu0 0
  %5820 = vmatpush1.bf16.msra.mxu0 0
  %5821 = vmatprep.subr.bf16.mxu0 0
  %5822 = vmatpush1.bf16.msra.mxu0 0
  %5823 = vmatprep.subr.bf16.mxu0 0
  %5824 = vmatpush1.bf16.msra.mxu0 0
  %5825 = vmatprep.mubr.bf16.mxu0 0
  %5826 = vmatmul.mubr.bf16.gmra.mrb[0].mxu0 %v5629
  %v5827 = vpop.f32.mrb[0].mxu0
  %v5828 = vadd.f32 %v5535, %v5827
  %v5829 = vpop.f32.mrb[0].mxu0
  %v5830 = vadd.f32 %v5539, %v5829
  %v5831 = vpop.f32.mrb[0].mxu0
  %v5832 = vadd.f32 %v5535, %v5831
  %v5833 = vpop.f32.mrb[0].mxu0
  %v5834 = vadd.f32 %v5539, %v5833
  %5835 = vmatprep.mubr.bf16.mxu0 0
  %5836 = vmatmul.mubr.bf16.gmra.mrb[0].mxu0 %v5632
  %v5837 = vpop.f32.mrb[0].mxu0
  %v5838 = vadd.f32 %v5535, %v5837
  %v5839 = vpop.f32.mrb[0].mxu0
  %v5840 = vadd.f32 %v5539, %v5839
  %v5841 = vpop.f32.mrb[0].mxu0
  %v5842 = vadd.f32 %v5535, %v5841
  %v5843 = vpop.f32.mrb[0].mxu0
  %v5844 = vadd.f32 %v5539, %v5843
  %5845 = vdwg.mxu0
  %v5846 = vmax.f32 %v5669, 0.0
  %v5847 = vmax.f32 %v5671, 0.0
  %v5848 = vmax.f32 %v5722, 0.0
  %v5849 = vmax.f32 %v5724, 0.0
  %v5850 = vmax.f32 %v5775, 0.0
  %v5851 = vmax.f32 %v5777, 0.0
  %v5852 = vmax.f32 %v5828, 0.0
  %v5853 = vmax.f32 %v5830, 0.0
  %v5854 = vmax.f32 %v5673, 0.0
  %v5855 = vmax.f32 %v5675, 0.0
  %v5856 = vmax.f32 %v5726, 0.0
  %v5857 = vmax.f32 %v5728, 0.0
  %v5858 = vmax.f32 %v5779, 0.0
  %v5859 = vmax.f32 %v5781, 0.0
  %v5860 = vmax.f32 %v5832, 0.0
  %v5861 = vmax.f32 %v5834, 0.0
  %v5862 = vmax.f32 %v5679, 0.0
  %v5863 = vmax.f32 %v5681, 0.0
  %v5864 = vmax.f32 %v5732, 0.0
  %v5865 = vmax.f32 %v5734, 0.0
  %v5866 = vmax.f32 %v5785, 0.0
  %v5867 = vmax.f32 %v5787, 0.0
  %v5868 = vmax.f32 %v5838, 0.0
  %v5869 = vmax.f32 %v5840, 0.0
  %v5870 = vmax.f32 %v5683, 0.0
  %v5871 = vmax.f32 %v5685, 0.0
  %v5872 = vmax.f32 %v5736, 0.0
  %v5873 = vmax.f32 %v5738, 0.0
  %v5874 = vmax.f32 %v5789, 0.0
  %v5875 = vmax.f32 %v5791, 0.0
  %v5876 = vmax.f32 %v5842, 0.0
  %v5877 = vmax.f32 %v5844, 0.0
  %v5878 = vpack.c.bf16 %v5854, %v5846
  %v5879 = vpack.c.bf16 %v5855, %v5847
  %v5880 = vpack.c.bf16 %v5856, %v5848
  %v5881 = vpack.c.bf16 %v5857, %v5849
  %v5882 = vpack.c.bf16 %v5858, %v5850
  %v5883 = vpack.c.bf16 %v5859, %v5851
  %v5884 = vpack.c.bf16 %v5860, %v5852
  %v5885 = vpack.c.bf16 %v5861, %v5853
  %v5886 = vpack.c.bf16 %v5870, %v5862
  %v5887 = vpack.c.bf16 %v5871, %v5863
  %v5888 = vpack.c.bf16 %v5872, %v5864
  %v5889 = vpack.c.bf16 %v5873, %v5865
  %v5890 = vpack.c.bf16 %v5874, %v5866
  %v5891 = vpack.c.bf16 %v5875, %v5867
  %v5892 = vpack.c.bf16 %v5876, %v5868
  %v5893 = vpack.c.bf16 %v5877, %v5869
  %s5894 = scalar_lea.vmem %s16, 512
  %v5895 = vld [vmem:[%s5894] sm:$0xf]
  %v5896 = vld [vmem:[%s5894 + $0x4] sm:$0xf]
  %v5897 = vld [vmem:[%s5894 + $0x8] sm:$0xf]
  %v5898 = vld [vmem:[%s5894 + $0xc] sm:$0xf]
  %v5899 = vld [vmem:[%s5894 + $0x10] sm:$0xf]
  %v5900 = vld [vmem:[%s5894 + $0x14] sm:$0xf]
  %v5901 = vld [vmem:[%s5894 + $0x18] sm:$0xf]
  %v5902 = vld [vmem:[%s5894 + $0x1c] sm:$0xf]
  %v5903 = vld [vmem:[%s5894 + $0x20] sm:$0xf]
  %v5904 = vld [vmem:[%s5894 + $0x24] sm:$0xf]
  %v5905 = vld [vmem:[%s5894 + $0x28] sm:$0xf]
  %v5906 = vld [vmem:[%s5894 + $0x2c] sm:$0xf]
  %v5907 = vld [vmem:[%s5894 + $0x30] sm:$0xf]
  %v5908 = vld [vmem:[%s5894 + $0x34] sm:$0xf]
  %v5909 = vld [vmem:[%s5894 + $0x38] sm:$0xf]
  %v5910 = vld [vmem:[%s5894 + $0x3c] sm:$0xf]
  %v5911 = vld [vmem:[%s5894 + $0x40] sm:$0xf]
  %v5912 = vld [vmem:[%s5894 + $0x44] sm:$0xf]
  %v5913 = vld [vmem:[%s5894 + $0x48] sm:$0xf]
  %v5914 = vld [vmem:[%s5894 + $0x4c] sm:$0xf]
  %v5915 = vld [vmem:[%s5894 + $0x50] sm:$0xf]
  %v5916 = vld [vmem:[%s5894 + $0x54] sm:$0xf]
  %v5917 = vld [vmem:[%s5894 + $0x58] sm:$0xf]
  %v5918 = vld [vmem:[%s5894 + $0x5c] sm:$0xf]
  %v5919 = vld [vmem:[%s5894 + $0x60] sm:$0xf]
  %v5920 = vld [vmem:[%s5894 + $0x64] sm:$0xf]
  %v5921 = vld [vmem:[%s5894 + $0x68] sm:$0xf]
  %v5922 = vld [vmem:[%s5894 + $0x6c] sm:$0xf]
  %v5923 = vld [vmem:[%s5894 + $0x70] sm:$0xf]
  %v5924 = vld [vmem:[%s5894 + $0x74] sm:$0xf]
  %v5925 = vld [vmem:[%s5894 + $0x78] sm:$0xf]
  %v5926 = vld [vmem:[%s5894 + $0x7c] sm:$0xf]
  %v5927 = vld [vmem:[%s5894 + $0x80] sm:$0xf]
  %v5928 = vld [vmem:[%s5894 + $0x84] sm:$0xf]
  %v5929 = vld [vmem:[%s5894 + $0x88] sm:$0xf]
  %v5930 = vld [vmem:[%s5894 + $0x8c] sm:$0xf]
  %v5931 = vld [vmem:[%s5894 + $0x90] sm:$0xf]
  %v5932 = vld [vmem:[%s5894 + $0x94] sm:$0xf]
  %v5933 = vld [vmem:[%s5894 + $0x98] sm:$0xf]
  %v5934 = vld [vmem:[%s5894 + $0x9c] sm:$0xf]
  %v5935 = vld [vmem:[%s5894 + $0xa0] sm:$0xf]
  %v5936 = vld [vmem:[%s5894 + $0xa4] sm:$0xf]
  %v5937 = vld [vmem:[%s5894 + $0xa8] sm:$0xf]
  %v5938 = vld [vmem:[%s5894 + $0xac] sm:$0xf]
  %v5939 = vld [vmem:[%s5894 + $0xb0] sm:$0xf]
  %v5940 = vld [vmem:[%s5894 + $0xb4] sm:$0xf]
  %v5941 = vld [vmem:[%s5894 + $0xb8] sm:$0xf]
  %v5942 = vld [vmem:[%s5894 + $0xbc] sm:$0xf]
  %v5943 = vld [vmem:[%s5894 + $0xc0] sm:$0xf]
  %v5944 = vld [vmem:[%s5894 + $0xc4] sm:$0xf]
  %v5945 = vld [vmem:[%s5894 + $0xc8] sm:$0xf]
  %v5946 = vld [vmem:[%s5894 + $0xcc] sm:$0xf]
  %v5947 = vld [vmem:[%s5894 + $0xd0] sm:$0xf]
  %v5948 = vld [vmem:[%s5894 + $0xd4] sm:$0xf]
  %v5949 = vld [vmem:[%s5894 + $0xd8] sm:$0xf]
  %v5950 = vld [vmem:[%s5894 + $0xdc] sm:$0xf]
  %v5951 = vld [vmem:[%s5894 + $0xe0] sm:$0xf]
  %v5952 = vld [vmem:[%s5894 + $0xe4] sm:$0xf]
  %v5953 = vld [vmem:[%s5894 + $0xe8] sm:$0xf]
  %v5954 = vld [vmem:[%s5894 + $0xec] sm:$0xf]
  %v5955 = vld [vmem:[%s5894 + $0xf0] sm:$0xf]
  %v5956 = vld [vmem:[%s5894 + $0xf4] sm:$0xf]
  %v5957 = vld [vmem:[%s5894 + $0xf8] sm:$0xf]
  %v5958 = vld [vmem:[%s5894 + $0xfc] sm:$0xf]
  %v5959 = vld [vmem:[%s5894 + $0x100] sm:$0xf]
  %v5960 = vld [vmem:[%s5894 + $0x104] sm:$0xf]
  %v5961 = vld [vmem:[%s5894 + $0x108] sm:$0xf]
  %v5962 = vld [vmem:[%s5894 + $0x10c] sm:$0xf]
  %v5963 = vld [vmem:[%s5894 + $0x110] sm:$0xf]
  %v5964 = vld [vmem:[%s5894 + $0x114] sm:$0xf]
  %v5965 = vld [vmem:[%s5894 + $0x118] sm:$0xf]
  %v5966 = vld [vmem:[%s5894 + $0x11c] sm:$0xf]
  %v5967 = vld [vmem:[%s5894 + $0x120] sm:$0xf]
  %v5968 = vld [vmem:[%s5894 + $0x124] sm:$0xf]
  %v5969 = vld [vmem:[%s5894 + $0x128] sm:$0xf]
  %v5970 = vld [vmem:[%s5894 + $0x12c] sm:$0xf]
  %v5971 = vld [vmem:[%s5894 + $0x130] sm:$0xf]
  %v5972 = vld [vmem:[%s5894 + $0x134] sm:$0xf]
  %v5973 = vld [vmem:[%s5894 + $0x138] sm:$0xf]
  %v5974 = vld [vmem:[%s5894 + $0x13c] sm:$0xf]
  %v5975 = vld [vmem:[%s5894 + $0x140] sm:$0xf]
  %v5976 = vld [vmem:[%s5894 + $0x144] sm:$0xf]
  %v5977 = vld [vmem:[%s5894 + $0x148] sm:$0xf]
  %v5978 = vld [vmem:[%s5894 + $0x14c] sm:$0xf]
  %v5979 = vld [vmem:[%s5894 + $0x150] sm:$0xf]
  %v5980 = vld [vmem:[%s5894 + $0x154] sm:$0xf]
  %v5981 = vld [vmem:[%s5894 + $0x158] sm:$0xf]
  %v5982 = vld [vmem:[%s5894 + $0x15c] sm:$0xf]
  %v5983 = vld [vmem:[%s5894 + $0x160] sm:$0xf]
  %v5984 = vld [vmem:[%s5894 + $0x164] sm:$0xf]
  %v5985 = vld [vmem:[%s5894 + $0x168] sm:$0xf]
  %v5986 = vld [vmem:[%s5894 + $0x16c] sm:$0xf]
  %v5987 = vld [vmem:[%s5894 + $0x170] sm:$0xf]
  %v5988 = vld [vmem:[%s5894 + $0x174] sm:$0xf]
  %v5989 = vld [vmem:[%s5894 + $0x178] sm:$0xf]
  %v5990 = vld [vmem:[%s5894 + $0x17c] sm:$0xf]
  %v5991 = vld [vmem:[%s5894 + $0x180] sm:$0xf]
  %v5992 = vld [vmem:[%s5894 + $0x184] sm:$0xf]
  %v5993 = vld [vmem:[%s5894 + $0x188] sm:$0xf]
  %v5994 = vld [vmem:[%s5894 + $0x18c] sm:$0xf]
  %v5995 = vld [vmem:[%s5894 + $0x190] sm:$0xf]
  %v5996 = vld [vmem:[%s5894 + $0x194] sm:$0xf]
  %v5997 = vld [vmem:[%s5894 + $0x198] sm:$0xf]
  %v5998 = vld [vmem:[%s5894 + $0x19c] sm:$0xf]
  %v5999 = vld [vmem:[%s5894 + $0x1a0] sm:$0xf]
  %v6000 = vld [vmem:[%s5894 + $0x1a4] sm:$0xf]
  %v6001 = vld [vmem:[%s5894 + $0x1a8] sm:$0xf]
  %v6002 = vld [vmem:[%s5894 + $0x1ac] sm:$0xf]
  %v6003 = vld [vmem:[%s5894 + $0x1b0] sm:$0xf]
  %v6004 = vld [vmem:[%s5894 + $0x1b4] sm:$0xf]
  %v6005 = vld [vmem:[%s5894 + $0x1b8] sm:$0xf]
  %v6006 = vld [vmem:[%s5894 + $0x1bc] sm:$0xf]
  %v6007 = vld [vmem:[%s5894 + $0x1c0] sm:$0xf]
  %v6008 = vld [vmem:[%s5894 + $0x1c4] sm:$0xf]
  %v6009 = vld [vmem:[%s5894 + $0x1c8] sm:$0xf]
  %v6010 = vld [vmem:[%s5894 + $0x1cc] sm:$0xf]
  %v6011 = vld [vmem:[%s5894 + $0x1d0] sm:$0xf]
  %v6012 = vld [vmem:[%s5894 + $0x1d4] sm:$0xf]
  %v6013 = vld [vmem:[%s5894 + $0x1d8] sm:$0xf]
  %v6014 = vld [vmem:[%s5894 + $0x1dc] sm:$0xf]
  %v6015 = vld [vmem:[%s5894 + $0x1e0] sm:$0xf]
  %v6016 = vld [vmem:[%s5894 + $0x1e4] sm:$0xf]
  %v6017 = vld [vmem:[%s5894 + $0x1e8] sm:$0xf]
  %v6018 = vld [vmem:[%s5894 + $0x1ec] sm:$0xf]
  %v6019 = vld [vmem:[%s5894 + $0x1f0] sm:$0xf]
  %v6020 = vld [vmem:[%s5894 + $0x1f4] sm:$0xf]
  %v6021 = vld [vmem:[%s5894 + $0x1f8] sm:$0xf]
  %v6022 = vld [vmem:[%s5894 + $0x1fc] sm:$0xf]
  %s6023 = scalar_lea.vmem %s17, 1
  %v6024 = vld [vmem:[%s6023] sm:$0x1]
  %v6026 = vlaneseq
  %v6027 = vshrl.u32 %v6026, 7
  %v6028 = vsub.s32 0, %v6027
  %v6029 = vrot.slane %v6024, %v6028
  %v6159 = vunpack.c.l.b16 %v5895
  %v6160 = vunpack.c.l.b16 %v5896
  %v6161 = vunpack.c.l.b16 %v5897
  %v6162 = vunpack.c.l.b16 %v5898
  %v6163 = vunpack.c.l.b16 %v5899
  %v6164 = vunpack.c.l.b16 %v5900
  %v6165 = vunpack.c.l.b16 %v5901
  %v6166 = vunpack.c.l.b16 %v5902
  %v6167 = vunpack.c.l.b16 %v5903
  %v6168 = vunpack.c.l.b16 %v5904
  %v6169 = vunpack.c.l.b16 %v5905
  %v6170 = vunpack.c.l.b16 %v5906
  %v6171 = vunpack.c.l.b16 %v5907
  %v6172 = vunpack.c.l.b16 %v5908
  %v6173 = vunpack.c.l.b16 %v5909
  %v6174 = vunpack.c.l.b16 %v5910
  %v6175 = vunpack.c.l.b16 %v5911
  %v6176 = vunpack.c.l.b16 %v5912
  %v6177 = vunpack.c.l.b16 %v5913
  %v6178 = vunpack.c.l.b16 %v5914
  %v6179 = vunpack.c.l.b16 %v5915
  %v6180 = vunpack.c.l.b16 %v5916
  %v6181 = vunpack.c.l.b16 %v5917
  %v6182 = vunpack.c.l.b16 %v5918
  %v6183 = vunpack.c.l.b16 %v5919
  %v6184 = vunpack.c.l.b16 %v5920
  %v6185 = vunpack.c.l.b16 %v5921
  %v6186 = vunpack.c.l.b16 %v5922
  %v6187 = vunpack.c.l.b16 %v5923
  %v6188 = vunpack.c.l.b16 %v5924
  %v6189 = vunpack.c.l.b16 %v5925
  %v6190 = vunpack.c.l.b16 %v5926
  %v6191 = vunpack.c.l.b16 %v5927
  %v6192 = vunpack.c.l.b16 %v5928
  %v6193 = vunpack.c.l.b16 %v5929
  %v6194 = vunpack.c.l.b16 %v5930
  %v6195 = vunpack.c.l.b16 %v5931
  %v6196 = vunpack.c.l.b16 %v5932
  %v6197 = vunpack.c.l.b16 %v5933
  %v6198 = vunpack.c.l.b16 %v5934
  %v6199 = vunpack.c.l.b16 %v5935
  %v6200 = vunpack.c.l.b16 %v5936
  %v6201 = vunpack.c.l.b16 %v5937
  %v6202 = vunpack.c.l.b16 %v5938
  %v6203 = vunpack.c.l.b16 %v5939
  %v6204 = vunpack.c.l.b16 %v5940
  %v6205 = vunpack.c.l.b16 %v5941
  %v6206 = vunpack.c.l.b16 %v5942
  %v6207 = vunpack.c.l.b16 %v5943
  %v6208 = vunpack.c.l.b16 %v5944
  %v6209 = vunpack.c.l.b16 %v5945
  %v6210 = vunpack.c.l.b16 %v5946
  %v6211 = vunpack.c.l.b16 %v5947
  %v6212 = vunpack.c.l.b16 %v5948
  %v6213 = vunpack.c.l.b16 %v5949
  %v6214 = vunpack.c.l.b16 %v5950
  %v6215 = vunpack.c.l.b16 %v5951
  %v6216 = vunpack.c.l.b16 %v5952
  %v6217 = vunpack.c.l.b16 %v5953
  %v6218 = vunpack.c.l.b16 %v5954
  %v6219 = vunpack.c.l.b16 %v5955
  %v6220 = vunpack.c.l.b16 %v5956
  %v6221 = vunpack.c.l.b16 %v5957
  %v6222 = vunpack.c.l.b16 %v5958
  %v6223 = vunpack.c.l.b16 %v5959
  %v6224 = vunpack.c.l.b16 %v5960
  %v6225 = vunpack.c.l.b16 %v5961
  %v6226 = vunpack.c.l.b16 %v5962
  %v6227 = vunpack.c.l.b16 %v5963
  %v6228 = vunpack.c.l.b16 %v5964
  %v6229 = vunpack.c.l.b16 %v5965
  %v6230 = vunpack.c.l.b16 %v5966
  %v6231 = vunpack.c.l.b16 %v5967
  %v6232 = vunpack.c.l.b16 %v5968
  %v6233 = vunpack.c.l.b16 %v5969
  %v6234 = vunpack.c.l.b16 %v5970
  %v6235 = vunpack.c.l.b16 %v5971
  %v6236 = vunpack.c.l.b16 %v5972
  %v6237 = vunpack.c.l.b16 %v5973
  %v6238 = vunpack.c.l.b16 %v5974
  %v6239 = vunpack.c.l.b16 %v5975
  %v6240 = vunpack.c.l.b16 %v5976
  %v6241 = vunpack.c.l.b16 %v5977
  %v6242 = vunpack.c.l.b16 %v5978
  %v6243 = vunpack.c.l.b16 %v5979
  %v6244 = vunpack.c.l.b16 %v5980
  %v6245 = vunpack.c.l.b16 %v5981
  %v6246 = vunpack.c.l.b16 %v5982
  %v6247 = vunpack.c.l.b16 %v5983
  %v6248 = vunpack.c.l.b16 %v5984
  %v6249 = vunpack.c.l.b16 %v5985
  %v6250 = vunpack.c.l.b16 %v5986
  %v6251 = vunpack.c.l.b16 %v5987
  %v6252 = vunpack.c.l.b16 %v5988
  %v6253 = vunpack.c.l.b16 %v5989
  %v6254 = vunpack.c.l.b16 %v5990
  %v6255 = vunpack.c.l.b16 %v5991
  %v6256 = vunpack.c.l.b16 %v5992
  %v6257 = vunpack.c.l.b16 %v5993
  %v6258 = vunpack.c.l.b16 %v5994
  %v6259 = vunpack.c.l.b16 %v5995
  %v6260 = vunpack.c.l.b16 %v5996
  %v6261 = vunpack.c.l.b16 %v5997
  %v6262 = vunpack.c.l.b16 %v5998
  %v6263 = vunpack.c.l.b16 %v5999
  %v6264 = vunpack.c.l.b16 %v6000
  %v6265 = vunpack.c.l.b16 %v6001
  %v6266 = vunpack.c.l.b16 %v6002
  %v6267 = vunpack.c.l.b16 %v6003
  %v6268 = vunpack.c.l.b16 %v6004
  %v6269 = vunpack.c.l.b16 %v6005
  %v6270 = vunpack.c.l.b16 %v6006
  %v6271 = vunpack.c.l.b16 %v6007
  %v6272 = vunpack.c.l.b16 %v6008
  %v6273 = vunpack.c.l.b16 %v6009
  %v6274 = vunpack.c.l.b16 %v6010
  %v6275 = vunpack.c.l.b16 %v6011
  %v6276 = vunpack.c.l.b16 %v6012
  %v6277 = vunpack.c.l.b16 %v6013
  %v6278 = vunpack.c.l.b16 %v6014
  %v6279 = vunpack.c.l.b16 %v6015
  %v6280 = vunpack.c.l.b16 %v6016
  %v6281 = vunpack.c.l.b16 %v6017
  %v6282 = vunpack.c.l.b16 %v6018
  %v6283 = vunpack.c.l.b16 %v6019
  %v6284 = vunpack.c.l.b16 %v6020
  %v6285 = vunpack.c.l.b16 %v6021
  %v6286 = vunpack.c.l.b16 %v6022
  %v6287 = vpack.c.b16 %v6160, %v6159
  %v6288 = vpack.c.b16 %v6162, %v6161
  %v6289 = vpack.c.b16 %v6164, %v6163
  %v6290 = vpack.c.b16 %v6166, %v6165
  %v6291 = vpack.c.b16 %v6168, %v6167
  %v6292 = vpack.c.b16 %v6170, %v6169
  %v6293 = vpack.c.b16 %v6172, %v6171
  %v6294 = vpack.c.b16 %v6174, %v6173
  %v6295 = vpack.c.b16 %v6176, %v6175
  %v6296 = vpack.c.b16 %v6178, %v6177
  %v6297 = vpack.c.b16 %v6180, %v6179
  %v6298 = vpack.c.b16 %v6182, %v6181
  %v6299 = vpack.c.b16 %v6184, %v6183
  %v6300 = vpack.c.b16 %v6186, %v6185
  %v6301 = vpack.c.b16 %v6188, %v6187
  %v6302 = vpack.c.b16 %v6190, %v6189
  %v6303 = vpack.c.b16 %v6192, %v6191
  %v6304 = vpack.c.b16 %v6194, %v6193
  %v6305 = vpack.c.b16 %v6196, %v6195
  %v6306 = vpack.c.b16 %v6198, %v6197
  %v6307 = vpack.c.b16 %v6200, %v6199
  %v6308 = vpack.c.b16 %v6202, %v6201
  %v6309 = vpack.c.b16 %v6204, %v6203
  %v6310 = vpack.c.b16 %v6206, %v6205
  %v6311 = vpack.c.b16 %v6208, %v6207
  %v6312 = vpack.c.b16 %v6210, %v6209
  %v6313 = vpack.c.b16 %v6212, %v6211
  %v6314 = vpack.c.b16 %v6214, %v6213
  %v6315 = vpack.c.b16 %v6216, %v6215
  %v6316 = vpack.c.b16 %v6218, %v6217
  %v6317 = vpack.c.b16 %v6220, %v6219
  %v6318 = vpack.c.b16 %v6222, %v6221
  %v6319 = vpack.c.b16 %v6224, %v6223
  %v6320 = vpack.c.b16 %v6226, %v6225
  %v6321 = vpack.c.b16 %v6228, %v6227
  %v6322 = vpack.c.b16 %v6230, %v6229
  %v6323 = vpack.c.b16 %v6232, %v6231
  %v6324 = vpack.c.b16 %v6234, %v6233
  %v6325 = vpack.c.b16 %v6236, %v6235
  %v6326 = vpack.c.b16 %v6238, %v6237
  %v6327 = vpack.c.b16 %v6240, %v6239
  %v6328 = vpack.c.b16 %v6242, %v6241
  %v6329 = vpack.c.b16 %v6244, %v6243
  %v6330 = vpack.c.b16 %v6246, %v6245
  %v6331 = vpack.c.b16 %v6248, %v6247
  %v6332 = vpack.c.b16 %v6250, %v6249
  %v6333 = vpack.c.b16 %v6252, %v6251
  %v6334 = vpack.c.b16 %v6254, %v6253
  %v6335 = vpack.c.b16 %v6256, %v6255
  %v6336 = vpack.c.b16 %v6258, %v6257
  %v6337 = vpack.c.b16 %v6260, %v6259
  %v6338 = vpack.c.b16 %v6262, %v6261
  %v6339 = vpack.c.b16 %v6264, %v6263
  %v6340 = vpack.c.b16 %v6266, %v6265
  %v6341 = vpack.c.b16 %v6268, %v6267
  %v6342 = vpack.c.b16 %v6270, %v6269
  %v6343 = vpack.c.b16 %v6272, %v6271
  %v6344 = vpack.c.b16 %v6274, %v6273
  %v6345 = vpack.c.b16 %v6276, %v6275
  %v6346 = vpack.c.b16 %v6278, %v6277
  %v6347 = vpack.c.b16 %v6280, %v6279
  %v6348 = vpack.c.b16 %v6282, %v6281
  %v6349 = vpack.c.b16 %v6284, %v6283
  %v6350 = vpack.c.b16 %v6286, %v6285
  %6415 = vmatprep.subr.bf16.mxu0 0
  %6416 = vmatpush1.bf16.msra.mxu0 %v6287
  %6417 = vmatprep.subr.bf16.mxu0 0
  %6418 = vmatpush1.bf16.msra.mxu0 %v6288
  %6419 = vmatprep.subr.bf16.mxu0 0
  %6420 = vmatpush1.bf16.msra.mxu0 %v6289
  %6421 = vmatprep.subr.bf16.mxu0 0
  %6422 = vmatpush1.bf16.msra.mxu0 %v6290
  %6423 = vmatprep.subr.bf16.mxu0 0
  %6424 = vmatpush1.bf16.msra.mxu0 %v6291
  %6425 = vmatprep.subr.bf16.mxu0 0
  %6426 = vmatpush1.bf16.msra.mxu0 %v6292
  %6427 = vmatprep.subr.bf16.mxu0 0
  %6428 = vmatpush1.bf16.msra.mxu0 %v6293
  %6429 = vmatprep.subr.bf16.mxu0 0
  %6430 = vmatpush1.bf16.msra.mxu0 %v6294
  %6431 = vmatprep.subr.bf16.mxu0 0
  %6432 = vmatpush1.bf16.msra.mxu0 %v6295
  %6433 = vmatprep.subr.bf16.mxu0 0
  %6434 = vmatpush1.bf16.msra.mxu0 %v6296
  %6435 = vmatprep.subr.bf16.mxu0 0
  %6436 = vmatpush1.bf16.msra.mxu0 %v6297
  %6437 = vmatprep.subr.bf16.mxu0 0
  %6438 = vmatpush1.bf16.msra.mxu0 %v6298
  %6439 = vmatprep.subr.bf16.mxu0 0
  %6440 = vmatpush1.bf16.msra.mxu0 %v6299
  %6441 = vmatprep.subr.bf16.mxu0 0
  %6442 = vmatpush1.bf16.msra.mxu0 %v6300
  %6443 = vmatprep.subr.bf16.mxu0 0
  %6444 = vmatpush1.bf16.msra.mxu0 %v6301
  %6445 = vmatprep.subr.bf16.mxu0 0
  %6446 = vmatpush1.bf16.msra.mxu0 %v6302
  %6447 = vmatprep.mubr.bf16.mxu0 %v5879
  %6448 = vmatmul.mubr.bf16.gmra.mrb[0].mxu0 %v5878
  %v6449 = vpop.f32.mrb[0].mxu0
  %v6450 = vadd.f32 %v6029, %v6449
  %v6451 = vpop.f32.mrb[0].mxu0
  %v6452 = vpop.f32.mrb[0].mxu0
  %v6453 = vadd.f32 %v6029, %v6452
  %v6454 = vpop.f32.mrb[0].mxu0
  %6455 = vmatprep.mubr.bf16.mxu0 %v5887
  %6456 = vmatmul.mubr.bf16.gmra.mrb[0].mxu0 %v5886
  %v6457 = vpop.f32.mrb[0].mxu0
  %v6458 = vadd.f32 %v6029, %v6457
  %v6459 = vpop.f32.mrb[0].mxu0
  %v6460 = vpop.f32.mrb[0].mxu0
  %v6461 = vadd.f32 %v6029, %v6460
  %v6462 = vpop.f32.mrb[0].mxu0
  %6463 = vdwg.mxu0
  %6464 = vmatprep.subr.bf16.mxu0 0
  %6465 = vmatpush1.bf16.msra.mxu0 %v6303
  %6466 = vmatprep.subr.bf16.mxu0 0
  %6467 = vmatpush1.bf16.msra.mxu0 %v6304
  %6468 = vmatprep.subr.bf16.mxu0 0
  %6469 = vmatpush1.bf16.msra.mxu0 %v6305
  %6470 = vmatprep.subr.bf16.mxu0 0
  %6471 = vmatpush1.bf16.msra.mxu0 %v6306
  %6472 = vmatprep.subr.bf16.mxu0 0
  %6473 = vmatpush1.bf16.msra.mxu0 %v6307
  %6474 = vmatprep.subr.bf16.mxu0 0
  %6475 = vmatpush1.bf16.msra.mxu0 %v6308
  %6476 = vmatprep.subr.bf16.mxu0 0
  %6477 = vmatpush1.bf16.msra.mxu0 %v6309
  %6478 = vmatprep.subr.bf16.mxu0 0
  %6479 = vmatpush1.bf16.msra.mxu0 %v6310
  %6480 = vmatprep.subr.bf16.mxu0 0
  %6481 = vmatpush1.bf16.msra.mxu0 %v6311
  %6482 = vmatprep.subr.bf16.mxu0 0
  %6483 = vmatpush1.bf16.msra.mxu0 %v6312
  %6484 = vmatprep.subr.bf16.mxu0 0
  %6485 = vmatpush1.bf16.msra.mxu0 %v6313
  %6486 = vmatprep.subr.bf16.mxu0 0
  %6487 = vmatpush1.bf16.msra.mxu0 %v6314
  %6488 = vmatprep.subr.bf16.mxu0 0
  %6489 = vmatpush1.bf16.msra.mxu0 %v6315
  %6490 = vmatprep.subr.bf16.mxu0 0
  %6491 = vmatpush1.bf16.msra.mxu0 %v6316
  %6492 = vmatprep.subr.bf16.mxu0 0
  %6493 = vmatpush1.bf16.msra.mxu0 %v6317
  %6494 = vmatprep.subr.bf16.mxu0 0
  %6495 = vmatpush1.bf16.msra.mxu0 %v6318
  %6496 = vmatprep.mubr.bf16.mxu0 %v5881
  %6497 = vmatmul.mubr.bf16.gmra.mrb[0].mxu0 %v5880
  %v6498 = vpop.f32.mrb[0].mxu0
  %v6499 = vadd.f32 %v6450, %v6498
  %v6500 = vpop.f32.mrb[0].mxu0
  %v6501 = vpop.f32.mrb[0].mxu0
  %v6502 = vadd.f32 %v6453, %v6501
  %v6503 = vpop.f32.mrb[0].mxu0
  %6504 = vmatprep.mubr.bf16.mxu0 %v5889
  %6505 = vmatmul.mubr.bf16.gmra.mrb[0].mxu0 %v5888
  %v6506 = vpop.f32.mrb[0].mxu0
  %v6507 = vadd.f32 %v6458, %v6506
  %v6508 = vpop.f32.mrb[0].mxu0
  %v6509 = vpop.f32.mrb[0].mxu0
  %v6510 = vadd.f32 %v6461, %v6509
  %v6511 = vpop.f32.mrb[0].mxu0
  %6512 = vdwg.mxu0
  %6513 = vmatprep.subr.bf16.mxu0 0
  %6514 = vmatpush1.bf16.msra.mxu0 %v6319
  %6515 = vmatprep.subr.bf16.mxu0 0
  %6516 = vmatpush1.bf16.msra.mxu0 %v6320
  %6517 = vmatprep.subr.bf16.mxu0 0
  %6518 = vmatpush1.bf16.msra.mxu0 %v6321
  %6519 = vmatprep.subr.bf16.mxu0 0
  %6520 = vmatpush1.bf16.msra.mxu0 %v6322
  %6521 = vmatprep.subr.bf16.mxu0 0
  %6522 = vmatpush1.bf16.msra.mxu0 %v6323
  %6523 = vmatprep.subr.bf16.mxu0 0
  %6524 = vmatpush1.bf16.msra.mxu0 %v6324
  %6525 = vmatprep.subr.bf16.mxu0 0
  %6526 = vmatpush1.bf16.msra.mxu0 %v6325
  %6527 = vmatprep.subr.bf16.mxu0 0
  %6528 = vmatpush1.bf16.msra.mxu0 %v6326
  %6529 = vmatprep.subr.bf16.mxu0 0
  %6530 = vmatpush1.bf16.msra.mxu0 %v6327
  %6531 = vmatprep.subr.bf16.mxu0 0
  %6532 = vmatpush1.bf16.msra.mxu0 %v6328
  %6533 = vmatprep.subr.bf16.mxu0 0
  %6534 = vmatpush1.bf16.msra.mxu0 %v6329
  %6535 = vmatprep.subr.bf16.mxu0 0
  %6536 = vmatpush1.bf16.msra.mxu0 %v6330
  %6537 = vmatprep.subr.bf16.mxu0 0
  %6538 = vmatpush1.bf16.msra.mxu0 %v6331
  %6539 = vmatprep.subr.bf16.mxu0 0
  %6540 = vmatpush1.bf16.msra.mxu0 %v6332
  %6541 = vmatprep.subr.bf16.mxu0 0
  %6542 = vmatpush1.bf16.msra.mxu0 %v6333
  %6543 = vmatprep.subr.bf16.mxu0 0
  %6544 = vmatpush1.bf16.msra.mxu0 %v6334
  %6545 = vmatprep.mubr.bf16.mxu0 %v5883
  %6546 = vmatmul.mubr.bf16.gmra.mrb[0].mxu0 %v5882
  %v6547 = vpop.f32.mrb[0].mxu0
  %v6548 = vadd.f32 %v6499, %v6547
  %v6549 = vpop.f32.mrb[0].mxu0
  %v6550 = vpop.f32.mrb[0].mxu0
  %v6551 = vadd.f32 %v6502, %v6550
  %v6552 = vpop.f32.mrb[0].mxu0
  %6553 = vmatprep.mubr.bf16.mxu0 %v5891
  %6554 = vmatmul.mubr.bf16.gmra.mrb[0].mxu0 %v5890
  %v6555 = vpop.f32.mrb[0].mxu0
  %v6556 = vadd.f32 %v6507, %v6555
  %v6557 = vpop.f32.mrb[0].mxu0
  %v6558 = vpop.f32.mrb[0].mxu0
  %v6559 = vadd.f32 %v6510, %v6558
  %v6560 = vpop.f32.mrb[0].mxu0
  %6561 = vdwg.mxu0
  %6562 = vmatprep.subr.bf16.mxu0 0
  %6563 = vmatpush1.bf16.msra.mxu0 %v6335
  %6564 = vmatprep.subr.bf16.mxu0 0
  %6565 = vmatpush1.bf16.msra.mxu0 %v6336
  %6566 = vmatprep.subr.bf16.mxu0 0
  %6567 = vmatpush1.bf16.msra.mxu0 %v6337
  %6568 = vmatprep.subr.bf16.mxu0 0
  %6569 = vmatpush1.bf16.msra.mxu0 %v6338
  %6570 = vmatprep.subr.bf16.mxu0 0
  %6571 = vmatpush1.bf16.msra.mxu0 %v6339
  %6572 = vmatprep.subr.bf16.mxu0 0
  %6573 = vmatpush1.bf16.msra.mxu0 %v6340
  %6574 = vmatprep.subr.bf16.mxu0 0
  %6575 = vmatpush1.bf16.msra.mxu0 %v6341
  %6576 = vmatprep.subr.bf16.mxu0 0
  %6577 = vmatpush1.bf16.msra.mxu0 %v6342
  %6578 = vmatprep.subr.bf16.mxu0 0
  %6579 = vmatpush1.bf16.msra.mxu0 %v6343
  %6580 = vmatprep.subr.bf16.mxu0 0
  %6581 = vmatpush1.bf16.msra.mxu0 %v6344
  %6582 = vmatprep.subr.bf16.mxu0 0
  %6583 = vmatpush1.bf16.msra.mxu0 %v6345
  %6584 = vmatprep.subr.bf16.mxu0 0
  %6585 = vmatpush1.bf16.msra.mxu0 %v6346
  %6586 = vmatprep.subr.bf16.mxu0 0
  %6587 = vmatpush1.bf16.msra.mxu0 %v6347
  %6588 = vmatprep.subr.bf16.mxu0 0
  %6589 = vmatpush1.bf16.msra.mxu0 %v6348
  %6590 = vmatprep.subr.bf16.mxu0 0
  %6591 = vmatpush1.bf16.msra.mxu0 %v6349
  %6592 = vmatprep.subr.bf16.mxu0 0
  %6593 = vmatpush1.bf16.msra.mxu0 %v6350
  %6594 = vmatprep.mubr.bf16.mxu0 %v5885
  %6595 = vmatmul.mubr.bf16.gmra.mrb[0].mxu0 %v5884
  %v6596 = vpop.f32.mrb[0].mxu0
  %v6597 = vadd.f32 %v6548, %v6596
  %v6598 = vpop.f32.mrb[0].mxu0
  %v6599 = vpop.f32.mrb[0].mxu0
  %v6600 = vadd.f32 %v6551, %v6599
  %v6601 = vpop.f32.mrb[0].mxu0
  %6602 = vmatprep.mubr.bf16.mxu0 %v5893
  %6603 = vmatmul.mubr.bf16.gmra.mrb[0].mxu0 %v5892
  %v6604 = vpop.f32.mrb[0].mxu0
  %v6605 = vadd.f32 %v6556, %v6604
  %v6606 = vpop.f32.mrb[0].mxu0
  %v6607 = vpop.f32.mrb[0].mxu0
  %v6608 = vadd.f32 %v6559, %v6607
  %v6609 = vpop.f32.mrb[0].mxu0
  %6610 = vdwg.mxu0
  %v6611 = vadd.f32 %v5482, %v6597
  %v6612 = vadd.f32 %v5483, %v6600
  %v6613 = vadd.f32 %v5484, %v6605
  %v6614 = vadd.f32 %v5485, %v6608
  %s6615 = scalar_lea.vmem %s18, 1
  %v6616 = vld [vmem:[%s6615] sm:$0x1]
  %s6617 = scalar_lea.vmem %s19, 1
  %v6618 = vld [vmem:[%s6617] sm:$0x1]
  %v6619 = vsel %vm1988, %v6611, 0.0
  %6620 = vadd.xlane.f32.xlu0 %v6619
  %v6621 = vpop.xlane.xlu0 %6620
  %v6622 = vsel %vm1988, %v6612, 0.0
  %6623 = vadd.xlane.f32.xlu0 %v6622
  %v6624 = vpop.xlane.xlu0 %6623
  %v6625 = vsel %vm1988, %v6613, 0.0
  %6626 = vadd.xlane.f32.xlu0 %v6625
  %v6627 = vpop.xlane.xlu0 %6626
  %v6628 = vsel %vm1988, %v6614, 0.0
  %6629 = vadd.xlane.f32.xlu0 %v6628
  %v6630 = vpop.xlane.xlu0 %6629
  %v6631 = vmul.f32 %v6621, %v3040
  %v6632 = vmul.f32 %v6624, %v3040
  %v6633 = vmul.f32 %v6627, %v3040
  %v6634 = vmul.f32 %v6630, %v3040
  %v6635 = vsub.f32 %v6611, %v6631
  %v6636 = vsub.f32 %v6612, %v6632
  %v6637 = vsub.f32 %v6613, %v6633
  %v6638 = vsub.f32 %v6614, %v6634
  %v6639 = vmul.f32 %v6635, %v6635
  %v6640 = vmul.f32 %v6636, %v6636
  %v6641 = vmul.f32 %v6637, %v6637
  %v6642 = vmul.f32 %v6638, %v6638
  %v6643 = vsel %vm1988, %v6639, 0.0
  %6644 = vadd.xlane.f32.xlu0 %v6643
  %v6645 = vpop.xlane.xlu0 %6644
  %v6646 = vsel %vm1988, %v6640, 0.0
  %6647 = vadd.xlane.f32.xlu0 %v6646
  %v6648 = vpop.xlane.xlu0 %6647
  %v6649 = vsel %vm1988, %v6641, 0.0
  %6650 = vadd.xlane.f32.xlu0 %v6649
  %v6651 = vpop.xlane.xlu0 %6650
  %v6652 = vsel %vm1988, %v6642, 0.0
  %6653 = vadd.xlane.f32.xlu0 %v6652
  %v6654 = vpop.xlane.xlu0 %6653
  %v6655 = vmul.f32 %v6645, %v3040
  %v6656 = vmul.f32 %v6648, %v3040
  %v6657 = vmul.f32 %v6651, %v3040
  %v6658 = vmul.f32 %v6654, %v3040
  %v6659 = vadd.f32 %v6655, 1e-05
  %v6660 = vadd.f32 %v6656, 1e-05
  %v6661 = vadd.f32 %v6657, 1e-05
  %v6662 = vadd.f32 %v6658, 1e-05
  %v6663 = vrsqrt.pop %v6659
  %v6664 = vrsqrt.pop %v6660
  %v6665 = vrsqrt.pop %v6661
  %v6666 = vrsqrt.pop %v6662
  %v6667 = vmul.f32 %v6635, %v6663
  %v6668 = vmul.f32 %v6636, %v6664
  %v6669 = vmul.f32 %v6637, %v6665
  %v6670 = vmul.f32 %v6638, %v6666
  %v6672 = vlaneseq
  %v6673 = vshrl.u32 %v6672, 7
  %v6674 = vsub.s32 0, %v6673
  %v6675 = vrot.slane %v6616, %v6674
  %v6677 = vmul.f32 %v6667, %v6675
  %v6678 = vmul.f32 %v6668, %v6675
  %v6679 = vmul.f32 %v6669, %v6675
  %v6680 = vmul.f32 %v6670, %v6675
  %v6682 = vlaneseq
  %v6683 = vshrl.u32 %v6682, 7
  %v6684 = vsub.s32 0, %v6683
  %v6685 = vrot.slane %v6618, %v6684
  %v6687 = vadd.f32 %v6677, %v6685
  %v6688 = vadd.f32 %v6678, %v6685
  %v6689 = vadd.f32 %v6679, %v6685
  %v6690 = vadd.f32 %v6680, %v6685
  %v6691 = vsel %vm1988, %v6687, 0.0
  %v6692 = vrot.slane %v6691, 4
  %v6693 = vadd.f32 %v6691, %v6692
  %v6694 = vrot.slane %v6693, 2
  %v6695 = vadd.f32 %v6693, %v6694
  %v6696 = vrot.slane %v6695, 1
  %v6697 = vadd.f32 %v6695, %v6696
  %v6698 = vsel %vm1988, %v6688, 0.0
  %v6699 = vrot.slane %v6698, 4
  %v6700 = vadd.f32 %v6698, %v6699
  %v6701 = vrot.slane %v6700, 2
  %v6702 = vadd.f32 %v6700, %v6701
  %v6703 = vrot.slane %v6702, 1
  %v6704 = vadd.f32 %v6702, %v6703
  %v6705 = vsel %vm1988, %v6689, 0.0
  %v6706 = vrot.slane %v6705, 4
  %v6707 = vadd.f32 %v6705, %v6706
  %v6708 = vrot.slane %v6707, 2
  %v6709 = vadd.f32 %v6707, %v6708
  %v6710 = vrot.slane %v6709, 1
  %v6711 = vadd.f32 %v6709, %v6710
  %v6712 = vsel %vm1988, %v6690, 0.0
  %v6713 = vrot.slane %v6712, 4
  %v6714 = vadd.f32 %v6712, %v6713
  %v6715 = vrot.slane %v6714, 2
  %v6716 = vadd.f32 %v6714, %v6715
  %v6717 = vrot.slane %v6716, 1
  %v6718 = vadd.f32 %v6716, %v6717
  %v6719 = vmul.f32 %v6697, %v4328
  %v6720 = vmul.f32 %v6704, %v4328
  %v6721 = vmul.f32 %v6711, %v4328
  %v6722 = vmul.f32 %v6718, %v4328
  %v6727 = vsel %vm4337, %v6720, %v6719
  %v6728 = vsel %vm4339, %v6721, %v6727
  %v6729 = vsel %vm4341, %v6722, %v6728
  %6731 = vst.msk [vmem:[#allocation5 + $0x4] sm:$0xf] %vm4344, %v6729
  %v6732 = vld [vmem:[#allocation5] sm:$0xff]
  %v6733 = vpack.c.bf16 %v6732, %v6732
  %v6734 = vld [vmem:[%s20] sm:$0xf]
  %v6735 = vld [vmem:[%s20 + $0x4] sm:$0xf]
  %v6736 = vld [vmem:[%s20 + $0x8] sm:$0xf]
  %v6737 = vld [vmem:[%s20 + $0xc] sm:$0xf]
  %v6738 = vld [vmem:[%s21] sm:$0x1]
  %v6740 = vlaneseq
  %v6741 = vshrl.u32 %v6740, 7
  %v6742 = vsub.s32 0, %v6741
  %v6743 = vrot.slane %v6738, %v6742
  %v6749 = vunpack.c.l.b16 %v6734
  %v6750 = vunpack.c.l.b16 %v6735
  %v6751 = vunpack.c.l.b16 %v6736
  %v6752 = vunpack.c.l.b16 %v6737
  %v6753 = vpack.c.b16 %v6750, %v6749
  %v6754 = vpack.c.b16 %v6752, %v6751
  %v6758 = vsel %vm1988, %v6733, 0
  %6760 = vmatprep.subr.bf16.mxu0 0
  %6761 = vmatpush1.bf16.msra.mxu0 %v6753
  %6762 = vmatprep.subr.bf16.mxu0 0
  %6763 = vmatpush1.bf16.msra.mxu0 %v6754
  %6764 = vmatprep.subr.bf16.mxu0 0
  %6765 = vmatpush1.bf16.msra.mxu0 0
  %6766 = vmatprep.subr.bf16.mxu0 0
  %6767 = vmatpush1.bf16.msra.mxu0 0
  %6768 = vmatprep.subr.bf16.mxu0 0
  %6769 = vmatpush1.bf16.msra.mxu0 0
  %6770 = vmatprep.subr.bf16.mxu0 0
  %6771 = vmatpush1.bf16.msra.mxu0 0
  %6772 = vmatprep.subr.bf16.mxu0 0
  %6773 = vmatpush1.bf16.msra.mxu0 0
  %6774 = vmatprep.subr.bf16.mxu0 0
  %6775 = vmatpush1.bf16.msra.mxu0 0
  %6776 = vmatprep.subr.bf16.mxu0 0
  %6777 = vmatpush1.bf16.msra.mxu0 0
  %6778 = vmatprep.subr.bf16.mxu0 0
  %6779 = vmatpush1.bf16.msra.mxu0 0
  %6780 = vmatprep.subr.bf16.mxu0 0
  %6781 = vmatpush1.bf16.msra.mxu0 0
  %6782 = vmatprep.subr.bf16.mxu0 0
  %6783 = vmatpush1.bf16.msra.mxu0 0
  %6784 = vmatprep.subr.bf16.mxu0 0
  %6785 = vmatpush1.bf16.msra.mxu0 0
  %6786 = vmatprep.subr.bf16.mxu0 0
  %6787 = vmatpush1.bf16.msra.mxu0 0
  %6788 = vmatprep.subr.bf16.mxu0 0
  %6789 = vmatpush1.bf16.msra.mxu0 0
  %6790 = vmatprep.subr.bf16.mxu0 0
  %6791 = vmatpush1.bf16.msra.mxu0 0
  %6792 = vmatprep.mubr.bf16.mxu0 0
  %6793 = vmatmul.mubr.bf16.gmra.mrb[0].mxu0 %v6758
  %v6794 = vpop.f32.mrb[0].mxu0
  %v6795 = vadd.f32 %v6743, %v6794
  %v6796 = vpop.f32.mrb[0].mxu0
  %v6797 = vpop.f32.mrb[0].mxu0
  %v6798 = vpop.f32.mrb[0].mxu0
  %6799 = vdwg.mxu0
  %v6800 = vmax.f32 %v6795, 0.0
  %v6801 = vpack.c.bf16 %v6800, %v6800
  %v6802 = vld [vmem:[%s22] sm:$0xf]
  %v6803 = vld [vmem:[%s22 + $0x4] sm:$0xf]
  %v6804 = vld [vmem:[%s22 + $0x8] sm:$0xf]
  %v6805 = vld [vmem:[%s22 + $0xc] sm:$0xf]
  %v6806 = vld [vmem:[%s23] sm:$0x1]
  %v6808 = vlaneseq
  %v6809 = vshrl.u32 %v6808, 7
  %v6810 = vsub.s32 0, %v6809
  %v6811 = vrot.slane %v6806, %v6810
  %v6817 = vunpack.c.l.b16 %v6802
  %v6818 = vunpack.c.l.b16 %v6803
  %v6819 = vunpack.c.l.b16 %v6804
  %v6820 = vunpack.c.l.b16 %v6805
  %v6821 = vpack.c.b16 %v6818, %v6817
  %v6822 = vpack.c.b16 %v6820, %v6819
  %v6826 = vsel %vm1988, %v6801, 0
  %6828 = vmatprep.subr.bf16.mxu0 0
  %6829 = vmatpush1.bf16.msra.mxu0 %v6821
  %6830 = vmatprep.subr.bf16.mxu0 0
  %6831 = vmatpush1.bf16.msra.mxu0 %v6822
  %6832 = vmatprep.subr.bf16.mxu0 0
  %6833 = vmatpush1.bf16.msra.mxu0 0
  %6834 = vmatprep.subr.bf16.mxu0 0
  %6835 = vmatpush1.bf16.msra.mxu0 0
  %6836 = vmatprep.subr.bf16.mxu0 0
  %6837 = vmatpush1.bf16.msra.mxu0 0
  %6838 = vmatprep.subr.bf16.mxu0 0
  %6839 = vmatpush1.bf16.msra.mxu0 0
  %6840 = vmatprep.subr.bf16.mxu0 0
  %6841 = vmatpush1.bf16.msra.mxu0 0
  %6842 = vmatprep.subr.bf16.mxu0 0
  %6843 = vmatpush1.bf16.msra.mxu0 0
  %6844 = vmatprep.subr.bf16.mxu0 0
  %6845 = vmatpush1.bf16.msra.mxu0 0
  %6846 = vmatprep.subr.bf16.mxu0 0
  %6847 = vmatpush1.bf16.msra.mxu0 0
  %6848 = vmatprep.subr.bf16.mxu0 0
  %6849 = vmatpush1.bf16.msra.mxu0 0
  %6850 = vmatprep.subr.bf16.mxu0 0
  %6851 = vmatpush1.bf16.msra.mxu0 0
  %6852 = vmatprep.subr.bf16.mxu0 0
  %6853 = vmatpush1.bf16.msra.mxu0 0
  %6854 = vmatprep.subr.bf16.mxu0 0
  %6855 = vmatpush1.bf16.msra.mxu0 0
  %6856 = vmatprep.subr.bf16.mxu0 0
  %6857 = vmatpush1.bf16.msra.mxu0 0
  %6858 = vmatprep.subr.bf16.mxu0 0
  %6859 = vmatpush1.bf16.msra.mxu0 0
  %6860 = vmatprep.mubr.bf16.mxu0 0
  %6861 = vmatmul.mubr.bf16.gmra.mrb[0].mxu0 %v6826
  %v6862 = vpop.f32.mrb[0].mxu0
  %v6863 = vadd.f32 %v6811, %v6862
  %v6864 = vpop.f32.mrb[0].mxu0
  %v6865 = vpop.f32.mrb[0].mxu0
  %v6866 = vpop.f32.mrb[0].mxu0
  %6867 = vdwg.mxu0
  %vm6868 = vcmask 80896
  %6869 = vst.msk [vmem:[%s24] sm:$0xff] %vm6868, %v6863
  // Predicated region
  $region98: #{scmoanno_pretrain.1} parent=0 // pred_check
    _
  $region99: #{scmoanno_pretrain.1} parent=0 // pred_check_branch
    %6871 = sbr.rel (0) target = $region101
  $region100: #{scmoanno_pretrain.1} parent=0 // pred_region
    _
  $region101: #{scmoanno_pretrain.1} parent=0 // pred_fallthru
    _
  // Predicated region
  $region102: #{scmoanno_pretrain.1} parent=0 // pred_check
    _
  $region103: #{scmoanno_pretrain.1} parent=0 // pred_check_branch
    %6873 = sbr.rel (0) target = $region105
  $region104: #{scmoanno_pretrain.1} parent=0 // pred_region
    _
  $region105: #{scmoanno_pretrain.1} parent=0 // pred_fallthru
    _

</llo_original>
